<compile_context>
chip_gen: v7x
topology: tpu7x:2x2x1
jax: 0.10.0
libtpu: 0.0.40
codegen_flags: <defaults>
</compile_context>

<pallas_src>
import functools

import jax
import jax.numpy as jnp
from jax.experimental import pallas as pl
from jax.experimental.pallas import tpu as pltpu

# Set to jnp.bfloat16 on v6e / v7x for ~2x MXU throughput and halved HBM/VMEM bytes
# (accumulation stays f32 via preferred_element_type). f32 keeps reference numerics.
MATMUL_DTYPE = jnp.float32
_LN_EPS = 1e-5  # PyTorch nn.LayerNorm default


def _mm(a, b):
    """a @ b with f32 accumulation."""
    return jnp.dot(a.astype(MATMUL_DTYPE), b.astype(MATMUL_DTYPE),
                   preferred_element_type=jnp.float32)


def _mm_nt(a, b):
    """a @ b.T (contract last dims) without materializing a transpose."""
    return jax.lax.dot_general(a.astype(MATMUL_DTYPE), b.astype(MATMUL_DTYPE),
                               (((1,), (1,)), ((), ())),
                               preferred_element_type=jnp.float32)


# --------------------------- fused decoder-layer kernel ---------------------------

def _decoder_layer_kernel(*refs, num_heads, dim_k, dim_v):
    (tgt_ref, mem_ref,
     wq1, bq1, wk1, bk1, wv1, bv1, wo1, bo1,
     wq2, bq2, wk2, bk2, wv2, bv2, wo2, bo2,
     w1, b1, w2, b2,
     ln1g, ln1b, ln2g, ln2b, ln3g, ln3b,
     o_ref) = refs

    inv_scale = 1.0 / (float(dim_k) ** 0.5)
    hk = num_heads * dim_k
    hv = num_heads * dim_v

    def mha(q_all, k_all, v_all, wo_ref, bo_ref):
        # q_all/k_all: (Sq|Sk, H*dk), v_all: (Sk, H*dv); heads packed along lanes.
        # Head separation via lane masks keeps every MXU contraction full-width and
        # avoids lane-unaligned slices / concats / transposes inside the kernel.
        lane_k = jax.lax.broadcasted_iota(jnp.int32, (1, hk), 1)
        lane_v = jax.lax.broadcasted_iota(jnp.int32, (1, hv), 1)
        ctx = jnp.zeros((q_all.shape[0], hv), jnp.float32)
        for h in range(num_heads):
            mk = ((lane_k >= h * dim_k) & (lane_k < (h + 1) * dim_k)).astype(jnp.float32)
            mv = ((lane_v >= h * dim_v) & (lane_v < (h + 1) * dim_v)).astype(jnp.float32)
            s = _mm_nt(q_all * mk, k_all) * inv_scale           # (Sq, Sk) head-h scores
            m = jnp.max(s, axis=-1, keepdims=True)
            e = jnp.exp(s - m)
            # softmax denominator via EUP reciprocal (separate VLIW slot).
            p = e * pl.reciprocal(jnp.sum(e, axis=-1, keepdims=True), approx=True)
            ctx = ctx + _mm(p, v_all * mv)                      # head-h context lanes
        # lane-dense concatenated heads -> single output-projection GEMM
        return _mm(ctx, wo_ref[...]) + bo_ref[...]              # (Sq, D)

    def add_layernorm(x, y, g, b):
        z = x + y
        mu = jnp.mean(z, axis=-1, keepdims=True)
        var = jnp.mean((z - mu) ** 2, axis=-1, keepdims=True)
        return (z - mu) * jax.lax.rsqrt(var + _LN_EPS) * g + b

    tgt = tgt_ref[...].astype(jnp.float32)                      # (S, D)
    mem = mem_ref[...].astype(jnp.float32)                      # (Sm, D)

    # ---- Residual 1: self-attention (q, k, v all from tgt) ----
    q1 = _mm(tgt, wq1[...]) + bq1[...]
    k1 = _mm(tgt, wk1[...]) + bk1[...]
    v1 = _mm(tgt, wv1[...]) + bv1[...]
    t1 = add_layernorm(tgt, mha(q1, k1, v1, wo1, bo1), ln1g[...], ln1b[...])

    # ---- Residual 2 (faithful to reference): query=memory, key=memory, value=tgt;
    #      residual connection adds tgt (tensors[-1]) ----
    q2 = _mm(mem, wq2[...]) + bq2[...]
    k2 = _mm(mem, wk2[...]) + bk2[...]
    v2 = _mm(t1, wv2[...]) + bv2[...]
    t2 = add_layernorm(t1, mha(q2, k2, v2, wo2, bo2), ln2g[...], ln2b[...])

    # ---- Residual 3: feed-forward ----
    hmid = jnp.maximum(_mm(t2, w1[...]) + b1[...], 0.0)
    ffo = _mm(hmid, w2[...]) + b2[...]
    t3 = add_layernorm(t2, ffo, ln3g[...], ln3b[...])

    o_ref[...] = t3.astype(o_ref.dtype)


def pallas_decoder_layer(tgt, memory, p, *, num_heads, dim_k, dim_v):
    B, S, D = tgt.shape
    Sm = memory.shape[1]

    weights = (p["wq1"], p["bq1"], p["wk1"], p["bk1"], p["wv1"], p["bv1"], p["wo1"], p["bo1"],
               p["wq2"], p["bq2"], p["wk2"], p["bk2"], p["wv2"], p["bv2"], p["wo2"], p["bo2"],
               p["w1"], p["b1"], p["w2"], p["b2"],
               p["ln1_g"], p["ln1_b"], p["ln2_g"], p["ln2_b"], p["ln3_g"], p["ln3_b"])

    def wspec(arr):
        shp = arr.shape
        return pl.BlockSpec(shp, lambda b: (0,) * len(shp))     # weights resident in VMEM

    kernel = functools.partial(_decoder_layer_kernel,
                               num_heads=num_heads, dim_k=dim_k, dim_v=dim_v)

    return pl.pallas_call(
        kernel,
        out_shape=jax.ShapeDtypeStruct((B, S, D), tgt.dtype),
        grid=(B,),                                              # one batch per grid step
        in_specs=[pl.BlockSpec((None, S, D), lambda b: (b, 0, 0)),
                  pl.BlockSpec((None, Sm, D), lambda b: (b, 0, 0))]
                 + [wspec(w) for w in weights],
        out_specs=pl.BlockSpec((None, S, D), lambda b: (b, 0, 0)),
        compiler_params=pltpu.CompilerParams(dimension_semantics=("parallel",)),
    )(tgt, memory, *weights)


# --------------------------- final linear + softmax kernel ---------------------------

def _linear_softmax_kernel(x_ref, w_ref, b_ref, o_ref):
    s = _mm(x_ref[...], w_ref[...]) + b_ref[...]
    m = jnp.max(s, axis=-1, keepdims=True)
    e = jnp.exp(s - m)
    # exact divide so output rows sum to 1 to f32 precision
    o_ref[...] = (e / jnp.sum(e, axis=-1, keepdims=True)).astype(o_ref.dtype)


def pallas_linear_softmax(x2d, w, b, *, block_m=512):
    M, K = x2d.shape
    N = w.shape[1]
    tm = block_m if (M > block_m and M % block_m == 0) else M
    return pl.pallas_call(
        _linear_softmax_kernel,
        out_shape=jax.ShapeDtypeStruct((M, N), x2d.dtype),
        grid=(M // tm,),
        in_specs=[pl.BlockSpec((tm, K), lambda i: (i, 0)),
                  pl.BlockSpec((K, N), lambda i: (0, 0)),
                  pl.BlockSpec((1, N), lambda i: (0, 0))],
        out_specs=pl.BlockSpec((tm, N), lambda i: (i, 0)),
        compiler_params=pltpu.CompilerParams(dimension_semantics=("parallel",)),
    )(x2d, w, b.reshape(1, N))


# ------------------------------ model (glue) --------------------------------

def position_encoding(seq_len, dim_model, dtype=jnp.float32):
    pos = jnp.arange(seq_len, dtype=jnp.float32).reshape(1, -1, 1)
    dim = jnp.arange(dim_model, dtype=jnp.float32).reshape(1, 1, -1)
    phase = pos / (10000.0 ** (dim / dim_model))
    even = (jnp.arange(dim_model).reshape(1, 1, -1) % 2) == 0
    return jnp.where(even, jnp.sin(phase), jnp.cos(phase)).astype(dtype)


def transformer_decoder(tgt, memory, params, *, num_heads, dim_k, dim_v):
    B, S, D = tgt.shape
    tgt = tgt + position_encoding(S, D, tgt.dtype)
    for lp in params["layers"]:
        tgt = pallas_decoder_layer(tgt, memory, lp,
                                   num_heads=num_heads, dim_k=dim_k, dim_v=dim_v)
    out = pallas_linear_softmax(tgt.reshape(B * S, D), params["wf"], params["bf"])
    return out.reshape(B, S, D)


# --------------------------- deterministic params ---------------------------

def init_params(key, num_layers, dim_model, num_heads, dim_feedforward):
    dim_k = dim_v = dim_model // num_heads
    hk = num_heads * dim_k
    hv = num_heads * dim_v

    def lin(k, fan_in, fan_out):
        kw, kb = jax.random.split(k)
        bound = 1.0 / (fan_in ** 0.5)
        w = jax.random.uniform(kw, (fan_in, fan_out), jnp.float32, -bound, bound)
        b = jax.random.uniform(kb, (1, fan_out), jnp.float32, -bound, bound)
        return w, b

    keys = jax.random.split(key, num_layers + 1)
    ones = jnp.ones((1, dim_model), jnp.float32)
    zeros = jnp.zeros((1, dim_model), jnp.float32)
    layers = []
    for lk in keys[:num_layers]:
        ks = jax.random.split(lk, 10)
        # per-head Linear weights are packed column-wise, head-major (== torch.cat of heads)
        wq1, bq1 = lin(ks[0], dim_model, hk)
        wk1, bk1 = lin(ks[1], dim_model, hk)
        wv1, bv1 = lin(ks[2], dim_model, hv)
        wo1, bo1 = lin(ks[3], hv, dim_model)
        wq2, bq2 = lin(ks[4], dim_model, hk)
        wk2, bk2 = lin(ks[5], dim_model, hk)
        wv2, bv2 = lin(ks[6], dim_model, hv)
        wo2, bo2 = lin(ks[7], hv, dim_model)
        w1, b1 = lin(ks[8], dim_model, dim_feedforward)
        w2, b2 = lin(ks[9], dim_feedforward, dim_model)
        layers.append(dict(
            wq1=wq1, bq1=bq1, wk1=wk1, bk1=bk1, wv1=wv1, bv1=bv1, wo1=wo1, bo1=bo1,
            wq2=wq2, bq2=bq2, wk2=wk2, bk2=bk2, wv2=wv2, bv2=bv2, wo2=wo2, bo2=bo2,
            w1=w1, b1=b1, w2=w2, b2=b2,
            ln1_g=ones, ln1_b=zeros, ln2_g=ones, ln2_b=zeros, ln3_g=ones, ln3_b=zeros,
        ))
    wf, bf = lin(keys[-1], dim_model, dim_model)
    return dict(layers=layers, wf=wf, bf=bf), dim_k, dim_v


# ----------------------------------- main ------------------------------------

if __name__ == "__main__":
    NUM_LAYERS = 2
    DIM_MODEL = 32
    NUM_HEADS = 4
    DIM_FF = 64
    B, S = 2, 8

    key = jax.random.PRNGKey(0)
    kp, kt, km = jax.random.split(key, 3)
    params, dim_k, dim_v = init_params(kp, NUM_LAYERS, DIM_MODEL, NUM_HEADS, DIM_FF)

    tgt = jax.random.normal(kt, (B, S, DIM_MODEL), jnp.float32)
    memory = jax.random.normal(km, (B, S, DIM_MODEL), jnp.float32)

    fwd = jax.jit(functools.partial(transformer_decoder,
                                    num_heads=NUM_HEADS, dim_k=dim_k, dim_v=dim_v))
    out = fwd(tgt, memory, params)
    out = jax.block_until_ready(out)

    assert out.shape == (B, S, DIM_MODEL)
    assert bool(jnp.all(jnp.isfinite(out)))
    # rows of the final softmax must sum to 1
    assert bool(jnp.allclose(jnp.sum(out, axis=-1), 1.0, atol=1e-5))
    print("KERNEL_OK")
</pallas_src>

<mosaic_0001>
module attributes {stable_mosaic.version = 11 : i64} {
  func.func @_linear_softmax_kernel(%arg0: i32, %arg1: memref<16x32xf32, #tpu.memory_space<vmem>>, %arg2: memref<32x32xf32, #tpu.memory_space<vmem>>, %arg3: memref<1x32xf32, #tpu.memory_space<vmem>>, %arg4: memref<16x32xf32, #tpu.memory_space<vmem>>) attributes {dimension_semantics = [#tpu.dimension_semantics<parallel>], iteration_bounds = array<i64: 1>, scalar_prefetch = 0 : i64, scratch_operands = 0 : i64, tpu.core_type = #tpu.core_type<tc>, window_params = [{transform_indices = @transform_0, window_bounds = array<i64: 16, 32>}, {pipeline_mode = #tpu.pipeline_mode<synchronous>, transform_indices = @transform_1, window_bounds = array<i64: 32, 32>}, {pipeline_mode = #tpu.pipeline_mode<synchronous>, transform_indices = @transform_2, window_bounds = array<i64: 1, 32>}, {transform_indices = @transform_3, window_bounds = array<i64: 16, 32>}]} {
    %c0 = arith.constant 0 : index
    %c0_0 = arith.constant 0 : index
    %0 = vector.load %arg1[%c0, %c0_0] : memref<16x32xf32, #tpu.memory_space<vmem>>, vector<16x32xf32>
    %c0_1 = arith.constant 0 : index
    %c0_2 = arith.constant 0 : index
    %1 = vector.load %arg2[%c0_1, %c0_2] : memref<32x32xf32, #tpu.memory_space<vmem>>, vector<32x32xf32>
    %cst = arith.constant dense<0.000000e+00> : vector<16x32xf32>
    %2 = tpu.matmul %0, %1, %cst {dimension_numbers = #tpu.dot_dimension_numbers<[1], [0], [0], [1], [0, 0, 1, 1], [], []>} : vector<16x32xf32>, vector<32x32xf32>, vector<16x32xf32> -> vector<16x32xf32>
    %c0_3 = arith.constant 0 : index
    %c0_4 = arith.constant 0 : index
    %3 = vector.load %arg3[%c0_3, %c0_4] : memref<1x32xf32, #tpu.memory_space<vmem>>, vector<1x32xf32>
    %4 = vector.broadcast %3 : vector<1x32xf32> to vector<16x32xf32>
    %5 = arith.addf %2, %4 : vector<16x32xf32>
    %cst_5 = arith.constant dense<0xFF800000> : vector<16xf32>
    %6 = vector.multi_reduction <maximumf>, %5, %cst_5 [1] : vector<16x32xf32> to vector<16xf32>
    %7 = vector.shape_cast %6 : vector<16xf32> to vector<16x1xf32>
    %8 = vector.broadcast %7 : vector<16x1xf32> to vector<16x32xf32>
    %9 = arith.subf %5, %8 : vector<16x32xf32>
    %10 = math.exp %9 : vector<16x32xf32>
    %cst_6 = arith.constant dense<0.000000e+00> : vector<16xf32>
    %11 = vector.multi_reduction <add>, %10, %cst_6 [1] : vector<16x32xf32> to vector<16xf32>
    %12 = vector.shape_cast %11 : vector<16xf32> to vector<16x1xf32>
    %13 = vector.broadcast %12 : vector<16x1xf32> to vector<16x32xf32>
    %14 = arith.divf %10, %13 : vector<16x32xf32>
    %c0_7 = arith.constant 0 : index
    %c0_8 = arith.constant 0 : index
    %15 = vector.load %arg4[%c0_7, %c0_8] : memref<16x32xf32, #tpu.memory_space<vmem>>, vector<16x32xf32>
    tpu.vector_store %arg4[%c0_7, %c0_8], %14 {strides = array<i32>} : memref<16x32xf32, #tpu.memory_space<vmem>>, vector<16x32xf32>,
    return
  }
  func.func @transform_0(%arg0: i32) -> (i32, i32) {
    %c0_i32 = arith.constant 0 : i32
    %c0_i32_0 = arith.constant 0 : i32
    return %arg0, %c0_i32 : i32, i32
  }
  func.func @transform_1(%arg0: i32) -> (i32, i32) {
    %c0_i32 = arith.constant 0 : i32
    %c0_i32_0 = arith.constant 0 : i32
    %c0_i32_1 = arith.constant 0 : i32
    return %c0_i32, %c0_i32_0 : i32, i32
  }
  func.func @transform_2(%arg0: i32) -> (i32, i32) {
    %c0_i32 = arith.constant 0 : i32
    %c0_i32_0 = arith.constant 0 : i32
    %c0_i32_1 = arith.constant 0 : i32
    return %c0_i32, %c0_i32_0 : i32, i32
  }
  func.func @transform_3(%arg0: i32) -> (i32, i32) {
    %c0_i32 = arith.constant 0 : i32
    %c0_i32_0 = arith.constant 0 : i32
    return %arg0, %c0_i32 : i32, i32
  }
}

module attributes {stable_mosaic.version = 11 : i64} {
  func.func @_decoder_layer_kernel(%arg0: i32, %arg1: memref<1x8x32xf32, #tpu.memory_space<vmem>>, %arg2: memref<1x8x32xf32, #tpu.memory_space<vmem>>, %arg3: memref<32x32xf32, #tpu.memory_space<vmem>>, %arg4: memref<1x32xf32, #tpu.memory_space<vmem>>, %arg5: memref<32x32xf32, #tpu.memory_space<vmem>>, %arg6: memref<1x32xf32, #tpu.memory_space<vmem>>, %arg7: memref<32x32xf32, #tpu.memory_space<vmem>>, %arg8: memref<1x32xf32, #tpu.memory_space<vmem>>, %arg9: memref<32x32xf32, #tpu.memory_space<vmem>>, %arg10: memref<1x32xf32, #tpu.memory_space<vmem>>, %arg11: memref<32x32xf32, #tpu.memory_space<vmem>>, %arg12: memref<1x32xf32, #tpu.memory_space<vmem>>, %arg13: memref<32x32xf32, #tpu.memory_space<vmem>>, %arg14: memref<1x32xf32, #tpu.memory_space<vmem>>, %arg15: memref<32x32xf32, #tpu.memory_space<vmem>>, %arg16: memref<1x32xf32, #tpu.memory_space<vmem>>, %arg17: memref<32x32xf32, #tpu.memory_space<vmem>>, %arg18: memref<1x32xf32, #tpu.memory_space<vmem>>, %arg19: memref<32x64xf32, #tpu.memory_space<vmem>>, %arg20: memref<1x64xf32, #tpu.memory_space<vmem>>, %arg21: memref<64x32xf32, #tpu.memory_space<vmem>>, %arg22: memref<1x32xf32, #tpu.memory_space<vmem>>, %arg23: memref<1x32xf32, #tpu.memory_space<vmem>>, %arg24: memref<1x32xf32, #tpu.memory_space<vmem>>, %arg25: memref<1x32xf32, #tpu.memory_space<vmem>>, %arg26: memref<1x32xf32, #tpu.memory_space<vmem>>, %arg27: memref<1x32xf32, #tpu.memory_space<vmem>>, %arg28: memref<1x32xf32, #tpu.memory_space<vmem>>, %arg29: memref<1x8x32xf32, #tpu.memory_space<vmem>>) attributes {dimension_semantics = [#tpu.dimension_semantics<parallel>], iteration_bounds = array<i64: 2>, scalar_prefetch = 0 : i64, scratch_operands = 0 : i64, tpu.core_type = #tpu.core_type<tc>, window_params = [{transform_indices = @transform_0, window_bounds = array<i64: 1, 8, 32>}, {transform_indices = @transform_1, window_bounds = array<i64: 1, 8, 32>}, {pipeline_mode = #tpu.pipeline_mode<synchronous>, transform_indices = @transform_2, window_bounds = array<i64: 32, 32>}, {pipeline_mode = #tpu.pipeline_mode<synchronous>, transform_indices = @transform_3, window_bounds = array<i64: 1, 32>}, {pipeline_mode = #tpu.pipeline_mode<synchronous>, transform_indices = @transform_4, window_bounds = array<i64: 32, 32>}, {pipeline_mode = #tpu.pipeline_mode<synchronous>, transform_indices = @transform_5, window_bounds = array<i64: 1, 32>}, {pipeline_mode = #tpu.pipeline_mode<synchronous>, transform_indices = @transform_6, window_bounds = array<i64: 32, 32>}, {pipeline_mode = #tpu.pipeline_mode<synchronous>, transform_indices = @transform_7, window_bounds = array<i64: 1, 32>}, {pipeline_mode = #tpu.pipeline_mode<synchronous>, transform_indices = @transform_8, window_bounds = array<i64: 32, 32>}, {pipeline_mode = #tpu.pipeline_mode<synchronous>, transform_indices = @transform_9, window_bounds = array<i64: 1, 32>}, {pipeline_mode = #tpu.pipeline_mode<synchronous>, transform_indices = @transform_10, window_bounds = array<i64: 32, 32>}, {pipeline_mode = #tpu.pipeline_mode<synchronous>, transform_indices = @transform_11, window_bounds = array<i64: 1, 32>}, {pipeline_mode = #tpu.pipeline_mode<synchronous>, transform_indices = @transform_12, window_bounds = array<i64: 32, 32>}, {pipeline_mode = #tpu.pipeline_mode<synchronous>, transform_indices = @transform_13, window_bounds = array<i64: 1, 32>}, {pipeline_mode = #tpu.pipeline_mode<synchronous>, transform_indices = @transform_14, window_bounds = array<i64: 32, 32>}, {pipeline_mode = #tpu.pipeline_mode<synchronous>, transform_indices = @transform_15, window_bounds = array<i64: 1, 32>}, {pipeline_mode = #tpu.pipeline_mode<synchronous>, transform_indices = @transform_16, window_bounds = array<i64: 32, 32>}, {pipeline_mode = #tpu.pipeline_mode<synchronous>, transform_indices = @transform_17, window_bounds = array<i64: 1, 32>}, {pipeline_mode = #tpu.pipeline_mode<synchronous>, transform_indices = @transform_18, window_bounds = array<i64: 32, 64>}, {pipeline_mode = #tpu.pipeline_mode<synchronous>, transform_indices = @transform_19, window_bounds = array<i64: 1, 64>}, {pipeline_mode = #tpu.pipeline_mode<synchronous>, transform_indices = @transform_20, window_bounds = array<i64: 64, 32>}, {pipeline_mode = #tpu.pipeline_mode<synchronous>, transform_indices = @transform_21, window_bounds = array<i64: 1, 32>}, {pipeline_mode = #tpu.pipeline_mode<synchronous>, transform_indices = @transform_22, window_bounds = array<i64: 1, 32>}, {pipeline_mode = #tpu.pipeline_mode<synchronous>, transform_indices = @transform_23, window_bounds = array<i64: 1, 32>}, {pipeline_mode = #tpu.pipeline_mode<synchronous>, transform_indices = @transform_24, window_bounds = array<i64: 1, 32>}, {pipeline_mode = #tpu.pipeline_mode<synchronous>, transform_indices = @transform_25, window_bounds = array<i64: 1, 32>}, {pipeline_mode = #tpu.pipeline_mode<synchronous>, transform_indices = @transform_26, window_bounds = array<i64: 1, 32>}, {pipeline_mode = #tpu.pipeline_mode<synchronous>, transform_indices = @transform_27, window_bounds = array<i64: 1, 32>}, {transform_indices = @transform_28, window_bounds = array<i64: 1, 8, 32>}]} {
    %c0 = arith.constant 0 : index
    %c0_0 = arith.constant 0 : index
    %c0_1 = arith.constant 0 : index
    %0 = vector.load %arg1[%c0, %c0_0, %c0_1] : memref<1x8x32xf32, #tpu.memory_space<vmem>>, vector<1x8x32xf32>
    %1 = vector.shape_cast %0 : vector<1x8x32xf32> to vector<8x32xf32>
    %c0_2 = arith.constant 0 : index
    %c0_3 = arith.constant 0 : index
    %c0_4 = arith.constant 0 : index
    %2 = vector.load %arg2[%c0_2, %c0_3, %c0_4] : memref<1x8x32xf32, #tpu.memory_space<vmem>>, vector<1x8x32xf32>
    %3 = vector.shape_cast %2 : vector<1x8x32xf32> to vector<8x32xf32>
    %c0_5 = arith.constant 0 : index
    %c0_6 = arith.constant 0 : index
    %4 = vector.load %arg3[%c0_5, %c0_6] : memref<32x32xf32, #tpu.memory_space<vmem>>, vector<32x32xf32>
    %cst = arith.constant dense<0.000000e+00> : vector<8x32xf32>
    %5 = tpu.matmul %1, %4, %cst {dimension_numbers = #tpu.dot_dimension_numbers<[1], [0], [0], [1], [0, 0, 1, 1], [], []>} : vector<8x32xf32>, vector<32x32xf32>, vector<8x32xf32> -> vector<8x32xf32>
    %c0_7 = arith.constant 0 : index
    %c0_8 = arith.constant 0 : index
    %6 = vector.load %arg4[%c0_7, %c0_8] : memref<1x32xf32, #tpu.memory_space<vmem>>, vector<1x32xf32>
    %7 = vector.broadcast %6 : vector<1x32xf32> to vector<8x32xf32>
    %8 = arith.addf %5, %7 : vector<8x32xf32>
    %c0_9 = arith.constant 0 : index
    %c0_10 = arith.constant 0 : index
    %9 = vector.load %arg5[%c0_9, %c0_10] : memref<32x32xf32, #tpu.memory_space<vmem>>, vector<32x32xf32>
    %cst_11 = arith.constant dense<0.000000e+00> : vector<8x32xf32>
    %10 = tpu.matmul %1, %9, %cst_11 {dimension_numbers = #tpu.dot_dimension_numbers<[1], [0], [0], [1], [0, 0, 1, 1], [], []>} : vector<8x32xf32>, vector<32x32xf32>, vector<8x32xf32> -> vector<8x32xf32>
    %c0_12 = arith.constant 0 : index
    %c0_13 = arith.constant 0 : index
    %11 = vector.load %arg6[%c0_12, %c0_13] : memref<1x32xf32, #tpu.memory_space<vmem>>, vector<1x32xf32>
    %12 = vector.broadcast %11 : vector<1x32xf32> to vector<8x32xf32>
    %13 = arith.addf %10, %12 : vector<8x32xf32>
    %c0_14 = arith.constant 0 : index
    %c0_15 = arith.constant 0 : index
    %14 = vector.load %arg7[%c0_14, %c0_15] : memref<32x32xf32, #tpu.memory_space<vmem>>, vector<32x32xf32>
    %cst_16 = arith.constant dense<0.000000e+00> : vector<8x32xf32>
    %15 = tpu.matmul %1, %14, %cst_16 {dimension_numbers = #tpu.dot_dimension_numbers<[1], [0], [0], [1], [0, 0, 1, 1], [], []>} : vector<8x32xf32>, vector<32x32xf32>, vector<8x32xf32> -> vector<8x32xf32>
    %c0_17 = arith.constant 0 : index
    %c0_18 = arith.constant 0 : index
    %16 = vector.load %arg8[%c0_17, %c0_18] : memref<1x32xf32, #tpu.memory_space<vmem>>, vector<1x32xf32>
    %17 = vector.broadcast %16 : vector<1x32xf32> to vector<8x32xf32>
    %18 = arith.addf %15, %17 : vector<8x32xf32>
    %19 = tpu.iota {dimensions = array<i32: 1>} : vector<1x32xi32>
    %20 = tpu.iota {dimensions = array<i32: 1>} : vector<1x32xi32>
    %cst_19 = arith.constant 0.000000e+00 : f32
    %21 = vector.broadcast %cst_19 : f32 to vector<8x32xf32>
    %c0_i32 = arith.constant 0 : i32
    %22 = vector.broadcast %c0_i32 : i32 to vector<1x32xi32>
    %23 = arith.cmpi sge, %19, %22 : vector<1x32xi32>
    %c8_i32 = arith.constant 8 : i32
    %24 = vector.broadcast %c8_i32 : i32 to vector<1x32xi32>
    %25 = arith.cmpi slt, %19, %24 : vector<1x32xi32>
    %26 = arith.andi %23, %25 : vector<1x32xi1>
    %27 = arith.extui %26 : vector<1x32xi1> to vector<1x32xi32>
    %28 = arith.sitofp %27 : vector<1x32xi32> to vector<1x32xf32>
    %c0_i32_20 = arith.constant 0 : i32
    %29 = vector.broadcast %c0_i32_20 : i32 to vector<1x32xi32>
    %30 = arith.cmpi sge, %20, %29 : vector<1x32xi32>
    %c8_i32_21 = arith.constant 8 : i32
    %31 = vector.broadcast %c8_i32_21 : i32 to vector<1x32xi32>
    %32 = arith.cmpi slt, %20, %31 : vector<1x32xi32>
    %33 = arith.andi %30, %32 : vector<1x32xi1>
    %34 = arith.extui %33 : vector<1x32xi1> to vector<1x32xi32>
    %35 = arith.sitofp %34 : vector<1x32xi32> to vector<1x32xf32>
    %36 = vector.broadcast %28 : vector<1x32xf32> to vector<8x32xf32>
    %37 = arith.mulf %8, %36 : vector<8x32xf32>
    %cst_22 = arith.constant dense<0.000000e+00> : vector<8x8xf32>
    %38 = tpu.matmul %37, %13, %cst_22 {dimension_numbers = #tpu.dot_dimension_numbers<[1], [1], [0], [0], [0, 0, 1, 0], [], []>} : vector<8x32xf32>, vector<8x32xf32>, vector<8x8xf32> -> vector<8x8xf32>
    %cst_23 = arith.constant 0.353553385 : f32
    %39 = vector.broadcast %cst_23 : f32 to vector<8x8xf32>
    %40 = arith.mulf %38, %39 : vector<8x8xf32>
    %cst_24 = arith.constant dense<0xFF800000> : vector<8xf32>
    %41 = vector.multi_reduction <maximumf>, %40, %cst_24 [1] : vector<8x8xf32> to vector<8xf32>
    %42 = vector.shape_cast %41 : vector<8xf32> to vector<8x1xf32>
    %43 = vector.broadcast %42 : vector<8x1xf32> to vector<8x8xf32>
    %44 = arith.subf %40, %43 : vector<8x8xf32>
    %45 = math.exp %44 : vector<8x8xf32>
    %cst_25 = arith.constant dense<0.000000e+00> : vector<8xf32>
    %46 = vector.multi_reduction <add>, %45, %cst_25 [1] : vector<8x8xf32> to vector<8xf32>
    %47 = vector.shape_cast %46 : vector<8xf32> to vector<8x1xf32>
    %48 = tpu.reciprocal %47 {approx = true} : vector<8x1xf32> -> vector<8x1xf32>
    %49 = vector.broadcast %48 : vector<8x1xf32> to vector<8x8xf32>
    %50 = arith.mulf %45, %49 : vector<8x8xf32>
    %51 = vector.broadcast %35 : vector<1x32xf32> to vector<8x32xf32>
    %52 = arith.mulf %18, %51 : vector<8x32xf32>
    %cst_26 = arith.constant dense<0.000000e+00> : vector<8x32xf32>
    %53 = tpu.matmul %50, %52, %cst_26 {dimension_numbers = #tpu.dot_dimension_numbers<[1], [0], [0], [1], [0, 0, 1, 1], [], []>} : vector<8x8xf32>, vector<8x32xf32>, vector<8x32xf32> -> vector<8x32xf32>
    %54 = arith.addf %21, %53 : vector<8x32xf32>
    %c8_i32_27 = arith.constant 8 : i32
    %55 = vector.broadcast %c8_i32_27 : i32 to vector<1x32xi32>
    %56 = arith.cmpi sge, %19, %55 : vector<1x32xi32>
    %c16_i32 = arith.constant 16 : i32
    %57 = vector.broadcast %c16_i32 : i32 to vector<1x32xi32>
    %58 = arith.cmpi slt, %19, %57 : vector<1x32xi32>
    %59 = arith.andi %56, %58 : vector<1x32xi1>
    %60 = arith.extui %59 : vector<1x32xi1> to vector<1x32xi32>
    %61 = arith.sitofp %60 : vector<1x32xi32> to vector<1x32xf32>
    %c8_i32_28 = arith.constant 8 : i32
    %62 = vector.broadcast %c8_i32_28 : i32 to vector<1x32xi32>
    %63 = arith.cmpi sge, %20, %62 : vector<1x32xi32>
    %c16_i32_29 = arith.constant 16 : i32
    %64 = vector.broadcast %c16_i32_29 : i32 to vector<1x32xi32>
    %65 = arith.cmpi slt, %20, %64 : vector<1x32xi32>
    %66 = arith.andi %63, %65 : vector<1x32xi1>
    %67 = arith.extui %66 : vector<1x32xi1> to vector<1x32xi32>
    %68 = arith.sitofp %67 : vector<1x32xi32> to vector<1x32xf32>
    %69 = vector.broadcast %61 : vector<1x32xf32> to vector<8x32xf32>
    %70 = arith.mulf %8, %69 : vector<8x32xf32>
    %cst_30 = arith.constant dense<0.000000e+00> : vector<8x8xf32>
    %71 = tpu.matmul %70, %13, %cst_30 {dimension_numbers = #tpu.dot_dimension_numbers<[1], [1], [0], [0], [0, 0, 1, 0], [], []>} : vector<8x32xf32>, vector<8x32xf32>, vector<8x8xf32> -> vector<8x8xf32>
    %cst_31 = arith.constant 0.353553385 : f32
    %72 = vector.broadcast %cst_31 : f32 to vector<8x8xf32>
    %73 = arith.mulf %71, %72 : vector<8x8xf32>
    %cst_32 = arith.constant dense<0xFF800000> : vector<8xf32>
    %74 = vector.multi_reduction <maximumf>, %73, %cst_32 [1] : vector<8x8xf32> to vector<8xf32>
    %75 = vector.shape_cast %74 : vector<8xf32> to vector<8x1xf32>
    %76 = vector.broadcast %75 : vector<8x1xf32> to vector<8x8xf32>
    %77 = arith.subf %73, %76 : vector<8x8xf32>
    %78 = math.exp %77 : vector<8x8xf32>
    %cst_33 = arith.constant dense<0.000000e+00> : vector<8xf32>
    %79 = vector.multi_reduction <add>, %78, %cst_33 [1] : vector<8x8xf32> to vector<8xf32>
    %80 = vector.shape_cast %79 : vector<8xf32> to vector<8x1xf32>
    %81 = tpu.reciprocal %80 {approx = true} : vector<8x1xf32> -> vector<8x1xf32>
    %82 = vector.broadcast %81 : vector<8x1xf32> to vector<8x8xf32>
    %83 = arith.mulf %78, %82 : vector<8x8xf32>
    %84 = vector.broadcast %68 : vector<1x32xf32> to vector<8x32xf32>
    %85 = arith.mulf %18, %84 : vector<8x32xf32>
    %cst_34 = arith.constant dense<0.000000e+00> : vector<8x32xf32>
    %86 = tpu.matmul %83, %85, %cst_34 {dimension_numbers = #tpu.dot_dimension_numbers<[1], [0], [0], [1], [0, 0, 1, 1], [], []>} : vector<8x8xf32>, vector<8x32xf32>, vector<8x32xf32> -> vector<8x32xf32>
    %87 = arith.addf %54, %86 : vector<8x32xf32>
    %c16_i32_35 = arith.constant 16 : i32
    %88 = vector.broadcast %c16_i32_35 : i32 to vector<1x32xi32>
    %89 = arith.cmpi sge, %19, %88 : vector<1x32xi32>
    %c24_i32 = arith.constant 24 : i32
    %90 = vector.broadcast %c24_i32 : i32 to vector<1x32xi32>
    %91 = arith.cmpi slt, %19, %90 : vector<1x32xi32>
    %92 = arith.andi %89, %91 : vector<1x32xi1>
    %93 = arith.extui %92 : vector<1x32xi1> to vector<1x32xi32>
    %94 = arith.sitofp %93 : vector<1x32xi32> to vector<1x32xf32>
    %c16_i32_36 = arith.constant 16 : i32
    %95 = vector.broadcast %c16_i32_36 : i32 to vector<1x32xi32>
    %96 = arith.cmpi sge, %20, %95 : vector<1x32xi32>
    %c24_i32_37 = arith.constant 24 : i32
    %97 = vector.broadcast %c24_i32_37 : i32 to vector<1x32xi32>
    %98 = arith.cmpi slt, %20, %97 : vector<1x32xi32>
    %99 = arith.andi %96, %98 : vector<1x32xi1>
    %100 = arith.extui %99 : vector<1x32xi1> to vector<1x32xi32>
    %101 = arith.sitofp %100 : vector<1x32xi32> to vector<1x32xf32>
    %102 = vector.broadcast %94 : vector<1x32xf32> to vector<8x32xf32>
    %103 = arith.mulf %8, %102 : vector<8x32xf32>
    %cst_38 = arith.constant dense<0.000000e+00> : vector<8x8xf32>
    %104 = tpu.matmul %103, %13, %cst_38 {dimension_numbers = #tpu.dot_dimension_numbers<[1], [1], [0], [0], [0, 0, 1, 0], [], []>} : vector<8x32xf32>, vector<8x32xf32>, vector<8x8xf32> -> vector<8x8xf32>
    %cst_39 = arith.constant 0.353553385 : f32
    %105 = vector.broadcast %cst_39 : f32 to vector<8x8xf32>
    %106 = arith.mulf %104, %105 : vector<8x8xf32>
    %cst_40 = arith.constant dense<0xFF800000> : vector<8xf32>
    %107 = vector.multi_reduction <maximumf>, %106, %cst_40 [1] : vector<8x8xf32> to vector<8xf32>
    %108 = vector.shape_cast %107 : vector<8xf32> to vector<8x1xf32>
    %109 = vector.broadcast %108 : vector<8x1xf32> to vector<8x8xf32>
    %110 = arith.subf %106, %109 : vector<8x8xf32>
    %111 = math.exp %110 : vector<8x8xf32>
    %cst_41 = arith.constant dense<0.000000e+00> : vector<8xf32>
    %112 = vector.multi_reduction <add>, %111, %cst_41 [1] : vector<8x8xf32> to vector<8xf32>
    %113 = vector.shape_cast %112 : vector<8xf32> to vector<8x1xf32>
    %114 = tpu.reciprocal %113 {approx = true} : vector<8x1xf32> -> vector<8x1xf32>
    %115 = vector.broadcast %114 : vector<8x1xf32> to vector<8x8xf32>
    %116 = arith.mulf %111, %115 : vector<8x8xf32>
    %117 = vector.broadcast %101 : vector<1x32xf32> to vector<8x32xf32>
    %118 = arith.mulf %18, %117 : vector<8x32xf32>
    %cst_42 = arith.constant dense<0.000000e+00> : vector<8x32xf32>
    %119 = tpu.matmul %116, %118, %cst_42 {dimension_numbers = #tpu.dot_dimension_numbers<[1], [0], [0], [1], [0, 0, 1, 1], [], []>} : vector<8x8xf32>, vector<8x32xf32>, vector<8x32xf32> -> vector<8x32xf32>
    %120 = arith.addf %87, %119 : vector<8x32xf32>
    %c24_i32_43 = arith.constant 24 : i32
    %121 = vector.broadcast %c24_i32_43 : i32 to vector<1x32xi32>
    %122 = arith.cmpi sge, %19, %121 : vector<1x32xi32>
    %c32_i32 = arith.constant 32 : i32
    %123 = vector.broadcast %c32_i32 : i32 to vector<1x32xi32>
    %124 = arith.cmpi slt, %19, %123 : vector<1x32xi32>
    %125 = arith.andi %122, %124 : vector<1x32xi1>
    %126 = arith.extui %125 : vector<1x32xi1> to vector<1x32xi32>
    %127 = arith.sitofp %126 : vector<1x32xi32> to vector<1x32xf32>
    %c24_i32_44 = arith.constant 24 : i32
    %128 = vector.broadcast %c24_i32_44 : i32 to vector<1x32xi32>
    %129 = arith.cmpi sge, %20, %128 : vector<1x32xi32>
    %c32_i32_45 = arith.constant 32 : i32
    %130 = vector.broadcast %c32_i32_45 : i32 to vector<1x32xi32>
    %131 = arith.cmpi slt, %20, %130 : vector<1x32xi32>
    %132 = arith.andi %129, %131 : vector<1x32xi1>
    %133 = arith.extui %132 : vector<1x32xi1> to vector<1x32xi32>
    %134 = arith.sitofp %133 : vector<1x32xi32> to vector<1x32xf32>
    %135 = vector.broadcast %127 : vector<1x32xf32> to vector<8x32xf32>
    %136 = arith.mulf %8, %135 : vector<8x32xf32>
    %cst_46 = arith.constant dense<0.000000e+00> : vector<8x8xf32>
    %137 = tpu.matmul %136, %13, %cst_46 {dimension_numbers = #tpu.dot_dimension_numbers<[1], [1], [0], [0], [0, 0, 1, 0], [], []>} : vector<8x32xf32>, vector<8x32xf32>, vector<8x8xf32> -> vector<8x8xf32>
    %cst_47 = arith.constant 0.353553385 : f32
    %138 = vector.broadcast %cst_47 : f32 to vector<8x8xf32>
    %139 = arith.mulf %137, %138 : vector<8x8xf32>
    %cst_48 = arith.constant dense<0xFF800000> : vector<8xf32>
    %140 = vector.multi_reduction <maximumf>, %139, %cst_48 [1] : vector<8x8xf32> to vector<8xf32>
    %141 = vector.shape_cast %140 : vector<8xf32> to vector<8x1xf32>
    %142 = vector.broadcast %141 : vector<8x1xf32> to vector<8x8xf32>
    %143 = arith.subf %139, %142 : vector<8x8xf32>
    %144 = math.exp %143 : vector<8x8xf32>
    %cst_49 = arith.constant dense<0.000000e+00> : vector<8xf32>
    %145 = vector.multi_reduction <add>, %144, %cst_49 [1] : vector<8x8xf32> to vector<8xf32>
    %146 = vector.shape_cast %145 : vector<8xf32> to vector<8x1xf32>
    %147 = tpu.reciprocal %146 {approx = true} : vector<8x1xf32> -> vector<8x1xf32>
    %148 = vector.broadcast %147 : vector<8x1xf32> to vector<8x8xf32>
    %149 = arith.mulf %144, %148 : vector<8x8xf32>
    %150 = vector.broadcast %134 : vector<1x32xf32> to vector<8x32xf32>
    %151 = arith.mulf %18, %150 : vector<8x32xf32>
    %cst_50 = arith.constant dense<0.000000e+00> : vector<8x32xf32>
    %152 = tpu.matmul %149, %151, %cst_50 {dimension_numbers = #tpu.dot_dimension_numbers<[1], [0], [0], [1], [0, 0, 1, 1], [], []>} : vector<8x8xf32>, vector<8x32xf32>, vector<8x32xf32> -> vector<8x32xf32>
    %153 = arith.addf %120, %152 : vector<8x32xf32>
    %c0_51 = arith.constant 0 : index
    %c0_52 = arith.constant 0 : index
    %154 = vector.load %arg9[%c0_51, %c0_52] : memref<32x32xf32, #tpu.memory_space<vmem>>, vector<32x32xf32>
    %cst_53 = arith.constant dense<0.000000e+00> : vector<8x32xf32>
    %155 = tpu.matmul %153, %154, %cst_53 {dimension_numbers = #tpu.dot_dimension_numbers<[1], [0], [0], [1], [0, 0, 1, 1], [], []>} : vector<8x32xf32>, vector<32x32xf32>, vector<8x32xf32> -> vector<8x32xf32>
    %c0_54 = arith.constant 0 : index
    %c0_55 = arith.constant 0 : index
    %156 = vector.load %arg10[%c0_54, %c0_55] : memref<1x32xf32, #tpu.memory_space<vmem>>, vector<1x32xf32>
    %157 = vector.broadcast %156 : vector<1x32xf32> to vector<8x32xf32>
    %158 = arith.addf %155, %157 : vector<8x32xf32>
    %c0_56 = arith.constant 0 : index
    %c0_57 = arith.constant 0 : index
    %159 = vector.load %arg23[%c0_56, %c0_57] : memref<1x32xf32, #tpu.memory_space<vmem>>, vector<1x32xf32>
    %c0_58 = arith.constant 0 : index
    %c0_59 = arith.constant 0 : index
    %160 = vector.load %arg24[%c0_58, %c0_59] : memref<1x32xf32, #tpu.memory_space<vmem>>, vector<1x32xf32>
    %161 = arith.addf %1, %158 : vector<8x32xf32>
    %cst_60 = arith.constant dense<0.000000e+00> : vector<8xf32>
    %162 = vector.multi_reduction <add>, %161, %cst_60 [1] : vector<8x32xf32> to vector<8xf32>
    %163 = vector.shape_cast %162 : vector<8xf32> to vector<8x1xf32>
    %cst_61 = arith.constant 3.200000e+01 : f32
    %164 = vector.broadcast %cst_61 : f32 to vector<8x1xf32>
    %165 = arith.divf %163, %164 : vector<8x1xf32>
    %166 = vector.broadcast %165 : vector<8x1xf32> to vector<8x32xf32>
    %167 = arith.subf %161, %166 : vector<8x32xf32>
    %168 = arith.mulf %167, %167 : vector<8x32xf32>
    %cst_62 = arith.constant dense<0.000000e+00> : vector<8xf32>
    %169 = vector.multi_reduction <add>, %168, %cst_62 [1] : vector<8x32xf32> to vector<8xf32>
    %170 = vector.shape_cast %169 : vector<8xf32> to vector<8x1xf32>
    %cst_63 = arith.constant 3.200000e+01 : f32
    %171 = vector.broadcast %cst_63 : f32 to vector<8x1xf32>
    %172 = arith.divf %170, %171 : vector<8x1xf32>
    %173 = vector.broadcast %165 : vector<8x1xf32> to vector<8x32xf32>
    %174 = arith.subf %161, %173 : vector<8x32xf32>
    %cst_64 = arith.constant 9.99999974E-6 : f32
    %175 = vector.broadcast %cst_64 : f32 to vector<8x1xf32>
    %176 = arith.addf %172, %175 : vector<8x1xf32>
    %177 = math.rsqrt %176 : vector<8x1xf32>
    %178 = vector.broadcast %177 : vector<8x1xf32> to vector<8x32xf32>
    %179 = arith.mulf %174, %178 : vector<8x32xf32>
    %180 = vector.broadcast %159 : vector<1x32xf32> to vector<8x32xf32>
    %181 = arith.mulf %179, %180 : vector<8x32xf32>
    %182 = vector.broadcast %160 : vector<1x32xf32> to vector<8x32xf32>
    %183 = arith.addf %181, %182 : vector<8x32xf32>
    %c0_65 = arith.constant 0 : index
    %c0_66 = arith.constant 0 : index
    %184 = vector.load %arg11[%c0_65, %c0_66] : memref<32x32xf32, #tpu.memory_space<vmem>>, vector<32x32xf32>
    %cst_67 = arith.constant dense<0.000000e+00> : vector<8x32xf32>
    %185 = tpu.matmul %3, %184, %cst_67 {dimension_numbers = #tpu.dot_dimension_numbers<[1], [0], [0], [1], [0, 0, 1, 1], [], []>} : vector<8x32xf32>, vector<32x32xf32>, vector<8x32xf32> -> vector<8x32xf32>
    %c0_68 = arith.constant 0 : index
    %c0_69 = arith.constant 0 : index
    %186 = vector.load %arg12[%c0_68, %c0_69] : memref<1x32xf32, #tpu.memory_space<vmem>>, vector<1x32xf32>
    %187 = vector.broadcast %186 : vector<1x32xf32> to vector<8x32xf32>
    %188 = arith.addf %185, %187 : vector<8x32xf32>
    %c0_70 = arith.constant 0 : index
    %c0_71 = arith.constant 0 : index
    %189 = vector.load %arg13[%c0_70, %c0_71] : memref<32x32xf32, #tpu.memory_space<vmem>>, vector<32x32xf32>
    %cst_72 = arith.constant dense<0.000000e+00> : vector<8x32xf32>
    %190 = tpu.matmul %3, %189, %cst_72 {dimension_numbers = #tpu.dot_dimension_numbers<[1], [0], [0], [1], [0, 0, 1, 1], [], []>} : vector<8x32xf32>, vector<32x32xf32>, vector<8x32xf32> -> vector<8x32xf32>
    %c0_73 = arith.constant 0 : index
    %c0_74 = arith.constant 0 : index
    %191 = vector.load %arg14[%c0_73, %c0_74] : memref<1x32xf32, #tpu.memory_space<vmem>>, vector<1x32xf32>
    %192 = vector.broadcast %191 : vector<1x32xf32> to vector<8x32xf32>
    %193 = arith.addf %190, %192 : vector<8x32xf32>
    %c0_75 = arith.constant 0 : index
    %c0_76 = arith.constant 0 : index
    %194 = vector.load %arg15[%c0_75, %c0_76] : memref<32x32xf32, #tpu.memory_space<vmem>>, vector<32x32xf32>
    %cst_77 = arith.constant dense<0.000000e+00> : vector<8x32xf32>
    %195 = tpu.matmul %183, %194, %cst_77 {dimension_numbers = #tpu.dot_dimension_numbers<[1], [0], [0], [1], [0, 0, 1, 1], [], []>} : vector<8x32xf32>, vector<32x32xf32>, vector<8x32xf32> -> vector<8x32xf32>
    %c0_78 = arith.constant 0 : index
    %c0_79 = arith.constant 0 : index
    %196 = vector.load %arg16[%c0_78, %c0_79] : memref<1x32xf32, #tpu.memory_space<vmem>>, vector<1x32xf32>
    %197 = vector.broadcast %196 : vector<1x32xf32> to vector<8x32xf32>
    %198 = arith.addf %195, %197 : vector<8x32xf32>
    %199 = tpu.iota {dimensions = array<i32: 1>} : vector<1x32xi32>
    %200 = tpu.iota {dimensions = array<i32: 1>} : vector<1x32xi32>
    %cst_80 = arith.constant 0.000000e+00 : f32
    %201 = vector.broadcast %cst_80 : f32 to vector<8x32xf32>
    %c0_i32_81 = arith.constant 0 : i32
    %202 = vector.broadcast %c0_i32_81 : i32 to vector<1x32xi32>
    %203 = arith.cmpi sge, %199, %202 : vector<1x32xi32>
    %c8_i32_82 = arith.constant 8 : i32
    %204 = vector.broadcast %c8_i32_82 : i32 to vector<1x32xi32>
    %205 = arith.cmpi slt, %199, %204 : vector<1x32xi32>
    %206 = arith.andi %203, %205 : vector<1x32xi1>
    %207 = arith.extui %206 : vector<1x32xi1> to vector<1x32xi32>
    %208 = arith.sitofp %207 : vector<1x32xi32> to vector<1x32xf32>
    %c0_i32_83 = arith.constant 0 : i32
    %209 = vector.broadcast %c0_i32_83 : i32 to vector<1x32xi32>
    %210 = arith.cmpi sge, %200, %209 : vector<1x32xi32>
    %c8_i32_84 = arith.constant 8 : i32
    %211 = vector.broadcast %c8_i32_84 : i32 to vector<1x32xi32>
    %212 = arith.cmpi slt, %200, %211 : vector<1x32xi32>
    %213 = arith.andi %210, %212 : vector<1x32xi1>
    %214 = arith.extui %213 : vector<1x32xi1> to vector<1x32xi32>
    %215 = arith.sitofp %214 : vector<1x32xi32> to vector<1x32xf32>
    %216 = vector.broadcast %208 : vector<1x32xf32> to vector<8x32xf32>
    %217 = arith.mulf %188, %216 : vector<8x32xf32>
    %cst_85 = arith.constant dense<0.000000e+00> : vector<8x8xf32>
    %218 = tpu.matmul %217, %193, %cst_85 {dimension_numbers = #tpu.dot_dimension_numbers<[1], [1], [0], [0], [0, 0, 1, 0], [], []>} : vector<8x32xf32>, vector<8x32xf32>, vector<8x8xf32> -> vector<8x8xf32>
    %cst_86 = arith.constant 0.353553385 : f32
    %219 = vector.broadcast %cst_86 : f32 to vector<8x8xf32>
    %220 = arith.mulf %218, %219 : vector<8x8xf32>
    %cst_87 = arith.constant dense<0xFF800000> : vector<8xf32>
    %221 = vector.multi_reduction <maximumf>, %220, %cst_87 [1] : vector<8x8xf32> to vector<8xf32>
    %222 = vector.shape_cast %221 : vector<8xf32> to vector<8x1xf32>
    %223 = vector.broadcast %222 : vector<8x1xf32> to vector<8x8xf32>
    %224 = arith.subf %220, %223 : vector<8x8xf32>
    %225 = math.exp %224 : vector<8x8xf32>
    %cst_88 = arith.constant dense<0.000000e+00> : vector<8xf32>
    %226 = vector.multi_reduction <add>, %225, %cst_88 [1] : vector<8x8xf32> to vector<8xf32>
    %227 = vector.shape_cast %226 : vector<8xf32> to vector<8x1xf32>
    %228 = tpu.reciprocal %227 {approx = true} : vector<8x1xf32> -> vector<8x1xf32>
    %229 = vector.broadcast %228 : vector<8x1xf32> to vector<8x8xf32>
    %230 = arith.mulf %225, %229 : vector<8x8xf32>
    %231 = vector.broadcast %215 : vector<1x32xf32> to vector<8x32xf32>
    %232 = arith.mulf %198, %231 : vector<8x32xf32>
    %cst_89 = arith.constant dense<0.000000e+00> : vector<8x32xf32>
    %233 = tpu.matmul %230, %232, %cst_89 {dimension_numbers = #tpu.dot_dimension_numbers<[1], [0], [0], [1], [0, 0, 1, 1], [], []>} : vector<8x8xf32>, vector<8x32xf32>, vector<8x32xf32> -> vector<8x32xf32>
    %234 = arith.addf %201, %233 : vector<8x32xf32>
    %c8_i32_90 = arith.constant 8 : i32
    %235 = vector.broadcast %c8_i32_90 : i32 to vector<1x32xi32>
    %236 = arith.cmpi sge, %199, %235 : vector<1x32xi32>
    %c16_i32_91 = arith.constant 16 : i32
    %237 = vector.broadcast %c16_i32_91 : i32 to vector<1x32xi32>
    %238 = arith.cmpi slt, %199, %237 : vector<1x32xi32>
    %239 = arith.andi %236, %238 : vector<1x32xi1>
    %240 = arith.extui %239 : vector<1x32xi1> to vector<1x32xi32>
    %241 = arith.sitofp %240 : vector<1x32xi32> to vector<1x32xf32>
    %c8_i32_92 = arith.constant 8 : i32
    %242 = vector.broadcast %c8_i32_92 : i32 to vector<1x32xi32>
    %243 = arith.cmpi sge, %200, %242 : vector<1x32xi32>
    %c16_i32_93 = arith.constant 16 : i32
    %244 = vector.broadcast %c16_i32_93 : i32 to vector<1x32xi32>
    %245 = arith.cmpi slt, %200, %244 : vector<1x32xi32>
    %246 = arith.andi %243, %245 : vector<1x32xi1>
    %247 = arith.extui %246 : vector<1x32xi1> to vector<1x32xi32>
    %248 = arith.sitofp %247 : vector<1x32xi32> to vector<1x32xf32>
    %249 = vector.broadcast %241 : vector<1x32xf32> to vector<8x32xf32>
    %250 = arith.mulf %188, %249 : vector<8x32xf32>
    %cst_94 = arith.constant dense<0.000000e+00> : vector<8x8xf32>
    %251 = tpu.matmul %250, %193, %cst_94 {dimension_numbers = #tpu.dot_dimension_numbers<[1], [1], [0], [0], [0, 0, 1, 0], [], []>} : vector<8x32xf32>, vector<8x32xf32>, vector<8x8xf32> -> vector<8x8xf32>
    %cst_95 = arith.constant 0.353553385 : f32
    %252 = vector.broadcast %cst_95 : f32 to vector<8x8xf32>
    %253 = arith.mulf %251, %252 : vector<8x8xf32>
    %cst_96 = arith.constant dense<0xFF800000> : vector<8xf32>
    %254 = vector.multi_reduction <maximumf>, %253, %cst_96 [1] : vector<8x8xf32> to vector<8xf32>
    %255 = vector.shape_cast %254 : vector<8xf32> to vector<8x1xf32>
    %256 = vector.broadcast %255 : vector<8x1xf32> to vector<8x8xf32>
    %257 = arith.subf %253, %256 : vector<8x8xf32>
    %258 = math.exp %257 : vector<8x8xf32>
    %cst_97 = arith.constant dense<0.000000e+00> : vector<8xf32>
    %259 = vector.multi_reduction <add>, %258, %cst_97 [1] : vector<8x8xf32> to vector<8xf32>
    %260 = vector.shape_cast %259 : vector<8xf32> to vector<8x1xf32>
    %261 = tpu.reciprocal %260 {approx = true} : vector<8x1xf32> -> vector<8x1xf32>
    %262 = vector.broadcast %261 : vector<8x1xf32> to vector<8x8xf32>
    %263 = arith.mulf %258, %262 : vector<8x8xf32>
    %264 = vector.broadcast %248 : vector<1x32xf32> to vector<8x32xf32>
    %265 = arith.mulf %198, %264 : vector<8x32xf32>
    %cst_98 = arith.constant dense<0.000000e+00> : vector<8x32xf32>
    %266 = tpu.matmul %263, %265, %cst_98 {dimension_numbers = #tpu.dot_dimension_numbers<[1], [0], [0], [1], [0, 0, 1, 1], [], []>} : vector<8x8xf32>, vector<8x32xf32>, vector<8x32xf32> -> vector<8x32xf32>
    %267 = arith.addf %234, %266 : vector<8x32xf32>
    %c16_i32_99 = arith.constant 16 : i32
    %268 = vector.broadcast %c16_i32_99 : i32 to vector<1x32xi32>
    %269 = arith.cmpi sge, %199, %268 : vector<1x32xi32>
    %c24_i32_100 = arith.constant 24 : i32
    %270 = vector.broadcast %c24_i32_100 : i32 to vector<1x32xi32>
    %271 = arith.cmpi slt, %199, %270 : vector<1x32xi32>
    %272 = arith.andi %269, %271 : vector<1x32xi1>
    %273 = arith.extui %272 : vector<1x32xi1> to vector<1x32xi32>
    %274 = arith.sitofp %273 : vector<1x32xi32> to vector<1x32xf32>
    %c16_i32_101 = arith.constant 16 : i32
    %275 = vector.broadcast %c16_i32_101 : i32 to vector<1x32xi32>
    %276 = arith.cmpi sge, %200, %275 : vector<1x32xi32>
    %c24_i32_102 = arith.constant 24 : i32
    %277 = vector.broadcast %c24_i32_102 : i32 to vector<1x32xi32>
    %278 = arith.cmpi slt, %200, %277 : vector<1x32xi32>
    %279 = arith.andi %276, %278 : vector<1x32xi1>
    %280 = arith.extui %279 : vector<1x32xi1> to vector<1x32xi32>
    %281 = arith.sitofp %280 : vector<1x32xi32> to vector<1x32xf32>
    %282 = vector.broadcast %274 : vector<1x32xf32> to vector<8x32xf32>
    %283 = arith.mulf %188, %282 : vector<8x32xf32>
    %cst_103 = arith.constant dense<0.000000e+00> : vector<8x8xf32>
    %284 = tpu.matmul %283, %193, %cst_103 {dimension_numbers = #tpu.dot_dimension_numbers<[1], [1], [0], [0], [0, 0, 1, 0], [], []>} : vector<8x32xf32>, vector<8x32xf32>, vector<8x8xf32> -> vector<8x8xf32>
    %cst_104 = arith.constant 0.353553385 : f32
    %285 = vector.broadcast %cst_104 : f32 to vector<8x8xf32>
    %286 = arith.mulf %284, %285 : vector<8x8xf32>
    %cst_105 = arith.constant dense<0xFF800000> : vector<8xf32>
    %287 = vector.multi_reduction <maximumf>, %286, %cst_105 [1] : vector<8x8xf32> to vector<8xf32>
    %288 = vector.shape_cast %287 : vector<8xf32> to vector<8x1xf32>
    %289 = vector.broadcast %288 : vector<8x1xf32> to vector<8x8xf32>
    %290 = arith.subf %286, %289 : vector<8x8xf32>
    %291 = math.exp %290 : vector<8x8xf32>
    %cst_106 = arith.constant dense<0.000000e+00> : vector<8xf32>
    %292 = vector.multi_reduction <add>, %291, %cst_106 [1] : vector<8x8xf32> to vector<8xf32>
    %293 = vector.shape_cast %292 : vector<8xf32> to vector<8x1xf32>
    %294 = tpu.reciprocal %293 {approx = true} : vector<8x1xf32> -> vector<8x1xf32>
    %295 = vector.broadcast %294 : vector<8x1xf32> to vector<8x8xf32>
    %296 = arith.mulf %291, %295 : vector<8x8xf32>
    %297 = vector.broadcast %281 : vector<1x32xf32> to vector<8x32xf32>
    %298 = arith.mulf %198, %297 : vector<8x32xf32>
    %cst_107 = arith.constant dense<0.000000e+00> : vector<8x32xf32>
    %299 = tpu.matmul %296, %298, %cst_107 {dimension_numbers = #tpu.dot_dimension_numbers<[1], [0], [0], [1], [0, 0, 1, 1], [], []>} : vector<8x8xf32>, vector<8x32xf32>, vector<8x32xf32> -> vector<8x32xf32>
    %300 = arith.addf %267, %299 : vector<8x32xf32>
    %c24_i32_108 = arith.constant 24 : i32
    %301 = vector.broadcast %c24_i32_108 : i32 to vector<1x32xi32>
    %302 = arith.cmpi sge, %199, %301 : vector<1x32xi32>
    %c32_i32_109 = arith.constant 32 : i32
    %303 = vector.broadcast %c32_i32_109 : i32 to vector<1x32xi32>
    %304 = arith.cmpi slt, %199, %303 : vector<1x32xi32>
    %305 = arith.andi %302, %304 : vector<1x32xi1>
    %306 = arith.extui %305 : vector<1x32xi1> to vector<1x32xi32>
    %307 = arith.sitofp %306 : vector<1x32xi32> to vector<1x32xf32>
    %c24_i32_110 = arith.constant 24 : i32
    %308 = vector.broadcast %c24_i32_110 : i32 to vector<1x32xi32>
    %309 = arith.cmpi sge, %200, %308 : vector<1x32xi32>
    %c32_i32_111 = arith.constant 32 : i32
    %310 = vector.broadcast %c32_i32_111 : i32 to vector<1x32xi32>
    %311 = arith.cmpi slt, %200, %310 : vector<1x32xi32>
    %312 = arith.andi %309, %311 : vector<1x32xi1>
    %313 = arith.extui %312 : vector<1x32xi1> to vector<1x32xi32>
    %314 = arith.sitofp %313 : vector<1x32xi32> to vector<1x32xf32>
    %315 = vector.broadcast %307 : vector<1x32xf32> to vector<8x32xf32>
    %316 = arith.mulf %188, %315 : vector<8x32xf32>
    %cst_112 = arith.constant dense<0.000000e+00> : vector<8x8xf32>
    %317 = tpu.matmul %316, %193, %cst_112 {dimension_numbers = #tpu.dot_dimension_numbers<[1], [1], [0], [0], [0, 0, 1, 0], [], []>} : vector<8x32xf32>, vector<8x32xf32>, vector<8x8xf32> -> vector<8x8xf32>
    %cst_113 = arith.constant 0.353553385 : f32
    %318 = vector.broadcast %cst_113 : f32 to vector<8x8xf32>
    %319 = arith.mulf %317, %318 : vector<8x8xf32>
    %cst_114 = arith.constant dense<0xFF800000> : vector<8xf32>
    %320 = vector.multi_reduction <maximumf>, %319, %cst_114 [1] : vector<8x8xf32> to vector<8xf32>
    %321 = vector.shape_cast %320 : vector<8xf32> to vector<8x1xf32>
    %322 = vector.broadcast %321 : vector<8x1xf32> to vector<8x8xf32>
    %323 = arith.subf %319, %322 : vector<8x8xf32>
    %324 = math.exp %323 : vector<8x8xf32>
    %cst_115 = arith.constant dense<0.000000e+00> : vector<8xf32>
    %325 = vector.multi_reduction <add>, %324, %cst_115 [1] : vector<8x8xf32> to vector<8xf32>
    %326 = vector.shape_cast %325 : vector<8xf32> to vector<8x1xf32>
    %327 = tpu.reciprocal %326 {approx = true} : vector<8x1xf32> -> vector<8x1xf32>
    %328 = vector.broadcast %327 : vector<8x1xf32> to vector<8x8xf32>
    %329 = arith.mulf %324, %328 : vector<8x8xf32>
    %330 = vector.broadcast %314 : vector<1x32xf32> to vector<8x32xf32>
    %331 = arith.mulf %198, %330 : vector<8x32xf32>
    %cst_116 = arith.constant dense<0.000000e+00> : vector<8x32xf32>
    %332 = tpu.matmul %329, %331, %cst_116 {dimension_numbers = #tpu.dot_dimension_numbers<[1], [0], [0], [1], [0, 0, 1, 1], [], []>} : vector<8x8xf32>, vector<8x32xf32>, vector<8x32xf32> -> vector<8x32xf32>
    %333 = arith.addf %300, %332 : vector<8x32xf32>
    %c0_117 = arith.constant 0 : index
    %c0_118 = arith.constant 0 : index
    %334 = vector.load %arg17[%c0_117, %c0_118] : memref<32x32xf32, #tpu.memory_space<vmem>>, vector<32x32xf32>
    %cst_119 = arith.constant dense<0.000000e+00> : vector<8x32xf32>
    %335 = tpu.matmul %333, %334, %cst_119 {dimension_numbers = #tpu.dot_dimension_numbers<[1], [0], [0], [1], [0, 0, 1, 1], [], []>} : vector<8x32xf32>, vector<32x32xf32>, vector<8x32xf32> -> vector<8x32xf32>
    %c0_120 = arith.constant 0 : index
    %c0_121 = arith.constant 0 : index
    %336 = vector.load %arg18[%c0_120, %c0_121] : memref<1x32xf32, #tpu.memory_space<vmem>>, vector<1x32xf32>
    %337 = vector.broadcast %336 : vector<1x32xf32> to vector<8x32xf32>
    %338 = arith.addf %335, %337 : vector<8x32xf32>
    %c0_122 = arith.constant 0 : index
    %c0_123 = arith.constant 0 : index
    %339 = vector.load %arg25[%c0_122, %c0_123] : memref<1x32xf32, #tpu.memory_space<vmem>>, vector<1x32xf32>
    %c0_124 = arith.constant 0 : index
    %c0_125 = arith.constant 0 : index
    %340 = vector.load %arg26[%c0_124, %c0_125] : memref<1x32xf32, #tpu.memory_space<vmem>>, vector<1x32xf32>
    %341 = arith.addf %183, %338 : vector<8x32xf32>
    %cst_126 = arith.constant dense<0.000000e+00> : vector<8xf32>
    %342 = vector.multi_reduction <add>, %341, %cst_126 [1] : vector<8x32xf32> to vector<8xf32>
    %343 = vector.shape_cast %342 : vector<8xf32> to vector<8x1xf32>
    %cst_127 = arith.constant 3.200000e+01 : f32
    %344 = vector.broadcast %cst_127 : f32 to vector<8x1xf32>
    %345 = arith.divf %343, %344 : vector<8x1xf32>
    %346 = vector.broadcast %345 : vector<8x1xf32> to vector<8x32xf32>
    %347 = arith.subf %341, %346 : vector<8x32xf32>
    %348 = arith.mulf %347, %347 : vector<8x32xf32>
    %cst_128 = arith.constant dense<0.000000e+00> : vector<8xf32>
    %349 = vector.multi_reduction <add>, %348, %cst_128 [1] : vector<8x32xf32> to vector<8xf32>
    %350 = vector.shape_cast %349 : vector<8xf32> to vector<8x1xf32>
    %cst_129 = arith.constant 3.200000e+01 : f32
    %351 = vector.broadcast %cst_129 : f32 to vector<8x1xf32>
    %352 = arith.divf %350, %351 : vector<8x1xf32>
    %353 = vector.broadcast %345 : vector<8x1xf32> to vector<8x32xf32>
    %354 = arith.subf %341, %353 : vector<8x32xf32>
    %cst_130 = arith.constant 9.99999974E-6 : f32
    %355 = vector.broadcast %cst_130 : f32 to vector<8x1xf32>
    %356 = arith.addf %352, %355 : vector<8x1xf32>
    %357 = math.rsqrt %356 : vector<8x1xf32>
    %358 = vector.broadcast %357 : vector<8x1xf32> to vector<8x32xf32>
    %359 = arith.mulf %354, %358 : vector<8x32xf32>
    %360 = vector.broadcast %339 : vector<1x32xf32> to vector<8x32xf32>
    %361 = arith.mulf %359, %360 : vector<8x32xf32>
    %362 = vector.broadcast %340 : vector<1x32xf32> to vector<8x32xf32>
    %363 = arith.addf %361, %362 : vector<8x32xf32>
    %c0_131 = arith.constant 0 : index
    %c0_132 = arith.constant 0 : index
    %364 = vector.load %arg19[%c0_131, %c0_132] : memref<32x64xf32, #tpu.memory_space<vmem>>, vector<32x64xf32>
    %cst_133 = arith.constant dense<0.000000e+00> : vector<8x64xf32>
    %365 = tpu.matmul %363, %364, %cst_133 {dimension_numbers = #tpu.dot_dimension_numbers<[1], [0], [0], [1], [0, 0, 1, 1], [], []>} : vector<8x32xf32>, vector<32x64xf32>, vector<8x64xf32> -> vector<8x64xf32>
    %c0_134 = arith.constant 0 : index
    %c0_135 = arith.constant 0 : index
    %366 = vector.load %arg20[%c0_134, %c0_135] : memref<1x64xf32, #tpu.memory_space<vmem>>, vector<1x64xf32>
    %367 = vector.broadcast %366 : vector<1x64xf32> to vector<8x64xf32>
    %368 = arith.addf %365, %367 : vector<8x64xf32>
    %cst_136 = arith.constant 0.000000e+00 : f32
    %369 = vector.broadcast %cst_136 : f32 to vector<8x64xf32>
    %370 = arith.maximumf %368, %369 : vector<8x64xf32>
    %c0_137 = arith.constant 0 : index
    %c0_138 = arith.constant 0 : index
    %371 = vector.load %arg21[%c0_137, %c0_138] : memref<64x32xf32, #tpu.memory_space<vmem>>, vector<64x32xf32>
    %cst_139 = arith.constant dense<0.000000e+00> : vector<8x32xf32>
    %372 = tpu.matmul %370, %371, %cst_139 {dimension_numbers = #tpu.dot_dimension_numbers<[1], [0], [0], [1], [0, 0, 1, 1], [], []>} : vector<8x64xf32>, vector<64x32xf32>, vector<8x32xf32> -> vector<8x32xf32>
    %c0_140 = arith.constant 0 : index
    %c0_141 = arith.constant 0 : index
    %373 = vector.load %arg22[%c0_140, %c0_141] : memref<1x32xf32, #tpu.memory_space<vmem>>, vector<1x32xf32>
    %374 = vector.broadcast %373 : vector<1x32xf32> to vector<8x32xf32>
    %375 = arith.addf %372, %374 : vector<8x32xf32>
    %c0_142 = arith.constant 0 : index
    %c0_143 = arith.constant 0 : index
    %376 = vector.load %arg27[%c0_142, %c0_143] : memref<1x32xf32, #tpu.memory_space<vmem>>, vector<1x32xf32>
    %c0_144 = arith.constant 0 : index
    %c0_145 = arith.constant 0 : index
    %377 = vector.load %arg28[%c0_144, %c0_145] : memref<1x32xf32, #tpu.memory_space<vmem>>, vector<1x32xf32>
    %378 = arith.addf %363, %375 : vector<8x32xf32>
    %cst_146 = arith.constant dense<0.000000e+00> : vector<8xf32>
    %379 = vector.multi_reduction <add>, %378, %cst_146 [1] : vector<8x32xf32> to vector<8xf32>
    %380 = vector.shape_cast %379 : vector<8xf32> to vector<8x1xf32>
    %cst_147 = arith.constant 3.200000e+01 : f32
    %381 = vector.broadcast %cst_147 : f32 to vector<8x1xf32>
    %382 = arith.divf %380, %381 : vector<8x1xf32>
    %383 = vector.broadcast %382 : vector<8x1xf32> to vector<8x32xf32>
    %384 = arith.subf %378, %383 : vector<8x32xf32>
    %385 = arith.mulf %384, %384 : vector<8x32xf32>
    %cst_148 = arith.constant dense<0.000000e+00> : vector<8xf32>
    %386 = vector.multi_reduction <add>, %385, %cst_148 [1] : vector<8x32xf32> to vector<8xf32>
    %387 = vector.shape_cast %386 : vector<8xf32> to vector<8x1xf32>
    %cst_149 = arith.constant 3.200000e+01 : f32
    %388 = vector.broadcast %cst_149 : f32 to vector<8x1xf32>
    %389 = arith.divf %387, %388 : vector<8x1xf32>
    %390 = vector.broadcast %382 : vector<8x1xf32> to vector<8x32xf32>
    %391 = arith.subf %378, %390 : vector<8x32xf32>
    %cst_150 = arith.constant 9.99999974E-6 : f32
    %392 = vector.broadcast %cst_150 : f32 to vector<8x1xf32>
    %393 = arith.addf %389, %392 : vector<8x1xf32>
    %394 = math.rsqrt %393 : vector<8x1xf32>
    %395 = vector.broadcast %394 : vector<8x1xf32> to vector<8x32xf32>
    %396 = arith.mulf %391, %395 : vector<8x32xf32>
    %397 = vector.broadcast %376 : vector<1x32xf32> to vector<8x32xf32>
    %398 = arith.mulf %396, %397 : vector<8x32xf32>
    %399 = vector.broadcast %377 : vector<1x32xf32> to vector<8x32xf32>
    %400 = arith.addf %398, %399 : vector<8x32xf32>
    %c0_151 = arith.constant 0 : index
    %c0_152 = arith.constant 0 : index
    %c0_153 = arith.constant 0 : index
    %401 = vector.load %arg29[%c0_151, %c0_152, %c0_153] : memref<1x8x32xf32, #tpu.memory_space<vmem>>, vector<1x8x32xf32>
    %402 = vector.shape_cast %401 : vector<1x8x32xf32> to vector<8x32xf32>
    %403 = vector.shape_cast %400 : vector<8x32xf32> to vector<1x8x32xf32>
    tpu.vector_store %arg29[%c0_151, %c0_152, %c0_153], %403 {strides = array<i32>} : memref<1x8x32xf32, #tpu.memory_space<vmem>>, vector<1x8x32xf32>,
    return
  }
  func.func @transform_0(%arg0: i32) -> (i32, i32, i32) {
    %c0_i32 = arith.constant 0 : i32
    %c0_i32_0 = arith.constant 0 : i32
    %c0_i32_1 = arith.constant 0 : i32
    return %arg0, %c0_i32, %c0_i32_0 : i32, i32, i32
  }
  func.func @transform_1(%arg0: i32) -> (i32, i32, i32) {
    %c0_i32 = arith.constant 0 : i32
    %c0_i32_0 = arith.constant 0 : i32
    %c0_i32_1 = arith.constant 0 : i32
    return %arg0, %c0_i32, %c0_i32_0 : i32, i32, i32
  }
  func.func @transform_2(%arg0: i32) -> (i32, i32) {
    %c0_i32 = arith.constant 0 : i32
    %c0_i32_0 = arith.constant 0 : i32
    %c0_i32_1 = arith.constant 0 : i32
    return %c0_i32, %c0_i32_0 : i32, i32
  }
  func.func @transform_3(%arg0: i32) -> (i32, i32) {
    %c0_i32 = arith.constant 0 : i32
    %c0_i32_0 = arith.constant 0 : i32
    %c0_i32_1 = arith.constant 0 : i32
    return %c0_i32, %c0_i32_0 : i32, i32
  }
  func.func @transform_4(%arg0: i32) -> (i32, i32) {
    %c0_i32 = arith.constant 0 : i32
    %c0_i32_0 = arith.constant 0 : i32
    %c0_i32_1 = arith.constant 0 : i32
    return %c0_i32, %c0_i32_0 : i32, i32
  }
  func.func @transform_5(%arg0: i32) -> (i32, i32) {
    %c0_i32 = arith.constant 0 : i32
    %c0_i32_0 = arith.constant 0 : i32
    %c0_i32_1 = arith.constant 0 : i32
    return %c0_i32, %c0_i32_0 : i32, i32
  }
  func.func @transform_6(%arg0: i32) -> (i32, i32) {
    %c0_i32 = arith.constant 0 : i32
    %c0_i32_0 = arith.constant 0 : i32
    %c0_i32_1 = arith.constant 0 : i32
    return %c0_i32, %c0_i32_0 : i32, i32
  }
  func.func @transform_7(%arg0: i32) -> (i32, i32) {
    %c0_i32 = arith.constant 0 : i32
    %c0_i32_0 = arith.constant 0 : i32
    %c0_i32_1 = arith.constant 0 : i32
    return %c0_i32, %c0_i32_0 : i32, i32
  }
  func.func @transform_8(%arg0: i32) -> (i32, i32) {
    %c0_i32 = arith.constant 0 : i32
    %c0_i32_0 = arith.constant 0 : i32
    %c0_i32_1 = arith.constant 0 : i32
    return %c0_i32, %c0_i32_0 : i32, i32
  }
  func.func @transform_9(%arg0: i32) -> (i32, i32) {
    %c0_i32 = arith.constant 0 : i32
    %c0_i32_0 = arith.constant 0 : i32
    %c0_i32_1 = arith.constant 0 : i32
    return %c0_i32, %c0_i32_0 : i32, i32
  }
  func.func @transform_10(%arg0: i32) -> (i32, i32) {
    %c0_i32 = arith.constant 0 : i32
    %c0_i32_0 = arith.constant 0 : i32
    %c0_i32_1 = arith.constant 0 : i32
    return %c0_i32, %c0_i32_0 : i32, i32
  }
  func.func @transform_11(%arg0: i32) -> (i32, i32) {
    %c0_i32 = arith.constant 0 : i32
    %c0_i32_0 = arith.constant 0 : i32
    %c0_i32_1 = arith.constant 0 : i32
    return %c0_i32, %c0_i32_0 : i32, i32
  }
  func.func @transform_12(%arg0: i32) -> (i32, i32) {
    %c0_i32 = arith.constant 0 : i32
    %c0_i32_0 = arith.constant 0 : i32
    %c0_i32_1 = arith.constant 0 : i32
    return %c0_i32, %c0_i32_0 : i32, i32
  }
  func.func @transform_13(%arg0: i32) -> (i32, i32) {
    %c0_i32 = arith.constant 0 : i32
    %c0_i32_0 = arith.constant 0 : i32
    %c0_i32_1 = arith.constant 0 : i32
    return %c0_i32, %c0_i32_0 : i32, i32
  }
  func.func @transform_14(%arg0: i32) -> (i32, i32) {
    %c0_i32 = arith.constant 0 : i32
    %c0_i32_0 = arith.constant 0 : i32
    %c0_i32_1 = arith.constant 0 : i32
    return %c0_i32, %c0_i32_0 : i32, i32
  }
  func.func @transform_15(%arg0: i32) -> (i32, i32) {
    %c0_i32 = arith.constant 0 : i32
    %c0_i32_0 = arith.constant 0 : i32
    %c0_i32_1 = arith.constant 0 : i32
    return %c0_i32, %c0_i32_0 : i32, i32
  }
  func.func @transform_16(%arg0: i32) -> (i32, i32) {
    %c0_i32 = arith.constant 0 : i32
    %c0_i32_0 = arith.constant 0 : i32
    %c0_i32_1 = arith.constant 0 : i32
    return %c0_i32, %c0_i32_0 : i32, i32
  }
  func.func @transform_17(%arg0: i32) -> (i32, i32) {
    %c0_i32 = arith.constant 0 : i32
    %c0_i32_0 = arith.constant 0 : i32
    %c0_i32_1 = arith.constant 0 : i32
    return %c0_i32, %c0_i32_0 : i32, i32
  }
  func.func @transform_18(%arg0: i32) -> (i32, i32) {
    %c0_i32 = arith.constant 0 : i32
    %c0_i32_0 = arith.constant 0 : i32
    %c0_i32_1 = arith.constant 0 : i32
    return %c0_i32, %c0_i32_0 : i32, i32
  }
  func.func @transform_19(%arg0: i32) -> (i32, i32) {
    %c0_i32 = arith.constant 0 : i32
    %c0_i32_0 = arith.constant 0 : i32
    %c0_i32_1 = arith.constant 0 : i32
    return %c0_i32, %c0_i32_0 : i32, i32
  }
  func.func @transform_20(%arg0: i32) -> (i32, i32) {
    %c0_i32 = arith.constant 0 : i32
    %c0_i32_0 = arith.constant 0 : i32
    %c0_i32_1 = arith.constant 0 : i32
    return %c0_i32, %c0_i32_0 : i32, i32
  }
  func.func @transform_21(%arg0: i32) -> (i32, i32) {
    %c0_i32 = arith.constant 0 : i32
    %c0_i32_0 = arith.constant 0 : i32
    %c0_i32_1 = arith.constant 0 : i32
    return %c0_i32, %c0_i32_0 : i32, i32
  }
  func.func @transform_22(%arg0: i32) -> (i32, i32) {
    %c0_i32 = arith.constant 0 : i32
    %c0_i32_0 = arith.constant 0 : i32
    %c0_i32_1 = arith.constant 0 : i32
    return %c0_i32, %c0_i32_0 : i32, i32
  }
  func.func @transform_23(%arg0: i32) -> (i32, i32) {
    %c0_i32 = arith.constant 0 : i32
    %c0_i32_0 = arith.constant 0 : i32
    %c0_i32_1 = arith.constant 0 : i32
    return %c0_i32, %c0_i32_0 : i32, i32
  }
  func.func @transform_24(%arg0: i32) -> (i32, i32) {
    %c0_i32 = arith.constant 0 : i32
    %c0_i32_0 = arith.constant 0 : i32
    %c0_i32_1 = arith.constant 0 : i32
    return %c0_i32, %c0_i32_0 : i32, i32
  }
  func.func @transform_25(%arg0: i32) -> (i32, i32) {
    %c0_i32 = arith.constant 0 : i32
    %c0_i32_0 = arith.constant 0 : i32
    %c0_i32_1 = arith.constant 0 : i32
    return %c0_i32, %c0_i32_0 : i32, i32
  }
  func.func @transform_26(%arg0: i32) -> (i32, i32) {
    %c0_i32 = arith.constant 0 : i32
    %c0_i32_0 = arith.constant 0 : i32
    %c0_i32_1 = arith.constant 0 : i32
    return %c0_i32, %c0_i32_0 : i32, i32
  }
  func.func @transform_27(%arg0: i32) -> (i32, i32) {
    %c0_i32 = arith.constant 0 : i32
    %c0_i32_0 = arith.constant 0 : i32
    %c0_i32_1 = arith.constant 0 : i32
    return %c0_i32, %c0_i32_0 : i32, i32
  }
  func.func @transform_28(%arg0: i32) -> (i32, i32, i32) {
    %c0_i32 = arith.constant 0 : i32
    %c0_i32_0 = arith.constant 0 : i32
    %c0_i32_1 = arith.constant 0 : i32
    return %arg0, %c0_i32, %c0_i32_0 : i32, i32, i32
  }
}

module attributes {stable_mosaic.version = 11 : i64} {
  func.func @_decoder_layer_kernel(%arg0: i32, %arg1: memref<1x8x32xf32, #tpu.memory_space<vmem>>, %arg2: memref<1x8x32xf32, #tpu.memory_space<vmem>>, %arg3: memref<32x32xf32, #tpu.memory_space<vmem>>, %arg4: memref<1x32xf32, #tpu.memory_space<vmem>>, %arg5: memref<32x32xf32, #tpu.memory_space<vmem>>, %arg6: memref<1x32xf32, #tpu.memory_space<vmem>>, %arg7: memref<32x32xf32, #tpu.memory_space<vmem>>, %arg8: memref<1x32xf32, #tpu.memory_space<vmem>>, %arg9: memref<32x32xf32, #tpu.memory_space<vmem>>, %arg10: memref<1x32xf32, #tpu.memory_space<vmem>>, %arg11: memref<32x32xf32, #tpu.memory_space<vmem>>, %arg12: memref<1x32xf32, #tpu.memory_space<vmem>>, %arg13: memref<32x32xf32, #tpu.memory_space<vmem>>, %arg14: memref<1x32xf32, #tpu.memory_space<vmem>>, %arg15: memref<32x32xf32, #tpu.memory_space<vmem>>, %arg16: memref<1x32xf32, #tpu.memory_space<vmem>>, %arg17: memref<32x32xf32, #tpu.memory_space<vmem>>, %arg18: memref<1x32xf32, #tpu.memory_space<vmem>>, %arg19: memref<32x64xf32, #tpu.memory_space<vmem>>, %arg20: memref<1x64xf32, #tpu.memory_space<vmem>>, %arg21: memref<64x32xf32, #tpu.memory_space<vmem>>, %arg22: memref<1x32xf32, #tpu.memory_space<vmem>>, %arg23: memref<1x32xf32, #tpu.memory_space<vmem>>, %arg24: memref<1x32xf32, #tpu.memory_space<vmem>>, %arg25: memref<1x32xf32, #tpu.memory_space<vmem>>, %arg26: memref<1x32xf32, #tpu.memory_space<vmem>>, %arg27: memref<1x32xf32, #tpu.memory_space<vmem>>, %arg28: memref<1x32xf32, #tpu.memory_space<vmem>>, %arg29: memref<1x8x32xf32, #tpu.memory_space<vmem>>) attributes {dimension_semantics = [#tpu.dimension_semantics<parallel>], iteration_bounds = array<i64: 2>, scalar_prefetch = 0 : i64, scratch_operands = 0 : i64, tpu.core_type = #tpu.core_type<tc>, window_params = [{transform_indices = @transform_0, window_bounds = array<i64: 1, 8, 32>}, {transform_indices = @transform_1, window_bounds = array<i64: 1, 8, 32>}, {pipeline_mode = #tpu.pipeline_mode<synchronous>, transform_indices = @transform_2, window_bounds = array<i64: 32, 32>}, {pipeline_mode = #tpu.pipeline_mode<synchronous>, transform_indices = @transform_3, window_bounds = array<i64: 1, 32>}, {pipeline_mode = #tpu.pipeline_mode<synchronous>, transform_indices = @transform_4, window_bounds = array<i64: 32, 32>}, {pipeline_mode = #tpu.pipeline_mode<synchronous>, transform_indices = @transform_5, window_bounds = array<i64: 1, 32>}, {pipeline_mode = #tpu.pipeline_mode<synchronous>, transform_indices = @transform_6, window_bounds = array<i64: 32, 32>}, {pipeline_mode = #tpu.pipeline_mode<synchronous>, transform_indices = @transform_7, window_bounds = array<i64: 1, 32>}, {pipeline_mode = #tpu.pipeline_mode<synchronous>, transform_indices = @transform_8, window_bounds = array<i64: 32, 32>}, {pipeline_mode = #tpu.pipeline_mode<synchronous>, transform_indices = @transform_9, window_bounds = array<i64: 1, 32>}, {pipeline_mode = #tpu.pipeline_mode<synchronous>, transform_indices = @transform_10, window_bounds = array<i64: 32, 32>}, {pipeline_mode = #tpu.pipeline_mode<synchronous>, transform_indices = @transform_11, window_bounds = array<i64: 1, 32>}, {pipeline_mode = #tpu.pipeline_mode<synchronous>, transform_indices = @transform_12, window_bounds = array<i64: 32, 32>}, {pipeline_mode = #tpu.pipeline_mode<synchronous>, transform_indices = @transform_13, window_bounds = array<i64: 1, 32>}, {pipeline_mode = #tpu.pipeline_mode<synchronous>, transform_indices = @transform_14, window_bounds = array<i64: 32, 32>}, {pipeline_mode = #tpu.pipeline_mode<synchronous>, transform_indices = @transform_15, window_bounds = array<i64: 1, 32>}, {pipeline_mode = #tpu.pipeline_mode<synchronous>, transform_indices = @transform_16, window_bounds = array<i64: 32, 32>}, {pipeline_mode = #tpu.pipeline_mode<synchronous>, transform_indices = @transform_17, window_bounds = array<i64: 1, 32>}, {pipeline_mode = #tpu.pipeline_mode<synchronous>, transform_indices = @transform_18, window_bounds = array<i64: 32, 64>}, {pipeline_mode = #tpu.pipeline_mode<synchronous>, transform_indices = @transform_19, window_bounds = array<i64: 1, 64>}, {pipeline_mode = #tpu.pipeline_mode<synchronous>, transform_indices = @transform_20, window_bounds = array<i64: 64, 32>}, {pipeline_mode = #tpu.pipeline_mode<synchronous>, transform_indices = @transform_21, window_bounds = array<i64: 1, 32>}, {pipeline_mode = #tpu.pipeline_mode<synchronous>, transform_indices = @transform_22, window_bounds = array<i64: 1, 32>}, {pipeline_mode = #tpu.pipeline_mode<synchronous>, transform_indices = @transform_23, window_bounds = array<i64: 1, 32>}, {pipeline_mode = #tpu.pipeline_mode<synchronous>, transform_indices = @transform_24, window_bounds = array<i64: 1, 32>}, {pipeline_mode = #tpu.pipeline_mode<synchronous>, transform_indices = @transform_25, window_bounds = array<i64: 1, 32>}, {pipeline_mode = #tpu.pipeline_mode<synchronous>, transform_indices = @transform_26, window_bounds = array<i64: 1, 32>}, {pipeline_mode = #tpu.pipeline_mode<synchronous>, transform_indices = @transform_27, window_bounds = array<i64: 1, 32>}, {transform_indices = @transform_28, window_bounds = array<i64: 1, 8, 32>}]} {
    %c0 = arith.constant 0 : index
    %c0_0 = arith.constant 0 : index
    %c0_1 = arith.constant 0 : index
    %0 = vector.load %arg1[%c0, %c0_0, %c0_1] : memref<1x8x32xf32, #tpu.memory_space<vmem>>, vector<1x8x32xf32>
    %1 = vector.shape_cast %0 : vector<1x8x32xf32> to vector<8x32xf32>
    %c0_2 = arith.constant 0 : index
    %c0_3 = arith.constant 0 : index
    %c0_4 = arith.constant 0 : index
    %2 = vector.load %arg2[%c0_2, %c0_3, %c0_4] : memref<1x8x32xf32, #tpu.memory_space<vmem>>, vector<1x8x32xf32>
    %3 = vector.shape_cast %2 : vector<1x8x32xf32> to vector<8x32xf32>
    %c0_5 = arith.constant 0 : index
    %c0_6 = arith.constant 0 : index
    %4 = vector.load %arg3[%c0_5, %c0_6] : memref<32x32xf32, #tpu.memory_space<vmem>>, vector<32x32xf32>
    %cst = arith.constant dense<0.000000e+00> : vector<8x32xf32>
    %5 = tpu.matmul %1, %4, %cst {dimension_numbers = #tpu.dot_dimension_numbers<[1], [0], [0], [1], [0, 0, 1, 1], [], []>} : vector<8x32xf32>, vector<32x32xf32>, vector<8x32xf32> -> vector<8x32xf32>
    %c0_7 = arith.constant 0 : index
    %c0_8 = arith.constant 0 : index
    %6 = vector.load %arg4[%c0_7, %c0_8] : memref<1x32xf32, #tpu.memory_space<vmem>>, vector<1x32xf32>
    %7 = vector.broadcast %6 : vector<1x32xf32> to vector<8x32xf32>
    %8 = arith.addf %5, %7 : vector<8x32xf32>
    %c0_9 = arith.constant 0 : index
    %c0_10 = arith.constant 0 : index
    %9 = vector.load %arg5[%c0_9, %c0_10] : memref<32x32xf32, #tpu.memory_space<vmem>>, vector<32x32xf32>
    %cst_11 = arith.constant dense<0.000000e+00> : vector<8x32xf32>
    %10 = tpu.matmul %1, %9, %cst_11 {dimension_numbers = #tpu.dot_dimension_numbers<[1], [0], [0], [1], [0, 0, 1, 1], [], []>} : vector<8x32xf32>, vector<32x32xf32>, vector<8x32xf32> -> vector<8x32xf32>
    %c0_12 = arith.constant 0 : index
    %c0_13 = arith.constant 0 : index
    %11 = vector.load %arg6[%c0_12, %c0_13] : memref<1x32xf32, #tpu.memory_space<vmem>>, vector<1x32xf32>
    %12 = vector.broadcast %11 : vector<1x32xf32> to vector<8x32xf32>
    %13 = arith.addf %10, %12 : vector<8x32xf32>
    %c0_14 = arith.constant 0 : index
    %c0_15 = arith.constant 0 : index
    %14 = vector.load %arg7[%c0_14, %c0_15] : memref<32x32xf32, #tpu.memory_space<vmem>>, vector<32x32xf32>
    %cst_16 = arith.constant dense<0.000000e+00> : vector<8x32xf32>
    %15 = tpu.matmul %1, %14, %cst_16 {dimension_numbers = #tpu.dot_dimension_numbers<[1], [0], [0], [1], [0, 0, 1, 1], [], []>} : vector<8x32xf32>, vector<32x32xf32>, vector<8x32xf32> -> vector<8x32xf32>
    %c0_17 = arith.constant 0 : index
    %c0_18 = arith.constant 0 : index
    %16 = vector.load %arg8[%c0_17, %c0_18] : memref<1x32xf32, #tpu.memory_space<vmem>>, vector<1x32xf32>
    %17 = vector.broadcast %16 : vector<1x32xf32> to vector<8x32xf32>
    %18 = arith.addf %15, %17 : vector<8x32xf32>
    %19 = tpu.iota {dimensions = array<i32: 1>} : vector<1x32xi32>
    %20 = tpu.iota {dimensions = array<i32: 1>} : vector<1x32xi32>
    %cst_19 = arith.constant 0.000000e+00 : f32
    %21 = vector.broadcast %cst_19 : f32 to vector<8x32xf32>
    %c0_i32 = arith.constant 0 : i32
    %22 = vector.broadcast %c0_i32 : i32 to vector<1x32xi32>
    %23 = arith.cmpi sge, %19, %22 : vector<1x32xi32>
    %c8_i32 = arith.constant 8 : i32
    %24 = vector.broadcast %c8_i32 : i32 to vector<1x32xi32>
    %25 = arith.cmpi slt, %19, %24 : vector<1x32xi32>
    %26 = arith.andi %23, %25 : vector<1x32xi1>
    %27 = arith.extui %26 : vector<1x32xi1> to vector<1x32xi32>
    %28 = arith.sitofp %27 : vector<1x32xi32> to vector<1x32xf32>
    %c0_i32_20 = arith.constant 0 : i32
    %29 = vector.broadcast %c0_i32_20 : i32 to vector<1x32xi32>
    %30 = arith.cmpi sge, %20, %29 : vector<1x32xi32>
    %c8_i32_21 = arith.constant 8 : i32
    %31 = vector.broadcast %c8_i32_21 : i32 to vector<1x32xi32>
    %32 = arith.cmpi slt, %20, %31 : vector<1x32xi32>
    %33 = arith.andi %30, %32 : vector<1x32xi1>
    %34 = arith.extui %33 : vector<1x32xi1> to vector<1x32xi32>
    %35 = arith.sitofp %34 : vector<1x32xi32> to vector<1x32xf32>
    %36 = vector.broadcast %28 : vector<1x32xf32> to vector<8x32xf32>
    %37 = arith.mulf %8, %36 : vector<8x32xf32>
    %cst_22 = arith.constant dense<0.000000e+00> : vector<8x8xf32>
    %38 = tpu.matmul %37, %13, %cst_22 {dimension_numbers = #tpu.dot_dimension_numbers<[1], [1], [0], [0], [0, 0, 1, 0], [], []>} : vector<8x32xf32>, vector<8x32xf32>, vector<8x8xf32> -> vector<8x8xf32>
    %cst_23 = arith.constant 0.353553385 : f32
    %39 = vector.broadcast %cst_23 : f32 to vector<8x8xf32>
    %40 = arith.mulf %38, %39 : vector<8x8xf32>
    %cst_24 = arith.constant dense<0xFF800000> : vector<8xf32>
    %41 = vector.multi_reduction <maximumf>, %40, %cst_24 [1] : vector<8x8xf32> to vector<8xf32>
    %42 = vector.shape_cast %41 : vector<8xf32> to vector<8x1xf32>
    %43 = vector.broadcast %42 : vector<8x1xf32> to vector<8x8xf32>
    %44 = arith.subf %40, %43 : vector<8x8xf32>
    %45 = math.exp %44 : vector<8x8xf32>
    %cst_25 = arith.constant dense<0.000000e+00> : vector<8xf32>
    %46 = vector.multi_reduction <add>, %45, %cst_25 [1] : vector<8x8xf32> to vector<8xf32>
    %47 = vector.shape_cast %46 : vector<8xf32> to vector<8x1xf32>
    %48 = tpu.reciprocal %47 {approx = true} : vector<8x1xf32> -> vector<8x1xf32>
    %49 = vector.broadcast %48 : vector<8x1xf32> to vector<8x8xf32>
    %50 = arith.mulf %45, %49 : vector<8x8xf32>
    %51 = vector.broadcast %35 : vector<1x32xf32> to vector<8x32xf32>
    %52 = arith.mulf %18, %51 : vector<8x32xf32>
    %cst_26 = arith.constant dense<0.000000e+00> : vector<8x32xf32>
    %53 = tpu.matmul %50, %52, %cst_26 {dimension_numbers = #tpu.dot_dimension_numbers<[1], [0], [0], [1], [0, 0, 1, 1], [], []>} : vector<8x8xf32>, vector<8x32xf32>, vector<8x32xf32> -> vector<8x32xf32>
    %54 = arith.addf %21, %53 : vector<8x32xf32>
    %c8_i32_27 = arith.constant 8 : i32
    %55 = vector.broadcast %c8_i32_27 : i32 to vector<1x32xi32>
    %56 = arith.cmpi sge, %19, %55 : vector<1x32xi32>
    %c16_i32 = arith.constant 16 : i32
    %57 = vector.broadcast %c16_i32 : i32 to vector<1x32xi32>
    %58 = arith.cmpi slt, %19, %57 : vector<1x32xi32>
    %59 = arith.andi %56, %58 : vector<1x32xi1>
    %60 = arith.extui %59 : vector<1x32xi1> to vector<1x32xi32>
    %61 = arith.sitofp %60 : vector<1x32xi32> to vector<1x32xf32>
    %c8_i32_28 = arith.constant 8 : i32
    %62 = vector.broadcast %c8_i32_28 : i32 to vector<1x32xi32>
    %63 = arith.cmpi sge, %20, %62 : vector<1x32xi32>
    %c16_i32_29 = arith.constant 16 : i32
    %64 = vector.broadcast %c16_i32_29 : i32 to vector<1x32xi32>
    %65 = arith.cmpi slt, %20, %64 : vector<1x32xi32>
    %66 = arith.andi %63, %65 : vector<1x32xi1>
    %67 = arith.extui %66 : vector<1x32xi1> to vector<1x32xi32>
    %68 = arith.sitofp %67 : vector<1x32xi32> to vector<1x32xf32>
    %69 = vector.broadcast %61 : vector<1x32xf32> to vector<8x32xf32>
    %70 = arith.mulf %8, %69 : vector<8x32xf32>
    %cst_30 = arith.constant dense<0.000000e+00> : vector<8x8xf32>
    %71 = tpu.matmul %70, %13, %cst_30 {dimension_numbers = #tpu.dot_dimension_numbers<[1], [1], [0], [0], [0, 0, 1, 0], [], []>} : vector<8x32xf32>, vector<8x32xf32>, vector<8x8xf32> -> vector<8x8xf32>
    %cst_31 = arith.constant 0.353553385 : f32
    %72 = vector.broadcast %cst_31 : f32 to vector<8x8xf32>
    %73 = arith.mulf %71, %72 : vector<8x8xf32>
    %cst_32 = arith.constant dense<0xFF800000> : vector<8xf32>
    %74 = vector.multi_reduction <maximumf>, %73, %cst_32 [1] : vector<8x8xf32> to vector<8xf32>
    %75 = vector.shape_cast %74 : vector<8xf32> to vector<8x1xf32>
    %76 = vector.broadcast %75 : vector<8x1xf32> to vector<8x8xf32>
    %77 = arith.subf %73, %76 : vector<8x8xf32>
    %78 = math.exp %77 : vector<8x8xf32>
    %cst_33 = arith.constant dense<0.000000e+00> : vector<8xf32>
    %79 = vector.multi_reduction <add>, %78, %cst_33 [1] : vector<8x8xf32> to vector<8xf32>
    %80 = vector.shape_cast %79 : vector<8xf32> to vector<8x1xf32>
    %81 = tpu.reciprocal %80 {approx = true} : vector<8x1xf32> -> vector<8x1xf32>
    %82 = vector.broadcast %81 : vector<8x1xf32> to vector<8x8xf32>
    %83 = arith.mulf %78, %82 : vector<8x8xf32>
    %84 = vector.broadcast %68 : vector<1x32xf32> to vector<8x32xf32>
    %85 = arith.mulf %18, %84 : vector<8x32xf32>
    %cst_34 = arith.constant dense<0.000000e+00> : vector<8x32xf32>
    %86 = tpu.matmul %83, %85, %cst_34 {dimension_numbers = #tpu.dot_dimension_numbers<[1], [0], [0], [1], [0, 0, 1, 1], [], []>} : vector<8x8xf32>, vector<8x32xf32>, vector<8x32xf32> -> vector<8x32xf32>
    %87 = arith.addf %54, %86 : vector<8x32xf32>
    %c16_i32_35 = arith.constant 16 : i32
    %88 = vector.broadcast %c16_i32_35 : i32 to vector<1x32xi32>
    %89 = arith.cmpi sge, %19, %88 : vector<1x32xi32>
    %c24_i32 = arith.constant 24 : i32
    %90 = vector.broadcast %c24_i32 : i32 to vector<1x32xi32>
    %91 = arith.cmpi slt, %19, %90 : vector<1x32xi32>
    %92 = arith.andi %89, %91 : vector<1x32xi1>
    %93 = arith.extui %92 : vector<1x32xi1> to vector<1x32xi32>
    %94 = arith.sitofp %93 : vector<1x32xi32> to vector<1x32xf32>
    %c16_i32_36 = arith.constant 16 : i32
    %95 = vector.broadcast %c16_i32_36 : i32 to vector<1x32xi32>
    %96 = arith.cmpi sge, %20, %95 : vector<1x32xi32>
    %c24_i32_37 = arith.constant 24 : i32
    %97 = vector.broadcast %c24_i32_37 : i32 to vector<1x32xi32>
    %98 = arith.cmpi slt, %20, %97 : vector<1x32xi32>
    %99 = arith.andi %96, %98 : vector<1x32xi1>
    %100 = arith.extui %99 : vector<1x32xi1> to vector<1x32xi32>
    %101 = arith.sitofp %100 : vector<1x32xi32> to vector<1x32xf32>
    %102 = vector.broadcast %94 : vector<1x32xf32> to vector<8x32xf32>
    %103 = arith.mulf %8, %102 : vector<8x32xf32>
    %cst_38 = arith.constant dense<0.000000e+00> : vector<8x8xf32>
    %104 = tpu.matmul %103, %13, %cst_38 {dimension_numbers = #tpu.dot_dimension_numbers<[1], [1], [0], [0], [0, 0, 1, 0], [], []>} : vector<8x32xf32>, vector<8x32xf32>, vector<8x8xf32> -> vector<8x8xf32>
    %cst_39 = arith.constant 0.353553385 : f32
    %105 = vector.broadcast %cst_39 : f32 to vector<8x8xf32>
    %106 = arith.mulf %104, %105 : vector<8x8xf32>
    %cst_40 = arith.constant dense<0xFF800000> : vector<8xf32>
    %107 = vector.multi_reduction <maximumf>, %106, %cst_40 [1] : vector<8x8xf32> to vector<8xf32>
    %108 = vector.shape_cast %107 : vector<8xf32> to vector<8x1xf32>
    %109 = vector.broadcast %108 : vector<8x1xf32> to vector<8x8xf32>
    %110 = arith.subf %106, %109 : vector<8x8xf32>
    %111 = math.exp %110 : vector<8x8xf32>
    %cst_41 = arith.constant dense<0.000000e+00> : vector<8xf32>
    %112 = vector.multi_reduction <add>, %111, %cst_41 [1] : vector<8x8xf32> to vector<8xf32>
    %113 = vector.shape_cast %112 : vector<8xf32> to vector<8x1xf32>
    %114 = tpu.reciprocal %113 {approx = true} : vector<8x1xf32> -> vector<8x1xf32>
    %115 = vector.broadcast %114 : vector<8x1xf32> to vector<8x8xf32>
    %116 = arith.mulf %111, %115 : vector<8x8xf32>
    %117 = vector.broadcast %101 : vector<1x32xf32> to vector<8x32xf32>
    %118 = arith.mulf %18, %117 : vector<8x32xf32>
    %cst_42 = arith.constant dense<0.000000e+00> : vector<8x32xf32>
    %119 = tpu.matmul %116, %118, %cst_42 {dimension_numbers = #tpu.dot_dimension_numbers<[1], [0], [0], [1], [0, 0, 1, 1], [], []>} : vector<8x8xf32>, vector<8x32xf32>, vector<8x32xf32> -> vector<8x32xf32>
    %120 = arith.addf %87, %119 : vector<8x32xf32>
    %c24_i32_43 = arith.constant 24 : i32
    %121 = vector.broadcast %c24_i32_43 : i32 to vector<1x32xi32>
    %122 = arith.cmpi sge, %19, %121 : vector<1x32xi32>
    %c32_i32 = arith.constant 32 : i32
    %123 = vector.broadcast %c32_i32 : i32 to vector<1x32xi32>
    %124 = arith.cmpi slt, %19, %123 : vector<1x32xi32>
    %125 = arith.andi %122, %124 : vector<1x32xi1>
    %126 = arith.extui %125 : vector<1x32xi1> to vector<1x32xi32>
    %127 = arith.sitofp %126 : vector<1x32xi32> to vector<1x32xf32>
    %c24_i32_44 = arith.constant 24 : i32
    %128 = vector.broadcast %c24_i32_44 : i32 to vector<1x32xi32>
    %129 = arith.cmpi sge, %20, %128 : vector<1x32xi32>
    %c32_i32_45 = arith.constant 32 : i32
    %130 = vector.broadcast %c32_i32_45 : i32 to vector<1x32xi32>
    %131 = arith.cmpi slt, %20, %130 : vector<1x32xi32>
    %132 = arith.andi %129, %131 : vector<1x32xi1>
    %133 = arith.extui %132 : vector<1x32xi1> to vector<1x32xi32>
    %134 = arith.sitofp %133 : vector<1x32xi32> to vector<1x32xf32>
    %135 = vector.broadcast %127 : vector<1x32xf32> to vector<8x32xf32>
    %136 = arith.mulf %8, %135 : vector<8x32xf32>
    %cst_46 = arith.constant dense<0.000000e+00> : vector<8x8xf32>
    %137 = tpu.matmul %136, %13, %cst_46 {dimension_numbers = #tpu.dot_dimension_numbers<[1], [1], [0], [0], [0, 0, 1, 0], [], []>} : vector<8x32xf32>, vector<8x32xf32>, vector<8x8xf32> -> vector<8x8xf32>
    %cst_47 = arith.constant 0.353553385 : f32
    %138 = vector.broadcast %cst_47 : f32 to vector<8x8xf32>
    %139 = arith.mulf %137, %138 : vector<8x8xf32>
    %cst_48 = arith.constant dense<0xFF800000> : vector<8xf32>
    %140 = vector.multi_reduction <maximumf>, %139, %cst_48 [1] : vector<8x8xf32> to vector<8xf32>
    %141 = vector.shape_cast %140 : vector<8xf32> to vector<8x1xf32>
    %142 = vector.broadcast %141 : vector<8x1xf32> to vector<8x8xf32>
    %143 = arith.subf %139, %142 : vector<8x8xf32>
    %144 = math.exp %143 : vector<8x8xf32>
    %cst_49 = arith.constant dense<0.000000e+00> : vector<8xf32>
    %145 = vector.multi_reduction <add>, %144, %cst_49 [1] : vector<8x8xf32> to vector<8xf32>
    %146 = vector.shape_cast %145 : vector<8xf32> to vector<8x1xf32>
    %147 = tpu.reciprocal %146 {approx = true} : vector<8x1xf32> -> vector<8x1xf32>
    %148 = vector.broadcast %147 : vector<8x1xf32> to vector<8x8xf32>
    %149 = arith.mulf %144, %148 : vector<8x8xf32>
    %150 = vector.broadcast %134 : vector<1x32xf32> to vector<8x32xf32>
    %151 = arith.mulf %18, %150 : vector<8x32xf32>
    %cst_50 = arith.constant dense<0.000000e+00> : vector<8x32xf32>
    %152 = tpu.matmul %149, %151, %cst_50 {dimension_numbers = #tpu.dot_dimension_numbers<[1], [0], [0], [1], [0, 0, 1, 1], [], []>} : vector<8x8xf32>, vector<8x32xf32>, vector<8x32xf32> -> vector<8x32xf32>
    %153 = arith.addf %120, %152 : vector<8x32xf32>
    %c0_51 = arith.constant 0 : index
    %c0_52 = arith.constant 0 : index
    %154 = vector.load %arg9[%c0_51, %c0_52] : memref<32x32xf32, #tpu.memory_space<vmem>>, vector<32x32xf32>
    %cst_53 = arith.constant dense<0.000000e+00> : vector<8x32xf32>
    %155 = tpu.matmul %153, %154, %cst_53 {dimension_numbers = #tpu.dot_dimension_numbers<[1], [0], [0], [1], [0, 0, 1, 1], [], []>} : vector<8x32xf32>, vector<32x32xf32>, vector<8x32xf32> -> vector<8x32xf32>
    %c0_54 = arith.constant 0 : index
    %c0_55 = arith.constant 0 : index
    %156 = vector.load %arg10[%c0_54, %c0_55] : memref<1x32xf32, #tpu.memory_space<vmem>>, vector<1x32xf32>
    %157 = vector.broadcast %156 : vector<1x32xf32> to vector<8x32xf32>
    %158 = arith.addf %155, %157 : vector<8x32xf32>
    %c0_56 = arith.constant 0 : index
    %c0_57 = arith.constant 0 : index
    %159 = vector.load %arg23[%c0_56, %c0_57] : memref<1x32xf32, #tpu.memory_space<vmem>>, vector<1x32xf32>
    %c0_58 = arith.constant 0 : index
    %c0_59 = arith.constant 0 : index
    %160 = vector.load %arg24[%c0_58, %c0_59] : memref<1x32xf32, #tpu.memory_space<vmem>>, vector<1x32xf32>
    %161 = arith.addf %1, %158 : vector<8x32xf32>
    %cst_60 = arith.constant dense<0.000000e+00> : vector<8xf32>
    %162 = vector.multi_reduction <add>, %161, %cst_60 [1] : vector<8x32xf32> to vector<8xf32>
    %163 = vector.shape_cast %162 : vector<8xf32> to vector<8x1xf32>
    %cst_61 = arith.constant 3.200000e+01 : f32
    %164 = vector.broadcast %cst_61 : f32 to vector<8x1xf32>
    %165 = arith.divf %163, %164 : vector<8x1xf32>
    %166 = vector.broadcast %165 : vector<8x1xf32> to vector<8x32xf32>
    %167 = arith.subf %161, %166 : vector<8x32xf32>
    %168 = arith.mulf %167, %167 : vector<8x32xf32>
    %cst_62 = arith.constant dense<0.000000e+00> : vector<8xf32>
    %169 = vector.multi_reduction <add>, %168, %cst_62 [1] : vector<8x32xf32> to vector<8xf32>
    %170 = vector.shape_cast %169 : vector<8xf32> to vector<8x1xf32>
    %cst_63 = arith.constant 3.200000e+01 : f32
    %171 = vector.broadcast %cst_63 : f32 to vector<8x1xf32>
    %172 = arith.divf %170, %171 : vector<8x1xf32>
    %173 = vector.broadcast %165 : vector<8x1xf32> to vector<8x32xf32>
    %174 = arith.subf %161, %173 : vector<8x32xf32>
    %cst_64 = arith.constant 9.99999974E-6 : f32
    %175 = vector.broadcast %cst_64 : f32 to vector<8x1xf32>
    %176 = arith.addf %172, %175 : vector<8x1xf32>
    %177 = math.rsqrt %176 : vector<8x1xf32>
    %178 = vector.broadcast %177 : vector<8x1xf32> to vector<8x32xf32>
    %179 = arith.mulf %174, %178 : vector<8x32xf32>
    %180 = vector.broadcast %159 : vector<1x32xf32> to vector<8x32xf32>
    %181 = arith.mulf %179, %180 : vector<8x32xf32>
    %182 = vector.broadcast %160 : vector<1x32xf32> to vector<8x32xf32>
    %183 = arith.addf %181, %182 : vector<8x32xf32>
    %c0_65 = arith.constant 0 : index
    %c0_66 = arith.constant 0 : index
    %184 = vector.load %arg11[%c0_65, %c0_66] : memref<32x32xf32, #tpu.memory_space<vmem>>, vector<32x32xf32>
    %cst_67 = arith.constant dense<0.000000e+00> : vector<8x32xf32>
    %185 = tpu.matmul %3, %184, %cst_67 {dimension_numbers = #tpu.dot_dimension_numbers<[1], [0], [0], [1], [0, 0, 1, 1], [], []>} : vector<8x32xf32>, vector<32x32xf32>, vector<8x32xf32> -> vector<8x32xf32>
    %c0_68 = arith.constant 0 : index
    %c0_69 = arith.constant 0 : index
    %186 = vector.load %arg12[%c0_68, %c0_69] : memref<1x32xf32, #tpu.memory_space<vmem>>, vector<1x32xf32>
    %187 = vector.broadcast %186 : vector<1x32xf32> to vector<8x32xf32>
    %188 = arith.addf %185, %187 : vector<8x32xf32>
    %c0_70 = arith.constant 0 : index
    %c0_71 = arith.constant 0 : index
    %189 = vector.load %arg13[%c0_70, %c0_71] : memref<32x32xf32, #tpu.memory_space<vmem>>, vector<32x32xf32>
    %cst_72 = arith.constant dense<0.000000e+00> : vector<8x32xf32>
    %190 = tpu.matmul %3, %189, %cst_72 {dimension_numbers = #tpu.dot_dimension_numbers<[1], [0], [0], [1], [0, 0, 1, 1], [], []>} : vector<8x32xf32>, vector<32x32xf32>, vector<8x32xf32> -> vector<8x32xf32>
    %c0_73 = arith.constant 0 : index
    %c0_74 = arith.constant 0 : index
    %191 = vector.load %arg14[%c0_73, %c0_74] : memref<1x32xf32, #tpu.memory_space<vmem>>, vector<1x32xf32>
    %192 = vector.broadcast %191 : vector<1x32xf32> to vector<8x32xf32>
    %193 = arith.addf %190, %192 : vector<8x32xf32>
    %c0_75 = arith.constant 0 : index
    %c0_76 = arith.constant 0 : index
    %194 = vector.load %arg15[%c0_75, %c0_76] : memref<32x32xf32, #tpu.memory_space<vmem>>, vector<32x32xf32>
    %cst_77 = arith.constant dense<0.000000e+00> : vector<8x32xf32>
    %195 = tpu.matmul %183, %194, %cst_77 {dimension_numbers = #tpu.dot_dimension_numbers<[1], [0], [0], [1], [0, 0, 1, 1], [], []>} : vector<8x32xf32>, vector<32x32xf32>, vector<8x32xf32> -> vector<8x32xf32>
    %c0_78 = arith.constant 0 : index
    %c0_79 = arith.constant 0 : index
    %196 = vector.load %arg16[%c0_78, %c0_79] : memref<1x32xf32, #tpu.memory_space<vmem>>, vector<1x32xf32>
    %197 = vector.broadcast %196 : vector<1x32xf32> to vector<8x32xf32>
    %198 = arith.addf %195, %197 : vector<8x32xf32>
    %199 = tpu.iota {dimensions = array<i32: 1>} : vector<1x32xi32>
    %200 = tpu.iota {dimensions = array<i32: 1>} : vector<1x32xi32>
    %cst_80 = arith.constant 0.000000e+00 : f32
    %201 = vector.broadcast %cst_80 : f32 to vector<8x32xf32>
    %c0_i32_81 = arith.constant 0 : i32
    %202 = vector.broadcast %c0_i32_81 : i32 to vector<1x32xi32>
    %203 = arith.cmpi sge, %199, %202 : vector<1x32xi32>
    %c8_i32_82 = arith.constant 8 : i32
    %204 = vector.broadcast %c8_i32_82 : i32 to vector<1x32xi32>
    %205 = arith.cmpi slt, %199, %204 : vector<1x32xi32>
    %206 = arith.andi %203, %205 : vector<1x32xi1>
    %207 = arith.extui %206 : vector<1x32xi1> to vector<1x32xi32>
    %208 = arith.sitofp %207 : vector<1x32xi32> to vector<1x32xf32>
    %c0_i32_83 = arith.constant 0 : i32
    %209 = vector.broadcast %c0_i32_83 : i32 to vector<1x32xi32>
    %210 = arith.cmpi sge, %200, %209 : vector<1x32xi32>
    %c8_i32_84 = arith.constant 8 : i32
    %211 = vector.broadcast %c8_i32_84 : i32 to vector<1x32xi32>
    %212 = arith.cmpi slt, %200, %211 : vector<1x32xi32>
    %213 = arith.andi %210, %212 : vector<1x32xi1>
    %214 = arith.extui %213 : vector<1x32xi1> to vector<1x32xi32>
    %215 = arith.sitofp %214 : vector<1x32xi32> to vector<1x32xf32>
    %216 = vector.broadcast %208 : vector<1x32xf32> to vector<8x32xf32>
    %217 = arith.mulf %188, %216 : vector<8x32xf32>
    %cst_85 = arith.constant dense<0.000000e+00> : vector<8x8xf32>
    %218 = tpu.matmul %217, %193, %cst_85 {dimension_numbers = #tpu.dot_dimension_numbers<[1], [1], [0], [0], [0, 0, 1, 0], [], []>} : vector<8x32xf32>, vector<8x32xf32>, vector<8x8xf32> -> vector<8x8xf32>
    %cst_86 = arith.constant 0.353553385 : f32
    %219 = vector.broadcast %cst_86 : f32 to vector<8x8xf32>
    %220 = arith.mulf %218, %219 : vector<8x8xf32>
    %cst_87 = arith.constant dense<0xFF800000> : vector<8xf32>
    %221 = vector.multi_reduction <maximumf>, %220, %cst_87 [1] : vector<8x8xf32> to vector<8xf32>
    %222 = vector.shape_cast %221 : vector<8xf32> to vector<8x1xf32>
    %223 = vector.broadcast %222 : vector<8x1xf32> to vector<8x8xf32>
    %224 = arith.subf %220, %223 : vector<8x8xf32>
    %225 = math.exp %224 : vector<8x8xf32>
    %cst_88 = arith.constant dense<0.000000e+00> : vector<8xf32>
    %226 = vector.multi_reduction <add>, %225, %cst_88 [1] : vector<8x8xf32> to vector<8xf32>
    %227 = vector.shape_cast %226 : vector<8xf32> to vector<8x1xf32>
    %228 = tpu.reciprocal %227 {approx = true} : vector<8x1xf32> -> vector<8x1xf32>
    %229 = vector.broadcast %228 : vector<8x1xf32> to vector<8x8xf32>
    %230 = arith.mulf %225, %229 : vector<8x8xf32>
    %231 = vector.broadcast %215 : vector<1x32xf32> to vector<8x32xf32>
    %232 = arith.mulf %198, %231 : vector<8x32xf32>
    %cst_89 = arith.constant dense<0.000000e+00> : vector<8x32xf32>
    %233 = tpu.matmul %230, %232, %cst_89 {dimension_numbers = #tpu.dot_dimension_numbers<[1], [0], [0], [1], [0, 0, 1, 1], [], []>} : vector<8x8xf32>, vector<8x32xf32>, vector<8x32xf32> -> vector<8x32xf32>
    %234 = arith.addf %201, %233 : vector<8x32xf32>
    %c8_i32_90 = arith.constant 8 : i32
    %235 = vector.broadcast %c8_i32_90 : i32 to vector<1x32xi32>
    %236 = arith.cmpi sge, %199, %235 : vector<1x32xi32>
    %c16_i32_91 = arith.constant 16 : i32
    %237 = vector.broadcast %c16_i32_91 : i32 to vector<1x32xi32>
    %238 = arith.cmpi slt, %199, %237 : vector<1x32xi32>
    %239 = arith.andi %236, %238 : vector<1x32xi1>
    %240 = arith.extui %239 : vector<1x32xi1> to vector<1x32xi32>
    %241 = arith.sitofp %240 : vector<1x32xi32> to vector<1x32xf32>
    %c8_i32_92 = arith.constant 8 : i32
    %242 = vector.broadcast %c8_i32_92 : i32 to vector<1x32xi32>
    %243 = arith.cmpi sge, %200, %242 : vector<1x32xi32>
    %c16_i32_93 = arith.constant 16 : i32
    %244 = vector.broadcast %c16_i32_93 : i32 to vector<1x32xi32>
    %245 = arith.cmpi slt, %200, %244 : vector<1x32xi32>
    %246 = arith.andi %243, %245 : vector<1x32xi1>
    %247 = arith.extui %246 : vector<1x32xi1> to vector<1x32xi32>
    %248 = arith.sitofp %247 : vector<1x32xi32> to vector<1x32xf32>
    %249 = vector.broadcast %241 : vector<1x32xf32> to vector<8x32xf32>
    %250 = arith.mulf %188, %249 : vector<8x32xf32>
    %cst_94 = arith.constant dense<0.000000e+00> : vector<8x8xf32>
    %251 = tpu.matmul %250, %193, %cst_94 {dimension_numbers = #tpu.dot_dimension_numbers<[1], [1], [0], [0], [0, 0, 1, 0], [], []>} : vector<8x32xf32>, vector<8x32xf32>, vector<8x8xf32> -> vector<8x8xf32>
    %cst_95 = arith.constant 0.353553385 : f32
    %252 = vector.broadcast %cst_95 : f32 to vector<8x8xf32>
    %253 = arith.mulf %251, %252 : vector<8x8xf32>
    %cst_96 = arith.constant dense<0xFF800000> : vector<8xf32>
    %254 = vector.multi_reduction <maximumf>, %253, %cst_96 [1] : vector<8x8xf32> to vector<8xf32>
    %255 = vector.shape_cast %254 : vector<8xf32> to vector<8x1xf32>
    %256 = vector.broadcast %255 : vector<8x1xf32> to vector<8x8xf32>
    %257 = arith.subf %253, %256 : vector<8x8xf32>
    %258 = math.exp %257 : vector<8x8xf32>
    %cst_97 = arith.constant dense<0.000000e+00> : vector<8xf32>
    %259 = vector.multi_reduction <add>, %258, %cst_97 [1] : vector<8x8xf32> to vector<8xf32>
    %260 = vector.shape_cast %259 : vector<8xf32> to vector<8x1xf32>
    %261 = tpu.reciprocal %260 {approx = true} : vector<8x1xf32> -> vector<8x1xf32>
    %262 = vector.broadcast %261 : vector<8x1xf32> to vector<8x8xf32>
    %263 = arith.mulf %258, %262 : vector<8x8xf32>
    %264 = vector.broadcast %248 : vector<1x32xf32> to vector<8x32xf32>
    %265 = arith.mulf %198, %264 : vector<8x32xf32>
    %cst_98 = arith.constant dense<0.000000e+00> : vector<8x32xf32>
    %266 = tpu.matmul %263, %265, %cst_98 {dimension_numbers = #tpu.dot_dimension_numbers<[1], [0], [0], [1], [0, 0, 1, 1], [], []>} : vector<8x8xf32>, vector<8x32xf32>, vector<8x32xf32> -> vector<8x32xf32>
    %267 = arith.addf %234, %266 : vector<8x32xf32>
    %c16_i32_99 = arith.constant 16 : i32
    %268 = vector.broadcast %c16_i32_99 : i32 to vector<1x32xi32>
    %269 = arith.cmpi sge, %199, %268 : vector<1x32xi32>
    %c24_i32_100 = arith.constant 24 : i32
    %270 = vector.broadcast %c24_i32_100 : i32 to vector<1x32xi32>
    %271 = arith.cmpi slt, %199, %270 : vector<1x32xi32>
    %272 = arith.andi %269, %271 : vector<1x32xi1>
    %273 = arith.extui %272 : vector<1x32xi1> to vector<1x32xi32>
    %274 = arith.sitofp %273 : vector<1x32xi32> to vector<1x32xf32>
    %c16_i32_101 = arith.constant 16 : i32
    %275 = vector.broadcast %c16_i32_101 : i32 to vector<1x32xi32>
    %276 = arith.cmpi sge, %200, %275 : vector<1x32xi32>
    %c24_i32_102 = arith.constant 24 : i32
    %277 = vector.broadcast %c24_i32_102 : i32 to vector<1x32xi32>
    %278 = arith.cmpi slt, %200, %277 : vector<1x32xi32>
    %279 = arith.andi %276, %278 : vector<1x32xi1>
    %280 = arith.extui %279 : vector<1x32xi1> to vector<1x32xi32>
    %281 = arith.sitofp %280 : vector<1x32xi32> to vector<1x32xf32>
    %282 = vector.broadcast %274 : vector<1x32xf32> to vector<8x32xf32>
    %283 = arith.mulf %188, %282 : vector<8x32xf32>
    %cst_103 = arith.constant dense<0.000000e+00> : vector<8x8xf32>
    %284 = tpu.matmul %283, %193, %cst_103 {dimension_numbers = #tpu.dot_dimension_numbers<[1], [1], [0], [0], [0, 0, 1, 0], [], []>} : vector<8x32xf32>, vector<8x32xf32>, vector<8x8xf32> -> vector<8x8xf32>
    %cst_104 = arith.constant 0.353553385 : f32
    %285 = vector.broadcast %cst_104 : f32 to vector<8x8xf32>
    %286 = arith.mulf %284, %285 : vector<8x8xf32>
    %cst_105 = arith.constant dense<0xFF800000> : vector<8xf32>
    %287 = vector.multi_reduction <maximumf>, %286, %cst_105 [1] : vector<8x8xf32> to vector<8xf32>
    %288 = vector.shape_cast %287 : vector<8xf32> to vector<8x1xf32>
    %289 = vector.broadcast %288 : vector<8x1xf32> to vector<8x8xf32>
    %290 = arith.subf %286, %289 : vector<8x8xf32>
    %291 = math.exp %290 : vector<8x8xf32>
    %cst_106 = arith.constant dense<0.000000e+00> : vector<8xf32>
    %292 = vector.multi_reduction <add>, %291, %cst_106 [1] : vector<8x8xf32> to vector<8xf32>
    %293 = vector.shape_cast %292 : vector<8xf32> to vector<8x1xf32>
    %294 = tpu.reciprocal %293 {approx = true} : vector<8x1xf32> -> vector<8x1xf32>
    %295 = vector.broadcast %294 : vector<8x1xf32> to vector<8x8xf32>
    %296 = arith.mulf %291, %295 : vector<8x8xf32>
    %297 = vector.broadcast %281 : vector<1x32xf32> to vector<8x32xf32>
    %298 = arith.mulf %198, %297 : vector<8x32xf32>
    %cst_107 = arith.constant dense<0.000000e+00> : vector<8x32xf32>
    %299 = tpu.matmul %296, %298, %cst_107 {dimension_numbers = #tpu.dot_dimension_numbers<[1], [0], [0], [1], [0, 0, 1, 1], [], []>} : vector<8x8xf32>, vector<8x32xf32>, vector<8x32xf32> -> vector<8x32xf32>
    %300 = arith.addf %267, %299 : vector<8x32xf32>
    %c24_i32_108 = arith.constant 24 : i32
    %301 = vector.broadcast %c24_i32_108 : i32 to vector<1x32xi32>
    %302 = arith.cmpi sge, %199, %301 : vector<1x32xi32>
    %c32_i32_109 = arith.constant 32 : i32
    %303 = vector.broadcast %c32_i32_109 : i32 to vector<1x32xi32>
    %304 = arith.cmpi slt, %199, %303 : vector<1x32xi32>
    %305 = arith.andi %302, %304 : vector<1x32xi1>
    %306 = arith.extui %305 : vector<1x32xi1> to vector<1x32xi32>
    %307 = arith.sitofp %306 : vector<1x32xi32> to vector<1x32xf32>
    %c24_i32_110 = arith.constant 24 : i32
    %308 = vector.broadcast %c24_i32_110 : i32 to vector<1x32xi32>
    %309 = arith.cmpi sge, %200, %308 : vector<1x32xi32>
    %c32_i32_111 = arith.constant 32 : i32
    %310 = vector.broadcast %c32_i32_111 : i32 to vector<1x32xi32>
    %311 = arith.cmpi slt, %200, %310 : vector<1x32xi32>
    %312 = arith.andi %309, %311 : vector<1x32xi1>
    %313 = arith.extui %312 : vector<1x32xi1> to vector<1x32xi32>
    %314 = arith.sitofp %313 : vector<1x32xi32> to vector<1x32xf32>
    %315 = vector.broadcast %307 : vector<1x32xf32> to vector<8x32xf32>
    %316 = arith.mulf %188, %315 : vector<8x32xf32>
    %cst_112 = arith.constant dense<0.000000e+00> : vector<8x8xf32>
    %317 = tpu.matmul %316, %193, %cst_112 {dimension_numbers = #tpu.dot_dimension_numbers<[1], [1], [0], [0], [0, 0, 1, 0], [], []>} : vector<8x32xf32>, vector<8x32xf32>, vector<8x8xf32> -> vector<8x8xf32>
    %cst_113 = arith.constant 0.353553385 : f32
    %318 = vector.broadcast %cst_113 : f32 to vector<8x8xf32>
    %319 = arith.mulf %317, %318 : vector<8x8xf32>
    %cst_114 = arith.constant dense<0xFF800000> : vector<8xf32>
    %320 = vector.multi_reduction <maximumf>, %319, %cst_114 [1] : vector<8x8xf32> to vector<8xf32>
    %321 = vector.shape_cast %320 : vector<8xf32> to vector<8x1xf32>
    %322 = vector.broadcast %321 : vector<8x1xf32> to vector<8x8xf32>
    %323 = arith.subf %319, %322 : vector<8x8xf32>
    %324 = math.exp %323 : vector<8x8xf32>
    %cst_115 = arith.constant dense<0.000000e+00> : vector<8xf32>
    %325 = vector.multi_reduction <add>, %324, %cst_115 [1] : vector<8x8xf32> to vector<8xf32>
    %326 = vector.shape_cast %325 : vector<8xf32> to vector<8x1xf32>
    %327 = tpu.reciprocal %326 {approx = true} : vector<8x1xf32> -> vector<8x1xf32>
    %328 = vector.broadcast %327 : vector<8x1xf32> to vector<8x8xf32>
    %329 = arith.mulf %324, %328 : vector<8x8xf32>
    %330 = vector.broadcast %314 : vector<1x32xf32> to vector<8x32xf32>
    %331 = arith.mulf %198, %330 : vector<8x32xf32>
    %cst_116 = arith.constant dense<0.000000e+00> : vector<8x32xf32>
    %332 = tpu.matmul %329, %331, %cst_116 {dimension_numbers = #tpu.dot_dimension_numbers<[1], [0], [0], [1], [0, 0, 1, 1], [], []>} : vector<8x8xf32>, vector<8x32xf32>, vector<8x32xf32> -> vector<8x32xf32>
    %333 = arith.addf %300, %332 : vector<8x32xf32>
    %c0_117 = arith.constant 0 : index
    %c0_118 = arith.constant 0 : index
    %334 = vector.load %arg17[%c0_117, %c0_118] : memref<32x32xf32, #tpu.memory_space<vmem>>, vector<32x32xf32>
    %cst_119 = arith.constant dense<0.000000e+00> : vector<8x32xf32>
    %335 = tpu.matmul %333, %334, %cst_119 {dimension_numbers = #tpu.dot_dimension_numbers<[1], [0], [0], [1], [0, 0, 1, 1], [], []>} : vector<8x32xf32>, vector<32x32xf32>, vector<8x32xf32> -> vector<8x32xf32>
    %c0_120 = arith.constant 0 : index
    %c0_121 = arith.constant 0 : index
    %336 = vector.load %arg18[%c0_120, %c0_121] : memref<1x32xf32, #tpu.memory_space<vmem>>, vector<1x32xf32>
    %337 = vector.broadcast %336 : vector<1x32xf32> to vector<8x32xf32>
    %338 = arith.addf %335, %337 : vector<8x32xf32>
    %c0_122 = arith.constant 0 : index
    %c0_123 = arith.constant 0 : index
    %339 = vector.load %arg25[%c0_122, %c0_123] : memref<1x32xf32, #tpu.memory_space<vmem>>, vector<1x32xf32>
    %c0_124 = arith.constant 0 : index
    %c0_125 = arith.constant 0 : index
    %340 = vector.load %arg26[%c0_124, %c0_125] : memref<1x32xf32, #tpu.memory_space<vmem>>, vector<1x32xf32>
    %341 = arith.addf %183, %338 : vector<8x32xf32>
    %cst_126 = arith.constant dense<0.000000e+00> : vector<8xf32>
    %342 = vector.multi_reduction <add>, %341, %cst_126 [1] : vector<8x32xf32> to vector<8xf32>
    %343 = vector.shape_cast %342 : vector<8xf32> to vector<8x1xf32>
    %cst_127 = arith.constant 3.200000e+01 : f32
    %344 = vector.broadcast %cst_127 : f32 to vector<8x1xf32>
    %345 = arith.divf %343, %344 : vector<8x1xf32>
    %346 = vector.broadcast %345 : vector<8x1xf32> to vector<8x32xf32>
    %347 = arith.subf %341, %346 : vector<8x32xf32>
    %348 = arith.mulf %347, %347 : vector<8x32xf32>
    %cst_128 = arith.constant dense<0.000000e+00> : vector<8xf32>
    %349 = vector.multi_reduction <add>, %348, %cst_128 [1] : vector<8x32xf32> to vector<8xf32>
    %350 = vector.shape_cast %349 : vector<8xf32> to vector<8x1xf32>
    %cst_129 = arith.constant 3.200000e+01 : f32
    %351 = vector.broadcast %cst_129 : f32 to vector<8x1xf32>
    %352 = arith.divf %350, %351 : vector<8x1xf32>
    %353 = vector.broadcast %345 : vector<8x1xf32> to vector<8x32xf32>
    %354 = arith.subf %341, %353 : vector<8x32xf32>
    %cst_130 = arith.constant 9.99999974E-6 : f32
    %355 = vector.broadcast %cst_130 : f32 to vector<8x1xf32>
    %356 = arith.addf %352, %355 : vector<8x1xf32>
    %357 = math.rsqrt %356 : vector<8x1xf32>
    %358 = vector.broadcast %357 : vector<8x1xf32> to vector<8x32xf32>
    %359 = arith.mulf %354, %358 : vector<8x32xf32>
    %360 = vector.broadcast %339 : vector<1x32xf32> to vector<8x32xf32>
    %361 = arith.mulf %359, %360 : vector<8x32xf32>
    %362 = vector.broadcast %340 : vector<1x32xf32> to vector<8x32xf32>
    %363 = arith.addf %361, %362 : vector<8x32xf32>
    %c0_131 = arith.constant 0 : index
    %c0_132 = arith.constant 0 : index
    %364 = vector.load %arg19[%c0_131, %c0_132] : memref<32x64xf32, #tpu.memory_space<vmem>>, vector<32x64xf32>
    %cst_133 = arith.constant dense<0.000000e+00> : vector<8x64xf32>
    %365 = tpu.matmul %363, %364, %cst_133 {dimension_numbers = #tpu.dot_dimension_numbers<[1], [0], [0], [1], [0, 0, 1, 1], [], []>} : vector<8x32xf32>, vector<32x64xf32>, vector<8x64xf32> -> vector<8x64xf32>
    %c0_134 = arith.constant 0 : index
    %c0_135 = arith.constant 0 : index
    %366 = vector.load %arg20[%c0_134, %c0_135] : memref<1x64xf32, #tpu.memory_space<vmem>>, vector<1x64xf32>
    %367 = vector.broadcast %366 : vector<1x64xf32> to vector<8x64xf32>
    %368 = arith.addf %365, %367 : vector<8x64xf32>
    %cst_136 = arith.constant 0.000000e+00 : f32
    %369 = vector.broadcast %cst_136 : f32 to vector<8x64xf32>
    %370 = arith.maximumf %368, %369 : vector<8x64xf32>
    %c0_137 = arith.constant 0 : index
    %c0_138 = arith.constant 0 : index
    %371 = vector.load %arg21[%c0_137, %c0_138] : memref<64x32xf32, #tpu.memory_space<vmem>>, vector<64x32xf32>
    %cst_139 = arith.constant dense<0.000000e+00> : vector<8x32xf32>
    %372 = tpu.matmul %370, %371, %cst_139 {dimension_numbers = #tpu.dot_dimension_numbers<[1], [0], [0], [1], [0, 0, 1, 1], [], []>} : vector<8x64xf32>, vector<64x32xf32>, vector<8x32xf32> -> vector<8x32xf32>
    %c0_140 = arith.constant 0 : index
    %c0_141 = arith.constant 0 : index
    %373 = vector.load %arg22[%c0_140, %c0_141] : memref<1x32xf32, #tpu.memory_space<vmem>>, vector<1x32xf32>
    %374 = vector.broadcast %373 : vector<1x32xf32> to vector<8x32xf32>
    %375 = arith.addf %372, %374 : vector<8x32xf32>
    %c0_142 = arith.constant 0 : index
    %c0_143 = arith.constant 0 : index
    %376 = vector.load %arg27[%c0_142, %c0_143] : memref<1x32xf32, #tpu.memory_space<vmem>>, vector<1x32xf32>
    %c0_144 = arith.constant 0 : index
    %c0_145 = arith.constant 0 : index
    %377 = vector.load %arg28[%c0_144, %c0_145] : memref<1x32xf32, #tpu.memory_space<vmem>>, vector<1x32xf32>
    %378 = arith.addf %363, %375 : vector<8x32xf32>
    %cst_146 = arith.constant dense<0.000000e+00> : vector<8xf32>
    %379 = vector.multi_reduction <add>, %378, %cst_146 [1] : vector<8x32xf32> to vector<8xf32>
    %380 = vector.shape_cast %379 : vector<8xf32> to vector<8x1xf32>
    %cst_147 = arith.constant 3.200000e+01 : f32
    %381 = vector.broadcast %cst_147 : f32 to vector<8x1xf32>
    %382 = arith.divf %380, %381 : vector<8x1xf32>
    %383 = vector.broadcast %382 : vector<8x1xf32> to vector<8x32xf32>
    %384 = arith.subf %378, %383 : vector<8x32xf32>
    %385 = arith.mulf %384, %384 : vector<8x32xf32>
    %cst_148 = arith.constant dense<0.000000e+00> : vector<8xf32>
    %386 = vector.multi_reduction <add>, %385, %cst_148 [1] : vector<8x32xf32> to vector<8xf32>
    %387 = vector.shape_cast %386 : vector<8xf32> to vector<8x1xf32>
    %cst_149 = arith.constant 3.200000e+01 : f32
    %388 = vector.broadcast %cst_149 : f32 to vector<8x1xf32>
    %389 = arith.divf %387, %388 : vector<8x1xf32>
    %390 = vector.broadcast %382 : vector<8x1xf32> to vector<8x32xf32>
    %391 = arith.subf %378, %390 : vector<8x32xf32>
    %cst_150 = arith.constant 9.99999974E-6 : f32
    %392 = vector.broadcast %cst_150 : f32 to vector<8x1xf32>
    %393 = arith.addf %389, %392 : vector<8x1xf32>
    %394 = math.rsqrt %393 : vector<8x1xf32>
    %395 = vector.broadcast %394 : vector<8x1xf32> to vector<8x32xf32>
    %396 = arith.mulf %391, %395 : vector<8x32xf32>
    %397 = vector.broadcast %376 : vector<1x32xf32> to vector<8x32xf32>
    %398 = arith.mulf %396, %397 : vector<8x32xf32>
    %399 = vector.broadcast %377 : vector<1x32xf32> to vector<8x32xf32>
    %400 = arith.addf %398, %399 : vector<8x32xf32>
    %c0_151 = arith.constant 0 : index
    %c0_152 = arith.constant 0 : index
    %c0_153 = arith.constant 0 : index
    %401 = vector.load %arg29[%c0_151, %c0_152, %c0_153] : memref<1x8x32xf32, #tpu.memory_space<vmem>>, vector<1x8x32xf32>
    %402 = vector.shape_cast %401 : vector<1x8x32xf32> to vector<8x32xf32>
    %403 = vector.shape_cast %400 : vector<8x32xf32> to vector<1x8x32xf32>
    tpu.vector_store %arg29[%c0_151, %c0_152, %c0_153], %403 {strides = array<i32>} : memref<1x8x32xf32, #tpu.memory_space<vmem>>, vector<1x8x32xf32>,
    return
  }
  func.func @transform_0(%arg0: i32) -> (i32, i32, i32) {
    %c0_i32 = arith.constant 0 : i32
    %c0_i32_0 = arith.constant 0 : i32
    %c0_i32_1 = arith.constant 0 : i32
    return %arg0, %c0_i32, %c0_i32_0 : i32, i32, i32
  }
  func.func @transform_1(%arg0: i32) -> (i32, i32, i32) {
    %c0_i32 = arith.constant 0 : i32
    %c0_i32_0 = arith.constant 0 : i32
    %c0_i32_1 = arith.constant 0 : i32
    return %arg0, %c0_i32, %c0_i32_0 : i32, i32, i32
  }
  func.func @transform_2(%arg0: i32) -> (i32, i32) {
    %c0_i32 = arith.constant 0 : i32
    %c0_i32_0 = arith.constant 0 : i32
    %c0_i32_1 = arith.constant 0 : i32
    return %c0_i32, %c0_i32_0 : i32, i32
  }
  func.func @transform_3(%arg0: i32) -> (i32, i32) {
    %c0_i32 = arith.constant 0 : i32
    %c0_i32_0 = arith.constant 0 : i32
    %c0_i32_1 = arith.constant 0 : i32
    return %c0_i32, %c0_i32_0 : i32, i32
  }
  func.func @transform_4(%arg0: i32) -> (i32, i32) {
    %c0_i32 = arith.constant 0 : i32
    %c0_i32_0 = arith.constant 0 : i32
    %c0_i32_1 = arith.constant 0 : i32
    return %c0_i32, %c0_i32_0 : i32, i32
  }
  func.func @transform_5(%arg0: i32) -> (i32, i32) {
    %c0_i32 = arith.constant 0 : i32
    %c0_i32_0 = arith.constant 0 : i32
    %c0_i32_1 = arith.constant 0 : i32
    return %c0_i32, %c0_i32_0 : i32, i32
  }
  func.func @transform_6(%arg0: i32) -> (i32, i32) {
    %c0_i32 = arith.constant 0 : i32
    %c0_i32_0 = arith.constant 0 : i32
    %c0_i32_1 = arith.constant 0 : i32
    return %c0_i32, %c0_i32_0 : i32, i32
  }
  func.func @transform_7(%arg0: i32) -> (i32, i32) {
    %c0_i32 = arith.constant 0 : i32
    %c0_i32_0 = arith.constant 0 : i32
    %c0_i32_1 = arith.constant 0 : i32
    return %c0_i32, %c0_i32_0 : i32, i32
  }
  func.func @transform_8(%arg0: i32) -> (i32, i32) {
    %c0_i32 = arith.constant 0 : i32
    %c0_i32_0 = arith.constant 0 : i32
    %c0_i32_1 = arith.constant 0 : i32
    return %c0_i32, %c0_i32_0 : i32, i32
  }
  func.func @transform_9(%arg0: i32) -> (i32, i32) {
    %c0_i32 = arith.constant 0 : i32
    %c0_i32_0 = arith.constant 0 : i32
    %c0_i32_1 = arith.constant 0 : i32
    return %c0_i32, %c0_i32_0 : i32, i32
  }
  func.func @transform_10(%arg0: i32) -> (i32, i32) {
    %c0_i32 = arith.constant 0 : i32
    %c0_i32_0 = arith.constant 0 : i32
    %c0_i32_1 = arith.constant 0 : i32
    return %c0_i32, %c0_i32_0 : i32, i32
  }
  func.func @transform_11(%arg0: i32) -> (i32, i32) {
    %c0_i32 = arith.constant 0 : i32
    %c0_i32_0 = arith.constant 0 : i32
    %c0_i32_1 = arith.constant 0 : i32
    return %c0_i32, %c0_i32_0 : i32, i32
  }
  func.func @transform_12(%arg0: i32) -> (i32, i32) {
    %c0_i32 = arith.constant 0 : i32
    %c0_i32_0 = arith.constant 0 : i32
    %c0_i32_1 = arith.constant 0 : i32
    return %c0_i32, %c0_i32_0 : i32, i32
  }
  func.func @transform_13(%arg0: i32) -> (i32, i32) {
    %c0_i32 = arith.constant 0 : i32
    %c0_i32_0 = arith.constant 0 : i32
    %c0_i32_1 = arith.constant 0 : i32
    return %c0_i32, %c0_i32_0 : i32, i32
  }
  func.func @transform_14(%arg0: i32) -> (i32, i32) {
    %c0_i32 = arith.constant 0 : i32
    %c0_i32_0 = arith.constant 0 : i32
    %c0_i32_1 = arith.constant 0 : i32
    return %c0_i32, %c0_i32_0 : i32, i32
  }
  func.func @transform_15(%arg0: i32) -> (i32, i32) {
    %c0_i32 = arith.constant 0 : i32
    %c0_i32_0 = arith.constant 0 : i32
    %c0_i32_1 = arith.constant 0 : i32
    return %c0_i32, %c0_i32_0 : i32, i32
  }
  func.func @transform_16(%arg0: i32) -> (i32, i32) {
    %c0_i32 = arith.constant 0 : i32
    %c0_i32_0 = arith.constant 0 : i32
    %c0_i32_1 = arith.constant 0 : i32
    return %c0_i32, %c0_i32_0 : i32, i32
  }
  func.func @transform_17(%arg0: i32) -> (i32, i32) {
    %c0_i32 = arith.constant 0 : i32
    %c0_i32_0 = arith.constant 0 : i32
    %c0_i32_1 = arith.constant 0 : i32
    return %c0_i32, %c0_i32_0 : i32, i32
  }
  func.func @transform_18(%arg0: i32) -> (i32, i32) {
    %c0_i32 = arith.constant 0 : i32
    %c0_i32_0 = arith.constant 0 : i32
    %c0_i32_1 = arith.constant 0 : i32
    return %c0_i32, %c0_i32_0 : i32, i32
  }
  func.func @transform_19(%arg0: i32) -> (i32, i32) {
    %c0_i32 = arith.constant 0 : i32
    %c0_i32_0 = arith.constant 0 : i32
    %c0_i32_1 = arith.constant 0 : i32
    return %c0_i32, %c0_i32_0 : i32, i32
  }
  func.func @transform_20(%arg0: i32) -> (i32, i32) {
    %c0_i32 = arith.constant 0 : i32
    %c0_i32_0 = arith.constant 0 : i32
    %c0_i32_1 = arith.constant 0 : i32
    return %c0_i32, %c0_i32_0 : i32, i32
  }
  func.func @transform_21(%arg0: i32) -> (i32, i32) {
    %c0_i32 = arith.constant 0 : i32
    %c0_i32_0 = arith.constant 0 : i32
    %c0_i32_1 = arith.constant 0 : i32
    return %c0_i32, %c0_i32_0 : i32, i32
  }
  func.func @transform_22(%arg0: i32) -> (i32, i32) {
    %c0_i32 = arith.constant 0 : i32
    %c0_i32_0 = arith.constant 0 : i32
    %c0_i32_1 = arith.constant 0 : i32
    return %c0_i32, %c0_i32_0 : i32, i32
  }
  func.func @transform_23(%arg0: i32) -> (i32, i32) {
    %c0_i32 = arith.constant 0 : i32
    %c0_i32_0 = arith.constant 0 : i32
    %c0_i32_1 = arith.constant 0 : i32
    return %c0_i32, %c0_i32_0 : i32, i32
  }
  func.func @transform_24(%arg0: i32) -> (i32, i32) {
    %c0_i32 = arith.constant 0 : i32
    %c0_i32_0 = arith.constant 0 : i32
    %c0_i32_1 = arith.constant 0 : i32
    return %c0_i32, %c0_i32_0 : i32, i32
  }
  func.func @transform_25(%arg0: i32) -> (i32, i32) {
    %c0_i32 = arith.constant 0 : i32
    %c0_i32_0 = arith.constant 0 : i32
    %c0_i32_1 = arith.constant 0 : i32
    return %c0_i32, %c0_i32_0 : i32, i32
  }
  func.func @transform_26(%arg0: i32) -> (i32, i32) {
    %c0_i32 = arith.constant 0 : i32
    %c0_i32_0 = arith.constant 0 : i32
    %c0_i32_1 = arith.constant 0 : i32
    return %c0_i32, %c0_i32_0 : i32, i32
  }
  func.func @transform_27(%arg0: i32) -> (i32, i32) {
    %c0_i32 = arith.constant 0 : i32
    %c0_i32_0 = arith.constant 0 : i32
    %c0_i32_1 = arith.constant 0 : i32
    return %c0_i32, %c0_i32_0 : i32, i32
  }
  func.func @transform_28(%arg0: i32) -> (i32, i32, i32) {
    %c0_i32 = arith.constant 0 : i32
    %c0_i32_0 = arith.constant 0 : i32
    %c0_i32_1 = arith.constant 0 : i32
    return %arg0, %c0_i32, %c0_i32_0 : i32, i32, i32
  }
}

</mosaic_0001>

<llo_original>
// kernel: transformer_decoder.5
$region0: #{transformer_decoder.5}
  #allocation0 [shape = 'u32[]', space=smem, size = 0x4, offset = 0x4, fixed_abs, tag = 'smem constant byte address 0x4 - core index']
  #allocation1 [shape = 'u32[144,128]{1,0:T(1,128)}', space=vmem, size = 0x12000, scoped, tag = 'internal scratch']
  %s0 = inlined_call_operand.vmem [shape: f32[16,32], index: 0, kind: input, shape index: {}]
  %s1 = inlined_call_operand.vmem [shape: f32[32,32], index: 1, kind: input, shape index: {}]
  %s2 = inlined_call_operand.vmem [shape: f32[1,32], index: 2, kind: input, shape index: {}]
  %s3 = inlined_call_operand.hbm [shape: f32[16,32], index: 3, kind: output, shape index: {}]
  %s4 = sld [smem:[#allocation0]]
  $region22: #{transformer_decoder.5} parent=0
    _
  %s6 = ssub.s32 1, %s4
  %s7 = scalar_select 0, %s6, %s4
  $region1: #{transformer_decoder.5} parent=0
    #allocation2 [shape = 'u8[8192]{0}', space=vmem, size = 0x2000, scoped, tag = 'output window, operand 0, single buffered']
    #allocation3 [shape = 's32[1]{0}', space=sflag, size = 0x4, scoped, tag = 'scoped memory for transformer_decoder.5']
    %8 = vsyncpa [#allocation3], 0
    // Predicated region
    $region2: #{transformer_decoder.5} parent=1 // pred_check
      _
    $region3: #{transformer_decoder.5} parent=1 // pred_check_branch
      %10 = sbr.rel (0) target = $region5
    $region4: #{transformer_decoder.5} parent=1 // pred_region
      _
    $region5: #{transformer_decoder.5} parent=1 // pred_fallthru
      _
    // Predicated region
    $region6: #{transformer_decoder.5} parent=1 // pred_check
      _
    $region7: #{transformer_decoder.5} parent=1 // pred_check_branch
      %12 = sbr.rel (0) target = $region9
    $region8: #{transformer_decoder.5} parent=1 // pred_region
      _
    $region9: #{transformer_decoder.5} parent=1 // pred_fallthru
      _
    // Predicated region
    $region10: #{transformer_decoder.5} parent=1 // pred_check
      _
    $region11: #{transformer_decoder.5} parent=1 // pred_check_branch
      %14 = sbr.rel (0) target = $region13
    $region12: #{transformer_decoder.5} parent=1 // pred_region
      _
    $region13: #{transformer_decoder.5} parent=1 // pred_fallthru
      _
    %v15 = vld [vmem:[%s0] sm:$0xff]
    %v16 = vld [vmem:[%s0 + $0x8] sm:$0xff]
    %v17 = vld [vmem:[%s1] sm:$0xff]
    %v18 = vld [vmem:[%s1 + $0x8] sm:$0xff]
    %v19 = vld [vmem:[%s1 + $0x10] sm:$0xff]
    %v20 = vld [vmem:[%s1 + $0x18] sm:$0xff]
    %v21 = vld [vmem:[%s2] sm:$0x1]
    %v23 = vlaneseq
    %v24 = vshrl.u32 %v23, 7
    %v25 = vsub.s32 0, %v24
    %v26 = vrot.slane %v21, %v25
    %vm28 = vcmask 261120
    %v30 = vsel %vm28, %v15, 0
    %v33 = vsel %vm28, %v16, 0
    %35 = vmatprep.subr.mxu0 0.0
    %36 = vmatpush1.msra.mxu0 %v17
    %37 = vmatprep.subr.mxu0 0.0
    %38 = vmatpush1.msra.mxu0 %v18
    %39 = vmatprep.subr.mxu0 0.0
    %40 = vmatpush1.msra.mxu0 %v19
    %41 = vmatprep.subr.mxu0 0.0
    %42 = vmatpush1.msra.mxu0 %v20
    %43 = vmatprep.subr.mxu0 0.0
    %44 = vmatpush1.msra.mxu0 0.0
    %45 = vmatprep.subr.mxu0 0.0
    %46 = vmatpush1.msra.mxu0 0.0
    %47 = vmatprep.subr.mxu0 0.0
    %48 = vmatpush1.msra.mxu0 0.0
    %49 = vmatprep.subr.mxu0 0.0
    %50 = vmatpush1.msra.mxu0 0.0
    %51 = vmatprep.subr.mxu0 0.0
    %52 = vmatpush1.msra.mxu0 0.0
    %53 = vmatprep.subr.mxu0 0.0
    %54 = vmatpush1.msra.mxu0 0.0
    %55 = vmatprep.subr.mxu0 0.0
    %56 = vmatpush1.msra.mxu0 0.0
    %57 = vmatprep.subr.mxu0 0.0
    %58 = vmatpush1.msra.mxu0 0.0
    %59 = vmatprep.subr.mxu0 0.0
    %60 = vmatpush1.msra.mxu0 0.0
    %61 = vmatprep.subr.mxu0 0.0
    %62 = vmatpush1.msra.mxu0 0.0
    %63 = vmatprep.subr.mxu0 0.0
    %64 = vmatpush1.msra.mxu0 0.0
    %65 = vmatprep.subr.mxu0 0.0
    %66 = vmatpush1.msra.mxu0 0.0
    %67 = vmatprep.subr.mxu0 0.0
    %68 = vmatpush1.msra.mxu0 0.0
    %69 = vmatprep.subr.mxu0 0.0
    %70 = vmatpush1.msra.mxu0 0.0
    %71 = vmatprep.subr.mxu0 0.0
    %72 = vmatpush1.msra.mxu0 0.0
    %73 = vmatprep.subr.mxu0 0.0
    %74 = vmatpush1.msra.mxu0 0.0
    %75 = vmatprep.subr.mxu0 0.0
    %76 = vmatpush1.msra.mxu0 0.0
    %77 = vmatprep.subr.mxu0 0.0
    %78 = vmatpush1.msra.mxu0 0.0
    %79 = vmatprep.subr.mxu0 0.0
    %80 = vmatpush1.msra.mxu0 0.0
    %81 = vmatprep.subr.mxu0 0.0
    %82 = vmatpush1.msra.mxu0 0.0
    %83 = vmatprep.subr.mxu0 0.0
    %84 = vmatpush1.msra.mxu0 0.0
    %85 = vmatprep.subr.mxu0 0.0
    %86 = vmatpush1.msra.mxu0 0.0
    %87 = vmatprep.subr.mxu0 0.0
    %88 = vmatpush1.msra.mxu0 0.0
    %89 = vmatprep.subr.mxu0 0.0
    %90 = vmatpush1.msra.mxu0 0.0
    %91 = vmatprep.subr.mxu0 0.0
    %92 = vmatpush1.msra.mxu0 0.0
    %93 = vmatprep.subr.mxu0 0.0
    %94 = vmatpush1.msra.mxu0 0.0
    %95 = vmatprep.subr.mxu0 0.0
    %96 = vmatpush1.msra.mxu0 0.0
    %97 = vmatprep.subr.mxu0 0.0
    %98 = vmatpush1.msra.mxu0 0.0
    %99 = vmatprep.mubr.f32.mxu0 0.0
    %100 = vmatmul.mubr.f32.gmra.mrb[0].mxu0 %v30
    %v101 = vpop.f32.mrb[0].mxu0
    %v102 = vadd.f32 %v26, %v101
    %v103 = vpop.f32.mrb[0].mxu0
    %104 = vmatprep.mubr.f32.mxu0 0.0
    %105 = vmatmul.mubr.f32.gmra.mrb[0].mxu0 %v33
    %v106 = vpop.f32.mrb[0].mxu0
    %v107 = vadd.f32 %v26, %v106
    %v108 = vpop.f32.mrb[0].mxu0
    %109 = vdwg.mxu0
    %v110 = vsel %vm28, %v102, -inf
    %111 = vmax.xlane.f32.xlu0 %v110
    %v112 = vpop.xlane.xlu0 %111
    %v113 = vsel %vm28, %v107, -inf
    %114 = vmax.xlane.f32.xlu0 %v113
    %v115 = vpop.xlane.xlu0 %114
    %v116 = vsub.f32 %v102, %v112
    %v117 = vsub.f32 %v107, %v115
    %v118 = vmul.f32 %v116, 1.442695
    %v119 = vpow.pop %v118
    %v120 = vmul.f32 %v117, 1.442695
    %v121 = vpow.pop %v120
    %v122 = vsel %vm28, %v119, 0.0
    %123 = vadd.xlane.f32.xlu0 %v122
    %v124 = vpop.xlane.xlu0 %123
    %v125 = vsel %vm28, %v121, 0.0
    %126 = vadd.xlane.f32.xlu0 %v125
    %v127 = vpop.xlane.xlu0 %126
    %v128 = vrcp.pop %v124
    %v129 = vmul.f32 %v119, %v128
    %v130 = vrcp.pop %v127
    %v131 = vmul.f32 %v121, %v130
    %132 = vst.msk [vmem:[#allocation2] sm:$0xff] %vm28, %v129
    %133 = vst.msk [vmem:[#allocation2 + $0x8] sm:$0xff] %vm28, %v131
    // Predicated region
    $region14: #{transformer_decoder.5} parent=1 // pred_check
      _
    $region15: #{transformer_decoder.5} parent=1 // pred_check_branch
      %135 = sbr.rel (0) target = $region17
    $region16: #{transformer_decoder.5} parent=1 // pred_region
      %s137 = ssub.s32 256, 256
      %138 = vsyncadd [#allocation3], %s137
      %s139 = sshll.u32 [#allocation2], 4
      %s140 = int_to_ptr.vmem [resolvable:$true] %s139
      %145 = dma.vmem_to_hbm [thread:$0]  %s140, 256, %s3, [#allocation3], 128, 128, 8
    $region17: #{transformer_decoder.5} parent=1 // pred_fallthru
      _
    // Predicated region
    $region18: #{transformer_decoder.5} parent=1 // pred_check
      _
    $region19: #{transformer_decoder.5} parent=1 // pred_check_branch
      %147 = sbr.rel (0) target = $region21
    $region20: #{transformer_decoder.5} parent=1 // pred_region
      %148 = dma.done [#allocation3], 256
    $region21: #{transformer_decoder.5} parent=1 // pred_fallthru
      _
    %149 = vsyncpa [#allocation3], 1

// kernel: transformer_decoder.4
$region0: #{transformer_decoder.4}
  #allocation0 [shape = 'u32[]', space=smem, size = 0x4, offset = 0x4, fixed_abs, tag = 'smem constant byte address 0x4 - core index']
  #allocation1 [shape = 'u32[144,128]{1,0:T(1,128)}', space=vmem, size = 0x12000, scoped, tag = 'internal scratch']
  %s0 = inlined_call_operand.vmem [shape: f32[2,8,32], index: 0, kind: input, shape index: {}]
  %s1 = inlined_call_operand.vmem [shape: f32[2,8,32], index: 1, kind: input, shape index: {}]
  %s2 = inlined_call_operand.vmem [shape: f32[32,32], index: 2, kind: input, shape index: {}]
  %s3 = inlined_call_operand.vmem [shape: f32[1,32], index: 3, kind: input, shape index: {}]
  %s4 = inlined_call_operand.vmem [shape: f32[32,32], index: 4, kind: input, shape index: {}]
  %s5 = inlined_call_operand.vmem [shape: f32[1,32], index: 5, kind: input, shape index: {}]
  %s6 = inlined_call_operand.vmem [shape: f32[32,32], index: 6, kind: input, shape index: {}]
  %s7 = inlined_call_operand.vmem [shape: f32[1,32], index: 7, kind: input, shape index: {}]
  %s8 = inlined_call_operand.vmem [shape: f32[32,32], index: 8, kind: input, shape index: {}]
  %s9 = inlined_call_operand.vmem [shape: f32[1,32], index: 9, kind: input, shape index: {}]
  %s10 = inlined_call_operand.vmem [shape: f32[32,32], index: 10, kind: input, shape index: {}]
  %s11 = inlined_call_operand.vmem [shape: f32[1,32], index: 11, kind: input, shape index: {}]
  %s12 = inlined_call_operand.vmem [shape: f32[32,32], index: 12, kind: input, shape index: {}]
  %s13 = inlined_call_operand.vmem [shape: f32[1,32], index: 13, kind: input, shape index: {}]
  %s14 = inlined_call_operand.vmem [shape: f32[32,32], index: 14, kind: input, shape index: {}]
  %s15 = inlined_call_operand.vmem [shape: f32[1,32], index: 15, kind: input, shape index: {}]
  %s16 = inlined_call_operand.vmem [shape: f32[32,32], index: 16, kind: input, shape index: {}]
  %s17 = inlined_call_operand.vmem [shape: f32[1,32], index: 17, kind: input, shape index: {}]
  %s18 = inlined_call_operand.vmem [shape: f32[32,64], index: 18, kind: input, shape index: {}]
  %s19 = inlined_call_operand.vmem [shape: f32[1,64], index: 19, kind: input, shape index: {}]
  %s20 = inlined_call_operand.vmem [shape: f32[64,32], index: 20, kind: input, shape index: {}]
  %s21 = inlined_call_operand.vmem [shape: f32[1,32], index: 21, kind: input, shape index: {}]
  %s22 = inlined_call_operand.vmem [shape: f32[1,32], index: 22, kind: input, shape index: {}]
  %s23 = inlined_call_operand.vmem [shape: f32[1,32], index: 23, kind: input, shape index: {}]
  %s24 = inlined_call_operand.vmem [shape: f32[1,32], index: 24, kind: input, shape index: {}]
  %s25 = inlined_call_operand.vmem [shape: f32[1,32], index: 25, kind: input, shape index: {}]
  %s26 = inlined_call_operand.vmem [shape: f32[1,32], index: 26, kind: input, shape index: {}]
  %s27 = inlined_call_operand.vmem [shape: f32[1,32], index: 27, kind: input, shape index: {}]
  %s28 = inlined_call_operand.vmem [shape: f32[2,8,32], index: 28, kind: output, shape index: {}]
  %s29 = sld [smem:[#allocation0]]
  $region145: #{transformer_decoder.4} parent=0
    _
  %s31 = ssub.s32 1, %s29
  %s32 = scalar_select 0, %s31, %s29
  loop: start=0, step=1, limit=4
  $region2: #{transformer_decoder.4} parent=0 // loop_pre_header
    _
  $region3: #{transformer_decoder.4} parent=0 // loop_header
    %s34 = sphi 0, %s38
    %p35 = scmp.ge.s32.totalorder %s34, 4
    %s44 = sphi 0, %s46
    %s47 = sphi 0, %s44
    %s48 = sphi 0, %s47
    %s64 = sphi 0, %s48
    %s70 = sphi 0, %s72
    %s73 = sphi 0, %s70
    %s74 = sphi 0, %s73
    %s90 = sphi 0, %s74
    %s94 = sphi 0, %s94
    %s96 = sphi 0, %s94
    %s97 = sphi 0, %s96
    %s111 = sphi 0, %s97
    %s115 = sphi 0, %s115
    %s117 = sphi 0, %s115
    %s118 = sphi 0, %s117
    %s132 = sphi 0, %s118
    %s136 = sphi 0, %s136
    %s138 = sphi 0, %s136
    %s139 = sphi 0, %s138
    %s153 = sphi 0, %s139
    %s157 = sphi 0, %s157
    %s159 = sphi 0, %s157
    %s160 = sphi 0, %s159
    %s174 = sphi 0, %s160
    %s178 = sphi 0, %s178
    %s180 = sphi 0, %s178
    %s181 = sphi 0, %s180
    %s195 = sphi 0, %s181
    %s199 = sphi 0, %s199
    %s201 = sphi 0, %s199
    %s202 = sphi 0, %s201
    %s216 = sphi 0, %s202
    %s220 = sphi 0, %s220
    %s222 = sphi 0, %s220
    %s223 = sphi 0, %s222
    %s237 = sphi 0, %s223
    %s241 = sphi 0, %s241
    %s243 = sphi 0, %s241
    %s244 = sphi 0, %s243
    %s258 = sphi 0, %s244
    %s262 = sphi 0, %s262
    %s264 = sphi 0, %s262
    %s265 = sphi 0, %s264
    %s279 = sphi 0, %s265
    %s283 = sphi 0, %s283
    %s285 = sphi 0, %s283
    %s286 = sphi 0, %s285
    %s300 = sphi 0, %s286
    %s304 = sphi 0, %s304
    %s306 = sphi 0, %s304
    %s307 = sphi 0, %s306
    %s321 = sphi 0, %s307
    %s325 = sphi 0, %s325
    %s327 = sphi 0, %s325
    %s328 = sphi 0, %s327
    %s342 = sphi 0, %s328
    %s346 = sphi 0, %s346
    %s348 = sphi 0, %s346
    %s349 = sphi 0, %s348
    %s363 = sphi 0, %s349
    %s367 = sphi 0, %s367
    %s369 = sphi 0, %s367
    %s370 = sphi 0, %s369
    %s384 = sphi 0, %s370
    %s388 = sphi 0, %s388
    %s390 = sphi 0, %s388
    %s391 = sphi 0, %s390
    %s405 = sphi 0, %s391
    %s409 = sphi 0, %s409
    %s411 = sphi 0, %s409
    %s412 = sphi 0, %s411
    %s426 = sphi 0, %s412
    %s430 = sphi 0, %s430
    %s432 = sphi 0, %s430
    %s433 = sphi 0, %s432
    %s447 = sphi 0, %s433
    %s451 = sphi 0, %s451
    %s453 = sphi 0, %s451
    %s454 = sphi 0, %s453
    %s468 = sphi 0, %s454
    %s472 = sphi 0, %s472
    %s474 = sphi 0, %s472
    %s475 = sphi 0, %s474
    %s489 = sphi 0, %s475
    %s493 = sphi 0, %s493
    %s495 = sphi 0, %s493
    %s496 = sphi 0, %s495
    %s510 = sphi 0, %s496
    %s514 = sphi 0, %s514
    %s516 = sphi 0, %s514
    %s517 = sphi 0, %s516
    %s531 = sphi 0, %s517
    %s535 = sphi 0, %s535
    %s537 = sphi 0, %s535
    %s538 = sphi 0, %s537
    %s552 = sphi 0, %s538
    %s556 = sphi 0, %s556
    %s558 = sphi 0, %s556
    %s559 = sphi 0, %s558
    %s573 = sphi 0, %s559
    %s577 = sphi 0, %s577
    %s579 = sphi 0, %s577
    %s580 = sphi 0, %s579
    %s594 = sphi 0, %s580
    %s598 = sphi 0, %s598
    %s600 = sphi 0, %s598
    %s601 = sphi 0, %s600
    %s615 = sphi 0, %s601
    %s619 = sphi 0, %s619
    %s621 = sphi 0, %s619
    %s622 = sphi 0, %s621
    %s636 = sphi 0, %s622
    %s642 = sphi 0, %s644
    %s645 = sphi 0, %s642
    %s646 = sphi 0, %s645
    %s662 = sphi 0, %s646
  $region4: #{transformer_decoder.4} parent=0 // loop_header_branch
    %37 = sbr.rel (%p35) target = $region8
  $region5: #{transformer_decoder.4} parent=0 // loop_body
    %s39 = ssub.s32 %s34, 1
    %s40 = ssub.s32 %s34, 2
    %s41 = sadd.s32 %s34, 1
    %s42 = ssub.s32 %s34, %s41
    %p43 = scmp.eq.s32.totalorder %s42, 0
    %s45 = sadd.s32 %s44, 1
    %s46 = scalar_select %p43, %s44, %s45
    %p49 = pneg %p43
    %p50 = scmp.eq.s32.totalorder %s34, 1
    %p51 = por %p49, %p50
    %p52 = scmp.ne.s32.totalorder %s44, %s47
    %p53 = scmp.eq.s32.totalorder %s34, 0
    %p54 = por %p52, %p53
    %p55 = scmp.ne.s32.totalorder %s44, %s47
    %p56 = scmp.eq.s32.totalorder %s39, 1
    %p57 = por %p55, %p56
    %p58 = scmp.ne.s32.totalorder %s47, %s48
    %p59 = scmp.eq.s32.totalorder %s39, 0
    %p60 = por %p58, %p59
    %p61 = scmp.ne.s32.totalorder %s47, %s48
    %p62 = scmp.eq.s32.totalorder %s40, 1
    %p63 = por %p61, %p62
    %p65 = scmp.ne.s32.totalorder %s48, %s64
    %p66 = scmp.eq.s32.totalorder %s40, 0
    %p67 = por %p65, %p66
    %s68 = ssub.s32 %s34, %s41
    %p69 = scmp.eq.s32.totalorder %s68, 0
    %s71 = sadd.s32 %s70, 1
    %s72 = scalar_select %p69, %s70, %s71
    %p75 = pneg %p69
    %p76 = scmp.eq.s32.totalorder %s34, 1
    %p77 = por %p75, %p76
    %p78 = scmp.ne.s32.totalorder %s70, %s73
    %p79 = scmp.eq.s32.totalorder %s34, 0
    %p80 = por %p78, %p79
    %p81 = scmp.ne.s32.totalorder %s70, %s73
    %p82 = scmp.eq.s32.totalorder %s39, 1
    %p83 = por %p81, %p82
    %p84 = scmp.ne.s32.totalorder %s73, %s74
    %p85 = scmp.eq.s32.totalorder %s39, 0
    %p86 = por %p84, %p85
    %p87 = scmp.ne.s32.totalorder %s73, %s74
    %p88 = scmp.eq.s32.totalorder %s40, 1
    %p89 = por %p87, %p88
    %p91 = scmp.ne.s32.totalorder %s74, %s90
    %p92 = scmp.eq.s32.totalorder %s40, 0
    %p93 = por %p91, %p92
    %s95 = sadd.s32 %s94, 1
    %p98 = scmp.eq.s32.totalorder %s34, 1
    %p99 = scmp.ne.s32.totalorder %s94, %s96
    %p100 = scmp.eq.s32.totalorder %s34, 0
    %p101 = por %p99, %p100
    %p102 = scmp.ne.s32.totalorder %s94, %s96
    %p103 = scmp.eq.s32.totalorder %s39, 1
    %p104 = por %p102, %p103
    %p105 = scmp.ne.s32.totalorder %s96, %s97
    %p106 = scmp.eq.s32.totalorder %s39, 0
    %p107 = por %p105, %p106
    %p108 = scmp.ne.s32.totalorder %s96, %s97
    %p109 = scmp.eq.s32.totalorder %s40, 1
    %p110 = por %p108, %p109
    %p112 = scmp.ne.s32.totalorder %s97, %s111
    %p113 = scmp.eq.s32.totalorder %s40, 0
    %p114 = por %p112, %p113
    %s116 = sadd.s32 %s115, 1
    %p119 = scmp.eq.s32.totalorder %s34, 1
    %p120 = scmp.ne.s32.totalorder %s115, %s117
    %p121 = scmp.eq.s32.totalorder %s34, 0
    %p122 = por %p120, %p121
    %p123 = scmp.ne.s32.totalorder %s115, %s117
    %p124 = scmp.eq.s32.totalorder %s39, 1
    %p125 = por %p123, %p124
    %p126 = scmp.ne.s32.totalorder %s117, %s118
    %p127 = scmp.eq.s32.totalorder %s39, 0
    %p128 = por %p126, %p127
    %p129 = scmp.ne.s32.totalorder %s117, %s118
    %p130 = scmp.eq.s32.totalorder %s40, 1
    %p131 = por %p129, %p130
    %p133 = scmp.ne.s32.totalorder %s118, %s132
    %p134 = scmp.eq.s32.totalorder %s40, 0
    %p135 = por %p133, %p134
    %s137 = sadd.s32 %s136, 1
    %p140 = scmp.eq.s32.totalorder %s34, 1
    %p141 = scmp.ne.s32.totalorder %s136, %s138
    %p142 = scmp.eq.s32.totalorder %s34, 0
    %p143 = por %p141, %p142
    %p144 = scmp.ne.s32.totalorder %s136, %s138
    %p145 = scmp.eq.s32.totalorder %s39, 1
    %p146 = por %p144, %p145
    %p147 = scmp.ne.s32.totalorder %s138, %s139
    %p148 = scmp.eq.s32.totalorder %s39, 0
    %p149 = por %p147, %p148
    %p150 = scmp.ne.s32.totalorder %s138, %s139
    %p151 = scmp.eq.s32.totalorder %s40, 1
    %p152 = por %p150, %p151
    %p154 = scmp.ne.s32.totalorder %s139, %s153
    %p155 = scmp.eq.s32.totalorder %s40, 0
    %p156 = por %p154, %p155
    %s158 = sadd.s32 %s157, 1
    %p161 = scmp.eq.s32.totalorder %s34, 1
    %p162 = scmp.ne.s32.totalorder %s157, %s159
    %p163 = scmp.eq.s32.totalorder %s34, 0
    %p164 = por %p162, %p163
    %p165 = scmp.ne.s32.totalorder %s157, %s159
    %p166 = scmp.eq.s32.totalorder %s39, 1
    %p167 = por %p165, %p166
    %p168 = scmp.ne.s32.totalorder %s159, %s160
    %p169 = scmp.eq.s32.totalorder %s39, 0
    %p170 = por %p168, %p169
    %p171 = scmp.ne.s32.totalorder %s159, %s160
    %p172 = scmp.eq.s32.totalorder %s40, 1
    %p173 = por %p171, %p172
    %p175 = scmp.ne.s32.totalorder %s160, %s174
    %p176 = scmp.eq.s32.totalorder %s40, 0
    %p177 = por %p175, %p176
    %s179 = sadd.s32 %s178, 1
    %p182 = scmp.eq.s32.totalorder %s34, 1
    %p183 = scmp.ne.s32.totalorder %s178, %s180
    %p184 = scmp.eq.s32.totalorder %s34, 0
    %p185 = por %p183, %p184
    %p186 = scmp.ne.s32.totalorder %s178, %s180
    %p187 = scmp.eq.s32.totalorder %s39, 1
    %p188 = por %p186, %p187
    %p189 = scmp.ne.s32.totalorder %s180, %s181
    %p190 = scmp.eq.s32.totalorder %s39, 0
    %p191 = por %p189, %p190
    %p192 = scmp.ne.s32.totalorder %s180, %s181
    %p193 = scmp.eq.s32.totalorder %s40, 1
    %p194 = por %p192, %p193
    %p196 = scmp.ne.s32.totalorder %s181, %s195
    %p197 = scmp.eq.s32.totalorder %s40, 0
    %p198 = por %p196, %p197
    %s200 = sadd.s32 %s199, 1
    %p203 = scmp.eq.s32.totalorder %s34, 1
    %p204 = scmp.ne.s32.totalorder %s199, %s201
    %p205 = scmp.eq.s32.totalorder %s34, 0
    %p206 = por %p204, %p205
    %p207 = scmp.ne.s32.totalorder %s199, %s201
    %p208 = scmp.eq.s32.totalorder %s39, 1
    %p209 = por %p207, %p208
    %p210 = scmp.ne.s32.totalorder %s201, %s202
    %p211 = scmp.eq.s32.totalorder %s39, 0
    %p212 = por %p210, %p211
    %p213 = scmp.ne.s32.totalorder %s201, %s202
    %p214 = scmp.eq.s32.totalorder %s40, 1
    %p215 = por %p213, %p214
    %p217 = scmp.ne.s32.totalorder %s202, %s216
    %p218 = scmp.eq.s32.totalorder %s40, 0
    %p219 = por %p217, %p218
    %s221 = sadd.s32 %s220, 1
    %p224 = scmp.eq.s32.totalorder %s34, 1
    %p225 = scmp.ne.s32.totalorder %s220, %s222
    %p226 = scmp.eq.s32.totalorder %s34, 0
    %p227 = por %p225, %p226
    %p228 = scmp.ne.s32.totalorder %s220, %s222
    %p229 = scmp.eq.s32.totalorder %s39, 1
    %p230 = por %p228, %p229
    %p231 = scmp.ne.s32.totalorder %s222, %s223
    %p232 = scmp.eq.s32.totalorder %s39, 0
    %p233 = por %p231, %p232
    %p234 = scmp.ne.s32.totalorder %s222, %s223
    %p235 = scmp.eq.s32.totalorder %s40, 1
    %p236 = por %p234, %p235
    %p238 = scmp.ne.s32.totalorder %s223, %s237
    %p239 = scmp.eq.s32.totalorder %s40, 0
    %p240 = por %p238, %p239
    %s242 = sadd.s32 %s241, 1
    %p245 = scmp.eq.s32.totalorder %s34, 1
    %p246 = scmp.ne.s32.totalorder %s241, %s243
    %p247 = scmp.eq.s32.totalorder %s34, 0
    %p248 = por %p246, %p247
    %p249 = scmp.ne.s32.totalorder %s241, %s243
    %p250 = scmp.eq.s32.totalorder %s39, 1
    %p251 = por %p249, %p250
    %p252 = scmp.ne.s32.totalorder %s243, %s244
    %p253 = scmp.eq.s32.totalorder %s39, 0
    %p254 = por %p252, %p253
    %p255 = scmp.ne.s32.totalorder %s243, %s244
    %p256 = scmp.eq.s32.totalorder %s40, 1
    %p257 = por %p255, %p256
    %p259 = scmp.ne.s32.totalorder %s244, %s258
    %p260 = scmp.eq.s32.totalorder %s40, 0
    %p261 = por %p259, %p260
    %s263 = sadd.s32 %s262, 1
    %p266 = scmp.eq.s32.totalorder %s34, 1
    %p267 = scmp.ne.s32.totalorder %s262, %s264
    %p268 = scmp.eq.s32.totalorder %s34, 0
    %p269 = por %p267, %p268
    %p270 = scmp.ne.s32.totalorder %s262, %s264
    %p271 = scmp.eq.s32.totalorder %s39, 1
    %p272 = por %p270, %p271
    %p273 = scmp.ne.s32.totalorder %s264, %s265
    %p274 = scmp.eq.s32.totalorder %s39, 0
    %p275 = por %p273, %p274
    %p276 = scmp.ne.s32.totalorder %s264, %s265
    %p277 = scmp.eq.s32.totalorder %s40, 1
    %p278 = por %p276, %p277
    %p280 = scmp.ne.s32.totalorder %s265, %s279
    %p281 = scmp.eq.s32.totalorder %s40, 0
    %p282 = por %p280, %p281
    %s284 = sadd.s32 %s283, 1
    %p287 = scmp.eq.s32.totalorder %s34, 1
    %p288 = scmp.ne.s32.totalorder %s283, %s285
    %p289 = scmp.eq.s32.totalorder %s34, 0
    %p290 = por %p288, %p289
    %p291 = scmp.ne.s32.totalorder %s283, %s285
    %p292 = scmp.eq.s32.totalorder %s39, 1
    %p293 = por %p291, %p292
    %p294 = scmp.ne.s32.totalorder %s285, %s286
    %p295 = scmp.eq.s32.totalorder %s39, 0
    %p296 = por %p294, %p295
    %p297 = scmp.ne.s32.totalorder %s285, %s286
    %p298 = scmp.eq.s32.totalorder %s40, 1
    %p299 = por %p297, %p298
    %p301 = scmp.ne.s32.totalorder %s286, %s300
    %p302 = scmp.eq.s32.totalorder %s40, 0
    %p303 = por %p301, %p302
    %s305 = sadd.s32 %s304, 1
    %p308 = scmp.eq.s32.totalorder %s34, 1
    %p309 = scmp.ne.s32.totalorder %s304, %s306
    %p310 = scmp.eq.s32.totalorder %s34, 0
    %p311 = por %p309, %p310
    %p312 = scmp.ne.s32.totalorder %s304, %s306
    %p313 = scmp.eq.s32.totalorder %s39, 1
    %p314 = por %p312, %p313
    %p315 = scmp.ne.s32.totalorder %s306, %s307
    %p316 = scmp.eq.s32.totalorder %s39, 0
    %p317 = por %p315, %p316
    %p318 = scmp.ne.s32.totalorder %s306, %s307
    %p319 = scmp.eq.s32.totalorder %s40, 1
    %p320 = por %p318, %p319
    %p322 = scmp.ne.s32.totalorder %s307, %s321
    %p323 = scmp.eq.s32.totalorder %s40, 0
    %p324 = por %p322, %p323
    %s326 = sadd.s32 %s325, 1
    %p329 = scmp.eq.s32.totalorder %s34, 1
    %p330 = scmp.ne.s32.totalorder %s325, %s327
    %p331 = scmp.eq.s32.totalorder %s34, 0
    %p332 = por %p330, %p331
    %p333 = scmp.ne.s32.totalorder %s325, %s327
    %p334 = scmp.eq.s32.totalorder %s39, 1
    %p335 = por %p333, %p334
    %p336 = scmp.ne.s32.totalorder %s327, %s328
    %p337 = scmp.eq.s32.totalorder %s39, 0
    %p338 = por %p336, %p337
    %p339 = scmp.ne.s32.totalorder %s327, %s328
    %p340 = scmp.eq.s32.totalorder %s40, 1
    %p341 = por %p339, %p340
    %p343 = scmp.ne.s32.totalorder %s328, %s342
    %p344 = scmp.eq.s32.totalorder %s40, 0
    %p345 = por %p343, %p344
    %s347 = sadd.s32 %s346, 1
    %p350 = scmp.eq.s32.totalorder %s34, 1
    %p351 = scmp.ne.s32.totalorder %s346, %s348
    %p352 = scmp.eq.s32.totalorder %s34, 0
    %p353 = por %p351, %p352
    %p354 = scmp.ne.s32.totalorder %s346, %s348
    %p355 = scmp.eq.s32.totalorder %s39, 1
    %p356 = por %p354, %p355
    %p357 = scmp.ne.s32.totalorder %s348, %s349
    %p358 = scmp.eq.s32.totalorder %s39, 0
    %p359 = por %p357, %p358
    %p360 = scmp.ne.s32.totalorder %s348, %s349
    %p361 = scmp.eq.s32.totalorder %s40, 1
    %p362 = por %p360, %p361
    %p364 = scmp.ne.s32.totalorder %s349, %s363
    %p365 = scmp.eq.s32.totalorder %s40, 0
    %p366 = por %p364, %p365
    %s368 = sadd.s32 %s367, 1
    %p371 = scmp.eq.s32.totalorder %s34, 1
    %p372 = scmp.ne.s32.totalorder %s367, %s369
    %p373 = scmp.eq.s32.totalorder %s34, 0
    %p374 = por %p372, %p373
    %p375 = scmp.ne.s32.totalorder %s367, %s369
    %p376 = scmp.eq.s32.totalorder %s39, 1
    %p377 = por %p375, %p376
    %p378 = scmp.ne.s32.totalorder %s369, %s370
    %p379 = scmp.eq.s32.totalorder %s39, 0
    %p380 = por %p378, %p379
    %p381 = scmp.ne.s32.totalorder %s369, %s370
    %p382 = scmp.eq.s32.totalorder %s40, 1
    %p383 = por %p381, %p382
    %p385 = scmp.ne.s32.totalorder %s370, %s384
    %p386 = scmp.eq.s32.totalorder %s40, 0
    %p387 = por %p385, %p386
    %s389 = sadd.s32 %s388, 1
    %p392 = scmp.eq.s32.totalorder %s34, 1
    %p393 = scmp.ne.s32.totalorder %s388, %s390
    %p394 = scmp.eq.s32.totalorder %s34, 0
    %p395 = por %p393, %p394
    %p396 = scmp.ne.s32.totalorder %s388, %s390
    %p397 = scmp.eq.s32.totalorder %s39, 1
    %p398 = por %p396, %p397
    %p399 = scmp.ne.s32.totalorder %s390, %s391
    %p400 = scmp.eq.s32.totalorder %s39, 0
    %p401 = por %p399, %p400
    %p402 = scmp.ne.s32.totalorder %s390, %s391
    %p403 = scmp.eq.s32.totalorder %s40, 1
    %p404 = por %p402, %p403
    %p406 = scmp.ne.s32.totalorder %s391, %s405
    %p407 = scmp.eq.s32.totalorder %s40, 0
    %p408 = por %p406, %p407
    %s410 = sadd.s32 %s409, 1
    %p413 = scmp.eq.s32.totalorder %s34, 1
    %p414 = scmp.ne.s32.totalorder %s409, %s411
    %p415 = scmp.eq.s32.totalorder %s34, 0
    %p416 = por %p414, %p415
    %p417 = scmp.ne.s32.totalorder %s409, %s411
    %p418 = scmp.eq.s32.totalorder %s39, 1
    %p419 = por %p417, %p418
    %p420 = scmp.ne.s32.totalorder %s411, %s412
    %p421 = scmp.eq.s32.totalorder %s39, 0
    %p422 = por %p420, %p421
    %p423 = scmp.ne.s32.totalorder %s411, %s412
    %p424 = scmp.eq.s32.totalorder %s40, 1
    %p425 = por %p423, %p424
    %p427 = scmp.ne.s32.totalorder %s412, %s426
    %p428 = scmp.eq.s32.totalorder %s40, 0
    %p429 = por %p427, %p428
    %s431 = sadd.s32 %s430, 1
    %p434 = scmp.eq.s32.totalorder %s34, 1
    %p435 = scmp.ne.s32.totalorder %s430, %s432
    %p436 = scmp.eq.s32.totalorder %s34, 0
    %p437 = por %p435, %p436
    %p438 = scmp.ne.s32.totalorder %s430, %s432
    %p439 = scmp.eq.s32.totalorder %s39, 1
    %p440 = por %p438, %p439
    %p441 = scmp.ne.s32.totalorder %s432, %s433
    %p442 = scmp.eq.s32.totalorder %s39, 0
    %p443 = por %p441, %p442
    %p444 = scmp.ne.s32.totalorder %s432, %s433
    %p445 = scmp.eq.s32.totalorder %s40, 1
    %p446 = por %p444, %p445
    %p448 = scmp.ne.s32.totalorder %s433, %s447
    %p449 = scmp.eq.s32.totalorder %s40, 0
    %p450 = por %p448, %p449
    %s452 = sadd.s32 %s451, 1
    %p455 = scmp.eq.s32.totalorder %s34, 1
    %p456 = scmp.ne.s32.totalorder %s451, %s453
    %p457 = scmp.eq.s32.totalorder %s34, 0
    %p458 = por %p456, %p457
    %p459 = scmp.ne.s32.totalorder %s451, %s453
    %p460 = scmp.eq.s32.totalorder %s39, 1
    %p461 = por %p459, %p460
    %p462 = scmp.ne.s32.totalorder %s453, %s454
    %p463 = scmp.eq.s32.totalorder %s39, 0
    %p464 = por %p462, %p463
    %p465 = scmp.ne.s32.totalorder %s453, %s454
    %p466 = scmp.eq.s32.totalorder %s40, 1
    %p467 = por %p465, %p466
    %p469 = scmp.ne.s32.totalorder %s454, %s468
    %p470 = scmp.eq.s32.totalorder %s40, 0
    %p471 = por %p469, %p470
    %s473 = sadd.s32 %s472, 1
    %p476 = scmp.eq.s32.totalorder %s34, 1
    %p477 = scmp.ne.s32.totalorder %s472, %s474
    %p478 = scmp.eq.s32.totalorder %s34, 0
    %p479 = por %p477, %p478
    %p480 = scmp.ne.s32.totalorder %s472, %s474
    %p481 = scmp.eq.s32.totalorder %s39, 1
    %p482 = por %p480, %p481
    %p483 = scmp.ne.s32.totalorder %s474, %s475
    %p484 = scmp.eq.s32.totalorder %s39, 0
    %p485 = por %p483, %p484
    %p486 = scmp.ne.s32.totalorder %s474, %s475
    %p487 = scmp.eq.s32.totalorder %s40, 1
    %p488 = por %p486, %p487
    %p490 = scmp.ne.s32.totalorder %s475, %s489
    %p491 = scmp.eq.s32.totalorder %s40, 0
    %p492 = por %p490, %p491
    %s494 = sadd.s32 %s493, 1
    %p497 = scmp.eq.s32.totalorder %s34, 1
    %p498 = scmp.ne.s32.totalorder %s493, %s495
    %p499 = scmp.eq.s32.totalorder %s34, 0
    %p500 = por %p498, %p499
    %p501 = scmp.ne.s32.totalorder %s493, %s495
    %p502 = scmp.eq.s32.totalorder %s39, 1
    %p503 = por %p501, %p502
    %p504 = scmp.ne.s32.totalorder %s495, %s496
    %p505 = scmp.eq.s32.totalorder %s39, 0
    %p506 = por %p504, %p505
    %p507 = scmp.ne.s32.totalorder %s495, %s496
    %p508 = scmp.eq.s32.totalorder %s40, 1
    %p509 = por %p507, %p508
    %p511 = scmp.ne.s32.totalorder %s496, %s510
    %p512 = scmp.eq.s32.totalorder %s40, 0
    %p513 = por %p511, %p512
    %s515 = sadd.s32 %s514, 1
    %p518 = scmp.eq.s32.totalorder %s34, 1
    %p519 = scmp.ne.s32.totalorder %s514, %s516
    %p520 = scmp.eq.s32.totalorder %s34, 0
    %p521 = por %p519, %p520
    %p522 = scmp.ne.s32.totalorder %s514, %s516
    %p523 = scmp.eq.s32.totalorder %s39, 1
    %p524 = por %p522, %p523
    %p525 = scmp.ne.s32.totalorder %s516, %s517
    %p526 = scmp.eq.s32.totalorder %s39, 0
    %p527 = por %p525, %p526
    %p528 = scmp.ne.s32.totalorder %s516, %s517
    %p529 = scmp.eq.s32.totalorder %s40, 1
    %p530 = por %p528, %p529
    %p532 = scmp.ne.s32.totalorder %s517, %s531
    %p533 = scmp.eq.s32.totalorder %s40, 0
    %p534 = por %p532, %p533
    %s536 = sadd.s32 %s535, 1
    %p539 = scmp.eq.s32.totalorder %s34, 1
    %p540 = scmp.ne.s32.totalorder %s535, %s537
    %p541 = scmp.eq.s32.totalorder %s34, 0
    %p542 = por %p540, %p541
    %p543 = scmp.ne.s32.totalorder %s535, %s537
    %p544 = scmp.eq.s32.totalorder %s39, 1
    %p545 = por %p543, %p544
    %p546 = scmp.ne.s32.totalorder %s537, %s538
    %p547 = scmp.eq.s32.totalorder %s39, 0
    %p548 = por %p546, %p547
    %p549 = scmp.ne.s32.totalorder %s537, %s538
    %p550 = scmp.eq.s32.totalorder %s40, 1
    %p551 = por %p549, %p550
    %p553 = scmp.ne.s32.totalorder %s538, %s552
    %p554 = scmp.eq.s32.totalorder %s40, 0
    %p555 = por %p553, %p554
    %s557 = sadd.s32 %s556, 1
    %p560 = scmp.eq.s32.totalorder %s34, 1
    %p561 = scmp.ne.s32.totalorder %s556, %s558
    %p562 = scmp.eq.s32.totalorder %s34, 0
    %p563 = por %p561, %p562
    %p564 = scmp.ne.s32.totalorder %s556, %s558
    %p565 = scmp.eq.s32.totalorder %s39, 1
    %p566 = por %p564, %p565
    %p567 = scmp.ne.s32.totalorder %s558, %s559
    %p568 = scmp.eq.s32.totalorder %s39, 0
    %p569 = por %p567, %p568
    %p570 = scmp.ne.s32.totalorder %s558, %s559
    %p571 = scmp.eq.s32.totalorder %s40, 1
    %p572 = por %p570, %p571
    %p574 = scmp.ne.s32.totalorder %s559, %s573
    %p575 = scmp.eq.s32.totalorder %s40, 0
    %p576 = por %p574, %p575
    %s578 = sadd.s32 %s577, 1
    %p581 = scmp.eq.s32.totalorder %s34, 1
    %p582 = scmp.ne.s32.totalorder %s577, %s579
    %p583 = scmp.eq.s32.totalorder %s34, 0
    %p584 = por %p582, %p583
    %p585 = scmp.ne.s32.totalorder %s577, %s579
    %p586 = scmp.eq.s32.totalorder %s39, 1
    %p587 = por %p585, %p586
    %p588 = scmp.ne.s32.totalorder %s579, %s580
    %p589 = scmp.eq.s32.totalorder %s39, 0
    %p590 = por %p588, %p589
    %p591 = scmp.ne.s32.totalorder %s579, %s580
    %p592 = scmp.eq.s32.totalorder %s40, 1
    %p593 = por %p591, %p592
    %p595 = scmp.ne.s32.totalorder %s580, %s594
    %p596 = scmp.eq.s32.totalorder %s40, 0
    %p597 = por %p595, %p596
    %s599 = sadd.s32 %s598, 1
    %p602 = scmp.eq.s32.totalorder %s34, 1
    %p603 = scmp.ne.s32.totalorder %s598, %s600
    %p604 = scmp.eq.s32.totalorder %s34, 0
    %p605 = por %p603, %p604
    %p606 = scmp.ne.s32.totalorder %s598, %s600
    %p607 = scmp.eq.s32.totalorder %s39, 1
    %p608 = por %p606, %p607
    %p609 = scmp.ne.s32.totalorder %s600, %s601
    %p610 = scmp.eq.s32.totalorder %s39, 0
    %p611 = por %p609, %p610
    %p612 = scmp.ne.s32.totalorder %s600, %s601
    %p613 = scmp.eq.s32.totalorder %s40, 1
    %p614 = por %p612, %p613
    %p616 = scmp.ne.s32.totalorder %s601, %s615
    %p617 = scmp.eq.s32.totalorder %s40, 0
    %p618 = por %p616, %p617
    %s620 = sadd.s32 %s619, 1
    %p623 = scmp.eq.s32.totalorder %s34, 1
    %p624 = scmp.ne.s32.totalorder %s619, %s621
    %p625 = scmp.eq.s32.totalorder %s34, 0
    %p626 = por %p624, %p625
    %p627 = scmp.ne.s32.totalorder %s619, %s621
    %p628 = scmp.eq.s32.totalorder %s39, 1
    %p629 = por %p627, %p628
    %p630 = scmp.ne.s32.totalorder %s621, %s622
    %p631 = scmp.eq.s32.totalorder %s39, 0
    %p632 = por %p630, %p631
    %p633 = scmp.ne.s32.totalorder %s621, %s622
    %p634 = scmp.eq.s32.totalorder %s40, 1
    %p635 = por %p633, %p634
    %p637 = scmp.ne.s32.totalorder %s622, %s636
    %p638 = scmp.eq.s32.totalorder %s40, 0
    %p639 = por %p637, %p638
    %s640 = ssub.s32 %s34, %s41
    %p641 = scmp.eq.s32.totalorder %s640, 0
    %s643 = sadd.s32 %s642, 1
    %s644 = scalar_select %p641, %s642, %s643
    %p647 = pneg %p641
    %p648 = scmp.eq.s32.totalorder %s34, 1
    %p649 = por %p647, %p648
    %p650 = scmp.ne.s32.totalorder %s642, %s645
    %p651 = scmp.eq.s32.totalorder %s34, 0
    %p652 = por %p650, %p651
    %p653 = scmp.ne.s32.totalorder %s642, %s645
    %p654 = scmp.eq.s32.totalorder %s39, 1
    %p655 = por %p653, %p654
    %p656 = scmp.ne.s32.totalorder %s645, %s646
    %p657 = scmp.eq.s32.totalorder %s39, 0
    %p658 = por %p656, %p657
    %p659 = scmp.ne.s32.totalorder %s645, %s646
    %p660 = scmp.eq.s32.totalorder %s40, 1
    %p661 = por %p659, %p660
    %p663 = scmp.ne.s32.totalorder %s646, %s662
    %p664 = scmp.eq.s32.totalorder %s40, 0
    %p665 = por %p663, %p664
    %p666 = scmp.le.s32.totalorder 1, %s34
    %p667 = scmp.lt.s32.totalorder %s34, 3
    %p668 = pnand %p666, %p667
    %p669 = pneg %p668
    // Predicated region
    $region9: #{transformer_decoder.4} parent=5 // pred_check
      _
    $region10: #{transformer_decoder.4} parent=5 // pred_check_branch
      %671 = sbr.rel (%p668) target = $region12
    $region11: #{transformer_decoder.4} parent=5 // pred_region
      %s672 = ssub.s32 %s34, 1
      // Predicated region
      $region13: #{transformer_decoder.4} parent=11 // pred_check
        %p673 = pneg %p107
      $region14: #{transformer_decoder.4} parent=11 // pred_check_branch
        %675 = sbr.rel (%p673) target = $region16
      $region15: #{transformer_decoder.4} parent=11 // pred_region
        _
      $region16: #{transformer_decoder.4} parent=11 // pred_fallthru
        _
      // Predicated region
      $region17: #{transformer_decoder.4} parent=11 // pred_check
        %p676 = pneg %p128
      $region18: #{transformer_decoder.4} parent=11 // pred_check_branch
        %678 = sbr.rel (%p676) target = $region20
      $region19: #{transformer_decoder.4} parent=11 // pred_region
        _
      $region20: #{transformer_decoder.4} parent=11 // pred_fallthru
        _
      // Predicated region
      $region21: #{transformer_decoder.4} parent=11 // pred_check
        %p679 = pneg %p149
      $region22: #{transformer_decoder.4} parent=11 // pred_check_branch
        %681 = sbr.rel (%p679) target = $region24
      $region23: #{transformer_decoder.4} parent=11 // pred_region
        _
      $region24: #{transformer_decoder.4} parent=11 // pred_fallthru
        _
      // Predicated region
      $region25: #{transformer_decoder.4} parent=11 // pred_check
        %p682 = pneg %p170
      $region26: #{transformer_decoder.4} parent=11 // pred_check_branch
        %684 = sbr.rel (%p682) target = $region28
      $region27: #{transformer_decoder.4} parent=11 // pred_region
        _
      $region28: #{transformer_decoder.4} parent=11 // pred_fallthru
        _
      // Predicated region
      $region29: #{transformer_decoder.4} parent=11 // pred_check
        %p685 = pneg %p191
      $region30: #{transformer_decoder.4} parent=11 // pred_check_branch
        %687 = sbr.rel (%p685) target = $region32
      $region31: #{transformer_decoder.4} parent=11 // pred_region
        _
      $region32: #{transformer_decoder.4} parent=11 // pred_fallthru
        _
      // Predicated region
      $region33: #{transformer_decoder.4} parent=11 // pred_check
        %p688 = pneg %p212
      $region34: #{transformer_decoder.4} parent=11 // pred_check_branch
        %690 = sbr.rel (%p688) target = $region36
      $region35: #{transformer_decoder.4} parent=11 // pred_region
        _
      $region36: #{transformer_decoder.4} parent=11 // pred_fallthru
        _
      // Predicated region
      $region37: #{transformer_decoder.4} parent=11 // pred_check
        %p691 = pneg %p233
      $region38: #{transformer_decoder.4} parent=11 // pred_check_branch
        %693 = sbr.rel (%p691) target = $region40
      $region39: #{transformer_decoder.4} parent=11 // pred_region
        _
      $region40: #{transformer_decoder.4} parent=11 // pred_fallthru
        _
      // Predicated region
      $region41: #{transformer_decoder.4} parent=11 // pred_check
        %p694 = pneg %p254
      $region42: #{transformer_decoder.4} parent=11 // pred_check_branch
        %696 = sbr.rel (%p694) target = $region44
      $region43: #{transformer_decoder.4} parent=11 // pred_region
        _
      $region44: #{transformer_decoder.4} parent=11 // pred_fallthru
        _
      // Predicated region
      $region45: #{transformer_decoder.4} parent=11 // pred_check
        %p697 = pneg %p275
      $region46: #{transformer_decoder.4} parent=11 // pred_check_branch
        %699 = sbr.rel (%p697) target = $region48
      $region47: #{transformer_decoder.4} parent=11 // pred_region
        _
      $region48: #{transformer_decoder.4} parent=11 // pred_fallthru
        _
      // Predicated region
      $region49: #{transformer_decoder.4} parent=11 // pred_check
        %p700 = pneg %p296
      $region50: #{transformer_decoder.4} parent=11 // pred_check_branch
        %702 = sbr.rel (%p700) target = $region52
      $region51: #{transformer_decoder.4} parent=11 // pred_region
        _
      $region52: #{transformer_decoder.4} parent=11 // pred_fallthru
        _
      // Predicated region
      $region53: #{transformer_decoder.4} parent=11 // pred_check
        %p703 = pneg %p317
      $region54: #{transformer_decoder.4} parent=11 // pred_check_branch
        %705 = sbr.rel (%p703) target = $region56
      $region55: #{transformer_decoder.4} parent=11 // pred_region
        _
      $region56: #{transformer_decoder.4} parent=11 // pred_fallthru
        _
      // Predicated region
      $region57: #{transformer_decoder.4} parent=11 // pred_check
        %p706 = pneg %p338
      $region58: #{transformer_decoder.4} parent=11 // pred_check_branch
        %708 = sbr.rel (%p706) target = $region60
      $region59: #{transformer_decoder.4} parent=11 // pred_region
        _
      $region60: #{transformer_decoder.4} parent=11 // pred_fallthru
        _
      // Predicated region
      $region61: #{transformer_decoder.4} parent=11 // pred_check
        %p709 = pneg %p359
      $region62: #{transformer_decoder.4} parent=11 // pred_check_branch
        %711 = sbr.rel (%p709) target = $region64
      $region63: #{transformer_decoder.4} parent=11 // pred_region
        _
      $region64: #{transformer_decoder.4} parent=11 // pred_fallthru
        _
      // Predicated region
      $region65: #{transformer_decoder.4} parent=11 // pred_check
        %p712 = pneg %p380
      $region66: #{transformer_decoder.4} parent=11 // pred_check_branch
        %714 = sbr.rel (%p712) target = $region68
      $region67: #{transformer_decoder.4} parent=11 // pred_region
        _
      $region68: #{transformer_decoder.4} parent=11 // pred_fallthru
        _
      // Predicated region
      $region69: #{transformer_decoder.4} parent=11 // pred_check
        %p715 = pneg %p401
      $region70: #{transformer_decoder.4} parent=11 // pred_check_branch
        %717 = sbr.rel (%p715) target = $region72
      $region71: #{transformer_decoder.4} parent=11 // pred_region
        _
      $region72: #{transformer_decoder.4} parent=11 // pred_fallthru
        _
      // Predicated region
      $region73: #{transformer_decoder.4} parent=11 // pred_check
        %p718 = pneg %p422
      $region74: #{transformer_decoder.4} parent=11 // pred_check_branch
        %720 = sbr.rel (%p718) target = $region76
      $region75: #{transformer_decoder.4} parent=11 // pred_region
        _
      $region76: #{transformer_decoder.4} parent=11 // pred_fallthru
        _
      // Predicated region
      $region77: #{transformer_decoder.4} parent=11 // pred_check
        %p721 = pneg %p443
      $region78: #{transformer_decoder.4} parent=11 // pred_check_branch
        %723 = sbr.rel (%p721) target = $region80
      $region79: #{transformer_decoder.4} parent=11 // pred_region
        _
      $region80: #{transformer_decoder.4} parent=11 // pred_fallthru
        _
      // Predicated region
      $region81: #{transformer_decoder.4} parent=11 // pred_check
        %p724 = pneg %p464
      $region82: #{transformer_decoder.4} parent=11 // pred_check_branch
        %726 = sbr.rel (%p724) target = $region84
      $region83: #{transformer_decoder.4} parent=11 // pred_region
        _
      $region84: #{transformer_decoder.4} parent=11 // pred_fallthru
        _
      // Predicated region
      $region85: #{transformer_decoder.4} parent=11 // pred_check
        %p727 = pneg %p485
      $region86: #{transformer_decoder.4} parent=11 // pred_check_branch
        %729 = sbr.rel (%p727) target = $region88
      $region87: #{transformer_decoder.4} parent=11 // pred_region
        _
      $region88: #{transformer_decoder.4} parent=11 // pred_fallthru
        _
      // Predicated region
      $region89: #{transformer_decoder.4} parent=11 // pred_check
        %p730 = pneg %p506
      $region90: #{transformer_decoder.4} parent=11 // pred_check_branch
        %732 = sbr.rel (%p730) target = $region92
      $region91: #{transformer_decoder.4} parent=11 // pred_region
        _
      $region92: #{transformer_decoder.4} parent=11 // pred_fallthru
        _
      // Predicated region
      $region93: #{transformer_decoder.4} parent=11 // pred_check
        %p733 = pneg %p527
      $region94: #{transformer_decoder.4} parent=11 // pred_check_branch
        %735 = sbr.rel (%p733) target = $region96
      $region95: #{transformer_decoder.4} parent=11 // pred_region
        _
      $region96: #{transformer_decoder.4} parent=11 // pred_fallthru
        _
      // Predicated region
      $region97: #{transformer_decoder.4} parent=11 // pred_check
        %p736 = pneg %p548
      $region98: #{transformer_decoder.4} parent=11 // pred_check_branch
        %738 = sbr.rel (%p736) target = $region100
      $region99: #{transformer_decoder.4} parent=11 // pred_region
        _
      $region100: #{transformer_decoder.4} parent=11 // pred_fallthru
        _
      // Predicated region
      $region101: #{transformer_decoder.4} parent=11 // pred_check
        %p739 = pneg %p569
      $region102: #{transformer_decoder.4} parent=11 // pred_check_branch
        %741 = sbr.rel (%p739) target = $region104
      $region103: #{transformer_decoder.4} parent=11 // pred_region
        _
      $region104: #{transformer_decoder.4} parent=11 // pred_fallthru
        _
      // Predicated region
      $region105: #{transformer_decoder.4} parent=11 // pred_check
        %p742 = pneg %p590
      $region106: #{transformer_decoder.4} parent=11 // pred_check_branch
        %744 = sbr.rel (%p742) target = $region108
      $region107: #{transformer_decoder.4} parent=11 // pred_region
        _
      $region108: #{transformer_decoder.4} parent=11 // pred_fallthru
        _
      // Predicated region
      $region109: #{transformer_decoder.4} parent=11 // pred_check
        %p745 = pneg %p611
      $region110: #{transformer_decoder.4} parent=11 // pred_check_branch
        %747 = sbr.rel (%p745) target = $region112
      $region111: #{transformer_decoder.4} parent=11 // pred_region
        _
      $region112: #{transformer_decoder.4} parent=11 // pred_fallthru
        _
      // Predicated region
      $region113: #{transformer_decoder.4} parent=11 // pred_check
        %p748 = pneg %p632
      $region114: #{transformer_decoder.4} parent=11 // pred_check_branch
        %750 = sbr.rel (%p748) target = $region116
      $region115: #{transformer_decoder.4} parent=11 // pred_region
        _
      $region116: #{transformer_decoder.4} parent=11 // pred_fallthru
        _
    $region12: #{transformer_decoder.4} parent=5 // pred_fallthru
      _
    %p751 = scmp.lt.s32.totalorder %s34, 2
    // Predicated region
    $region117: #{transformer_decoder.4} parent=5 // pred_check
      %p752 = pneg %p751
    $region118: #{transformer_decoder.4} parent=5 // pred_check_branch
      %754 = sbr.rel (%p752) target = $region120
    $region119: #{transformer_decoder.4} parent=5 // pred_region
      // Predicated region
      $region121: #{transformer_decoder.4} parent=119 // pred_check
        %p755 = pneg %p54
      $region122: #{transformer_decoder.4} parent=119 // pred_check_branch
        %757 = sbr.rel (%p755) target = $region124
      $region123: #{transformer_decoder.4} parent=119 // pred_region
        %p758 = scmp.lt.s32.totalorder %s34, 1
        %s759 = scalar_select %p758, %s34, 1
        %s760 = smul.addr %s759, 8
        %s761 = scalar_lea.vmem %s0, %s760
      $region124: #{transformer_decoder.4} parent=119 // pred_fallthru
        _
      // Predicated region
      $region125: #{transformer_decoder.4} parent=119 // pred_check
        %p762 = pneg %p80
      $region126: #{transformer_decoder.4} parent=119 // pred_check_branch
        %764 = sbr.rel (%p762) target = $region128
      $region127: #{transformer_decoder.4} parent=119 // pred_region
        %p765 = scmp.lt.s32.totalorder %s34, 1
        %s766 = scalar_select %p765, %s34, 1
        %s767 = smul.addr %s766, 8
        %s768 = scalar_lea.vmem %s1, %s767
      $region128: #{transformer_decoder.4} parent=119 // pred_fallthru
        _
    $region120: #{transformer_decoder.4} parent=5 // pred_fallthru
      _
    %p769 = scmp.le.s32.totalorder 1, %s34
    %p770 = scmp.lt.s32.totalorder %s34, 3
    %p771 = pnand %p769, %p770
    %p772 = pneg %p771
    // Predicated region
    $region129: #{transformer_decoder.4} parent=5 // pred_check
      _
    $region130: #{transformer_decoder.4} parent=5 // pred_check_branch
      %774 = sbr.rel (%p771) target = $region132
    $region131: #{transformer_decoder.4} parent=5 // pred_region
      %s775 = ssub.s32 %s34, 1
      %p776 = scmp.lt.s32.totalorder %s39, 1
      %s777 = scalar_select %p776, %s39, 1
      %s778 = smul.addr %s777, 8
      %s779 = scalar_lea.vmem %s0, %s778
      %p780 = pneg %p60
      %p781 = pneg %p57
      %p782 = scmp.lt.s32.totalorder %s39, 1
      %s783 = scalar_select %p782, %s39, 1
      %s784 = smul.addr %s783, 8
      %s785 = scalar_lea.vmem %s1, %s784
      %p786 = pneg %p86
      %p787 = pneg %p83
      %p788 = pneg %p107
      %p789 = pneg %p104
      %p790 = pneg %p128
      %p791 = pneg %p125
      %p792 = pneg %p149
      %p793 = pneg %p146
      %p794 = pneg %p170
      %p795 = pneg %p167
      %p796 = pneg %p191
      %p797 = pneg %p188
      %p798 = pneg %p212
      %p799 = pneg %p209
      %p800 = pneg %p233
      %p801 = pneg %p230
      %p802 = pneg %p254
      %p803 = pneg %p251
      %p804 = pneg %p275
      %p805 = pneg %p272
      %p806 = pneg %p296
      %p807 = pneg %p293
      %p808 = pneg %p317
      %p809 = pneg %p314
      %p810 = pneg %p338
      %p811 = pneg %p335
      %p812 = pneg %p359
      %p813 = pneg %p356
      %p814 = pneg %p380
      %p815 = pneg %p377
      %p816 = pneg %p401
      %p817 = pneg %p398
      %p818 = pneg %p422
      %p819 = pneg %p419
      %p820 = pneg %p443
      %p821 = pneg %p440
      %p822 = pneg %p464
      %p823 = pneg %p461
      %p824 = pneg %p485
      %p825 = pneg %p482
      %p826 = pneg %p506
      %p827 = pneg %p503
      %p828 = pneg %p527
      %p829 = pneg %p524
      %p830 = pneg %p548
      %p831 = pneg %p545
      %p832 = pneg %p569
      %p833 = pneg %p566
      %p834 = pneg %p590
      %p835 = pneg %p587
      %p836 = pneg %p611
      %p837 = pneg %p608
      %p838 = pneg %p632
      %p839 = pneg %p629
      %p840 = pneg %p658
      %p841 = pneg %p655
      %p842 = scmp.lt.s32.totalorder %s39, 1
      %s843 = scalar_select %p842, %s39, 1
      %s844 = smul.addr %s843, 8
      %s845 = scalar_lea.vmem %s28, %s844
      %p846 = scmp.lt.s32.totalorder %s39, 1
      %s847 = scalar_select %p846, %s39, 1
      %s848 = smul.addr %s847, 8
      %s849 = scalar_lea.vmem %s0, %s848
      %p850 = scmp.lt.s32.totalorder %s39, 1
      %s851 = scalar_select %p850, %s39, 1
      %s852 = smul.addr %s851, 8
      %s853 = scalar_lea.vmem %s1, %s852
      %p854 = scmp.lt.s32.totalorder %s39, 1
      %s855 = scalar_select %p854, %s39, 1
      %s856 = smul.addr %s855, 8
      %s857 = scalar_lea.vmem %s28, %s856
      %v858 = vld [vmem:[%s849] sm:$0xff]
      %v859 = vld [vmem:[%s853] sm:$0xff]
      %v860 = vld [vmem:[%s2] sm:$0xff]
      %v861 = vld [vmem:[%s2 + $0x8] sm:$0xff]
      %v862 = vld [vmem:[%s2 + $0x10] sm:$0xff]
      %v863 = vld [vmem:[%s2 + $0x18] sm:$0xff]
      %v864 = vld [vmem:[%s3] sm:$0x1]
      %v866 = vlaneseq
      %v867 = vshrl.u32 %v866, 7
      %v868 = vsub.s32 0, %v867
      %v869 = vrot.slane %v864, %v868
      %vm871 = vcmask 261120
      %v873 = vsel %vm871, %v858, 0
      %875 = vmatprep.subr.mxu0 0.0
      %876 = vmatpush1.msra.mxu0 %v860
      %877 = vmatprep.subr.mxu0 0.0
      %878 = vmatpush1.msra.mxu0 %v861
      %879 = vmatprep.subr.mxu0 0.0
      %880 = vmatpush1.msra.mxu0 %v862
      %881 = vmatprep.subr.mxu0 0.0
      %882 = vmatpush1.msra.mxu0 %v863
      %883 = vmatprep.subr.mxu0 0.0
      %884 = vmatpush1.msra.mxu0 0.0
      %885 = vmatprep.subr.mxu0 0.0
      %886 = vmatpush1.msra.mxu0 0.0
      %887 = vmatprep.subr.mxu0 0.0
      %888 = vmatpush1.msra.mxu0 0.0
      %889 = vmatprep.subr.mxu0 0.0
      %890 = vmatpush1.msra.mxu0 0.0
      %891 = vmatprep.subr.mxu0 0.0
      %892 = vmatpush1.msra.mxu0 0.0
      %893 = vmatprep.subr.mxu0 0.0
      %894 = vmatpush1.msra.mxu0 0.0
      %895 = vmatprep.subr.mxu0 0.0
      %896 = vmatpush1.msra.mxu0 0.0
      %897 = vmatprep.subr.mxu0 0.0
      %898 = vmatpush1.msra.mxu0 0.0
      %899 = vmatprep.subr.mxu0 0.0
      %900 = vmatpush1.msra.mxu0 0.0
      %901 = vmatprep.subr.mxu0 0.0
      %902 = vmatpush1.msra.mxu0 0.0
      %903 = vmatprep.subr.mxu0 0.0
      %904 = vmatpush1.msra.mxu0 0.0
      %905 = vmatprep.subr.mxu0 0.0
      %906 = vmatpush1.msra.mxu0 0.0
      %907 = vmatprep.subr.mxu0 0.0
      %908 = vmatpush1.msra.mxu0 0.0
      %909 = vmatprep.subr.mxu0 0.0
      %910 = vmatpush1.msra.mxu0 0.0
      %911 = vmatprep.subr.mxu0 0.0
      %912 = vmatpush1.msra.mxu0 0.0
      %913 = vmatprep.subr.mxu0 0.0
      %914 = vmatpush1.msra.mxu0 0.0
      %915 = vmatprep.subr.mxu0 0.0
      %916 = vmatpush1.msra.mxu0 0.0
      %917 = vmatprep.subr.mxu0 0.0
      %918 = vmatpush1.msra.mxu0 0.0
      %919 = vmatprep.subr.mxu0 0.0
      %920 = vmatpush1.msra.mxu0 0.0
      %921 = vmatprep.subr.mxu0 0.0
      %922 = vmatpush1.msra.mxu0 0.0
      %923 = vmatprep.subr.mxu0 0.0
      %924 = vmatpush1.msra.mxu0 0.0
      %925 = vmatprep.subr.mxu0 0.0
      %926 = vmatpush1.msra.mxu0 0.0
      %927 = vmatprep.subr.mxu0 0.0
      %928 = vmatpush1.msra.mxu0 0.0
      %929 = vmatprep.subr.mxu0 0.0
      %930 = vmatpush1.msra.mxu0 0.0
      %931 = vmatprep.subr.mxu0 0.0
      %932 = vmatpush1.msra.mxu0 0.0
      %933 = vmatprep.subr.mxu0 0.0
      %934 = vmatpush1.msra.mxu0 0.0
      %935 = vmatprep.subr.mxu0 0.0
      %936 = vmatpush1.msra.mxu0 0.0
      %937 = vmatprep.subr.mxu0 0.0
      %938 = vmatpush1.msra.mxu0 0.0
      %939 = vmatprep.mubr.f32.mxu0 0.0
      %940 = vmatmul.mubr.f32.gmra.mrb[0].mxu0 %v873
      %v941 = vpop.f32.mrb[0].mxu0
      %v942 = vadd.f32 %v869, %v941
      %v943 = vpop.f32.mrb[0].mxu0
      %944 = vdwg.mxu0
      %v945 = vld [vmem:[%s4] sm:$0xff]
      %v946 = vld [vmem:[%s4 + $0x8] sm:$0xff]
      %v947 = vld [vmem:[%s4 + $0x10] sm:$0xff]
      %v948 = vld [vmem:[%s4 + $0x18] sm:$0xff]
      %v949 = vld [vmem:[%s5] sm:$0x1]
      %v951 = vlaneseq
      %v952 = vshrl.u32 %v951, 7
      %v953 = vsub.s32 0, %v952
      %v954 = vrot.slane %v949, %v953
      %956 = vmatprep.subr.mxu0 0.0
      %957 = vmatpush1.msra.mxu0 %v945
      %958 = vmatprep.subr.mxu0 0.0
      %959 = vmatpush1.msra.mxu0 %v946
      %960 = vmatprep.subr.mxu0 0.0
      %961 = vmatpush1.msra.mxu0 %v947
      %962 = vmatprep.subr.mxu0 0.0
      %963 = vmatpush1.msra.mxu0 %v948
      %964 = vmatprep.subr.mxu0 0.0
      %965 = vmatpush1.msra.mxu0 0.0
      %966 = vmatprep.subr.mxu0 0.0
      %967 = vmatpush1.msra.mxu0 0.0
      %968 = vmatprep.subr.mxu0 0.0
      %969 = vmatpush1.msra.mxu0 0.0
      %970 = vmatprep.subr.mxu0 0.0
      %971 = vmatpush1.msra.mxu0 0.0
      %972 = vmatprep.subr.mxu0 0.0
      %973 = vmatpush1.msra.mxu0 0.0
      %974 = vmatprep.subr.mxu0 0.0
      %975 = vmatpush1.msra.mxu0 0.0
      %976 = vmatprep.subr.mxu0 0.0
      %977 = vmatpush1.msra.mxu0 0.0
      %978 = vmatprep.subr.mxu0 0.0
      %979 = vmatpush1.msra.mxu0 0.0
      %980 = vmatprep.subr.mxu0 0.0
      %981 = vmatpush1.msra.mxu0 0.0
      %982 = vmatprep.subr.mxu0 0.0
      %983 = vmatpush1.msra.mxu0 0.0
      %984 = vmatprep.subr.mxu0 0.0
      %985 = vmatpush1.msra.mxu0 0.0
      %986 = vmatprep.subr.mxu0 0.0
      %987 = vmatpush1.msra.mxu0 0.0
      %988 = vmatprep.subr.mxu0 0.0
      %989 = vmatpush1.msra.mxu0 0.0
      %990 = vmatprep.subr.mxu0 0.0
      %991 = vmatpush1.msra.mxu0 0.0
      %992 = vmatprep.subr.mxu0 0.0
      %993 = vmatpush1.msra.mxu0 0.0
      %994 = vmatprep.subr.mxu0 0.0
      %995 = vmatpush1.msra.mxu0 0.0
      %996 = vmatprep.subr.mxu0 0.0
      %997 = vmatpush1.msra.mxu0 0.0
      %998 = vmatprep.subr.mxu0 0.0
      %999 = vmatpush1.msra.mxu0 0.0
      %1000 = vmatprep.subr.mxu0 0.0
      %1001 = vmatpush1.msra.mxu0 0.0
      %1002 = vmatprep.subr.mxu0 0.0
      %1003 = vmatpush1.msra.mxu0 0.0
      %1004 = vmatprep.subr.mxu0 0.0
      %1005 = vmatpush1.msra.mxu0 0.0
      %1006 = vmatprep.subr.mxu0 0.0
      %1007 = vmatpush1.msra.mxu0 0.0
      %1008 = vmatprep.subr.mxu0 0.0
      %1009 = vmatpush1.msra.mxu0 0.0
      %1010 = vmatprep.subr.mxu0 0.0
      %1011 = vmatpush1.msra.mxu0 0.0
      %1012 = vmatprep.subr.mxu0 0.0
      %1013 = vmatpush1.msra.mxu0 0.0
      %1014 = vmatprep.subr.mxu0 0.0
      %1015 = vmatpush1.msra.mxu0 0.0
      %1016 = vmatprep.subr.mxu0 0.0
      %1017 = vmatpush1.msra.mxu0 0.0
      %1018 = vmatprep.subr.mxu0 0.0
      %1019 = vmatpush1.msra.mxu0 0.0
      %1020 = vmatprep.mubr.f32.mxu0 0.0
      %1021 = vmatmul.mubr.f32.gmra.mrb[0].mxu0 %v873
      %v1022 = vpop.f32.mrb[0].mxu0
      %v1023 = vadd.f32 %v954, %v1022
      %v1024 = vpop.f32.mrb[0].mxu0
      %1025 = vdwg.mxu0
      %v1026 = vld [vmem:[%s6] sm:$0xff]
      %v1027 = vld [vmem:[%s6 + $0x8] sm:$0xff]
      %v1028 = vld [vmem:[%s6 + $0x10] sm:$0xff]
      %v1029 = vld [vmem:[%s6 + $0x18] sm:$0xff]
      %v1030 = vld [vmem:[%s7] sm:$0x1]
      %v1032 = vlaneseq
      %v1033 = vshrl.u32 %v1032, 7
      %v1034 = vsub.s32 0, %v1033
      %v1035 = vrot.slane %v1030, %v1034
      %1037 = vmatprep.subr.mxu0 0.0
      %1038 = vmatpush1.msra.mxu0 %v1026
      %1039 = vmatprep.subr.mxu0 0.0
      %1040 = vmatpush1.msra.mxu0 %v1027
      %1041 = vmatprep.subr.mxu0 0.0
      %1042 = vmatpush1.msra.mxu0 %v1028
      %1043 = vmatprep.subr.mxu0 0.0
      %1044 = vmatpush1.msra.mxu0 %v1029
      %1045 = vmatprep.subr.mxu0 0.0
      %1046 = vmatpush1.msra.mxu0 0.0
      %1047 = vmatprep.subr.mxu0 0.0
      %1048 = vmatpush1.msra.mxu0 0.0
      %1049 = vmatprep.subr.mxu0 0.0
      %1050 = vmatpush1.msra.mxu0 0.0
      %1051 = vmatprep.subr.mxu0 0.0
      %1052 = vmatpush1.msra.mxu0 0.0
      %1053 = vmatprep.subr.mxu0 0.0
      %1054 = vmatpush1.msra.mxu0 0.0
      %1055 = vmatprep.subr.mxu0 0.0
      %1056 = vmatpush1.msra.mxu0 0.0
      %1057 = vmatprep.subr.mxu0 0.0
      %1058 = vmatpush1.msra.mxu0 0.0
      %1059 = vmatprep.subr.mxu0 0.0
      %1060 = vmatpush1.msra.mxu0 0.0
      %1061 = vmatprep.subr.mxu0 0.0
      %1062 = vmatpush1.msra.mxu0 0.0
      %1063 = vmatprep.subr.mxu0 0.0
      %1064 = vmatpush1.msra.mxu0 0.0
      %1065 = vmatprep.subr.mxu0 0.0
      %1066 = vmatpush1.msra.mxu0 0.0
      %1067 = vmatprep.subr.mxu0 0.0
      %1068 = vmatpush1.msra.mxu0 0.0
      %1069 = vmatprep.subr.mxu0 0.0
      %1070 = vmatpush1.msra.mxu0 0.0
      %1071 = vmatprep.subr.mxu0 0.0
      %1072 = vmatpush1.msra.mxu0 0.0
      %1073 = vmatprep.subr.mxu0 0.0
      %1074 = vmatpush1.msra.mxu0 0.0
      %1075 = vmatprep.subr.mxu0 0.0
      %1076 = vmatpush1.msra.mxu0 0.0
      %1077 = vmatprep.subr.mxu0 0.0
      %1078 = vmatpush1.msra.mxu0 0.0
      %1079 = vmatprep.subr.mxu0 0.0
      %1080 = vmatpush1.msra.mxu0 0.0
      %1081 = vmatprep.subr.mxu0 0.0
      %1082 = vmatpush1.msra.mxu0 0.0
      %1083 = vmatprep.subr.mxu0 0.0
      %1084 = vmatpush1.msra.mxu0 0.0
      %1085 = vmatprep.subr.mxu0 0.0
      %1086 = vmatpush1.msra.mxu0 0.0
      %1087 = vmatprep.subr.mxu0 0.0
      %1088 = vmatpush1.msra.mxu0 0.0
      %1089 = vmatprep.subr.mxu0 0.0
      %1090 = vmatpush1.msra.mxu0 0.0
      %1091 = vmatprep.subr.mxu0 0.0
      %1092 = vmatpush1.msra.mxu0 0.0
      %1093 = vmatprep.subr.mxu0 0.0
      %1094 = vmatpush1.msra.mxu0 0.0
      %1095 = vmatprep.subr.mxu0 0.0
      %1096 = vmatpush1.msra.mxu0 0.0
      %1097 = vmatprep.subr.mxu0 0.0
      %1098 = vmatpush1.msra.mxu0 0.0
      %1099 = vmatprep.subr.mxu0 0.0
      %1100 = vmatpush1.msra.mxu0 0.0
      %1101 = vmatprep.mubr.f32.mxu0 0.0
      %1102 = vmatmul.mubr.f32.gmra.mrb[0].mxu0 %v873
      %v1103 = vpop.f32.mrb[0].mxu0
      %v1104 = vadd.f32 %v1035, %v1103
      %v1105 = vpop.f32.mrb[0].mxu0
      %1106 = vdwg.mxu0
      %v1107 = vlaneseq
      %v1108 = vand.u32 %v1107, 127
      %vm1109 = vcmp.ge.s32.totalorder %v1108, 0
      %vm1110 = vcmp.lt.s32.totalorder %v1108, 8
      %vm1111 = vmand %vm1109, %vm1110
      %v1112 = vsel %vm1111, 1, 0
      %v1113 = vcvt.s32.f32 %v1112
      %v1114 = vmul.f32 %v942, %v1113
      %v1116 = vsel %vm871, %v1114, 0
      %v1119 = vsel %vm871, %v1023, 0
      %1121 = vmatprep.subr.mxu0 0.0
      %1122 = vmatpush1.xpose.msra.mxu0 %v1119
      %1123 = vmatprep.subr.mxu0 0.0
      %1124 = vmatpush1.xpose.msra.mxu0 0.0
      %1125 = vmatprep.subr.mxu0 0.0
      %1126 = vmatpush1.xpose.msra.mxu0 0.0
      %1127 = vmatprep.subr.mxu0 0.0
      %1128 = vmatpush1.xpose.msra.mxu0 0.0
      %1129 = vmatprep.subr.mxu0 0.0
      %1130 = vmatpush1.xpose.msra.mxu0 0.0
      %1131 = vmatprep.subr.mxu0 0.0
      %1132 = vmatpush1.xpose.msra.mxu0 0.0
      %1133 = vmatprep.subr.mxu0 0.0
      %1134 = vmatpush1.xpose.msra.mxu0 0.0
      %1135 = vmatprep.subr.mxu0 0.0
      %1136 = vmatpush1.xpose.msra.mxu0 0.0
      %1137 = vmatprep.subr.mxu0 0.0
      %1138 = vmatpush1.xpose.msra.mxu0 0.0
      %1139 = vmatprep.subr.mxu0 0.0
      %1140 = vmatpush1.xpose.msra.mxu0 0.0
      %1141 = vmatprep.subr.mxu0 0.0
      %1142 = vmatpush1.xpose.msra.mxu0 0.0
      %1143 = vmatprep.subr.mxu0 0.0
      %1144 = vmatpush1.xpose.msra.mxu0 0.0
      %1145 = vmatprep.subr.mxu0 0.0
      %1146 = vmatpush1.xpose.msra.mxu0 0.0
      %1147 = vmatprep.subr.mxu0 0.0
      %1148 = vmatpush1.xpose.msra.mxu0 0.0
      %1149 = vmatprep.subr.mxu0 0.0
      %1150 = vmatpush1.xpose.msra.mxu0 0.0
      %1151 = vmatprep.subr.mxu0 0.0
      %1152 = vmatpush1.xpose.msra.mxu0 0.0
      %1153 = vmatprep.subr.mxu0 0.0
      %1154 = vmatpush1.xpose.msra.mxu0 0.0
      %1155 = vmatprep.subr.mxu0 0.0
      %1156 = vmatpush1.xpose.msra.mxu0 0.0
      %1157 = vmatprep.subr.mxu0 0.0
      %1158 = vmatpush1.xpose.msra.mxu0 0.0
      %1159 = vmatprep.subr.mxu0 0.0
      %1160 = vmatpush1.xpose.msra.mxu0 0.0
      %1161 = vmatprep.subr.mxu0 0.0
      %1162 = vmatpush1.xpose.msra.mxu0 0.0
      %1163 = vmatprep.subr.mxu0 0.0
      %1164 = vmatpush1.xpose.msra.mxu0 0.0
      %1165 = vmatprep.subr.mxu0 0.0
      %1166 = vmatpush1.xpose.msra.mxu0 0.0
      %1167 = vmatprep.subr.mxu0 0.0
      %1168 = vmatpush1.xpose.msra.mxu0 0.0
      %1169 = vmatprep.subr.mxu0 0.0
      %1170 = vmatpush1.xpose.msra.mxu0 0.0
      %1171 = vmatprep.subr.mxu0 0.0
      %1172 = vmatpush1.xpose.msra.mxu0 0.0
      %1173 = vmatprep.subr.mxu0 0.0
      %1174 = vmatpush1.xpose.msra.mxu0 0.0
      %1175 = vmatprep.subr.mxu0 0.0
      %1176 = vmatpush1.xpose.msra.mxu0 0.0
      %1177 = vmatprep.subr.mxu0 0.0
      %1178 = vmatpush1.xpose.msra.mxu0 0.0
      %1179 = vmatprep.subr.mxu0 0.0
      %1180 = vmatpush1.xpose.msra.mxu0 0.0
      %1181 = vmatprep.subr.mxu0 0.0
      %1182 = vmatpush1.xpose.msra.mxu0 0.0
      %1183 = vmatprep.subr.mxu0 0.0
      %1184 = vmatpush1.xpose.msra.mxu0 0.0
      %1185 = vmatprep.mubr.f32.mxu0 0.0
      %1186 = vmatmul.mubr.f32.gmra.mrb[0].mxu0 %v1116
      %v1187 = vpop.f32.mrb[0].mxu0
      %v1188 = vadd.f32 0.0, %v1187
      %v1189 = vpop.f32.mrb[0].mxu0
      %1190 = vdwg.mxu0
      %v1191 = vmul.f32 %v1188, 0.35355338
      %vm1192 = vcmask 64512
      %v1193 = vsel %vm1192, %v1191, -inf
      %1194 = vmax.xlane.f32.xlu0 %v1193
      %v1195 = vpop.xlane.xlu0 %1194
      %v1196 = vsub.f32 %v1191, %v1195
      %v1197 = vmul.f32 %v1196, 1.442695
      %v1198 = vpow.pop %v1197
      %v1199 = vsel %vm1192, %v1198, 0.0
      %1200 = vadd.xlane.f32.xlu0 %v1199
      %v1201 = vpop.xlane.xlu0 %1200
      %v1202 = vrcp.pop %v1201
      %v1203 = vmul.f32 %v1198, %v1202
      %v1204 = vmul.f32 %v1104, %v1113
      %vm1205 = vcmp.ge.s32.totalorder %v1108, 8
      %vm1206 = vcmp.lt.s32.totalorder %v1108, 16
      %vm1207 = vmand %vm1205, %vm1206
      %v1208 = vsel %vm1207, 1, 0
      %v1209 = vcvt.s32.f32 %v1208
      %v1210 = vmul.f32 %v942, %v1209
      %v1212 = vsel %vm871, %v1210, 0
      %1214 = vmatprep.subr.mxu0 0.0
      %1215 = vmatpush1.xpose.msra.mxu0 %v1119
      %1216 = vmatprep.subr.mxu0 0.0
      %1217 = vmatpush1.xpose.msra.mxu0 0.0
      %1218 = vmatprep.subr.mxu0 0.0
      %1219 = vmatpush1.xpose.msra.mxu0 0.0
      %1220 = vmatprep.subr.mxu0 0.0
      %1221 = vmatpush1.xpose.msra.mxu0 0.0
      %1222 = vmatprep.subr.mxu0 0.0
      %1223 = vmatpush1.xpose.msra.mxu0 0.0
      %1224 = vmatprep.subr.mxu0 0.0
      %1225 = vmatpush1.xpose.msra.mxu0 0.0
      %1226 = vmatprep.subr.mxu0 0.0
      %1227 = vmatpush1.xpose.msra.mxu0 0.0
      %1228 = vmatprep.subr.mxu0 0.0
      %1229 = vmatpush1.xpose.msra.mxu0 0.0
      %1230 = vmatprep.subr.mxu0 0.0
      %1231 = vmatpush1.xpose.msra.mxu0 0.0
      %1232 = vmatprep.subr.mxu0 0.0
      %1233 = vmatpush1.xpose.msra.mxu0 0.0
      %1234 = vmatprep.subr.mxu0 0.0
      %1235 = vmatpush1.xpose.msra.mxu0 0.0
      %1236 = vmatprep.subr.mxu0 0.0
      %1237 = vmatpush1.xpose.msra.mxu0 0.0
      %1238 = vmatprep.subr.mxu0 0.0
      %1239 = vmatpush1.xpose.msra.mxu0 0.0
      %1240 = vmatprep.subr.mxu0 0.0
      %1241 = vmatpush1.xpose.msra.mxu0 0.0
      %1242 = vmatprep.subr.mxu0 0.0
      %1243 = vmatpush1.xpose.msra.mxu0 0.0
      %1244 = vmatprep.subr.mxu0 0.0
      %1245 = vmatpush1.xpose.msra.mxu0 0.0
      %1246 = vmatprep.subr.mxu0 0.0
      %1247 = vmatpush1.xpose.msra.mxu0 0.0
      %1248 = vmatprep.subr.mxu0 0.0
      %1249 = vmatpush1.xpose.msra.mxu0 0.0
      %1250 = vmatprep.subr.mxu0 0.0
      %1251 = vmatpush1.xpose.msra.mxu0 0.0
      %1252 = vmatprep.subr.mxu0 0.0
      %1253 = vmatpush1.xpose.msra.mxu0 0.0
      %1254 = vmatprep.subr.mxu0 0.0
      %1255 = vmatpush1.xpose.msra.mxu0 0.0
      %1256 = vmatprep.subr.mxu0 0.0
      %1257 = vmatpush1.xpose.msra.mxu0 0.0
      %1258 = vmatprep.subr.mxu0 0.0
      %1259 = vmatpush1.xpose.msra.mxu0 0.0
      %1260 = vmatprep.subr.mxu0 0.0
      %1261 = vmatpush1.xpose.msra.mxu0 0.0
      %1262 = vmatprep.subr.mxu0 0.0
      %1263 = vmatpush1.xpose.msra.mxu0 0.0
      %1264 = vmatprep.subr.mxu0 0.0
      %1265 = vmatpush1.xpose.msra.mxu0 0.0
      %1266 = vmatprep.subr.mxu0 0.0
      %1267 = vmatpush1.xpose.msra.mxu0 0.0
      %1268 = vmatprep.subr.mxu0 0.0
      %1269 = vmatpush1.xpose.msra.mxu0 0.0
      %1270 = vmatprep.subr.mxu0 0.0
      %1271 = vmatpush1.xpose.msra.mxu0 0.0
      %1272 = vmatprep.subr.mxu0 0.0
      %1273 = vmatpush1.xpose.msra.mxu0 0.0
      %1274 = vmatprep.subr.mxu0 0.0
      %1275 = vmatpush1.xpose.msra.mxu0 0.0
      %1276 = vmatprep.subr.mxu0 0.0
      %1277 = vmatpush1.xpose.msra.mxu0 0.0
      %1278 = vmatprep.mubr.f32.mxu0 0.0
      %1279 = vmatmul.mubr.f32.gmra.mrb[0].mxu0 %v1212
      %v1280 = vpop.f32.mrb[0].mxu0
      %v1281 = vadd.f32 0.0, %v1280
      %v1282 = vpop.f32.mrb[0].mxu0
      %1283 = vdwg.mxu0
      %v1284 = vmul.f32 %v1281, 0.35355338
      %v1285 = vsel %vm1192, %v1284, -inf
      %1286 = vmax.xlane.f32.xlu0 %v1285
      %v1287 = vpop.xlane.xlu0 %1286
      %v1288 = vsub.f32 %v1284, %v1287
      %v1289 = vmul.f32 %v1288, 1.442695
      %v1290 = vpow.pop %v1289
      %v1291 = vsel %vm1192, %v1290, 0.0
      %1292 = vadd.xlane.f32.xlu0 %v1291
      %v1293 = vpop.xlane.xlu0 %1292
      %v1294 = vrcp.pop %v1293
      %v1295 = vmul.f32 %v1290, %v1294
      %v1296 = vmul.f32 %v1104, %v1209
      %v1298 = vsel %vm1192, %v1295, 0
      %1300 = vmatprep.subr.mxu0 0.0
      %1301 = vmatpush1.msra.mxu0 %v1296
      %1302 = vmatprep.subr.mxu0 0.0
      %1303 = vmatpush1.msra.mxu0 0.0
      %1304 = vmatprep.subr.mxu0 0.0
      %1305 = vmatpush1.msra.mxu0 0.0
      %1306 = vmatprep.subr.mxu0 0.0
      %1307 = vmatpush1.msra.mxu0 0.0
      %1308 = vmatprep.subr.mxu0 0.0
      %1309 = vmatpush1.msra.mxu0 0.0
      %1310 = vmatprep.subr.mxu0 0.0
      %1311 = vmatpush1.msra.mxu0 0.0
      %1312 = vmatprep.subr.mxu0 0.0
      %1313 = vmatpush1.msra.mxu0 0.0
      %1314 = vmatprep.subr.mxu0 0.0
      %1315 = vmatpush1.msra.mxu0 0.0
      %1316 = vmatprep.subr.mxu0 0.0
      %1317 = vmatpush1.msra.mxu0 0.0
      %1318 = vmatprep.subr.mxu0 0.0
      %1319 = vmatpush1.msra.mxu0 0.0
      %1320 = vmatprep.subr.mxu0 0.0
      %1321 = vmatpush1.msra.mxu0 0.0
      %1322 = vmatprep.subr.mxu0 0.0
      %1323 = vmatpush1.msra.mxu0 0.0
      %1324 = vmatprep.subr.mxu0 0.0
      %1325 = vmatpush1.msra.mxu0 0.0
      %1326 = vmatprep.subr.mxu0 0.0
      %1327 = vmatpush1.msra.mxu0 0.0
      %1328 = vmatprep.subr.mxu0 0.0
      %1329 = vmatpush1.msra.mxu0 0.0
      %1330 = vmatprep.subr.mxu0 0.0
      %1331 = vmatpush1.msra.mxu0 0.0
      %1332 = vmatprep.subr.mxu0 0.0
      %1333 = vmatpush1.msra.mxu0 0.0
      %1334 = vmatprep.subr.mxu0 0.0
      %1335 = vmatpush1.msra.mxu0 0.0
      %1336 = vmatprep.subr.mxu0 0.0
      %1337 = vmatpush1.msra.mxu0 0.0
      %1338 = vmatprep.subr.mxu0 0.0
      %1339 = vmatpush1.msra.mxu0 0.0
      %1340 = vmatprep.subr.mxu0 0.0
      %1341 = vmatpush1.msra.mxu0 0.0
      %1342 = vmatprep.subr.mxu0 0.0
      %1343 = vmatpush1.msra.mxu0 0.0
      %1344 = vmatprep.subr.mxu0 0.0
      %1345 = vmatpush1.msra.mxu0 0.0
      %1346 = vmatprep.subr.mxu0 0.0
      %1347 = vmatpush1.msra.mxu0 0.0
      %1348 = vmatprep.subr.mxu0 0.0
      %1349 = vmatpush1.msra.mxu0 0.0
      %1350 = vmatprep.subr.mxu0 0.0
      %1351 = vmatpush1.msra.mxu0 0.0
      %1352 = vmatprep.subr.mxu0 0.0
      %1353 = vmatpush1.msra.mxu0 0.0
      %1354 = vmatprep.subr.mxu0 0.0
      %1355 = vmatpush1.msra.mxu0 0.0
      %1356 = vmatprep.subr.mxu0 0.0
      %1357 = vmatpush1.msra.mxu0 0.0
      %1358 = vmatprep.subr.mxu0 0.0
      %1359 = vmatpush1.msra.mxu0 0.0
      %1360 = vmatprep.subr.mxu0 0.0
      %1361 = vmatpush1.msra.mxu0 0.0
      %1362 = vmatprep.subr.mxu0 0.0
      %1363 = vmatpush1.msra.mxu0 0.0
      %1364 = vmatprep.mubr.f32.mxu0 0.0
      %1365 = vmatmul.mubr.f32.gmra.mrb[0].mxu0 %v1298
      %v1366 = vpop.f32.mrb[0].mxu0
      %v1367 = vadd.f32 0.0, %v1366
      %v1368 = vpop.f32.mrb[0].mxu0
      %1369 = vdwg.mxu0
      %v1371 = vsel %vm1192, %v1203, 0
      %1373 = vmatprep.subr.mxu0 0.0
      %1374 = vmatpush1.msra.mxu0 %v1204
      %1375 = vmatprep.subr.mxu0 0.0
      %1376 = vmatpush1.msra.mxu0 0.0
      %1377 = vmatprep.subr.mxu0 0.0
      %1378 = vmatpush1.msra.mxu0 0.0
      %1379 = vmatprep.subr.mxu0 0.0
      %1380 = vmatpush1.msra.mxu0 0.0
      %1381 = vmatprep.subr.mxu0 0.0
      %1382 = vmatpush1.msra.mxu0 0.0
      %1383 = vmatprep.subr.mxu0 0.0
      %1384 = vmatpush1.msra.mxu0 0.0
      %1385 = vmatprep.subr.mxu0 0.0
      %1386 = vmatpush1.msra.mxu0 0.0
      %1387 = vmatprep.subr.mxu0 0.0
      %1388 = vmatpush1.msra.mxu0 0.0
      %1389 = vmatprep.subr.mxu0 0.0
      %1390 = vmatpush1.msra.mxu0 0.0
      %1391 = vmatprep.subr.mxu0 0.0
      %1392 = vmatpush1.msra.mxu0 0.0
      %1393 = vmatprep.subr.mxu0 0.0
      %1394 = vmatpush1.msra.mxu0 0.0
      %1395 = vmatprep.subr.mxu0 0.0
      %1396 = vmatpush1.msra.mxu0 0.0
      %1397 = vmatprep.subr.mxu0 0.0
      %1398 = vmatpush1.msra.mxu0 0.0
      %1399 = vmatprep.subr.mxu0 0.0
      %1400 = vmatpush1.msra.mxu0 0.0
      %1401 = vmatprep.subr.mxu0 0.0
      %1402 = vmatpush1.msra.mxu0 0.0
      %1403 = vmatprep.subr.mxu0 0.0
      %1404 = vmatpush1.msra.mxu0 0.0
      %1405 = vmatprep.subr.mxu0 0.0
      %1406 = vmatpush1.msra.mxu0 0.0
      %1407 = vmatprep.subr.mxu0 0.0
      %1408 = vmatpush1.msra.mxu0 0.0
      %1409 = vmatprep.subr.mxu0 0.0
      %1410 = vmatpush1.msra.mxu0 0.0
      %1411 = vmatprep.subr.mxu0 0.0
      %1412 = vmatpush1.msra.mxu0 0.0
      %1413 = vmatprep.subr.mxu0 0.0
      %1414 = vmatpush1.msra.mxu0 0.0
      %1415 = vmatprep.subr.mxu0 0.0
      %1416 = vmatpush1.msra.mxu0 0.0
      %1417 = vmatprep.subr.mxu0 0.0
      %1418 = vmatpush1.msra.mxu0 0.0
      %1419 = vmatprep.subr.mxu0 0.0
      %1420 = vmatpush1.msra.mxu0 0.0
      %1421 = vmatprep.subr.mxu0 0.0
      %1422 = vmatpush1.msra.mxu0 0.0
      %1423 = vmatprep.subr.mxu0 0.0
      %1424 = vmatpush1.msra.mxu0 0.0
      %1425 = vmatprep.subr.mxu0 0.0
      %1426 = vmatpush1.msra.mxu0 0.0
      %1427 = vmatprep.subr.mxu0 0.0
      %1428 = vmatpush1.msra.mxu0 0.0
      %1429 = vmatprep.subr.mxu0 0.0
      %1430 = vmatpush1.msra.mxu0 0.0
      %1431 = vmatprep.subr.mxu0 0.0
      %1432 = vmatpush1.msra.mxu0 0.0
      %1433 = vmatprep.subr.mxu0 0.0
      %1434 = vmatpush1.msra.mxu0 0.0
      %1435 = vmatprep.subr.mxu0 0.0
      %1436 = vmatpush1.msra.mxu0 0.0
      %1437 = vmatprep.mubr.f32.mxu0 0.0
      %1438 = vmatmul.mubr.f32.gmra.mrb[0].mxu0 %v1371
      %v1439 = vpop.f32.mrb[0].mxu0
      %v1440 = vadd.f32 %v1367, %v1439
      %v1441 = vpop.f32.mrb[0].mxu0
      %1442 = vdwg.mxu0
      %vm1443 = vcmp.ge.s32.totalorder %v1108, 16
      %vm1444 = vcmp.lt.s32.totalorder %v1108, 24
      %vm1445 = vmand %vm1443, %vm1444
      %v1446 = vsel %vm1445, 1, 0
      %v1447 = vcvt.s32.f32 %v1446
      %v1448 = vmul.f32 %v942, %v1447
      %v1450 = vsel %vm871, %v1448, 0
      %1452 = vmatprep.subr.mxu0 0.0
      %1453 = vmatpush1.xpose.msra.mxu0 %v1119
      %1454 = vmatprep.subr.mxu0 0.0
      %1455 = vmatpush1.xpose.msra.mxu0 0.0
      %1456 = vmatprep.subr.mxu0 0.0
      %1457 = vmatpush1.xpose.msra.mxu0 0.0
      %1458 = vmatprep.subr.mxu0 0.0
      %1459 = vmatpush1.xpose.msra.mxu0 0.0
      %1460 = vmatprep.subr.mxu0 0.0
      %1461 = vmatpush1.xpose.msra.mxu0 0.0
      %1462 = vmatprep.subr.mxu0 0.0
      %1463 = vmatpush1.xpose.msra.mxu0 0.0
      %1464 = vmatprep.subr.mxu0 0.0
      %1465 = vmatpush1.xpose.msra.mxu0 0.0
      %1466 = vmatprep.subr.mxu0 0.0
      %1467 = vmatpush1.xpose.msra.mxu0 0.0
      %1468 = vmatprep.subr.mxu0 0.0
      %1469 = vmatpush1.xpose.msra.mxu0 0.0
      %1470 = vmatprep.subr.mxu0 0.0
      %1471 = vmatpush1.xpose.msra.mxu0 0.0
      %1472 = vmatprep.subr.mxu0 0.0
      %1473 = vmatpush1.xpose.msra.mxu0 0.0
      %1474 = vmatprep.subr.mxu0 0.0
      %1475 = vmatpush1.xpose.msra.mxu0 0.0
      %1476 = vmatprep.subr.mxu0 0.0
      %1477 = vmatpush1.xpose.msra.mxu0 0.0
      %1478 = vmatprep.subr.mxu0 0.0
      %1479 = vmatpush1.xpose.msra.mxu0 0.0
      %1480 = vmatprep.subr.mxu0 0.0
      %1481 = vmatpush1.xpose.msra.mxu0 0.0
      %1482 = vmatprep.subr.mxu0 0.0
      %1483 = vmatpush1.xpose.msra.mxu0 0.0
      %1484 = vmatprep.subr.mxu0 0.0
      %1485 = vmatpush1.xpose.msra.mxu0 0.0
      %1486 = vmatprep.subr.mxu0 0.0
      %1487 = vmatpush1.xpose.msra.mxu0 0.0
      %1488 = vmatprep.subr.mxu0 0.0
      %1489 = vmatpush1.xpose.msra.mxu0 0.0
      %1490 = vmatprep.subr.mxu0 0.0
      %1491 = vmatpush1.xpose.msra.mxu0 0.0
      %1492 = vmatprep.subr.mxu0 0.0
      %1493 = vmatpush1.xpose.msra.mxu0 0.0
      %1494 = vmatprep.subr.mxu0 0.0
      %1495 = vmatpush1.xpose.msra.mxu0 0.0
      %1496 = vmatprep.subr.mxu0 0.0
      %1497 = vmatpush1.xpose.msra.mxu0 0.0
      %1498 = vmatprep.subr.mxu0 0.0
      %1499 = vmatpush1.xpose.msra.mxu0 0.0
      %1500 = vmatprep.subr.mxu0 0.0
      %1501 = vmatpush1.xpose.msra.mxu0 0.0
      %1502 = vmatprep.subr.mxu0 0.0
      %1503 = vmatpush1.xpose.msra.mxu0 0.0
      %1504 = vmatprep.subr.mxu0 0.0
      %1505 = vmatpush1.xpose.msra.mxu0 0.0
      %1506 = vmatprep.subr.mxu0 0.0
      %1507 = vmatpush1.xpose.msra.mxu0 0.0
      %1508 = vmatprep.subr.mxu0 0.0
      %1509 = vmatpush1.xpose.msra.mxu0 0.0
      %1510 = vmatprep.subr.mxu0 0.0
      %1511 = vmatpush1.xpose.msra.mxu0 0.0
      %1512 = vmatprep.subr.mxu0 0.0
      %1513 = vmatpush1.xpose.msra.mxu0 0.0
      %1514 = vmatprep.subr.mxu0 0.0
      %1515 = vmatpush1.xpose.msra.mxu0 0.0
      %1516 = vmatprep.mubr.f32.mxu0 0.0
      %1517 = vmatmul.mubr.f32.gmra.mrb[0].mxu0 %v1450
      %v1518 = vpop.f32.mrb[0].mxu0
      %v1519 = vadd.f32 0.0, %v1518
      %v1520 = vpop.f32.mrb[0].mxu0
      %1521 = vdwg.mxu0
      %v1522 = vmul.f32 %v1519, 0.35355338
      %v1523 = vsel %vm1192, %v1522, -inf
      %1524 = vmax.xlane.f32.xlu0 %v1523
      %v1525 = vpop.xlane.xlu0 %1524
      %v1526 = vsub.f32 %v1522, %v1525
      %v1527 = vmul.f32 %v1526, 1.442695
      %v1528 = vpow.pop %v1527
      %v1529 = vsel %vm1192, %v1528, 0.0
      %1530 = vadd.xlane.f32.xlu0 %v1529
      %v1531 = vpop.xlane.xlu0 %1530
      %v1532 = vrcp.pop %v1531
      %v1533 = vmul.f32 %v1528, %v1532
      %v1534 = vmul.f32 %v1104, %v1447
      %v1536 = vsel %vm1192, %v1533, 0
      %1538 = vmatprep.subr.mxu0 0.0
      %1539 = vmatpush1.msra.mxu0 %v1534
      %1540 = vmatprep.subr.mxu0 0.0
      %1541 = vmatpush1.msra.mxu0 0.0
      %1542 = vmatprep.subr.mxu0 0.0
      %1543 = vmatpush1.msra.mxu0 0.0
      %1544 = vmatprep.subr.mxu0 0.0
      %1545 = vmatpush1.msra.mxu0 0.0
      %1546 = vmatprep.subr.mxu0 0.0
      %1547 = vmatpush1.msra.mxu0 0.0
      %1548 = vmatprep.subr.mxu0 0.0
      %1549 = vmatpush1.msra.mxu0 0.0
      %1550 = vmatprep.subr.mxu0 0.0
      %1551 = vmatpush1.msra.mxu0 0.0
      %1552 = vmatprep.subr.mxu0 0.0
      %1553 = vmatpush1.msra.mxu0 0.0
      %1554 = vmatprep.subr.mxu0 0.0
      %1555 = vmatpush1.msra.mxu0 0.0
      %1556 = vmatprep.subr.mxu0 0.0
      %1557 = vmatpush1.msra.mxu0 0.0
      %1558 = vmatprep.subr.mxu0 0.0
      %1559 = vmatpush1.msra.mxu0 0.0
      %1560 = vmatprep.subr.mxu0 0.0
      %1561 = vmatpush1.msra.mxu0 0.0
      %1562 = vmatprep.subr.mxu0 0.0
      %1563 = vmatpush1.msra.mxu0 0.0
      %1564 = vmatprep.subr.mxu0 0.0
      %1565 = vmatpush1.msra.mxu0 0.0
      %1566 = vmatprep.subr.mxu0 0.0
      %1567 = vmatpush1.msra.mxu0 0.0
      %1568 = vmatprep.subr.mxu0 0.0
      %1569 = vmatpush1.msra.mxu0 0.0
      %1570 = vmatprep.subr.mxu0 0.0
      %1571 = vmatpush1.msra.mxu0 0.0
      %1572 = vmatprep.subr.mxu0 0.0
      %1573 = vmatpush1.msra.mxu0 0.0
      %1574 = vmatprep.subr.mxu0 0.0
      %1575 = vmatpush1.msra.mxu0 0.0
      %1576 = vmatprep.subr.mxu0 0.0
      %1577 = vmatpush1.msra.mxu0 0.0
      %1578 = vmatprep.subr.mxu0 0.0
      %1579 = vmatpush1.msra.mxu0 0.0
      %1580 = vmatprep.subr.mxu0 0.0
      %1581 = vmatpush1.msra.mxu0 0.0
      %1582 = vmatprep.subr.mxu0 0.0
      %1583 = vmatpush1.msra.mxu0 0.0
      %1584 = vmatprep.subr.mxu0 0.0
      %1585 = vmatpush1.msra.mxu0 0.0
      %1586 = vmatprep.subr.mxu0 0.0
      %1587 = vmatpush1.msra.mxu0 0.0
      %1588 = vmatprep.subr.mxu0 0.0
      %1589 = vmatpush1.msra.mxu0 0.0
      %1590 = vmatprep.subr.mxu0 0.0
      %1591 = vmatpush1.msra.mxu0 0.0
      %1592 = vmatprep.subr.mxu0 0.0
      %1593 = vmatpush1.msra.mxu0 0.0
      %1594 = vmatprep.subr.mxu0 0.0
      %1595 = vmatpush1.msra.mxu0 0.0
      %1596 = vmatprep.subr.mxu0 0.0
      %1597 = vmatpush1.msra.mxu0 0.0
      %1598 = vmatprep.subr.mxu0 0.0
      %1599 = vmatpush1.msra.mxu0 0.0
      %1600 = vmatprep.subr.mxu0 0.0
      %1601 = vmatpush1.msra.mxu0 0.0
      %1602 = vmatprep.mubr.f32.mxu0 0.0
      %1603 = vmatmul.mubr.f32.gmra.mrb[0].mxu0 %v1536
      %v1604 = vpop.f32.mrb[0].mxu0
      %v1605 = vadd.f32 0.0, %v1604
      %v1606 = vpop.f32.mrb[0].mxu0
      %1607 = vdwg.mxu0
      %v1608 = vadd.f32 %v1440, %v1605
      %vm1609 = vcmp.ge.s32.totalorder %v1108, 24
      %vm1610 = vcmp.lt.s32.totalorder %v1108, 32
      %vm1611 = vmand %vm1609, %vm1610
      %v1612 = vsel %vm1611, 1, 0
      %v1613 = vcvt.s32.f32 %v1612
      %v1614 = vmul.f32 %v942, %v1613
      %v1616 = vsel %vm871, %v1614, 0
      %1618 = vmatprep.subr.mxu0 0.0
      %1619 = vmatpush1.xpose.msra.mxu0 %v1119
      %1620 = vmatprep.subr.mxu0 0.0
      %1621 = vmatpush1.xpose.msra.mxu0 0.0
      %1622 = vmatprep.subr.mxu0 0.0
      %1623 = vmatpush1.xpose.msra.mxu0 0.0
      %1624 = vmatprep.subr.mxu0 0.0
      %1625 = vmatpush1.xpose.msra.mxu0 0.0
      %1626 = vmatprep.subr.mxu0 0.0
      %1627 = vmatpush1.xpose.msra.mxu0 0.0
      %1628 = vmatprep.subr.mxu0 0.0
      %1629 = vmatpush1.xpose.msra.mxu0 0.0
      %1630 = vmatprep.subr.mxu0 0.0
      %1631 = vmatpush1.xpose.msra.mxu0 0.0
      %1632 = vmatprep.subr.mxu0 0.0
      %1633 = vmatpush1.xpose.msra.mxu0 0.0
      %1634 = vmatprep.subr.mxu0 0.0
      %1635 = vmatpush1.xpose.msra.mxu0 0.0
      %1636 = vmatprep.subr.mxu0 0.0
      %1637 = vmatpush1.xpose.msra.mxu0 0.0
      %1638 = vmatprep.subr.mxu0 0.0
      %1639 = vmatpush1.xpose.msra.mxu0 0.0
      %1640 = vmatprep.subr.mxu0 0.0
      %1641 = vmatpush1.xpose.msra.mxu0 0.0
      %1642 = vmatprep.subr.mxu0 0.0
      %1643 = vmatpush1.xpose.msra.mxu0 0.0
      %1644 = vmatprep.subr.mxu0 0.0
      %1645 = vmatpush1.xpose.msra.mxu0 0.0
      %1646 = vmatprep.subr.mxu0 0.0
      %1647 = vmatpush1.xpose.msra.mxu0 0.0
      %1648 = vmatprep.subr.mxu0 0.0
      %1649 = vmatpush1.xpose.msra.mxu0 0.0
      %1650 = vmatprep.subr.mxu0 0.0
      %1651 = vmatpush1.xpose.msra.mxu0 0.0
      %1652 = vmatprep.subr.mxu0 0.0
      %1653 = vmatpush1.xpose.msra.mxu0 0.0
      %1654 = vmatprep.subr.mxu0 0.0
      %1655 = vmatpush1.xpose.msra.mxu0 0.0
      %1656 = vmatprep.subr.mxu0 0.0
      %1657 = vmatpush1.xpose.msra.mxu0 0.0
      %1658 = vmatprep.subr.mxu0 0.0
      %1659 = vmatpush1.xpose.msra.mxu0 0.0
      %1660 = vmatprep.subr.mxu0 0.0
      %1661 = vmatpush1.xpose.msra.mxu0 0.0
      %1662 = vmatprep.subr.mxu0 0.0
      %1663 = vmatpush1.xpose.msra.mxu0 0.0
      %1664 = vmatprep.subr.mxu0 0.0
      %1665 = vmatpush1.xpose.msra.mxu0 0.0
      %1666 = vmatprep.subr.mxu0 0.0
      %1667 = vmatpush1.xpose.msra.mxu0 0.0
      %1668 = vmatprep.subr.mxu0 0.0
      %1669 = vmatpush1.xpose.msra.mxu0 0.0
      %1670 = vmatprep.subr.mxu0 0.0
      %1671 = vmatpush1.xpose.msra.mxu0 0.0
      %1672 = vmatprep.subr.mxu0 0.0
      %1673 = vmatpush1.xpose.msra.mxu0 0.0
      %1674 = vmatprep.subr.mxu0 0.0
      %1675 = vmatpush1.xpose.msra.mxu0 0.0
      %1676 = vmatprep.subr.mxu0 0.0
      %1677 = vmatpush1.xpose.msra.mxu0 0.0
      %1678 = vmatprep.subr.mxu0 0.0
      %1679 = vmatpush1.xpose.msra.mxu0 0.0
      %1680 = vmatprep.subr.mxu0 0.0
      %1681 = vmatpush1.xpose.msra.mxu0 0.0
      %1682 = vmatprep.mubr.f32.mxu0 0.0
      %1683 = vmatmul.mubr.f32.gmra.mrb[0].mxu0 %v1616
      %v1684 = vpop.f32.mrb[0].mxu0
      %v1685 = vadd.f32 0.0, %v1684
      %v1686 = vpop.f32.mrb[0].mxu0
      %1687 = vdwg.mxu0
      %v1688 = vmul.f32 %v1685, 0.35355338
      %v1689 = vsel %vm1192, %v1688, -inf
      %1690 = vmax.xlane.f32.xlu0 %v1689
      %v1691 = vpop.xlane.xlu0 %1690
      %v1692 = vsub.f32 %v1688, %v1691
      %v1693 = vmul.f32 %v1692, 1.442695
      %v1694 = vpow.pop %v1693
      %v1695 = vsel %vm1192, %v1694, 0.0
      %1696 = vadd.xlane.f32.xlu0 %v1695
      %v1697 = vpop.xlane.xlu0 %1696
      %v1698 = vrcp.pop %v1697
      %v1699 = vmul.f32 %v1694, %v1698
      %v1700 = vmul.f32 %v1104, %v1613
      %v1702 = vsel %vm1192, %v1699, 0
      %1704 = vmatprep.subr.mxu0 0.0
      %1705 = vmatpush1.msra.mxu0 %v1700
      %1706 = vmatprep.subr.mxu0 0.0
      %1707 = vmatpush1.msra.mxu0 0.0
      %1708 = vmatprep.subr.mxu0 0.0
      %1709 = vmatpush1.msra.mxu0 0.0
      %1710 = vmatprep.subr.mxu0 0.0
      %1711 = vmatpush1.msra.mxu0 0.0
      %1712 = vmatprep.subr.mxu0 0.0
      %1713 = vmatpush1.msra.mxu0 0.0
      %1714 = vmatprep.subr.mxu0 0.0
      %1715 = vmatpush1.msra.mxu0 0.0
      %1716 = vmatprep.subr.mxu0 0.0
      %1717 = vmatpush1.msra.mxu0 0.0
      %1718 = vmatprep.subr.mxu0 0.0
      %1719 = vmatpush1.msra.mxu0 0.0
      %1720 = vmatprep.subr.mxu0 0.0
      %1721 = vmatpush1.msra.mxu0 0.0
      %1722 = vmatprep.subr.mxu0 0.0
      %1723 = vmatpush1.msra.mxu0 0.0
      %1724 = vmatprep.subr.mxu0 0.0
      %1725 = vmatpush1.msra.mxu0 0.0
      %1726 = vmatprep.subr.mxu0 0.0
      %1727 = vmatpush1.msra.mxu0 0.0
      %1728 = vmatprep.subr.mxu0 0.0
      %1729 = vmatpush1.msra.mxu0 0.0
      %1730 = vmatprep.subr.mxu0 0.0
      %1731 = vmatpush1.msra.mxu0 0.0
      %1732 = vmatprep.subr.mxu0 0.0
      %1733 = vmatpush1.msra.mxu0 0.0
      %1734 = vmatprep.subr.mxu0 0.0
      %1735 = vmatpush1.msra.mxu0 0.0
      %1736 = vmatprep.subr.mxu0 0.0
      %1737 = vmatpush1.msra.mxu0 0.0
      %1738 = vmatprep.subr.mxu0 0.0
      %1739 = vmatpush1.msra.mxu0 0.0
      %1740 = vmatprep.subr.mxu0 0.0
      %1741 = vmatpush1.msra.mxu0 0.0
      %1742 = vmatprep.subr.mxu0 0.0
      %1743 = vmatpush1.msra.mxu0 0.0
      %1744 = vmatprep.subr.mxu0 0.0
      %1745 = vmatpush1.msra.mxu0 0.0
      %1746 = vmatprep.subr.mxu0 0.0
      %1747 = vmatpush1.msra.mxu0 0.0
      %1748 = vmatprep.subr.mxu0 0.0
      %1749 = vmatpush1.msra.mxu0 0.0
      %1750 = vmatprep.subr.mxu0 0.0
      %1751 = vmatpush1.msra.mxu0 0.0
      %1752 = vmatprep.subr.mxu0 0.0
      %1753 = vmatpush1.msra.mxu0 0.0
      %1754 = vmatprep.subr.mxu0 0.0
      %1755 = vmatpush1.msra.mxu0 0.0
      %1756 = vmatprep.subr.mxu0 0.0
      %1757 = vmatpush1.msra.mxu0 0.0
      %1758 = vmatprep.subr.mxu0 0.0
      %1759 = vmatpush1.msra.mxu0 0.0
      %1760 = vmatprep.subr.mxu0 0.0
      %1761 = vmatpush1.msra.mxu0 0.0
      %1762 = vmatprep.subr.mxu0 0.0
      %1763 = vmatpush1.msra.mxu0 0.0
      %1764 = vmatprep.subr.mxu0 0.0
      %1765 = vmatpush1.msra.mxu0 0.0
      %1766 = vmatprep.subr.mxu0 0.0
      %1767 = vmatpush1.msra.mxu0 0.0
      %1768 = vmatprep.mubr.f32.mxu0 0.0
      %1769 = vmatmul.mubr.f32.gmra.mrb[0].mxu0 %v1702
      %v1770 = vpop.f32.mrb[0].mxu0
      %v1771 = vadd.f32 0.0, %v1770
      %v1772 = vpop.f32.mrb[0].mxu0
      %1773 = vdwg.mxu0
      %v1774 = vadd.f32 %v1608, %v1771
      %v1775 = vld [vmem:[%s8] sm:$0xff]
      %v1776 = vld [vmem:[%s8 + $0x8] sm:$0xff]
      %v1777 = vld [vmem:[%s8 + $0x10] sm:$0xff]
      %v1778 = vld [vmem:[%s8 + $0x18] sm:$0xff]
      %v1779 = vld [vmem:[%s9] sm:$0x1]
      %v1781 = vlaneseq
      %v1782 = vshrl.u32 %v1781, 7
      %v1783 = vsub.s32 0, %v1782
      %v1784 = vrot.slane %v1779, %v1783
      %v1787 = vsel %vm871, %v1774, 0
      %1789 = vmatprep.subr.mxu0 0.0
      %1790 = vmatpush1.msra.mxu0 %v1775
      %1791 = vmatprep.subr.mxu0 0.0
      %1792 = vmatpush1.msra.mxu0 %v1776
      %1793 = vmatprep.subr.mxu0 0.0
      %1794 = vmatpush1.msra.mxu0 %v1777
      %1795 = vmatprep.subr.mxu0 0.0
      %1796 = vmatpush1.msra.mxu0 %v1778
      %1797 = vmatprep.subr.mxu0 0.0
      %1798 = vmatpush1.msra.mxu0 0.0
      %1799 = vmatprep.subr.mxu0 0.0
      %1800 = vmatpush1.msra.mxu0 0.0
      %1801 = vmatprep.subr.mxu0 0.0
      %1802 = vmatpush1.msra.mxu0 0.0
      %1803 = vmatprep.subr.mxu0 0.0
      %1804 = vmatpush1.msra.mxu0 0.0
      %1805 = vmatprep.subr.mxu0 0.0
      %1806 = vmatpush1.msra.mxu0 0.0
      %1807 = vmatprep.subr.mxu0 0.0
      %1808 = vmatpush1.msra.mxu0 0.0
      %1809 = vmatprep.subr.mxu0 0.0
      %1810 = vmatpush1.msra.mxu0 0.0
      %1811 = vmatprep.subr.mxu0 0.0
      %1812 = vmatpush1.msra.mxu0 0.0
      %1813 = vmatprep.subr.mxu0 0.0
      %1814 = vmatpush1.msra.mxu0 0.0
      %1815 = vmatprep.subr.mxu0 0.0
      %1816 = vmatpush1.msra.mxu0 0.0
      %1817 = vmatprep.subr.mxu0 0.0
      %1818 = vmatpush1.msra.mxu0 0.0
      %1819 = vmatprep.subr.mxu0 0.0
      %1820 = vmatpush1.msra.mxu0 0.0
      %1821 = vmatprep.subr.mxu0 0.0
      %1822 = vmatpush1.msra.mxu0 0.0
      %1823 = vmatprep.subr.mxu0 0.0
      %1824 = vmatpush1.msra.mxu0 0.0
      %1825 = vmatprep.subr.mxu0 0.0
      %1826 = vmatpush1.msra.mxu0 0.0
      %1827 = vmatprep.subr.mxu0 0.0
      %1828 = vmatpush1.msra.mxu0 0.0
      %1829 = vmatprep.subr.mxu0 0.0
      %1830 = vmatpush1.msra.mxu0 0.0
      %1831 = vmatprep.subr.mxu0 0.0
      %1832 = vmatpush1.msra.mxu0 0.0
      %1833 = vmatprep.subr.mxu0 0.0
      %1834 = vmatpush1.msra.mxu0 0.0
      %1835 = vmatprep.subr.mxu0 0.0
      %1836 = vmatpush1.msra.mxu0 0.0
      %1837 = vmatprep.subr.mxu0 0.0
      %1838 = vmatpush1.msra.mxu0 0.0
      %1839 = vmatprep.subr.mxu0 0.0
      %1840 = vmatpush1.msra.mxu0 0.0
      %1841 = vmatprep.subr.mxu0 0.0
      %1842 = vmatpush1.msra.mxu0 0.0
      %1843 = vmatprep.subr.mxu0 0.0
      %1844 = vmatpush1.msra.mxu0 0.0
      %1845 = vmatprep.subr.mxu0 0.0
      %1846 = vmatpush1.msra.mxu0 0.0
      %1847 = vmatprep.subr.mxu0 0.0
      %1848 = vmatpush1.msra.mxu0 0.0
      %1849 = vmatprep.subr.mxu0 0.0
      %1850 = vmatpush1.msra.mxu0 0.0
      %1851 = vmatprep.subr.mxu0 0.0
      %1852 = vmatpush1.msra.mxu0 0.0
      %1853 = vmatprep.mubr.f32.mxu0 0.0
      %1854 = vmatmul.mubr.f32.gmra.mrb[0].mxu0 %v1787
      %v1855 = vpop.f32.mrb[0].mxu0
      %v1856 = vadd.f32 %v1784, %v1855
      %v1857 = vpop.f32.mrb[0].mxu0
      %1858 = vdwg.mxu0
      %v1859 = vld [vmem:[%s22] sm:$0x1]
      %v1860 = vld [vmem:[%s23] sm:$0x1]
      %v1861 = vadd.f32 %v858, %v1856
      %v1862 = vsel %vm871, %v1861, 0.0
      %1863 = vadd.xlane.f32.xlu0 %v1862
      %v1864 = vpop.xlane.xlu0 %1863
      %v1865 = vrcp.pop 32.0
      %v1866 = vmul.f32 %v1864, %v1865
      %v1867 = vsub.f32 %v1861, %v1866
      %v1868 = vmul.f32 %v1867, %v1867
      %v1869 = vsel %vm871, %v1868, 0.0
      %1870 = vadd.xlane.f32.xlu0 %v1869
      %v1871 = vpop.xlane.xlu0 %1870
      %v1872 = vmul.f32 %v1871, %v1865
      %v1873 = vadd.f32 %v1872, 1e-05
      %v1874 = vrsqrt.pop %v1873
      %v1875 = vmul.f32 %v1867, %v1874
      %v1877 = vlaneseq
      %v1878 = vshrl.u32 %v1877, 7
      %v1879 = vsub.s32 0, %v1878
      %v1880 = vrot.slane %v1859, %v1879
      %v1882 = vmul.f32 %v1875, %v1880
      %v1884 = vlaneseq
      %v1885 = vshrl.u32 %v1884, 7
      %v1886 = vsub.s32 0, %v1885
      %v1887 = vrot.slane %v1860, %v1886
      %v1889 = vadd.f32 %v1882, %v1887
      %v1890 = vld [vmem:[%s10] sm:$0xff]
      %v1891 = vld [vmem:[%s10 + $0x8] sm:$0xff]
      %v1892 = vld [vmem:[%s10 + $0x10] sm:$0xff]
      %v1893 = vld [vmem:[%s10 + $0x18] sm:$0xff]
      %v1894 = vld [vmem:[%s11] sm:$0x1]
      %v1896 = vlaneseq
      %v1897 = vshrl.u32 %v1896, 7
      %v1898 = vsub.s32 0, %v1897
      %v1899 = vrot.slane %v1894, %v1898
      %v1902 = vsel %vm871, %v859, 0
      %1904 = vmatprep.subr.mxu0 0.0
      %1905 = vmatpush1.msra.mxu0 %v1890
      %1906 = vmatprep.subr.mxu0 0.0
      %1907 = vmatpush1.msra.mxu0 %v1891
      %1908 = vmatprep.subr.mxu0 0.0
      %1909 = vmatpush1.msra.mxu0 %v1892
      %1910 = vmatprep.subr.mxu0 0.0
      %1911 = vmatpush1.msra.mxu0 %v1893
      %1912 = vmatprep.subr.mxu0 0.0
      %1913 = vmatpush1.msra.mxu0 0.0
      %1914 = vmatprep.subr.mxu0 0.0
      %1915 = vmatpush1.msra.mxu0 0.0
      %1916 = vmatprep.subr.mxu0 0.0
      %1917 = vmatpush1.msra.mxu0 0.0
      %1918 = vmatprep.subr.mxu0 0.0
      %1919 = vmatpush1.msra.mxu0 0.0
      %1920 = vmatprep.subr.mxu0 0.0
      %1921 = vmatpush1.msra.mxu0 0.0
      %1922 = vmatprep.subr.mxu0 0.0
      %1923 = vmatpush1.msra.mxu0 0.0
      %1924 = vmatprep.subr.mxu0 0.0
      %1925 = vmatpush1.msra.mxu0 0.0
      %1926 = vmatprep.subr.mxu0 0.0
      %1927 = vmatpush1.msra.mxu0 0.0
      %1928 = vmatprep.subr.mxu0 0.0
      %1929 = vmatpush1.msra.mxu0 0.0
      %1930 = vmatprep.subr.mxu0 0.0
      %1931 = vmatpush1.msra.mxu0 0.0
      %1932 = vmatprep.subr.mxu0 0.0
      %1933 = vmatpush1.msra.mxu0 0.0
      %1934 = vmatprep.subr.mxu0 0.0
      %1935 = vmatpush1.msra.mxu0 0.0
      %1936 = vmatprep.subr.mxu0 0.0
      %1937 = vmatpush1.msra.mxu0 0.0
      %1938 = vmatprep.subr.mxu0 0.0
      %1939 = vmatpush1.msra.mxu0 0.0
      %1940 = vmatprep.subr.mxu0 0.0
      %1941 = vmatpush1.msra.mxu0 0.0
      %1942 = vmatprep.subr.mxu0 0.0
      %1943 = vmatpush1.msra.mxu0 0.0
      %1944 = vmatprep.subr.mxu0 0.0
      %1945 = vmatpush1.msra.mxu0 0.0
      %1946 = vmatprep.subr.mxu0 0.0
      %1947 = vmatpush1.msra.mxu0 0.0
      %1948 = vmatprep.subr.mxu0 0.0
      %1949 = vmatpush1.msra.mxu0 0.0
      %1950 = vmatprep.subr.mxu0 0.0
      %1951 = vmatpush1.msra.mxu0 0.0
      %1952 = vmatprep.subr.mxu0 0.0
      %1953 = vmatpush1.msra.mxu0 0.0
      %1954 = vmatprep.subr.mxu0 0.0
      %1955 = vmatpush1.msra.mxu0 0.0
      %1956 = vmatprep.subr.mxu0 0.0
      %1957 = vmatpush1.msra.mxu0 0.0
      %1958 = vmatprep.subr.mxu0 0.0
      %1959 = vmatpush1.msra.mxu0 0.0
      %1960 = vmatprep.subr.mxu0 0.0
      %1961 = vmatpush1.msra.mxu0 0.0
      %1962 = vmatprep.subr.mxu0 0.0
      %1963 = vmatpush1.msra.mxu0 0.0
      %1964 = vmatprep.subr.mxu0 0.0
      %1965 = vmatpush1.msra.mxu0 0.0
      %1966 = vmatprep.subr.mxu0 0.0
      %1967 = vmatpush1.msra.mxu0 0.0
      %1968 = vmatprep.mubr.f32.mxu0 0.0
      %1969 = vmatmul.mubr.f32.gmra.mrb[0].mxu0 %v1902
      %v1970 = vpop.f32.mrb[0].mxu0
      %v1971 = vadd.f32 %v1899, %v1970
      %v1972 = vpop.f32.mrb[0].mxu0
      %1973 = vdwg.mxu0
      %v1974 = vld [vmem:[%s12] sm:$0xff]
      %v1975 = vld [vmem:[%s12 + $0x8] sm:$0xff]
      %v1976 = vld [vmem:[%s12 + $0x10] sm:$0xff]
      %v1977 = vld [vmem:[%s12 + $0x18] sm:$0xff]
      %v1978 = vld [vmem:[%s13] sm:$0x1]
      %v1980 = vlaneseq
      %v1981 = vshrl.u32 %v1980, 7
      %v1982 = vsub.s32 0, %v1981
      %v1983 = vrot.slane %v1978, %v1982
      %1985 = vmatprep.subr.mxu0 0.0
      %1986 = vmatpush1.msra.mxu0 %v1974
      %1987 = vmatprep.subr.mxu0 0.0
      %1988 = vmatpush1.msra.mxu0 %v1975
      %1989 = vmatprep.subr.mxu0 0.0
      %1990 = vmatpush1.msra.mxu0 %v1976
      %1991 = vmatprep.subr.mxu0 0.0
      %1992 = vmatpush1.msra.mxu0 %v1977
      %1993 = vmatprep.subr.mxu0 0.0
      %1994 = vmatpush1.msra.mxu0 0.0
      %1995 = vmatprep.subr.mxu0 0.0
      %1996 = vmatpush1.msra.mxu0 0.0
      %1997 = vmatprep.subr.mxu0 0.0
      %1998 = vmatpush1.msra.mxu0 0.0
      %1999 = vmatprep.subr.mxu0 0.0
      %2000 = vmatpush1.msra.mxu0 0.0
      %2001 = vmatprep.subr.mxu0 0.0
      %2002 = vmatpush1.msra.mxu0 0.0
      %2003 = vmatprep.subr.mxu0 0.0
      %2004 = vmatpush1.msra.mxu0 0.0
      %2005 = vmatprep.subr.mxu0 0.0
      %2006 = vmatpush1.msra.mxu0 0.0
      %2007 = vmatprep.subr.mxu0 0.0
      %2008 = vmatpush1.msra.mxu0 0.0
      %2009 = vmatprep.subr.mxu0 0.0
      %2010 = vmatpush1.msra.mxu0 0.0
      %2011 = vmatprep.subr.mxu0 0.0
      %2012 = vmatpush1.msra.mxu0 0.0
      %2013 = vmatprep.subr.mxu0 0.0
      %2014 = vmatpush1.msra.mxu0 0.0
      %2015 = vmatprep.subr.mxu0 0.0
      %2016 = vmatpush1.msra.mxu0 0.0
      %2017 = vmatprep.subr.mxu0 0.0
      %2018 = vmatpush1.msra.mxu0 0.0
      %2019 = vmatprep.subr.mxu0 0.0
      %2020 = vmatpush1.msra.mxu0 0.0
      %2021 = vmatprep.subr.mxu0 0.0
      %2022 = vmatpush1.msra.mxu0 0.0
      %2023 = vmatprep.subr.mxu0 0.0
      %2024 = vmatpush1.msra.mxu0 0.0
      %2025 = vmatprep.subr.mxu0 0.0
      %2026 = vmatpush1.msra.mxu0 0.0
      %2027 = vmatprep.subr.mxu0 0.0
      %2028 = vmatpush1.msra.mxu0 0.0
      %2029 = vmatprep.subr.mxu0 0.0
      %2030 = vmatpush1.msra.mxu0 0.0
      %2031 = vmatprep.subr.mxu0 0.0
      %2032 = vmatpush1.msra.mxu0 0.0
      %2033 = vmatprep.subr.mxu0 0.0
      %2034 = vmatpush1.msra.mxu0 0.0
      %2035 = vmatprep.subr.mxu0 0.0
      %2036 = vmatpush1.msra.mxu0 0.0
      %2037 = vmatprep.subr.mxu0 0.0
      %2038 = vmatpush1.msra.mxu0 0.0
      %2039 = vmatprep.subr.mxu0 0.0
      %2040 = vmatpush1.msra.mxu0 0.0
      %2041 = vmatprep.subr.mxu0 0.0
      %2042 = vmatpush1.msra.mxu0 0.0
      %2043 = vmatprep.subr.mxu0 0.0
      %2044 = vmatpush1.msra.mxu0 0.0
      %2045 = vmatprep.subr.mxu0 0.0
      %2046 = vmatpush1.msra.mxu0 0.0
      %2047 = vmatprep.subr.mxu0 0.0
      %2048 = vmatpush1.msra.mxu0 0.0
      %2049 = vmatprep.mubr.f32.mxu0 0.0
      %2050 = vmatmul.mubr.f32.gmra.mrb[0].mxu0 %v1902
      %v2051 = vpop.f32.mrb[0].mxu0
      %v2052 = vadd.f32 %v1983, %v2051
      %v2053 = vpop.f32.mrb[0].mxu0
      %2054 = vdwg.mxu0
      %v2055 = vld [vmem:[%s14] sm:$0xff]
      %v2056 = vld [vmem:[%s14 + $0x8] sm:$0xff]
      %v2057 = vld [vmem:[%s14 + $0x10] sm:$0xff]
      %v2058 = vld [vmem:[%s14 + $0x18] sm:$0xff]
      %v2059 = vld [vmem:[%s15] sm:$0x1]
      %v2061 = vlaneseq
      %v2062 = vshrl.u32 %v2061, 7
      %v2063 = vsub.s32 0, %v2062
      %v2064 = vrot.slane %v2059, %v2063
      %v2067 = vsel %vm871, %v1889, 0
      %2069 = vmatprep.subr.mxu0 0.0
      %2070 = vmatpush1.msra.mxu0 %v2055
      %2071 = vmatprep.subr.mxu0 0.0
      %2072 = vmatpush1.msra.mxu0 %v2056
      %2073 = vmatprep.subr.mxu0 0.0
      %2074 = vmatpush1.msra.mxu0 %v2057
      %2075 = vmatprep.subr.mxu0 0.0
      %2076 = vmatpush1.msra.mxu0 %v2058
      %2077 = vmatprep.subr.mxu0 0.0
      %2078 = vmatpush1.msra.mxu0 0.0
      %2079 = vmatprep.subr.mxu0 0.0
      %2080 = vmatpush1.msra.mxu0 0.0
      %2081 = vmatprep.subr.mxu0 0.0
      %2082 = vmatpush1.msra.mxu0 0.0
      %2083 = vmatprep.subr.mxu0 0.0
      %2084 = vmatpush1.msra.mxu0 0.0
      %2085 = vmatprep.subr.mxu0 0.0
      %2086 = vmatpush1.msra.mxu0 0.0
      %2087 = vmatprep.subr.mxu0 0.0
      %2088 = vmatpush1.msra.mxu0 0.0
      %2089 = vmatprep.subr.mxu0 0.0
      %2090 = vmatpush1.msra.mxu0 0.0
      %2091 = vmatprep.subr.mxu0 0.0
      %2092 = vmatpush1.msra.mxu0 0.0
      %2093 = vmatprep.subr.mxu0 0.0
      %2094 = vmatpush1.msra.mxu0 0.0
      %2095 = vmatprep.subr.mxu0 0.0
      %2096 = vmatpush1.msra.mxu0 0.0
      %2097 = vmatprep.subr.mxu0 0.0
      %2098 = vmatpush1.msra.mxu0 0.0
      %2099 = vmatprep.subr.mxu0 0.0
      %2100 = vmatpush1.msra.mxu0 0.0
      %2101 = vmatprep.subr.mxu0 0.0
      %2102 = vmatpush1.msra.mxu0 0.0
      %2103 = vmatprep.subr.mxu0 0.0
      %2104 = vmatpush1.msra.mxu0 0.0
      %2105 = vmatprep.subr.mxu0 0.0
      %2106 = vmatpush1.msra.mxu0 0.0
      %2107 = vmatprep.subr.mxu0 0.0
      %2108 = vmatpush1.msra.mxu0 0.0
      %2109 = vmatprep.subr.mxu0 0.0
      %2110 = vmatpush1.msra.mxu0 0.0
      %2111 = vmatprep.subr.mxu0 0.0
      %2112 = vmatpush1.msra.mxu0 0.0
      %2113 = vmatprep.subr.mxu0 0.0
      %2114 = vmatpush1.msra.mxu0 0.0
      %2115 = vmatprep.subr.mxu0 0.0
      %2116 = vmatpush1.msra.mxu0 0.0
      %2117 = vmatprep.subr.mxu0 0.0
      %2118 = vmatpush1.msra.mxu0 0.0
      %2119 = vmatprep.subr.mxu0 0.0
      %2120 = vmatpush1.msra.mxu0 0.0
      %2121 = vmatprep.subr.mxu0 0.0
      %2122 = vmatpush1.msra.mxu0 0.0
      %2123 = vmatprep.subr.mxu0 0.0
      %2124 = vmatpush1.msra.mxu0 0.0
      %2125 = vmatprep.subr.mxu0 0.0
      %2126 = vmatpush1.msra.mxu0 0.0
      %2127 = vmatprep.subr.mxu0 0.0
      %2128 = vmatpush1.msra.mxu0 0.0
      %2129 = vmatprep.subr.mxu0 0.0
      %2130 = vmatpush1.msra.mxu0 0.0
      %2131 = vmatprep.subr.mxu0 0.0
      %2132 = vmatpush1.msra.mxu0 0.0
      %2133 = vmatprep.mubr.f32.mxu0 0.0
      %2134 = vmatmul.mubr.f32.gmra.mrb[0].mxu0 %v2067
      %v2135 = vpop.f32.mrb[0].mxu0
      %v2136 = vadd.f32 %v2064, %v2135
      %v2137 = vpop.f32.mrb[0].mxu0
      %2138 = vdwg.mxu0
      %v2139 = vmul.f32 %v1971, %v1113
      %v2141 = vsel %vm871, %v2139, 0
      %v2144 = vsel %vm871, %v2052, 0
      %2146 = vmatprep.subr.mxu0 0.0
      %2147 = vmatpush1.xpose.msra.mxu0 %v2144
      %2148 = vmatprep.subr.mxu0 0.0
      %2149 = vmatpush1.xpose.msra.mxu0 0.0
      %2150 = vmatprep.subr.mxu0 0.0
      %2151 = vmatpush1.xpose.msra.mxu0 0.0
      %2152 = vmatprep.subr.mxu0 0.0
      %2153 = vmatpush1.xpose.msra.mxu0 0.0
      %2154 = vmatprep.subr.mxu0 0.0
      %2155 = vmatpush1.xpose.msra.mxu0 0.0
      %2156 = vmatprep.subr.mxu0 0.0
      %2157 = vmatpush1.xpose.msra.mxu0 0.0
      %2158 = vmatprep.subr.mxu0 0.0
      %2159 = vmatpush1.xpose.msra.mxu0 0.0
      %2160 = vmatprep.subr.mxu0 0.0
      %2161 = vmatpush1.xpose.msra.mxu0 0.0
      %2162 = vmatprep.subr.mxu0 0.0
      %2163 = vmatpush1.xpose.msra.mxu0 0.0
      %2164 = vmatprep.subr.mxu0 0.0
      %2165 = vmatpush1.xpose.msra.mxu0 0.0
      %2166 = vmatprep.subr.mxu0 0.0
      %2167 = vmatpush1.xpose.msra.mxu0 0.0
      %2168 = vmatprep.subr.mxu0 0.0
      %2169 = vmatpush1.xpose.msra.mxu0 0.0
      %2170 = vmatprep.subr.mxu0 0.0
      %2171 = vmatpush1.xpose.msra.mxu0 0.0
      %2172 = vmatprep.subr.mxu0 0.0
      %2173 = vmatpush1.xpose.msra.mxu0 0.0
      %2174 = vmatprep.subr.mxu0 0.0
      %2175 = vmatpush1.xpose.msra.mxu0 0.0
      %2176 = vmatprep.subr.mxu0 0.0
      %2177 = vmatpush1.xpose.msra.mxu0 0.0
      %2178 = vmatprep.subr.mxu0 0.0
      %2179 = vmatpush1.xpose.msra.mxu0 0.0
      %2180 = vmatprep.subr.mxu0 0.0
      %2181 = vmatpush1.xpose.msra.mxu0 0.0
      %2182 = vmatprep.subr.mxu0 0.0
      %2183 = vmatpush1.xpose.msra.mxu0 0.0
      %2184 = vmatprep.subr.mxu0 0.0
      %2185 = vmatpush1.xpose.msra.mxu0 0.0
      %2186 = vmatprep.subr.mxu0 0.0
      %2187 = vmatpush1.xpose.msra.mxu0 0.0
      %2188 = vmatprep.subr.mxu0 0.0
      %2189 = vmatpush1.xpose.msra.mxu0 0.0
      %2190 = vmatprep.subr.mxu0 0.0
      %2191 = vmatpush1.xpose.msra.mxu0 0.0
      %2192 = vmatprep.subr.mxu0 0.0
      %2193 = vmatpush1.xpose.msra.mxu0 0.0
      %2194 = vmatprep.subr.mxu0 0.0
      %2195 = vmatpush1.xpose.msra.mxu0 0.0
      %2196 = vmatprep.subr.mxu0 0.0
      %2197 = vmatpush1.xpose.msra.mxu0 0.0
      %2198 = vmatprep.subr.mxu0 0.0
      %2199 = vmatpush1.xpose.msra.mxu0 0.0
      %2200 = vmatprep.subr.mxu0 0.0
      %2201 = vmatpush1.xpose.msra.mxu0 0.0
      %2202 = vmatprep.subr.mxu0 0.0
      %2203 = vmatpush1.xpose.msra.mxu0 0.0
      %2204 = vmatprep.subr.mxu0 0.0
      %2205 = vmatpush1.xpose.msra.mxu0 0.0
      %2206 = vmatprep.subr.mxu0 0.0
      %2207 = vmatpush1.xpose.msra.mxu0 0.0
      %2208 = vmatprep.subr.mxu0 0.0
      %2209 = vmatpush1.xpose.msra.mxu0 0.0
      %2210 = vmatprep.mubr.f32.mxu0 0.0
      %2211 = vmatmul.mubr.f32.gmra.mrb[0].mxu0 %v2141
      %v2212 = vpop.f32.mrb[0].mxu0
      %v2213 = vadd.f32 0.0, %v2212
      %v2214 = vpop.f32.mrb[0].mxu0
      %2215 = vdwg.mxu0
      %v2216 = vmul.f32 %v2213, 0.35355338
      %v2217 = vsel %vm1192, %v2216, -inf
      %2218 = vmax.xlane.f32.xlu0 %v2217
      %v2219 = vpop.xlane.xlu0 %2218
      %v2220 = vsub.f32 %v2216, %v2219
      %v2221 = vmul.f32 %v2220, 1.442695
      %v2222 = vpow.pop %v2221
      %v2223 = vsel %vm1192, %v2222, 0.0
      %2224 = vadd.xlane.f32.xlu0 %v2223
      %v2225 = vpop.xlane.xlu0 %2224
      %v2226 = vrcp.pop %v2225
      %v2227 = vmul.f32 %v2222, %v2226
      %v2228 = vmul.f32 %v2136, %v1113
      %v2229 = vmul.f32 %v1971, %v1209
      %v2231 = vsel %vm871, %v2229, 0
      %2233 = vmatprep.subr.mxu0 0.0
      %2234 = vmatpush1.xpose.msra.mxu0 %v2144
      %2235 = vmatprep.subr.mxu0 0.0
      %2236 = vmatpush1.xpose.msra.mxu0 0.0
      %2237 = vmatprep.subr.mxu0 0.0
      %2238 = vmatpush1.xpose.msra.mxu0 0.0
      %2239 = vmatprep.subr.mxu0 0.0
      %2240 = vmatpush1.xpose.msra.mxu0 0.0
      %2241 = vmatprep.subr.mxu0 0.0
      %2242 = vmatpush1.xpose.msra.mxu0 0.0
      %2243 = vmatprep.subr.mxu0 0.0
      %2244 = vmatpush1.xpose.msra.mxu0 0.0
      %2245 = vmatprep.subr.mxu0 0.0
      %2246 = vmatpush1.xpose.msra.mxu0 0.0
      %2247 = vmatprep.subr.mxu0 0.0
      %2248 = vmatpush1.xpose.msra.mxu0 0.0
      %2249 = vmatprep.subr.mxu0 0.0
      %2250 = vmatpush1.xpose.msra.mxu0 0.0
      %2251 = vmatprep.subr.mxu0 0.0
      %2252 = vmatpush1.xpose.msra.mxu0 0.0
      %2253 = vmatprep.subr.mxu0 0.0
      %2254 = vmatpush1.xpose.msra.mxu0 0.0
      %2255 = vmatprep.subr.mxu0 0.0
      %2256 = vmatpush1.xpose.msra.mxu0 0.0
      %2257 = vmatprep.subr.mxu0 0.0
      %2258 = vmatpush1.xpose.msra.mxu0 0.0
      %2259 = vmatprep.subr.mxu0 0.0
      %2260 = vmatpush1.xpose.msra.mxu0 0.0
      %2261 = vmatprep.subr.mxu0 0.0
      %2262 = vmatpush1.xpose.msra.mxu0 0.0
      %2263 = vmatprep.subr.mxu0 0.0
      %2264 = vmatpush1.xpose.msra.mxu0 0.0
      %2265 = vmatprep.subr.mxu0 0.0
      %2266 = vmatpush1.xpose.msra.mxu0 0.0
      %2267 = vmatprep.subr.mxu0 0.0
      %2268 = vmatpush1.xpose.msra.mxu0 0.0
      %2269 = vmatprep.subr.mxu0 0.0
      %2270 = vmatpush1.xpose.msra.mxu0 0.0
      %2271 = vmatprep.subr.mxu0 0.0
      %2272 = vmatpush1.xpose.msra.mxu0 0.0
      %2273 = vmatprep.subr.mxu0 0.0
      %2274 = vmatpush1.xpose.msra.mxu0 0.0
      %2275 = vmatprep.subr.mxu0 0.0
      %2276 = vmatpush1.xpose.msra.mxu0 0.0
      %2277 = vmatprep.subr.mxu0 0.0
      %2278 = vmatpush1.xpose.msra.mxu0 0.0
      %2279 = vmatprep.subr.mxu0 0.0
      %2280 = vmatpush1.xpose.msra.mxu0 0.0
      %2281 = vmatprep.subr.mxu0 0.0
      %2282 = vmatpush1.xpose.msra.mxu0 0.0
      %2283 = vmatprep.subr.mxu0 0.0
      %2284 = vmatpush1.xpose.msra.mxu0 0.0
      %2285 = vmatprep.subr.mxu0 0.0
      %2286 = vmatpush1.xpose.msra.mxu0 0.0
      %2287 = vmatprep.subr.mxu0 0.0
      %2288 = vmatpush1.xpose.msra.mxu0 0.0
      %2289 = vmatprep.subr.mxu0 0.0
      %2290 = vmatpush1.xpose.msra.mxu0 0.0
      %2291 = vmatprep.subr.mxu0 0.0
      %2292 = vmatpush1.xpose.msra.mxu0 0.0
      %2293 = vmatprep.subr.mxu0 0.0
      %2294 = vmatpush1.xpose.msra.mxu0 0.0
      %2295 = vmatprep.subr.mxu0 0.0
      %2296 = vmatpush1.xpose.msra.mxu0 0.0
      %2297 = vmatprep.mubr.f32.mxu0 0.0
      %2298 = vmatmul.mubr.f32.gmra.mrb[0].mxu0 %v2231
      %v2299 = vpop.f32.mrb[0].mxu0
      %v2300 = vadd.f32 0.0, %v2299
      %v2301 = vpop.f32.mrb[0].mxu0
      %2302 = vdwg.mxu0
      %v2303 = vmul.f32 %v2300, 0.35355338
      %v2304 = vsel %vm1192, %v2303, -inf
      %2305 = vmax.xlane.f32.xlu0 %v2304
      %v2306 = vpop.xlane.xlu0 %2305
      %v2307 = vsub.f32 %v2303, %v2306
      %v2308 = vmul.f32 %v2307, 1.442695
      %v2309 = vpow.pop %v2308
      %v2310 = vsel %vm1192, %v2309, 0.0
      %2311 = vadd.xlane.f32.xlu0 %v2310
      %v2312 = vpop.xlane.xlu0 %2311
      %v2313 = vrcp.pop %v2312
      %v2314 = vmul.f32 %v2309, %v2313
      %v2315 = vmul.f32 %v2136, %v1209
      %v2317 = vsel %vm1192, %v2314, 0
      %2319 = vmatprep.subr.mxu0 0.0
      %2320 = vmatpush1.msra.mxu0 %v2315
      %2321 = vmatprep.subr.mxu0 0.0
      %2322 = vmatpush1.msra.mxu0 0.0
      %2323 = vmatprep.subr.mxu0 0.0
      %2324 = vmatpush1.msra.mxu0 0.0
      %2325 = vmatprep.subr.mxu0 0.0
      %2326 = vmatpush1.msra.mxu0 0.0
      %2327 = vmatprep.subr.mxu0 0.0
      %2328 = vmatpush1.msra.mxu0 0.0
      %2329 = vmatprep.subr.mxu0 0.0
      %2330 = vmatpush1.msra.mxu0 0.0
      %2331 = vmatprep.subr.mxu0 0.0
      %2332 = vmatpush1.msra.mxu0 0.0
      %2333 = vmatprep.subr.mxu0 0.0
      %2334 = vmatpush1.msra.mxu0 0.0
      %2335 = vmatprep.subr.mxu0 0.0
      %2336 = vmatpush1.msra.mxu0 0.0
      %2337 = vmatprep.subr.mxu0 0.0
      %2338 = vmatpush1.msra.mxu0 0.0
      %2339 = vmatprep.subr.mxu0 0.0
      %2340 = vmatpush1.msra.mxu0 0.0
      %2341 = vmatprep.subr.mxu0 0.0
      %2342 = vmatpush1.msra.mxu0 0.0
      %2343 = vmatprep.subr.mxu0 0.0
      %2344 = vmatpush1.msra.mxu0 0.0
      %2345 = vmatprep.subr.mxu0 0.0
      %2346 = vmatpush1.msra.mxu0 0.0
      %2347 = vmatprep.subr.mxu0 0.0
      %2348 = vmatpush1.msra.mxu0 0.0
      %2349 = vmatprep.subr.mxu0 0.0
      %2350 = vmatpush1.msra.mxu0 0.0
      %2351 = vmatprep.subr.mxu0 0.0
      %2352 = vmatpush1.msra.mxu0 0.0
      %2353 = vmatprep.subr.mxu0 0.0
      %2354 = vmatpush1.msra.mxu0 0.0
      %2355 = vmatprep.subr.mxu0 0.0
      %2356 = vmatpush1.msra.mxu0 0.0
      %2357 = vmatprep.subr.mxu0 0.0
      %2358 = vmatpush1.msra.mxu0 0.0
      %2359 = vmatprep.subr.mxu0 0.0
      %2360 = vmatpush1.msra.mxu0 0.0
      %2361 = vmatprep.subr.mxu0 0.0
      %2362 = vmatpush1.msra.mxu0 0.0
      %2363 = vmatprep.subr.mxu0 0.0
      %2364 = vmatpush1.msra.mxu0 0.0
      %2365 = vmatprep.subr.mxu0 0.0
      %2366 = vmatpush1.msra.mxu0 0.0
      %2367 = vmatprep.subr.mxu0 0.0
      %2368 = vmatpush1.msra.mxu0 0.0
      %2369 = vmatprep.subr.mxu0 0.0
      %2370 = vmatpush1.msra.mxu0 0.0
      %2371 = vmatprep.subr.mxu0 0.0
      %2372 = vmatpush1.msra.mxu0 0.0
      %2373 = vmatprep.subr.mxu0 0.0
      %2374 = vmatpush1.msra.mxu0 0.0
      %2375 = vmatprep.subr.mxu0 0.0
      %2376 = vmatpush1.msra.mxu0 0.0
      %2377 = vmatprep.subr.mxu0 0.0
      %2378 = vmatpush1.msra.mxu0 0.0
      %2379 = vmatprep.subr.mxu0 0.0
      %2380 = vmatpush1.msra.mxu0 0.0
      %2381 = vmatprep.subr.mxu0 0.0
      %2382 = vmatpush1.msra.mxu0 0.0
      %2383 = vmatprep.mubr.f32.mxu0 0.0
      %2384 = vmatmul.mubr.f32.gmra.mrb[0].mxu0 %v2317
      %v2385 = vpop.f32.mrb[0].mxu0
      %v2386 = vadd.f32 0.0, %v2385
      %v2387 = vpop.f32.mrb[0].mxu0
      %2388 = vdwg.mxu0
      %v2390 = vsel %vm1192, %v2227, 0
      %2392 = vmatprep.subr.mxu0 0.0
      %2393 = vmatpush1.msra.mxu0 %v2228
      %2394 = vmatprep.subr.mxu0 0.0
      %2395 = vmatpush1.msra.mxu0 0.0
      %2396 = vmatprep.subr.mxu0 0.0
      %2397 = vmatpush1.msra.mxu0 0.0
      %2398 = vmatprep.subr.mxu0 0.0
      %2399 = vmatpush1.msra.mxu0 0.0
      %2400 = vmatprep.subr.mxu0 0.0
      %2401 = vmatpush1.msra.mxu0 0.0
      %2402 = vmatprep.subr.mxu0 0.0
      %2403 = vmatpush1.msra.mxu0 0.0
      %2404 = vmatprep.subr.mxu0 0.0
      %2405 = vmatpush1.msra.mxu0 0.0
      %2406 = vmatprep.subr.mxu0 0.0
      %2407 = vmatpush1.msra.mxu0 0.0
      %2408 = vmatprep.subr.mxu0 0.0
      %2409 = vmatpush1.msra.mxu0 0.0
      %2410 = vmatprep.subr.mxu0 0.0
      %2411 = vmatpush1.msra.mxu0 0.0
      %2412 = vmatprep.subr.mxu0 0.0
      %2413 = vmatpush1.msra.mxu0 0.0
      %2414 = vmatprep.subr.mxu0 0.0
      %2415 = vmatpush1.msra.mxu0 0.0
      %2416 = vmatprep.subr.mxu0 0.0
      %2417 = vmatpush1.msra.mxu0 0.0
      %2418 = vmatprep.subr.mxu0 0.0
      %2419 = vmatpush1.msra.mxu0 0.0
      %2420 = vmatprep.subr.mxu0 0.0
      %2421 = vmatpush1.msra.mxu0 0.0
      %2422 = vmatprep.subr.mxu0 0.0
      %2423 = vmatpush1.msra.mxu0 0.0
      %2424 = vmatprep.subr.mxu0 0.0
      %2425 = vmatpush1.msra.mxu0 0.0
      %2426 = vmatprep.subr.mxu0 0.0
      %2427 = vmatpush1.msra.mxu0 0.0
      %2428 = vmatprep.subr.mxu0 0.0
      %2429 = vmatpush1.msra.mxu0 0.0
      %2430 = vmatprep.subr.mxu0 0.0
      %2431 = vmatpush1.msra.mxu0 0.0
      %2432 = vmatprep.subr.mxu0 0.0
      %2433 = vmatpush1.msra.mxu0 0.0
      %2434 = vmatprep.subr.mxu0 0.0
      %2435 = vmatpush1.msra.mxu0 0.0
      %2436 = vmatprep.subr.mxu0 0.0
      %2437 = vmatpush1.msra.mxu0 0.0
      %2438 = vmatprep.subr.mxu0 0.0
      %2439 = vmatpush1.msra.mxu0 0.0
      %2440 = vmatprep.subr.mxu0 0.0
      %2441 = vmatpush1.msra.mxu0 0.0
      %2442 = vmatprep.subr.mxu0 0.0
      %2443 = vmatpush1.msra.mxu0 0.0
      %2444 = vmatprep.subr.mxu0 0.0
      %2445 = vmatpush1.msra.mxu0 0.0
      %2446 = vmatprep.subr.mxu0 0.0
      %2447 = vmatpush1.msra.mxu0 0.0
      %2448 = vmatprep.subr.mxu0 0.0
      %2449 = vmatpush1.msra.mxu0 0.0
      %2450 = vmatprep.subr.mxu0 0.0
      %2451 = vmatpush1.msra.mxu0 0.0
      %2452 = vmatprep.subr.mxu0 0.0
      %2453 = vmatpush1.msra.mxu0 0.0
      %2454 = vmatprep.subr.mxu0 0.0
      %2455 = vmatpush1.msra.mxu0 0.0
      %2456 = vmatprep.mubr.f32.mxu0 0.0
      %2457 = vmatmul.mubr.f32.gmra.mrb[0].mxu0 %v2390
      %v2458 = vpop.f32.mrb[0].mxu0
      %v2459 = vadd.f32 %v2386, %v2458
      %v2460 = vpop.f32.mrb[0].mxu0
      %2461 = vdwg.mxu0
      %v2462 = vmul.f32 %v1971, %v1447
      %v2464 = vsel %vm871, %v2462, 0
      %2466 = vmatprep.subr.mxu0 0.0
      %2467 = vmatpush1.xpose.msra.mxu0 %v2144
      %2468 = vmatprep.subr.mxu0 0.0
      %2469 = vmatpush1.xpose.msra.mxu0 0.0
      %2470 = vmatprep.subr.mxu0 0.0
      %2471 = vmatpush1.xpose.msra.mxu0 0.0
      %2472 = vmatprep.subr.mxu0 0.0
      %2473 = vmatpush1.xpose.msra.mxu0 0.0
      %2474 = vmatprep.subr.mxu0 0.0
      %2475 = vmatpush1.xpose.msra.mxu0 0.0
      %2476 = vmatprep.subr.mxu0 0.0
      %2477 = vmatpush1.xpose.msra.mxu0 0.0
      %2478 = vmatprep.subr.mxu0 0.0
      %2479 = vmatpush1.xpose.msra.mxu0 0.0
      %2480 = vmatprep.subr.mxu0 0.0
      %2481 = vmatpush1.xpose.msra.mxu0 0.0
      %2482 = vmatprep.subr.mxu0 0.0
      %2483 = vmatpush1.xpose.msra.mxu0 0.0
      %2484 = vmatprep.subr.mxu0 0.0
      %2485 = vmatpush1.xpose.msra.mxu0 0.0
      %2486 = vmatprep.subr.mxu0 0.0
      %2487 = vmatpush1.xpose.msra.mxu0 0.0
      %2488 = vmatprep.subr.mxu0 0.0
      %2489 = vmatpush1.xpose.msra.mxu0 0.0
      %2490 = vmatprep.subr.mxu0 0.0
      %2491 = vmatpush1.xpose.msra.mxu0 0.0
      %2492 = vmatprep.subr.mxu0 0.0
      %2493 = vmatpush1.xpose.msra.mxu0 0.0
      %2494 = vmatprep.subr.mxu0 0.0
      %2495 = vmatpush1.xpose.msra.mxu0 0.0
      %2496 = vmatprep.subr.mxu0 0.0
      %2497 = vmatpush1.xpose.msra.mxu0 0.0
      %2498 = vmatprep.subr.mxu0 0.0
      %2499 = vmatpush1.xpose.msra.mxu0 0.0
      %2500 = vmatprep.subr.mxu0 0.0
      %2501 = vmatpush1.xpose.msra.mxu0 0.0
      %2502 = vmatprep.subr.mxu0 0.0
      %2503 = vmatpush1.xpose.msra.mxu0 0.0
      %2504 = vmatprep.subr.mxu0 0.0
      %2505 = vmatpush1.xpose.msra.mxu0 0.0
      %2506 = vmatprep.subr.mxu0 0.0
      %2507 = vmatpush1.xpose.msra.mxu0 0.0
      %2508 = vmatprep.subr.mxu0 0.0
      %2509 = vmatpush1.xpose.msra.mxu0 0.0
      %2510 = vmatprep.subr.mxu0 0.0
      %2511 = vmatpush1.xpose.msra.mxu0 0.0
      %2512 = vmatprep.subr.mxu0 0.0
      %2513 = vmatpush1.xpose.msra.mxu0 0.0
      %2514 = vmatprep.subr.mxu0 0.0
      %2515 = vmatpush1.xpose.msra.mxu0 0.0
      %2516 = vmatprep.subr.mxu0 0.0
      %2517 = vmatpush1.xpose.msra.mxu0 0.0
      %2518 = vmatprep.subr.mxu0 0.0
      %2519 = vmatpush1.xpose.msra.mxu0 0.0
      %2520 = vmatprep.subr.mxu0 0.0
      %2521 = vmatpush1.xpose.msra.mxu0 0.0
      %2522 = vmatprep.subr.mxu0 0.0
      %2523 = vmatpush1.xpose.msra.mxu0 0.0
      %2524 = vmatprep.subr.mxu0 0.0
      %2525 = vmatpush1.xpose.msra.mxu0 0.0
      %2526 = vmatprep.subr.mxu0 0.0
      %2527 = vmatpush1.xpose.msra.mxu0 0.0
      %2528 = vmatprep.subr.mxu0 0.0
      %2529 = vmatpush1.xpose.msra.mxu0 0.0
      %2530 = vmatprep.mubr.f32.mxu0 0.0
      %2531 = vmatmul.mubr.f32.gmra.mrb[0].mxu0 %v2464
      %v2532 = vpop.f32.mrb[0].mxu0
      %v2533 = vadd.f32 0.0, %v2532
      %v2534 = vpop.f32.mrb[0].mxu0
      %2535 = vdwg.mxu0
      %v2536 = vmul.f32 %v2533, 0.35355338
      %v2537 = vsel %vm1192, %v2536, -inf
      %2538 = vmax.xlane.f32.xlu0 %v2537
      %v2539 = vpop.xlane.xlu0 %2538
      %v2540 = vsub.f32 %v2536, %v2539
      %v2541 = vmul.f32 %v2540, 1.442695
      %v2542 = vpow.pop %v2541
      %v2543 = vsel %vm1192, %v2542, 0.0
      %2544 = vadd.xlane.f32.xlu0 %v2543
      %v2545 = vpop.xlane.xlu0 %2544
      %v2546 = vrcp.pop %v2545
      %v2547 = vmul.f32 %v2542, %v2546
      %v2548 = vmul.f32 %v2136, %v1447
      %v2550 = vsel %vm1192, %v2547, 0
      %2552 = vmatprep.subr.mxu0 0.0
      %2553 = vmatpush1.msra.mxu0 %v2548
      %2554 = vmatprep.subr.mxu0 0.0
      %2555 = vmatpush1.msra.mxu0 0.0
      %2556 = vmatprep.subr.mxu0 0.0
      %2557 = vmatpush1.msra.mxu0 0.0
      %2558 = vmatprep.subr.mxu0 0.0
      %2559 = vmatpush1.msra.mxu0 0.0
      %2560 = vmatprep.subr.mxu0 0.0
      %2561 = vmatpush1.msra.mxu0 0.0
      %2562 = vmatprep.subr.mxu0 0.0
      %2563 = vmatpush1.msra.mxu0 0.0
      %2564 = vmatprep.subr.mxu0 0.0
      %2565 = vmatpush1.msra.mxu0 0.0
      %2566 = vmatprep.subr.mxu0 0.0
      %2567 = vmatpush1.msra.mxu0 0.0
      %2568 = vmatprep.subr.mxu0 0.0
      %2569 = vmatpush1.msra.mxu0 0.0
      %2570 = vmatprep.subr.mxu0 0.0
      %2571 = vmatpush1.msra.mxu0 0.0
      %2572 = vmatprep.subr.mxu0 0.0
      %2573 = vmatpush1.msra.mxu0 0.0
      %2574 = vmatprep.subr.mxu0 0.0
      %2575 = vmatpush1.msra.mxu0 0.0
      %2576 = vmatprep.subr.mxu0 0.0
      %2577 = vmatpush1.msra.mxu0 0.0
      %2578 = vmatprep.subr.mxu0 0.0
      %2579 = vmatpush1.msra.mxu0 0.0
      %2580 = vmatprep.subr.mxu0 0.0
      %2581 = vmatpush1.msra.mxu0 0.0
      %2582 = vmatprep.subr.mxu0 0.0
      %2583 = vmatpush1.msra.mxu0 0.0
      %2584 = vmatprep.subr.mxu0 0.0
      %2585 = vmatpush1.msra.mxu0 0.0
      %2586 = vmatprep.subr.mxu0 0.0
      %2587 = vmatpush1.msra.mxu0 0.0
      %2588 = vmatprep.subr.mxu0 0.0
      %2589 = vmatpush1.msra.mxu0 0.0
      %2590 = vmatprep.subr.mxu0 0.0
      %2591 = vmatpush1.msra.mxu0 0.0
      %2592 = vmatprep.subr.mxu0 0.0
      %2593 = vmatpush1.msra.mxu0 0.0
      %2594 = vmatprep.subr.mxu0 0.0
      %2595 = vmatpush1.msra.mxu0 0.0
      %2596 = vmatprep.subr.mxu0 0.0
      %2597 = vmatpush1.msra.mxu0 0.0
      %2598 = vmatprep.subr.mxu0 0.0
      %2599 = vmatpush1.msra.mxu0 0.0
      %2600 = vmatprep.subr.mxu0 0.0
      %2601 = vmatpush1.msra.mxu0 0.0
      %2602 = vmatprep.subr.mxu0 0.0
      %2603 = vmatpush1.msra.mxu0 0.0
      %2604 = vmatprep.subr.mxu0 0.0
      %2605 = vmatpush1.msra.mxu0 0.0
      %2606 = vmatprep.subr.mxu0 0.0
      %2607 = vmatpush1.msra.mxu0 0.0
      %2608 = vmatprep.subr.mxu0 0.0
      %2609 = vmatpush1.msra.mxu0 0.0
      %2610 = vmatprep.subr.mxu0 0.0
      %2611 = vmatpush1.msra.mxu0 0.0
      %2612 = vmatprep.subr.mxu0 0.0
      %2613 = vmatpush1.msra.mxu0 0.0
      %2614 = vmatprep.subr.mxu0 0.0
      %2615 = vmatpush1.msra.mxu0 0.0
      %2616 = vmatprep.mubr.f32.mxu0 0.0
      %2617 = vmatmul.mubr.f32.gmra.mrb[0].mxu0 %v2550
      %v2618 = vpop.f32.mrb[0].mxu0
      %v2619 = vadd.f32 0.0, %v2618
      %v2620 = vpop.f32.mrb[0].mxu0
      %2621 = vdwg.mxu0
      %v2622 = vadd.f32 %v2459, %v2619
      %v2623 = vmul.f32 %v1971, %v1613
      %v2625 = vsel %vm871, %v2623, 0
      %2627 = vmatprep.subr.mxu0 0.0
      %2628 = vmatpush1.xpose.msra.mxu0 %v2144
      %2629 = vmatprep.subr.mxu0 0.0
      %2630 = vmatpush1.xpose.msra.mxu0 0.0
      %2631 = vmatprep.subr.mxu0 0.0
      %2632 = vmatpush1.xpose.msra.mxu0 0.0
      %2633 = vmatprep.subr.mxu0 0.0
      %2634 = vmatpush1.xpose.msra.mxu0 0.0
      %2635 = vmatprep.subr.mxu0 0.0
      %2636 = vmatpush1.xpose.msra.mxu0 0.0
      %2637 = vmatprep.subr.mxu0 0.0
      %2638 = vmatpush1.xpose.msra.mxu0 0.0
      %2639 = vmatprep.subr.mxu0 0.0
      %2640 = vmatpush1.xpose.msra.mxu0 0.0
      %2641 = vmatprep.subr.mxu0 0.0
      %2642 = vmatpush1.xpose.msra.mxu0 0.0
      %2643 = vmatprep.subr.mxu0 0.0
      %2644 = vmatpush1.xpose.msra.mxu0 0.0
      %2645 = vmatprep.subr.mxu0 0.0
      %2646 = vmatpush1.xpose.msra.mxu0 0.0
      %2647 = vmatprep.subr.mxu0 0.0
      %2648 = vmatpush1.xpose.msra.mxu0 0.0
      %2649 = vmatprep.subr.mxu0 0.0
      %2650 = vmatpush1.xpose.msra.mxu0 0.0
      %2651 = vmatprep.subr.mxu0 0.0
      %2652 = vmatpush1.xpose.msra.mxu0 0.0
      %2653 = vmatprep.subr.mxu0 0.0
      %2654 = vmatpush1.xpose.msra.mxu0 0.0
      %2655 = vmatprep.subr.mxu0 0.0
      %2656 = vmatpush1.xpose.msra.mxu0 0.0
      %2657 = vmatprep.subr.mxu0 0.0
      %2658 = vmatpush1.xpose.msra.mxu0 0.0
      %2659 = vmatprep.subr.mxu0 0.0
      %2660 = vmatpush1.xpose.msra.mxu0 0.0
      %2661 = vmatprep.subr.mxu0 0.0
      %2662 = vmatpush1.xpose.msra.mxu0 0.0
      %2663 = vmatprep.subr.mxu0 0.0
      %2664 = vmatpush1.xpose.msra.mxu0 0.0
      %2665 = vmatprep.subr.mxu0 0.0
      %2666 = vmatpush1.xpose.msra.mxu0 0.0
      %2667 = vmatprep.subr.mxu0 0.0
      %2668 = vmatpush1.xpose.msra.mxu0 0.0
      %2669 = vmatprep.subr.mxu0 0.0
      %2670 = vmatpush1.xpose.msra.mxu0 0.0
      %2671 = vmatprep.subr.mxu0 0.0
      %2672 = vmatpush1.xpose.msra.mxu0 0.0
      %2673 = vmatprep.subr.mxu0 0.0
      %2674 = vmatpush1.xpose.msra.mxu0 0.0
      %2675 = vmatprep.subr.mxu0 0.0
      %2676 = vmatpush1.xpose.msra.mxu0 0.0
      %2677 = vmatprep.subr.mxu0 0.0
      %2678 = vmatpush1.xpose.msra.mxu0 0.0
      %2679 = vmatprep.subr.mxu0 0.0
      %2680 = vmatpush1.xpose.msra.mxu0 0.0
      %2681 = vmatprep.subr.mxu0 0.0
      %2682 = vmatpush1.xpose.msra.mxu0 0.0
      %2683 = vmatprep.subr.mxu0 0.0
      %2684 = vmatpush1.xpose.msra.mxu0 0.0
      %2685 = vmatprep.subr.mxu0 0.0
      %2686 = vmatpush1.xpose.msra.mxu0 0.0
      %2687 = vmatprep.subr.mxu0 0.0
      %2688 = vmatpush1.xpose.msra.mxu0 0.0
      %2689 = vmatprep.subr.mxu0 0.0
      %2690 = vmatpush1.xpose.msra.mxu0 0.0
      %2691 = vmatprep.mubr.f32.mxu0 0.0
      %2692 = vmatmul.mubr.f32.gmra.mrb[0].mxu0 %v2625
      %v2693 = vpop.f32.mrb[0].mxu0
      %v2694 = vadd.f32 0.0, %v2693
      %v2695 = vpop.f32.mrb[0].mxu0
      %2696 = vdwg.mxu0
      %v2697 = vmul.f32 %v2694, 0.35355338
      %v2698 = vsel %vm1192, %v2697, -inf
      %2699 = vmax.xlane.f32.xlu0 %v2698
      %v2700 = vpop.xlane.xlu0 %2699
      %v2701 = vsub.f32 %v2697, %v2700
      %v2702 = vmul.f32 %v2701, 1.442695
      %v2703 = vpow.pop %v2702
      %v2704 = vsel %vm1192, %v2703, 0.0
      %2705 = vadd.xlane.f32.xlu0 %v2704
      %v2706 = vpop.xlane.xlu0 %2705
      %v2707 = vrcp.pop %v2706
      %v2708 = vmul.f32 %v2703, %v2707
      %v2709 = vmul.f32 %v2136, %v1613
      %v2711 = vsel %vm1192, %v2708, 0
      %2713 = vmatprep.subr.mxu0 0.0
      %2714 = vmatpush1.msra.mxu0 %v2709
      %2715 = vmatprep.subr.mxu0 0.0
      %2716 = vmatpush1.msra.mxu0 0.0
      %2717 = vmatprep.subr.mxu0 0.0
      %2718 = vmatpush1.msra.mxu0 0.0
      %2719 = vmatprep.subr.mxu0 0.0
      %2720 = vmatpush1.msra.mxu0 0.0
      %2721 = vmatprep.subr.mxu0 0.0
      %2722 = vmatpush1.msra.mxu0 0.0
      %2723 = vmatprep.subr.mxu0 0.0
      %2724 = vmatpush1.msra.mxu0 0.0
      %2725 = vmatprep.subr.mxu0 0.0
      %2726 = vmatpush1.msra.mxu0 0.0
      %2727 = vmatprep.subr.mxu0 0.0
      %2728 = vmatpush1.msra.mxu0 0.0
      %2729 = vmatprep.subr.mxu0 0.0
      %2730 = vmatpush1.msra.mxu0 0.0
      %2731 = vmatprep.subr.mxu0 0.0
      %2732 = vmatpush1.msra.mxu0 0.0
      %2733 = vmatprep.subr.mxu0 0.0
      %2734 = vmatpush1.msra.mxu0 0.0
      %2735 = vmatprep.subr.mxu0 0.0
      %2736 = vmatpush1.msra.mxu0 0.0
      %2737 = vmatprep.subr.mxu0 0.0
      %2738 = vmatpush1.msra.mxu0 0.0
      %2739 = vmatprep.subr.mxu0 0.0
      %2740 = vmatpush1.msra.mxu0 0.0
      %2741 = vmatprep.subr.mxu0 0.0
      %2742 = vmatpush1.msra.mxu0 0.0
      %2743 = vmatprep.subr.mxu0 0.0
      %2744 = vmatpush1.msra.mxu0 0.0
      %2745 = vmatprep.subr.mxu0 0.0
      %2746 = vmatpush1.msra.mxu0 0.0
      %2747 = vmatprep.subr.mxu0 0.0
      %2748 = vmatpush1.msra.mxu0 0.0
      %2749 = vmatprep.subr.mxu0 0.0
      %2750 = vmatpush1.msra.mxu0 0.0
      %2751 = vmatprep.subr.mxu0 0.0
      %2752 = vmatpush1.msra.mxu0 0.0
      %2753 = vmatprep.subr.mxu0 0.0
      %2754 = vmatpush1.msra.mxu0 0.0
      %2755 = vmatprep.subr.mxu0 0.0
      %2756 = vmatpush1.msra.mxu0 0.0
      %2757 = vmatprep.subr.mxu0 0.0
      %2758 = vmatpush1.msra.mxu0 0.0
      %2759 = vmatprep.subr.mxu0 0.0
      %2760 = vmatpush1.msra.mxu0 0.0
      %2761 = vmatprep.subr.mxu0 0.0
      %2762 = vmatpush1.msra.mxu0 0.0
      %2763 = vmatprep.subr.mxu0 0.0
      %2764 = vmatpush1.msra.mxu0 0.0
      %2765 = vmatprep.subr.mxu0 0.0
      %2766 = vmatpush1.msra.mxu0 0.0
      %2767 = vmatprep.subr.mxu0 0.0
      %2768 = vmatpush1.msra.mxu0 0.0
      %2769 = vmatprep.subr.mxu0 0.0
      %2770 = vmatpush1.msra.mxu0 0.0
      %2771 = vmatprep.subr.mxu0 0.0
      %2772 = vmatpush1.msra.mxu0 0.0
      %2773 = vmatprep.subr.mxu0 0.0
      %2774 = vmatpush1.msra.mxu0 0.0
      %2775 = vmatprep.subr.mxu0 0.0
      %2776 = vmatpush1.msra.mxu0 0.0
      %2777 = vmatprep.mubr.f32.mxu0 0.0
      %2778 = vmatmul.mubr.f32.gmra.mrb[0].mxu0 %v2711
      %v2779 = vpop.f32.mrb[0].mxu0
      %v2780 = vadd.f32 0.0, %v2779
      %v2781 = vpop.f32.mrb[0].mxu0
      %2782 = vdwg.mxu0
      %v2783 = vadd.f32 %v2622, %v2780
      %v2784 = vld [vmem:[%s16] sm:$0xff]
      %v2785 = vld [vmem:[%s16 + $0x8] sm:$0xff]
      %v2786 = vld [vmem:[%s16 + $0x10] sm:$0xff]
      %v2787 = vld [vmem:[%s16 + $0x18] sm:$0xff]
      %v2788 = vld [vmem:[%s17] sm:$0x1]
      %v2790 = vlaneseq
      %v2791 = vshrl.u32 %v2790, 7
      %v2792 = vsub.s32 0, %v2791
      %v2793 = vrot.slane %v2788, %v2792
      %v2796 = vsel %vm871, %v2783, 0
      %2798 = vmatprep.subr.mxu0 0.0
      %2799 = vmatpush1.msra.mxu0 %v2784
      %2800 = vmatprep.subr.mxu0 0.0
      %2801 = vmatpush1.msra.mxu0 %v2785
      %2802 = vmatprep.subr.mxu0 0.0
      %2803 = vmatpush1.msra.mxu0 %v2786
      %2804 = vmatprep.subr.mxu0 0.0
      %2805 = vmatpush1.msra.mxu0 %v2787
      %2806 = vmatprep.subr.mxu0 0.0
      %2807 = vmatpush1.msra.mxu0 0.0
      %2808 = vmatprep.subr.mxu0 0.0
      %2809 = vmatpush1.msra.mxu0 0.0
      %2810 = vmatprep.subr.mxu0 0.0
      %2811 = vmatpush1.msra.mxu0 0.0
      %2812 = vmatprep.subr.mxu0 0.0
      %2813 = vmatpush1.msra.mxu0 0.0
      %2814 = vmatprep.subr.mxu0 0.0
      %2815 = vmatpush1.msra.mxu0 0.0
      %2816 = vmatprep.subr.mxu0 0.0
      %2817 = vmatpush1.msra.mxu0 0.0
      %2818 = vmatprep.subr.mxu0 0.0
      %2819 = vmatpush1.msra.mxu0 0.0
      %2820 = vmatprep.subr.mxu0 0.0
      %2821 = vmatpush1.msra.mxu0 0.0
      %2822 = vmatprep.subr.mxu0 0.0
      %2823 = vmatpush1.msra.mxu0 0.0
      %2824 = vmatprep.subr.mxu0 0.0
      %2825 = vmatpush1.msra.mxu0 0.0
      %2826 = vmatprep.subr.mxu0 0.0
      %2827 = vmatpush1.msra.mxu0 0.0
      %2828 = vmatprep.subr.mxu0 0.0
      %2829 = vmatpush1.msra.mxu0 0.0
      %2830 = vmatprep.subr.mxu0 0.0
      %2831 = vmatpush1.msra.mxu0 0.0
      %2832 = vmatprep.subr.mxu0 0.0
      %2833 = vmatpush1.msra.mxu0 0.0
      %2834 = vmatprep.subr.mxu0 0.0
      %2835 = vmatpush1.msra.mxu0 0.0
      %2836 = vmatprep.subr.mxu0 0.0
      %2837 = vmatpush1.msra.mxu0 0.0
      %2838 = vmatprep.subr.mxu0 0.0
      %2839 = vmatpush1.msra.mxu0 0.0
      %2840 = vmatprep.subr.mxu0 0.0
      %2841 = vmatpush1.msra.mxu0 0.0
      %2842 = vmatprep.subr.mxu0 0.0
      %2843 = vmatpush1.msra.mxu0 0.0
      %2844 = vmatprep.subr.mxu0 0.0
      %2845 = vmatpush1.msra.mxu0 0.0
      %2846 = vmatprep.subr.mxu0 0.0
      %2847 = vmatpush1.msra.mxu0 0.0
      %2848 = vmatprep.subr.mxu0 0.0
      %2849 = vmatpush1.msra.mxu0 0.0
      %2850 = vmatprep.subr.mxu0 0.0
      %2851 = vmatpush1.msra.mxu0 0.0
      %2852 = vmatprep.subr.mxu0 0.0
      %2853 = vmatpush1.msra.mxu0 0.0
      %2854 = vmatprep.subr.mxu0 0.0
      %2855 = vmatpush1.msra.mxu0 0.0
      %2856 = vmatprep.subr.mxu0 0.0
      %2857 = vmatpush1.msra.mxu0 0.0
      %2858 = vmatprep.subr.mxu0 0.0
      %2859 = vmatpush1.msra.mxu0 0.0
      %2860 = vmatprep.subr.mxu0 0.0
      %2861 = vmatpush1.msra.mxu0 0.0
      %2862 = vmatprep.mubr.f32.mxu0 0.0
      %2863 = vmatmul.mubr.f32.gmra.mrb[0].mxu0 %v2796
      %v2864 = vpop.f32.mrb[0].mxu0
      %v2865 = vadd.f32 %v2793, %v2864
      %v2866 = vpop.f32.mrb[0].mxu0
      %2867 = vdwg.mxu0
      %v2868 = vld [vmem:[%s24] sm:$0x1]
      %v2869 = vld [vmem:[%s25] sm:$0x1]
      %v2870 = vadd.f32 %v1889, %v2865
      %v2871 = vsel %vm871, %v2870, 0.0
      %2872 = vadd.xlane.f32.xlu0 %v2871
      %v2873 = vpop.xlane.xlu0 %2872
      %v2874 = vmul.f32 %v2873, %v1865
      %v2875 = vsub.f32 %v2870, %v2874
      %v2876 = vmul.f32 %v2875, %v2875
      %v2877 = vsel %vm871, %v2876, 0.0
      %2878 = vadd.xlane.f32.xlu0 %v2877
      %v2879 = vpop.xlane.xlu0 %2878
      %v2880 = vmul.f32 %v2879, %v1865
      %v2881 = vadd.f32 %v2880, 1e-05
      %v2882 = vrsqrt.pop %v2881
      %v2883 = vmul.f32 %v2875, %v2882
      %v2885 = vlaneseq
      %v2886 = vshrl.u32 %v2885, 7
      %v2887 = vsub.s32 0, %v2886
      %v2888 = vrot.slane %v2868, %v2887
      %v2890 = vmul.f32 %v2883, %v2888
      %v2892 = vlaneseq
      %v2893 = vshrl.u32 %v2892, 7
      %v2894 = vsub.s32 0, %v2893
      %v2895 = vrot.slane %v2869, %v2894
      %v2897 = vadd.f32 %v2890, %v2895
      %v2898 = vld [vmem:[%s18] sm:$0xff]
      %v2899 = vld [vmem:[%s18 + $0x8] sm:$0xff]
      %v2900 = vld [vmem:[%s18 + $0x10] sm:$0xff]
      %v2901 = vld [vmem:[%s18 + $0x18] sm:$0xff]
      %v2902 = vld [vmem:[%s19] sm:$0x1]
      %v2904 = vlaneseq
      %v2905 = vshrl.u32 %v2904, 7
      %v2906 = vsub.s32 0, %v2905
      %v2907 = vrot.slane %v2902, %v2906
      %v2910 = vsel %vm871, %v2897, 0
      %2912 = vmatprep.subr.mxu0 0.0
      %2913 = vmatpush1.msra.mxu0 %v2898
      %2914 = vmatprep.subr.mxu0 0.0
      %2915 = vmatpush1.msra.mxu0 %v2899
      %2916 = vmatprep.subr.mxu0 0.0
      %2917 = vmatpush1.msra.mxu0 %v2900
      %2918 = vmatprep.subr.mxu0 0.0
      %2919 = vmatpush1.msra.mxu0 %v2901
      %2920 = vmatprep.subr.mxu0 0.0
      %2921 = vmatpush1.msra.mxu0 0.0
      %2922 = vmatprep.subr.mxu0 0.0
      %2923 = vmatpush1.msra.mxu0 0.0
      %2924 = vmatprep.subr.mxu0 0.0
      %2925 = vmatpush1.msra.mxu0 0.0
      %2926 = vmatprep.subr.mxu0 0.0
      %2927 = vmatpush1.msra.mxu0 0.0
      %2928 = vmatprep.subr.mxu0 0.0
      %2929 = vmatpush1.msra.mxu0 0.0
      %2930 = vmatprep.subr.mxu0 0.0
      %2931 = vmatpush1.msra.mxu0 0.0
      %2932 = vmatprep.subr.mxu0 0.0
      %2933 = vmatpush1.msra.mxu0 0.0
      %2934 = vmatprep.subr.mxu0 0.0
      %2935 = vmatpush1.msra.mxu0 0.0
      %2936 = vmatprep.subr.mxu0 0.0
      %2937 = vmatpush1.msra.mxu0 0.0
      %2938 = vmatprep.subr.mxu0 0.0
      %2939 = vmatpush1.msra.mxu0 0.0
      %2940 = vmatprep.subr.mxu0 0.0
      %2941 = vmatpush1.msra.mxu0 0.0
      %2942 = vmatprep.subr.mxu0 0.0
      %2943 = vmatpush1.msra.mxu0 0.0
      %2944 = vmatprep.subr.mxu0 0.0
      %2945 = vmatpush1.msra.mxu0 0.0
      %2946 = vmatprep.subr.mxu0 0.0
      %2947 = vmatpush1.msra.mxu0 0.0
      %2948 = vmatprep.subr.mxu0 0.0
      %2949 = vmatpush1.msra.mxu0 0.0
      %2950 = vmatprep.subr.mxu0 0.0
      %2951 = vmatpush1.msra.mxu0 0.0
      %2952 = vmatprep.subr.mxu0 0.0
      %2953 = vmatpush1.msra.mxu0 0.0
      %2954 = vmatprep.subr.mxu0 0.0
      %2955 = vmatpush1.msra.mxu0 0.0
      %2956 = vmatprep.subr.mxu0 0.0
      %2957 = vmatpush1.msra.mxu0 0.0
      %2958 = vmatprep.subr.mxu0 0.0
      %2959 = vmatpush1.msra.mxu0 0.0
      %2960 = vmatprep.subr.mxu0 0.0
      %2961 = vmatpush1.msra.mxu0 0.0
      %2962 = vmatprep.subr.mxu0 0.0
      %2963 = vmatpush1.msra.mxu0 0.0
      %2964 = vmatprep.subr.mxu0 0.0
      %2965 = vmatpush1.msra.mxu0 0.0
      %2966 = vmatprep.subr.mxu0 0.0
      %2967 = vmatpush1.msra.mxu0 0.0
      %2968 = vmatprep.subr.mxu0 0.0
      %2969 = vmatpush1.msra.mxu0 0.0
      %2970 = vmatprep.subr.mxu0 0.0
      %2971 = vmatpush1.msra.mxu0 0.0
      %2972 = vmatprep.subr.mxu0 0.0
      %2973 = vmatpush1.msra.mxu0 0.0
      %2974 = vmatprep.subr.mxu0 0.0
      %2975 = vmatpush1.msra.mxu0 0.0
      %2976 = vmatprep.mubr.f32.mxu0 0.0
      %2977 = vmatmul.mubr.f32.gmra.mrb[0].mxu0 %v2910
      %v2978 = vpop.f32.mrb[0].mxu0
      %v2979 = vadd.f32 %v2907, %v2978
      %v2980 = vpop.f32.mrb[0].mxu0
      %2981 = vdwg.mxu0
      %v2982 = vmax.f32 %v2979, 0.0
      %v2983 = vld [vmem:[%s20] sm:$0xff]
      %v2984 = vld [vmem:[%s20 + $0x8] sm:$0xff]
      %v2985 = vld [vmem:[%s20 + $0x10] sm:$0xff]
      %v2986 = vld [vmem:[%s20 + $0x18] sm:$0xff]
      %v2987 = vld [vmem:[%s20 + $0x20] sm:$0xff]
      %v2988 = vld [vmem:[%s20 + $0x28] sm:$0xff]
      %v2989 = vld [vmem:[%s20 + $0x30] sm:$0xff]
      %v2990 = vld [vmem:[%s20 + $0x38] sm:$0xff]
      %v2991 = vld [vmem:[%s21] sm:$0x1]
      %v2993 = vlaneseq
      %v2994 = vshrl.u32 %v2993, 7
      %v2995 = vsub.s32 0, %v2994
      %v2996 = vrot.slane %v2991, %v2995
      %vm2998 = vcmask 523264
      %v3000 = vsel %vm2998, %v2982, 0
      %3002 = vmatprep.subr.mxu0 0.0
      %3003 = vmatpush1.msra.mxu0 %v2983
      %3004 = vmatprep.subr.mxu0 0.0
      %3005 = vmatpush1.msra.mxu0 %v2984
      %3006 = vmatprep.subr.mxu0 0.0
      %3007 = vmatpush1.msra.mxu0 %v2985
      %3008 = vmatprep.subr.mxu0 0.0
      %3009 = vmatpush1.msra.mxu0 %v2986
      %3010 = vmatprep.subr.mxu0 0.0
      %3011 = vmatpush1.msra.mxu0 %v2987
      %3012 = vmatprep.subr.mxu0 0.0
      %3013 = vmatpush1.msra.mxu0 %v2988
      %3014 = vmatprep.subr.mxu0 0.0
      %3015 = vmatpush1.msra.mxu0 %v2989
      %3016 = vmatprep.subr.mxu0 0.0
      %3017 = vmatpush1.msra.mxu0 %v2990
      %3018 = vmatprep.subr.mxu0 0.0
      %3019 = vmatpush1.msra.mxu0 0.0
      %3020 = vmatprep.subr.mxu0 0.0
      %3021 = vmatpush1.msra.mxu0 0.0
      %3022 = vmatprep.subr.mxu0 0.0
      %3023 = vmatpush1.msra.mxu0 0.0
      %3024 = vmatprep.subr.mxu0 0.0
      %3025 = vmatpush1.msra.mxu0 0.0
      %3026 = vmatprep.subr.mxu0 0.0
      %3027 = vmatpush1.msra.mxu0 0.0
      %3028 = vmatprep.subr.mxu0 0.0
      %3029 = vmatpush1.msra.mxu0 0.0
      %3030 = vmatprep.subr.mxu0 0.0
      %3031 = vmatpush1.msra.mxu0 0.0
      %3032 = vmatprep.subr.mxu0 0.0
      %3033 = vmatpush1.msra.mxu0 0.0
      %3034 = vmatprep.subr.mxu0 0.0
      %3035 = vmatpush1.msra.mxu0 0.0
      %3036 = vmatprep.subr.mxu0 0.0
      %3037 = vmatpush1.msra.mxu0 0.0
      %3038 = vmatprep.subr.mxu0 0.0
      %3039 = vmatpush1.msra.mxu0 0.0
      %3040 = vmatprep.subr.mxu0 0.0
      %3041 = vmatpush1.msra.mxu0 0.0
      %3042 = vmatprep.subr.mxu0 0.0
      %3043 = vmatpush1.msra.mxu0 0.0
      %3044 = vmatprep.subr.mxu0 0.0
      %3045 = vmatpush1.msra.mxu0 0.0
      %3046 = vmatprep.subr.mxu0 0.0
      %3047 = vmatpush1.msra.mxu0 0.0
      %3048 = vmatprep.subr.mxu0 0.0
      %3049 = vmatpush1.msra.mxu0 0.0
      %3050 = vmatprep.subr.mxu0 0.0
      %3051 = vmatpush1.msra.mxu0 0.0
      %3052 = vmatprep.subr.mxu0 0.0
      %3053 = vmatpush1.msra.mxu0 0.0
      %3054 = vmatprep.subr.mxu0 0.0
      %3055 = vmatpush1.msra.mxu0 0.0
      %3056 = vmatprep.subr.mxu0 0.0
      %3057 = vmatpush1.msra.mxu0 0.0
      %3058 = vmatprep.subr.mxu0 0.0
      %3059 = vmatpush1.msra.mxu0 0.0
      %3060 = vmatprep.subr.mxu0 0.0
      %3061 = vmatpush1.msra.mxu0 0.0
      %3062 = vmatprep.subr.mxu0 0.0
      %3063 = vmatpush1.msra.mxu0 0.0
      %3064 = vmatprep.subr.mxu0 0.0
      %3065 = vmatpush1.msra.mxu0 0.0
      %3066 = vmatprep.mubr.f32.mxu0 0.0
      %3067 = vmatmul.mubr.f32.gmra.mrb[0].mxu0 %v3000
      %v3068 = vpop.f32.mrb[0].mxu0
      %v3069 = vadd.f32 %v2996, %v3068
      %v3070 = vpop.f32.mrb[0].mxu0
      %3071 = vdwg.mxu0
      %v3072 = vld [vmem:[%s26] sm:$0x1]
      %v3073 = vld [vmem:[%s27] sm:$0x1]
      %v3074 = vadd.f32 %v2897, %v3069
      %v3075 = vsel %vm871, %v3074, 0.0
      %3076 = vadd.xlane.f32.xlu0 %v3075
      %v3077 = vpop.xlane.xlu0 %3076
      %v3078 = vmul.f32 %v3077, %v1865
      %v3079 = vsub.f32 %v3074, %v3078
      %v3080 = vmul.f32 %v3079, %v3079
      %v3081 = vsel %vm871, %v3080, 0.0
      %3082 = vadd.xlane.f32.xlu0 %v3081
      %v3083 = vpop.xlane.xlu0 %3082
      %v3084 = vmul.f32 %v3083, %v1865
      %v3085 = vadd.f32 %v3084, 1e-05
      %v3086 = vrsqrt.pop %v3085
      %v3087 = vmul.f32 %v3079, %v3086
      %v3089 = vlaneseq
      %v3090 = vshrl.u32 %v3089, 7
      %v3091 = vsub.s32 0, %v3090
      %v3092 = vrot.slane %v3072, %v3091
      %v3094 = vmul.f32 %v3087, %v3092
      %v3096 = vlaneseq
      %v3097 = vshrl.u32 %v3096, 7
      %v3098 = vsub.s32 0, %v3097
      %v3099 = vrot.slane %v3073, %v3098
      %v3101 = vadd.f32 %v3094, %v3099
      %3102 = vst.msk [vmem:[%s857] sm:$0xff] %vm871, %v3101
      %p3103 = scmp.lt.s32.totalorder %s39, 1
      %s3104 = scalar_select %p3103, %s39, 1
      %s3105 = smul.addr %s3104, 8
      %s3106 = scalar_lea.vmem %s28, %s3105
      // Predicated region
      $region133: #{transformer_decoder.4} parent=131 // pred_check
        %p3107 = pneg %p655
      $region134: #{transformer_decoder.4} parent=131 // pred_check_branch
        %3109 = sbr.rel (%p3107) target = $region136
      $region135: #{transformer_decoder.4} parent=131 // pred_region
        _
      $region136: #{transformer_decoder.4} parent=131 // pred_fallthru
        _
    $region132: #{transformer_decoder.4} parent=5 // pred_fallthru
      _
    %p3110 = scmp.le.s32.totalorder 2, %s34
    // Predicated region
    $region137: #{transformer_decoder.4} parent=5 // pred_check
      %p3111 = pneg %p3110
    $region138: #{transformer_decoder.4} parent=5 // pred_check_branch
      %3113 = sbr.rel (%p3111) target = $region140
    $region139: #{transformer_decoder.4} parent=5 // pred_region
      %s3114 = ssub.s32 %s34, 2
      // Predicated region
      $region141: #{transformer_decoder.4} parent=139 // pred_check
        %p3115 = pneg %p661
      $region142: #{transformer_decoder.4} parent=139 // pred_check_branch
        %3117 = sbr.rel (%p3115) target = $region144
      $region143: #{transformer_decoder.4} parent=139 // pred_region
        %p3118 = scmp.lt.s32.totalorder %s40, 1
        %s3119 = scalar_select %p3118, %s40, 1
        %s3120 = smul.addr %s3119, 8
        %s3121 = scalar_lea.vmem %s28, %s3120
      $region144: #{transformer_decoder.4} parent=139 // pred_fallthru
        _
    $region140: #{transformer_decoder.4} parent=5 // pred_fallthru
      _
  $region6: #{transformer_decoder.4} parent=0 // loop_footer
    %s38 = sadd.s32 1, %s34
  $region7: #{transformer_decoder.4} parent=0 // loop_footer_branch
    %33 = sbr.rel target = $region3
  $region8: #{transformer_decoder.4} parent=0 // loop_exit
    _

// kernel: transformer_decoder.3
$region0: #{transformer_decoder.3}
  #allocation0 [shape = 'u32[]', space=smem, size = 0x4, offset = 0x4, fixed_abs, tag = 'smem constant byte address 0x4 - core index']
  #allocation1 [shape = 'u32[144,128]{1,0:T(1,128)}', space=vmem, size = 0x12000, scoped, tag = 'internal scratch']
  %s0 = inlined_call_operand.vmem [shape: f32[2,8,32], index: 0, kind: input, shape index: {}]
  %s1 = inlined_call_operand.vmem [shape: f32[2,8,32], index: 1, kind: input, shape index: {}]
  %s2 = inlined_call_operand.vmem [shape: f32[32,32], index: 2, kind: input, shape index: {}]
  %s3 = inlined_call_operand.hbm [shape: f32[1,32], index: 3, kind: input, shape index: {}]
  %s4 = inlined_call_operand.vmem [shape: f32[32,32], index: 4, kind: input, shape index: {}]
  %s5 = inlined_call_operand.hbm [shape: f32[1,32], index: 5, kind: input, shape index: {}]
  %s6 = inlined_call_operand.vmem [shape: f32[32,32], index: 6, kind: input, shape index: {}]
  %s7 = inlined_call_operand.hbm [shape: f32[1,32], index: 7, kind: input, shape index: {}]
  %s8 = inlined_call_operand.vmem [shape: f32[32,32], index: 8, kind: input, shape index: {}]
  %s9 = inlined_call_operand.hbm [shape: f32[1,32], index: 9, kind: input, shape index: {}]
  %s10 = inlined_call_operand.vmem [shape: f32[32,32], index: 10, kind: input, shape index: {}]
  %s11 = inlined_call_operand.hbm [shape: f32[1,32], index: 11, kind: input, shape index: {}]
  %s12 = inlined_call_operand.hbm [shape: f32[32,32], index: 12, kind: input, shape index: {}]
  %s13 = inlined_call_operand.hbm [shape: f32[1,32], index: 13, kind: input, shape index: {}]
  %s14 = inlined_call_operand.vmem [shape: f32[32,32], index: 14, kind: input, shape index: {}]
  %s15 = inlined_call_operand.hbm [shape: f32[1,32], index: 15, kind: input, shape index: {}]
  %s16 = inlined_call_operand.hbm [shape: f32[32,32], index: 16, kind: input, shape index: {}]
  %s17 = inlined_call_operand.hbm [shape: f32[1,32], index: 17, kind: input, shape index: {}]
  %s18 = inlined_call_operand.hbm [shape: f32[32,64], index: 18, kind: input, shape index: {}]
  %s19 = inlined_call_operand.hbm [shape: f32[1,64], index: 19, kind: input, shape index: {}]
  %s20 = inlined_call_operand.vmem [shape: f32[64,32], index: 20, kind: input, shape index: {}]
  %s21 = inlined_call_operand.hbm [shape: f32[1,32], index: 21, kind: input, shape index: {}]
  %s22 = inlined_call_operand.hbm [shape: f32[1,32], index: 22, kind: input, shape index: {}]
  %s23 = inlined_call_operand.hbm [shape: f32[1,32], index: 23, kind: input, shape index: {}]
  %s24 = inlined_call_operand.hbm [shape: f32[1,32], index: 24, kind: input, shape index: {}]
  %s25 = inlined_call_operand.hbm [shape: f32[1,32], index: 25, kind: input, shape index: {}]
  %s26 = inlined_call_operand.hbm [shape: f32[1,32], index: 26, kind: input, shape index: {}]
  %s27 = inlined_call_operand.hbm [shape: f32[1,32], index: 27, kind: input, shape index: {}]
  %s28 = inlined_call_operand.vmem [shape: f32[2,8,32], index: 28, kind: output, shape index: {}]
  %s29 = sld [smem:[#allocation0]]
  $region221: #{transformer_decoder.3} parent=0
    _
  %s31 = ssub.s32 1, %s29
  %s32 = scalar_select 0, %s31, %s29
  $region1: #{transformer_decoder.3} parent=0
    #allocation2 [shape = 'u8[512]{0}', space=vmem, size = 0x400, scoped, tag = 'input window, operand 3, single buffered']
    #allocation3 [shape = 's32[2]{0}', space=sflag, size = 0x8, scoped, tag = 'scoped memory for transformer_decoder.3']
    #allocation4 [shape = 'u8[512]{0}', space=vmem, size = 0x400, scoped, tag = 'input window, operand 5, single buffered']
    #allocation5 [shape = 's32[1]{0}', space=sflag, size = 0x4, scoped, tag = 'scoped memory for transformer_decoder.3']
    #allocation6 [shape = 'u8[512]{0}', space=vmem, size = 0x400, scoped, tag = 'input window, operand 7, single buffered']
    #allocation7 [shape = 'u8[512]{0}', space=vmem, size = 0x400, scoped, tag = 'input window, operand 9, single buffered']
    #allocation8 [shape = 's32[1]{0}', space=sflag, size = 0x4, scoped, tag = 'scoped memory for transformer_decoder.3']
    #allocation9 [shape = 'u8[512]{0}', space=vmem, size = 0x400, scoped, tag = 'input window, operand 11, single buffered']
    #allocation10 [shape = 'u8[16384]{0}', space=vmem, size = 0x4000, scoped, tag = 'input window, operand 12, single buffered']
    #allocation11 [shape = 's32[1]{0}', space=sflag, size = 0x4, scoped, tag = 'scoped memory for transformer_decoder.3']
    #allocation12 [shape = 'u8[512]{0}', space=vmem, size = 0x400, scoped, tag = 'input window, operand 13, single buffered']
    #allocation13 [shape = 'u8[512]{0}', space=vmem, size = 0x400, scoped, tag = 'input window, operand 15, single buffered']
    #allocation14 [shape = 's32[1]{0}', space=sflag, size = 0x4, scoped, tag = 'scoped memory for transformer_decoder.3']
    #allocation15 [shape = 'u8[16384]{0}', space=vmem, size = 0x4000, scoped, tag = 'input window, operand 16, single buffered']
    #allocation16 [shape = 'u8[512]{0}', space=vmem, size = 0x400, scoped, tag = 'input window, operand 17, single buffered']
    #allocation17 [shape = 's32[1]{0}', space=sflag, size = 0x4, scoped, tag = 'scoped memory for transformer_decoder.3']
    #allocation18 [shape = 'u8[16384]{0}', space=vmem, size = 0x4000, scoped, tag = 'input window, operand 18, single buffered']
    #allocation19 [shape = 'u8[512]{0}', space=vmem, size = 0x400, scoped, tag = 'input window, operand 19, single buffered']
    #allocation20 [shape = 's32[1]{0}', space=sflag, size = 0x4, scoped, tag = 'scoped memory for transformer_decoder.3']
    #allocation21 [shape = 'u8[512]{0}', space=vmem, size = 0x400, scoped, tag = 'input window, operand 21, single buffered']
    #allocation22 [shape = 'u8[512]{0}', space=vmem, size = 0x400, scoped, tag = 'input window, operand 22, single buffered']
    #allocation23 [shape = 's32[1]{0}', space=sflag, size = 0x4, scoped, tag = 'scoped memory for transformer_decoder.3']
    #allocation24 [shape = 'u8[512]{0}', space=vmem, size = 0x400, scoped, tag = 'input window, operand 23, single buffered']
    #allocation25 [shape = 'u8[512]{0}', space=vmem, size = 0x400, scoped, tag = 'input window, operand 24, single buffered']
    #allocation26 [shape = 's32[1]{0}', space=sflag, size = 0x4, scoped, tag = 'scoped memory for transformer_decoder.3']
    #allocation27 [shape = 'u8[512]{0}', space=vmem, size = 0x400, scoped, tag = 'input window, operand 25, single buffered']
    #allocation28 [shape = 'u8[512]{0}', space=vmem, size = 0x400, scoped, tag = 'input window, operand 26, single buffered']
    #allocation29 [shape = 's32[1]{0}', space=sflag, size = 0x4, scoped, tag = 'scoped memory for transformer_decoder.3']
    #allocation30 [shape = 'u8[512]{0}', space=vmem, size = 0x400, scoped, tag = 'input window, operand 27, single buffered']
    %33 = vsyncpa [#allocation3], 0
    %34 = vsyncpa [#allocation5], 0
    %35 = vsyncpa [#allocation8], 0
    %36 = vsyncpa [#allocation11], 0
    %37 = vsyncpa [#allocation14], 0
    %38 = vsyncpa [#allocation17], 0
    %39 = vsyncpa [#allocation20], 0
    %40 = vsyncpa [#allocation23], 0
    %41 = vsyncpa [#allocation26], 0
    %42 = vsyncpa [#allocation29], 0
    loop: start=0, step=1, limit=4
    $region2: #{transformer_decoder.3} parent=1 // loop_pre_header
      _
    $region3: #{transformer_decoder.3} parent=1 // loop_header
      %s44 = sphi 0, %s48
      %p45 = scmp.ge.s32.totalorder %s44, 4
      %s54 = sphi 0, %s56
      %s57 = sphi 0, %s54
      %s58 = sphi 0, %s57
      %s74 = sphi 0, %s58
      %s80 = sphi 0, %s82
      %s83 = sphi 0, %s80
      %s84 = sphi 0, %s83
      %s100 = sphi 0, %s84
      %s104 = sphi 0, %s104
      %s106 = sphi 0, %s104
      %s107 = sphi 0, %s106
      %s121 = sphi 0, %s107
      %s125 = sphi 0, %s125
      %s127 = sphi 0, %s125
      %s128 = sphi 0, %s127
      %s142 = sphi 0, %s128
      %s146 = sphi 0, %s146
      %s148 = sphi 0, %s146
      %s149 = sphi 0, %s148
      %s163 = sphi 0, %s149
      %s167 = sphi 0, %s167
      %s169 = sphi 0, %s167
      %s170 = sphi 0, %s169
      %s184 = sphi 0, %s170
      %s188 = sphi 0, %s188
      %s190 = sphi 0, %s188
      %s191 = sphi 0, %s190
      %s205 = sphi 0, %s191
      %s209 = sphi 0, %s209
      %s211 = sphi 0, %s209
      %s212 = sphi 0, %s211
      %s226 = sphi 0, %s212
      %s230 = sphi 0, %s230
      %s232 = sphi 0, %s230
      %s233 = sphi 0, %s232
      %s247 = sphi 0, %s233
      %s251 = sphi 0, %s251
      %s253 = sphi 0, %s251
      %s254 = sphi 0, %s253
      %s268 = sphi 0, %s254
      %s272 = sphi 0, %s272
      %s274 = sphi 0, %s272
      %s275 = sphi 0, %s274
      %s289 = sphi 0, %s275
      %s293 = sphi 0, %s293
      %s295 = sphi 0, %s293
      %s296 = sphi 0, %s295
      %s310 = sphi 0, %s296
      %s314 = sphi 0, %s314
      %s316 = sphi 0, %s314
      %s317 = sphi 0, %s316
      %s331 = sphi 0, %s317
      %s335 = sphi 0, %s335
      %s337 = sphi 0, %s335
      %s338 = sphi 0, %s337
      %s352 = sphi 0, %s338
      %s356 = sphi 0, %s356
      %s358 = sphi 0, %s356
      %s359 = sphi 0, %s358
      %s373 = sphi 0, %s359
      %s377 = sphi 0, %s377
      %s379 = sphi 0, %s377
      %s380 = sphi 0, %s379
      %s394 = sphi 0, %s380
      %s398 = sphi 0, %s398
      %s400 = sphi 0, %s398
      %s401 = sphi 0, %s400
      %s415 = sphi 0, %s401
      %s419 = sphi 0, %s419
      %s421 = sphi 0, %s419
      %s422 = sphi 0, %s421
      %s436 = sphi 0, %s422
      %s440 = sphi 0, %s440
      %s442 = sphi 0, %s440
      %s443 = sphi 0, %s442
      %s457 = sphi 0, %s443
      %s461 = sphi 0, %s461
      %s463 = sphi 0, %s461
      %s464 = sphi 0, %s463
      %s478 = sphi 0, %s464
      %s482 = sphi 0, %s482
      %s484 = sphi 0, %s482
      %s485 = sphi 0, %s484
      %s499 = sphi 0, %s485
      %s503 = sphi 0, %s503
      %s505 = sphi 0, %s503
      %s506 = sphi 0, %s505
      %s520 = sphi 0, %s506
      %s524 = sphi 0, %s524
      %s526 = sphi 0, %s524
      %s527 = sphi 0, %s526
      %s541 = sphi 0, %s527
      %s545 = sphi 0, %s545
      %s547 = sphi 0, %s545
      %s548 = sphi 0, %s547
      %s562 = sphi 0, %s548
      %s566 = sphi 0, %s566
      %s568 = sphi 0, %s566
      %s569 = sphi 0, %s568
      %s583 = sphi 0, %s569
      %s587 = sphi 0, %s587
      %s589 = sphi 0, %s587
      %s590 = sphi 0, %s589
      %s604 = sphi 0, %s590
      %s608 = sphi 0, %s608
      %s610 = sphi 0, %s608
      %s611 = sphi 0, %s610
      %s625 = sphi 0, %s611
      %s629 = sphi 0, %s629
      %s631 = sphi 0, %s629
      %s632 = sphi 0, %s631
      %s646 = sphi 0, %s632
      %s652 = sphi 0, %s654
      %s655 = sphi 0, %s652
      %s656 = sphi 0, %s655
      %s672 = sphi 0, %s656
    $region4: #{transformer_decoder.3} parent=1 // loop_header_branch
      %47 = sbr.rel (%p45) target = $region8
    $region5: #{transformer_decoder.3} parent=1 // loop_body
      %s49 = ssub.s32 %s44, 1
      %s50 = ssub.s32 %s44, 2
      %s51 = sadd.s32 %s44, 1
      %s52 = ssub.s32 %s44, %s51
      %p53 = scmp.eq.s32.totalorder %s52, 0
      %s55 = sadd.s32 %s54, 1
      %s56 = scalar_select %p53, %s54, %s55
      %p59 = pneg %p53
      %p60 = scmp.eq.s32.totalorder %s44, 1
      %p61 = por %p59, %p60
      %p62 = scmp.ne.s32.totalorder %s54, %s57
      %p63 = scmp.eq.s32.totalorder %s44, 0
      %p64 = por %p62, %p63
      %p65 = scmp.ne.s32.totalorder %s54, %s57
      %p66 = scmp.eq.s32.totalorder %s49, 1
      %p67 = por %p65, %p66
      %p68 = scmp.ne.s32.totalorder %s57, %s58
      %p69 = scmp.eq.s32.totalorder %s49, 0
      %p70 = por %p68, %p69
      %p71 = scmp.ne.s32.totalorder %s57, %s58
      %p72 = scmp.eq.s32.totalorder %s50, 1
      %p73 = por %p71, %p72
      %p75 = scmp.ne.s32.totalorder %s58, %s74
      %p76 = scmp.eq.s32.totalorder %s50, 0
      %p77 = por %p75, %p76
      %s78 = ssub.s32 %s44, %s51
      %p79 = scmp.eq.s32.totalorder %s78, 0
      %s81 = sadd.s32 %s80, 1
      %s82 = scalar_select %p79, %s80, %s81
      %p85 = pneg %p79
      %p86 = scmp.eq.s32.totalorder %s44, 1
      %p87 = por %p85, %p86
      %p88 = scmp.ne.s32.totalorder %s80, %s83
      %p89 = scmp.eq.s32.totalorder %s44, 0
      %p90 = por %p88, %p89
      %p91 = scmp.ne.s32.totalorder %s80, %s83
      %p92 = scmp.eq.s32.totalorder %s49, 1
      %p93 = por %p91, %p92
      %p94 = scmp.ne.s32.totalorder %s83, %s84
      %p95 = scmp.eq.s32.totalorder %s49, 0
      %p96 = por %p94, %p95
      %p97 = scmp.ne.s32.totalorder %s83, %s84
      %p98 = scmp.eq.s32.totalorder %s50, 1
      %p99 = por %p97, %p98
      %p101 = scmp.ne.s32.totalorder %s84, %s100
      %p102 = scmp.eq.s32.totalorder %s50, 0
      %p103 = por %p101, %p102
      %s105 = sadd.s32 %s104, 1
      %p108 = scmp.eq.s32.totalorder %s44, 1
      %p109 = scmp.ne.s32.totalorder %s104, %s106
      %p110 = scmp.eq.s32.totalorder %s44, 0
      %p111 = por %p109, %p110
      %p112 = scmp.ne.s32.totalorder %s104, %s106
      %p113 = scmp.eq.s32.totalorder %s49, 1
      %p114 = por %p112, %p113
      %p115 = scmp.ne.s32.totalorder %s106, %s107
      %p116 = scmp.eq.s32.totalorder %s49, 0
      %p117 = por %p115, %p116
      %p118 = scmp.ne.s32.totalorder %s106, %s107
      %p119 = scmp.eq.s32.totalorder %s50, 1
      %p120 = por %p118, %p119
      %p122 = scmp.ne.s32.totalorder %s107, %s121
      %p123 = scmp.eq.s32.totalorder %s50, 0
      %p124 = por %p122, %p123
      %s126 = sadd.s32 %s125, 1
      %p129 = scmp.eq.s32.totalorder %s44, 1
      %p130 = scmp.ne.s32.totalorder %s125, %s127
      %p131 = scmp.eq.s32.totalorder %s44, 0
      %p132 = por %p130, %p131
      %p133 = scmp.ne.s32.totalorder %s125, %s127
      %p134 = scmp.eq.s32.totalorder %s49, 1
      %p135 = por %p133, %p134
      %p136 = scmp.ne.s32.totalorder %s127, %s128
      %p137 = scmp.eq.s32.totalorder %s49, 0
      %p138 = por %p136, %p137
      %p139 = scmp.ne.s32.totalorder %s127, %s128
      %p140 = scmp.eq.s32.totalorder %s50, 1
      %p141 = por %p139, %p140
      %p143 = scmp.ne.s32.totalorder %s128, %s142
      %p144 = scmp.eq.s32.totalorder %s50, 0
      %p145 = por %p143, %p144
      %s147 = sadd.s32 %s146, 1
      %p150 = scmp.eq.s32.totalorder %s44, 1
      %p151 = scmp.ne.s32.totalorder %s146, %s148
      %p152 = scmp.eq.s32.totalorder %s44, 0
      %p153 = por %p151, %p152
      %p154 = scmp.ne.s32.totalorder %s146, %s148
      %p155 = scmp.eq.s32.totalorder %s49, 1
      %p156 = por %p154, %p155
      %p157 = scmp.ne.s32.totalorder %s148, %s149
      %p158 = scmp.eq.s32.totalorder %s49, 0
      %p159 = por %p157, %p158
      %p160 = scmp.ne.s32.totalorder %s148, %s149
      %p161 = scmp.eq.s32.totalorder %s50, 1
      %p162 = por %p160, %p161
      %p164 = scmp.ne.s32.totalorder %s149, %s163
      %p165 = scmp.eq.s32.totalorder %s50, 0
      %p166 = por %p164, %p165
      %s168 = sadd.s32 %s167, 1
      %p171 = scmp.eq.s32.totalorder %s44, 1
      %p172 = scmp.ne.s32.totalorder %s167, %s169
      %p173 = scmp.eq.s32.totalorder %s44, 0
      %p174 = por %p172, %p173
      %p175 = scmp.ne.s32.totalorder %s167, %s169
      %p176 = scmp.eq.s32.totalorder %s49, 1
      %p177 = por %p175, %p176
      %p178 = scmp.ne.s32.totalorder %s169, %s170
      %p179 = scmp.eq.s32.totalorder %s49, 0
      %p180 = por %p178, %p179
      %p181 = scmp.ne.s32.totalorder %s169, %s170
      %p182 = scmp.eq.s32.totalorder %s50, 1
      %p183 = por %p181, %p182
      %p185 = scmp.ne.s32.totalorder %s170, %s184
      %p186 = scmp.eq.s32.totalorder %s50, 0
      %p187 = por %p185, %p186
      %s189 = sadd.s32 %s188, 1
      %p192 = scmp.eq.s32.totalorder %s44, 1
      %p193 = scmp.ne.s32.totalorder %s188, %s190
      %p194 = scmp.eq.s32.totalorder %s44, 0
      %p195 = por %p193, %p194
      %p196 = scmp.ne.s32.totalorder %s188, %s190
      %p197 = scmp.eq.s32.totalorder %s49, 1
      %p198 = por %p196, %p197
      %p199 = scmp.ne.s32.totalorder %s190, %s191
      %p200 = scmp.eq.s32.totalorder %s49, 0
      %p201 = por %p199, %p200
      %p202 = scmp.ne.s32.totalorder %s190, %s191
      %p203 = scmp.eq.s32.totalorder %s50, 1
      %p204 = por %p202, %p203
      %p206 = scmp.ne.s32.totalorder %s191, %s205
      %p207 = scmp.eq.s32.totalorder %s50, 0
      %p208 = por %p206, %p207
      %s210 = sadd.s32 %s209, 1
      %p213 = scmp.eq.s32.totalorder %s44, 1
      %p214 = scmp.ne.s32.totalorder %s209, %s211
      %p215 = scmp.eq.s32.totalorder %s44, 0
      %p216 = por %p214, %p215
      %p217 = scmp.ne.s32.totalorder %s209, %s211
      %p218 = scmp.eq.s32.totalorder %s49, 1
      %p219 = por %p217, %p218
      %p220 = scmp.ne.s32.totalorder %s211, %s212
      %p221 = scmp.eq.s32.totalorder %s49, 0
      %p222 = por %p220, %p221
      %p223 = scmp.ne.s32.totalorder %s211, %s212
      %p224 = scmp.eq.s32.totalorder %s50, 1
      %p225 = por %p223, %p224
      %p227 = scmp.ne.s32.totalorder %s212, %s226
      %p228 = scmp.eq.s32.totalorder %s50, 0
      %p229 = por %p227, %p228
      %s231 = sadd.s32 %s230, 1
      %p234 = scmp.eq.s32.totalorder %s44, 1
      %p235 = scmp.ne.s32.totalorder %s230, %s232
      %p236 = scmp.eq.s32.totalorder %s44, 0
      %p237 = por %p235, %p236
      %p238 = scmp.ne.s32.totalorder %s230, %s232
      %p239 = scmp.eq.s32.totalorder %s49, 1
      %p240 = por %p238, %p239
      %p241 = scmp.ne.s32.totalorder %s232, %s233
      %p242 = scmp.eq.s32.totalorder %s49, 0
      %p243 = por %p241, %p242
      %p244 = scmp.ne.s32.totalorder %s232, %s233
      %p245 = scmp.eq.s32.totalorder %s50, 1
      %p246 = por %p244, %p245
      %p248 = scmp.ne.s32.totalorder %s233, %s247
      %p249 = scmp.eq.s32.totalorder %s50, 0
      %p250 = por %p248, %p249
      %s252 = sadd.s32 %s251, 1
      %p255 = scmp.eq.s32.totalorder %s44, 1
      %p256 = scmp.ne.s32.totalorder %s251, %s253
      %p257 = scmp.eq.s32.totalorder %s44, 0
      %p258 = por %p256, %p257
      %p259 = scmp.ne.s32.totalorder %s251, %s253
      %p260 = scmp.eq.s32.totalorder %s49, 1
      %p261 = por %p259, %p260
      %p262 = scmp.ne.s32.totalorder %s253, %s254
      %p263 = scmp.eq.s32.totalorder %s49, 0
      %p264 = por %p262, %p263
      %p265 = scmp.ne.s32.totalorder %s253, %s254
      %p266 = scmp.eq.s32.totalorder %s50, 1
      %p267 = por %p265, %p266
      %p269 = scmp.ne.s32.totalorder %s254, %s268
      %p270 = scmp.eq.s32.totalorder %s50, 0
      %p271 = por %p269, %p270
      %s273 = sadd.s32 %s272, 1
      %p276 = scmp.eq.s32.totalorder %s44, 1
      %p277 = scmp.ne.s32.totalorder %s272, %s274
      %p278 = scmp.eq.s32.totalorder %s44, 0
      %p279 = por %p277, %p278
      %p280 = scmp.ne.s32.totalorder %s272, %s274
      %p281 = scmp.eq.s32.totalorder %s49, 1
      %p282 = por %p280, %p281
      %p283 = scmp.ne.s32.totalorder %s274, %s275
      %p284 = scmp.eq.s32.totalorder %s49, 0
      %p285 = por %p283, %p284
      %p286 = scmp.ne.s32.totalorder %s274, %s275
      %p287 = scmp.eq.s32.totalorder %s50, 1
      %p288 = por %p286, %p287
      %p290 = scmp.ne.s32.totalorder %s275, %s289
      %p291 = scmp.eq.s32.totalorder %s50, 0
      %p292 = por %p290, %p291
      %s294 = sadd.s32 %s293, 1
      %p297 = scmp.eq.s32.totalorder %s44, 1
      %p298 = scmp.ne.s32.totalorder %s293, %s295
      %p299 = scmp.eq.s32.totalorder %s44, 0
      %p300 = por %p298, %p299
      %p301 = scmp.ne.s32.totalorder %s293, %s295
      %p302 = scmp.eq.s32.totalorder %s49, 1
      %p303 = por %p301, %p302
      %p304 = scmp.ne.s32.totalorder %s295, %s296
      %p305 = scmp.eq.s32.totalorder %s49, 0
      %p306 = por %p304, %p305
      %p307 = scmp.ne.s32.totalorder %s295, %s296
      %p308 = scmp.eq.s32.totalorder %s50, 1
      %p309 = por %p307, %p308
      %p311 = scmp.ne.s32.totalorder %s296, %s310
      %p312 = scmp.eq.s32.totalorder %s50, 0
      %p313 = por %p311, %p312
      %s315 = sadd.s32 %s314, 1
      %p318 = scmp.eq.s32.totalorder %s44, 1
      %p319 = scmp.ne.s32.totalorder %s314, %s316
      %p320 = scmp.eq.s32.totalorder %s44, 0
      %p321 = por %p319, %p320
      %p322 = scmp.ne.s32.totalorder %s314, %s316
      %p323 = scmp.eq.s32.totalorder %s49, 1
      %p324 = por %p322, %p323
      %p325 = scmp.ne.s32.totalorder %s316, %s317
      %p326 = scmp.eq.s32.totalorder %s49, 0
      %p327 = por %p325, %p326
      %p328 = scmp.ne.s32.totalorder %s316, %s317
      %p329 = scmp.eq.s32.totalorder %s50, 1
      %p330 = por %p328, %p329
      %p332 = scmp.ne.s32.totalorder %s317, %s331
      %p333 = scmp.eq.s32.totalorder %s50, 0
      %p334 = por %p332, %p333
      %s336 = sadd.s32 %s335, 1
      %p339 = scmp.eq.s32.totalorder %s44, 1
      %p340 = scmp.ne.s32.totalorder %s335, %s337
      %p341 = scmp.eq.s32.totalorder %s44, 0
      %p342 = por %p340, %p341
      %p343 = scmp.ne.s32.totalorder %s335, %s337
      %p344 = scmp.eq.s32.totalorder %s49, 1
      %p345 = por %p343, %p344
      %p346 = scmp.ne.s32.totalorder %s337, %s338
      %p347 = scmp.eq.s32.totalorder %s49, 0
      %p348 = por %p346, %p347
      %p349 = scmp.ne.s32.totalorder %s337, %s338
      %p350 = scmp.eq.s32.totalorder %s50, 1
      %p351 = por %p349, %p350
      %p353 = scmp.ne.s32.totalorder %s338, %s352
      %p354 = scmp.eq.s32.totalorder %s50, 0
      %p355 = por %p353, %p354
      %s357 = sadd.s32 %s356, 1
      %p360 = scmp.eq.s32.totalorder %s44, 1
      %p361 = scmp.ne.s32.totalorder %s356, %s358
      %p362 = scmp.eq.s32.totalorder %s44, 0
      %p363 = por %p361, %p362
      %p364 = scmp.ne.s32.totalorder %s356, %s358
      %p365 = scmp.eq.s32.totalorder %s49, 1
      %p366 = por %p364, %p365
      %p367 = scmp.ne.s32.totalorder %s358, %s359
      %p368 = scmp.eq.s32.totalorder %s49, 0
      %p369 = por %p367, %p368
      %p370 = scmp.ne.s32.totalorder %s358, %s359
      %p371 = scmp.eq.s32.totalorder %s50, 1
      %p372 = por %p370, %p371
      %p374 = scmp.ne.s32.totalorder %s359, %s373
      %p375 = scmp.eq.s32.totalorder %s50, 0
      %p376 = por %p374, %p375
      %s378 = sadd.s32 %s377, 1
      %p381 = scmp.eq.s32.totalorder %s44, 1
      %p382 = scmp.ne.s32.totalorder %s377, %s379
      %p383 = scmp.eq.s32.totalorder %s44, 0
      %p384 = por %p382, %p383
      %p385 = scmp.ne.s32.totalorder %s377, %s379
      %p386 = scmp.eq.s32.totalorder %s49, 1
      %p387 = por %p385, %p386
      %p388 = scmp.ne.s32.totalorder %s379, %s380
      %p389 = scmp.eq.s32.totalorder %s49, 0
      %p390 = por %p388, %p389
      %p391 = scmp.ne.s32.totalorder %s379, %s380
      %p392 = scmp.eq.s32.totalorder %s50, 1
      %p393 = por %p391, %p392
      %p395 = scmp.ne.s32.totalorder %s380, %s394
      %p396 = scmp.eq.s32.totalorder %s50, 0
      %p397 = por %p395, %p396
      %s399 = sadd.s32 %s398, 1
      %p402 = scmp.eq.s32.totalorder %s44, 1
      %p403 = scmp.ne.s32.totalorder %s398, %s400
      %p404 = scmp.eq.s32.totalorder %s44, 0
      %p405 = por %p403, %p404
      %p406 = scmp.ne.s32.totalorder %s398, %s400
      %p407 = scmp.eq.s32.totalorder %s49, 1
      %p408 = por %p406, %p407
      %p409 = scmp.ne.s32.totalorder %s400, %s401
      %p410 = scmp.eq.s32.totalorder %s49, 0
      %p411 = por %p409, %p410
      %p412 = scmp.ne.s32.totalorder %s400, %s401
      %p413 = scmp.eq.s32.totalorder %s50, 1
      %p414 = por %p412, %p413
      %p416 = scmp.ne.s32.totalorder %s401, %s415
      %p417 = scmp.eq.s32.totalorder %s50, 0
      %p418 = por %p416, %p417
      %s420 = sadd.s32 %s419, 1
      %p423 = scmp.eq.s32.totalorder %s44, 1
      %p424 = scmp.ne.s32.totalorder %s419, %s421
      %p425 = scmp.eq.s32.totalorder %s44, 0
      %p426 = por %p424, %p425
      %p427 = scmp.ne.s32.totalorder %s419, %s421
      %p428 = scmp.eq.s32.totalorder %s49, 1
      %p429 = por %p427, %p428
      %p430 = scmp.ne.s32.totalorder %s421, %s422
      %p431 = scmp.eq.s32.totalorder %s49, 0
      %p432 = por %p430, %p431
      %p433 = scmp.ne.s32.totalorder %s421, %s422
      %p434 = scmp.eq.s32.totalorder %s50, 1
      %p435 = por %p433, %p434
      %p437 = scmp.ne.s32.totalorder %s422, %s436
      %p438 = scmp.eq.s32.totalorder %s50, 0
      %p439 = por %p437, %p438
      %s441 = sadd.s32 %s440, 1
      %p444 = scmp.eq.s32.totalorder %s44, 1
      %p445 = scmp.ne.s32.totalorder %s440, %s442
      %p446 = scmp.eq.s32.totalorder %s44, 0
      %p447 = por %p445, %p446
      %p448 = scmp.ne.s32.totalorder %s440, %s442
      %p449 = scmp.eq.s32.totalorder %s49, 1
      %p450 = por %p448, %p449
      %p451 = scmp.ne.s32.totalorder %s442, %s443
      %p452 = scmp.eq.s32.totalorder %s49, 0
      %p453 = por %p451, %p452
      %p454 = scmp.ne.s32.totalorder %s442, %s443
      %p455 = scmp.eq.s32.totalorder %s50, 1
      %p456 = por %p454, %p455
      %p458 = scmp.ne.s32.totalorder %s443, %s457
      %p459 = scmp.eq.s32.totalorder %s50, 0
      %p460 = por %p458, %p459
      %s462 = sadd.s32 %s461, 1
      %p465 = scmp.eq.s32.totalorder %s44, 1
      %p466 = scmp.ne.s32.totalorder %s461, %s463
      %p467 = scmp.eq.s32.totalorder %s44, 0
      %p468 = por %p466, %p467
      %p469 = scmp.ne.s32.totalorder %s461, %s463
      %p470 = scmp.eq.s32.totalorder %s49, 1
      %p471 = por %p469, %p470
      %p472 = scmp.ne.s32.totalorder %s463, %s464
      %p473 = scmp.eq.s32.totalorder %s49, 0
      %p474 = por %p472, %p473
      %p475 = scmp.ne.s32.totalorder %s463, %s464
      %p476 = scmp.eq.s32.totalorder %s50, 1
      %p477 = por %p475, %p476
      %p479 = scmp.ne.s32.totalorder %s464, %s478
      %p480 = scmp.eq.s32.totalorder %s50, 0
      %p481 = por %p479, %p480
      %s483 = sadd.s32 %s482, 1
      %p486 = scmp.eq.s32.totalorder %s44, 1
      %p487 = scmp.ne.s32.totalorder %s482, %s484
      %p488 = scmp.eq.s32.totalorder %s44, 0
      %p489 = por %p487, %p488
      %p490 = scmp.ne.s32.totalorder %s482, %s484
      %p491 = scmp.eq.s32.totalorder %s49, 1
      %p492 = por %p490, %p491
      %p493 = scmp.ne.s32.totalorder %s484, %s485
      %p494 = scmp.eq.s32.totalorder %s49, 0
      %p495 = por %p493, %p494
      %p496 = scmp.ne.s32.totalorder %s484, %s485
      %p497 = scmp.eq.s32.totalorder %s50, 1
      %p498 = por %p496, %p497
      %p500 = scmp.ne.s32.totalorder %s485, %s499
      %p501 = scmp.eq.s32.totalorder %s50, 0
      %p502 = por %p500, %p501
      %s504 = sadd.s32 %s503, 1
      %p507 = scmp.eq.s32.totalorder %s44, 1
      %p508 = scmp.ne.s32.totalorder %s503, %s505
      %p509 = scmp.eq.s32.totalorder %s44, 0
      %p510 = por %p508, %p509
      %p511 = scmp.ne.s32.totalorder %s503, %s505
      %p512 = scmp.eq.s32.totalorder %s49, 1
      %p513 = por %p511, %p512
      %p514 = scmp.ne.s32.totalorder %s505, %s506
      %p515 = scmp.eq.s32.totalorder %s49, 0
      %p516 = por %p514, %p515
      %p517 = scmp.ne.s32.totalorder %s505, %s506
      %p518 = scmp.eq.s32.totalorder %s50, 1
      %p519 = por %p517, %p518
      %p521 = scmp.ne.s32.totalorder %s506, %s520
      %p522 = scmp.eq.s32.totalorder %s50, 0
      %p523 = por %p521, %p522
      %s525 = sadd.s32 %s524, 1
      %p528 = scmp.eq.s32.totalorder %s44, 1
      %p529 = scmp.ne.s32.totalorder %s524, %s526
      %p530 = scmp.eq.s32.totalorder %s44, 0
      %p531 = por %p529, %p530
      %p532 = scmp.ne.s32.totalorder %s524, %s526
      %p533 = scmp.eq.s32.totalorder %s49, 1
      %p534 = por %p532, %p533
      %p535 = scmp.ne.s32.totalorder %s526, %s527
      %p536 = scmp.eq.s32.totalorder %s49, 0
      %p537 = por %p535, %p536
      %p538 = scmp.ne.s32.totalorder %s526, %s527
      %p539 = scmp.eq.s32.totalorder %s50, 1
      %p540 = por %p538, %p539
      %p542 = scmp.ne.s32.totalorder %s527, %s541
      %p543 = scmp.eq.s32.totalorder %s50, 0
      %p544 = por %p542, %p543
      %s546 = sadd.s32 %s545, 1
      %p549 = scmp.eq.s32.totalorder %s44, 1
      %p550 = scmp.ne.s32.totalorder %s545, %s547
      %p551 = scmp.eq.s32.totalorder %s44, 0
      %p552 = por %p550, %p551
      %p553 = scmp.ne.s32.totalorder %s545, %s547
      %p554 = scmp.eq.s32.totalorder %s49, 1
      %p555 = por %p553, %p554
      %p556 = scmp.ne.s32.totalorder %s547, %s548
      %p557 = scmp.eq.s32.totalorder %s49, 0
      %p558 = por %p556, %p557
      %p559 = scmp.ne.s32.totalorder %s547, %s548
      %p560 = scmp.eq.s32.totalorder %s50, 1
      %p561 = por %p559, %p560
      %p563 = scmp.ne.s32.totalorder %s548, %s562
      %p564 = scmp.eq.s32.totalorder %s50, 0
      %p565 = por %p563, %p564
      %s567 = sadd.s32 %s566, 1
      %p570 = scmp.eq.s32.totalorder %s44, 1
      %p571 = scmp.ne.s32.totalorder %s566, %s568
      %p572 = scmp.eq.s32.totalorder %s44, 0
      %p573 = por %p571, %p572
      %p574 = scmp.ne.s32.totalorder %s566, %s568
      %p575 = scmp.eq.s32.totalorder %s49, 1
      %p576 = por %p574, %p575
      %p577 = scmp.ne.s32.totalorder %s568, %s569
      %p578 = scmp.eq.s32.totalorder %s49, 0
      %p579 = por %p577, %p578
      %p580 = scmp.ne.s32.totalorder %s568, %s569
      %p581 = scmp.eq.s32.totalorder %s50, 1
      %p582 = por %p580, %p581
      %p584 = scmp.ne.s32.totalorder %s569, %s583
      %p585 = scmp.eq.s32.totalorder %s50, 0
      %p586 = por %p584, %p585
      %s588 = sadd.s32 %s587, 1
      %p591 = scmp.eq.s32.totalorder %s44, 1
      %p592 = scmp.ne.s32.totalorder %s587, %s589
      %p593 = scmp.eq.s32.totalorder %s44, 0
      %p594 = por %p592, %p593
      %p595 = scmp.ne.s32.totalorder %s587, %s589
      %p596 = scmp.eq.s32.totalorder %s49, 1
      %p597 = por %p595, %p596
      %p598 = scmp.ne.s32.totalorder %s589, %s590
      %p599 = scmp.eq.s32.totalorder %s49, 0
      %p600 = por %p598, %p599
      %p601 = scmp.ne.s32.totalorder %s589, %s590
      %p602 = scmp.eq.s32.totalorder %s50, 1
      %p603 = por %p601, %p602
      %p605 = scmp.ne.s32.totalorder %s590, %s604
      %p606 = scmp.eq.s32.totalorder %s50, 0
      %p607 = por %p605, %p606
      %s609 = sadd.s32 %s608, 1
      %p612 = scmp.eq.s32.totalorder %s44, 1
      %p613 = scmp.ne.s32.totalorder %s608, %s610
      %p614 = scmp.eq.s32.totalorder %s44, 0
      %p615 = por %p613, %p614
      %p616 = scmp.ne.s32.totalorder %s608, %s610
      %p617 = scmp.eq.s32.totalorder %s49, 1
      %p618 = por %p616, %p617
      %p619 = scmp.ne.s32.totalorder %s610, %s611
      %p620 = scmp.eq.s32.totalorder %s49, 0
      %p621 = por %p619, %p620
      %p622 = scmp.ne.s32.totalorder %s610, %s611
      %p623 = scmp.eq.s32.totalorder %s50, 1
      %p624 = por %p622, %p623
      %p626 = scmp.ne.s32.totalorder %s611, %s625
      %p627 = scmp.eq.s32.totalorder %s50, 0
      %p628 = por %p626, %p627
      %s630 = sadd.s32 %s629, 1
      %p633 = scmp.eq.s32.totalorder %s44, 1
      %p634 = scmp.ne.s32.totalorder %s629, %s631
      %p635 = scmp.eq.s32.totalorder %s44, 0
      %p636 = por %p634, %p635
      %p637 = scmp.ne.s32.totalorder %s629, %s631
      %p638 = scmp.eq.s32.totalorder %s49, 1
      %p639 = por %p637, %p638
      %p640 = scmp.ne.s32.totalorder %s631, %s632
      %p641 = scmp.eq.s32.totalorder %s49, 0
      %p642 = por %p640, %p641
      %p643 = scmp.ne.s32.totalorder %s631, %s632
      %p644 = scmp.eq.s32.totalorder %s50, 1
      %p645 = por %p643, %p644
      %p647 = scmp.ne.s32.totalorder %s632, %s646
      %p648 = scmp.eq.s32.totalorder %s50, 0
      %p649 = por %p647, %p648
      %s650 = ssub.s32 %s44, %s51
      %p651 = scmp.eq.s32.totalorder %s650, 0
      %s653 = sadd.s32 %s652, 1
      %s654 = scalar_select %p651, %s652, %s653
      %p657 = pneg %p651
      %p658 = scmp.eq.s32.totalorder %s44, 1
      %p659 = por %p657, %p658
      %p660 = scmp.ne.s32.totalorder %s652, %s655
      %p661 = scmp.eq.s32.totalorder %s44, 0
      %p662 = por %p660, %p661
      %p663 = scmp.ne.s32.totalorder %s652, %s655
      %p664 = scmp.eq.s32.totalorder %s49, 1
      %p665 = por %p663, %p664
      %p666 = scmp.ne.s32.totalorder %s655, %s656
      %p667 = scmp.eq.s32.totalorder %s49, 0
      %p668 = por %p666, %p667
      %p669 = scmp.ne.s32.totalorder %s655, %s656
      %p670 = scmp.eq.s32.totalorder %s50, 1
      %p671 = por %p669, %p670
      %p673 = scmp.ne.s32.totalorder %s656, %s672
      %p674 = scmp.eq.s32.totalorder %s50, 0
      %p675 = por %p673, %p674
      %p676 = scmp.le.s32.totalorder 1, %s44
      %p677 = scmp.lt.s32.totalorder %s44, 3
      %p678 = pnand %p676, %p677
      %p679 = pneg %p678
      // Predicated region
      $region9: #{transformer_decoder.3} parent=5 // pred_check
        _
      $region10: #{transformer_decoder.3} parent=5 // pred_check_branch
        %681 = sbr.rel (%p678) target = $region12
      $region11: #{transformer_decoder.3} parent=5 // pred_region
        %s682 = ssub.s32 %s44, 1
        // Predicated region
        $region13: #{transformer_decoder.3} parent=11 // pred_check
          %p683 = pneg %p117
        $region14: #{transformer_decoder.3} parent=11 // pred_check_branch
          %685 = sbr.rel (%p683) target = $region16
        $region15: #{transformer_decoder.3} parent=11 // pred_region
          _
        $region16: #{transformer_decoder.3} parent=11 // pred_fallthru
          _
        // Predicated region
        $region17: #{transformer_decoder.3} parent=11 // pred_check
          %p686 = pneg %p138
        $region18: #{transformer_decoder.3} parent=11 // pred_check_branch
          %688 = sbr.rel (%p686) target = $region20
        $region19: #{transformer_decoder.3} parent=11 // pred_region
          %s690 = ssub.s32 16, 16
          %691 = vsyncadd [#allocation3], %s690
          %s693 = sshll.u32 [#allocation2], 4
          %s694 = int_to_ptr.vmem [resolvable:$true] %s693
          %696 = dma.hbm_to_vmem [thread:$0]  %s3, 16, %s694, [#allocation3]
        $region20: #{transformer_decoder.3} parent=11 // pred_fallthru
          _
        // Predicated region
        $region21: #{transformer_decoder.3} parent=11 // pred_check
          %p697 = pneg %p159
        $region22: #{transformer_decoder.3} parent=11 // pred_check_branch
          %699 = sbr.rel (%p697) target = $region24
        $region23: #{transformer_decoder.3} parent=11 // pred_region
          _
        $region24: #{transformer_decoder.3} parent=11 // pred_fallthru
          _
        // Predicated region
        $region25: #{transformer_decoder.3} parent=11 // pred_check
          %p700 = pneg %p180
        $region26: #{transformer_decoder.3} parent=11 // pred_check_branch
          %702 = sbr.rel (%p700) target = $region28
        $region27: #{transformer_decoder.3} parent=11 // pred_region
          %s704 = ssub.s32 16, 16
          %705 = vsyncadd [#allocation5], %s704
          %s707 = sshll.u32 [#allocation4], 4
          %s708 = int_to_ptr.vmem [resolvable:$true] %s707
          %710 = dma.hbm_to_vmem [thread:$0]  %s5, 16, %s708, [#allocation5]
        $region28: #{transformer_decoder.3} parent=11 // pred_fallthru
          _
        // Predicated region
        $region29: #{transformer_decoder.3} parent=11 // pred_check
          %p711 = pneg %p201
        $region30: #{transformer_decoder.3} parent=11 // pred_check_branch
          %713 = sbr.rel (%p711) target = $region32
        $region31: #{transformer_decoder.3} parent=11 // pred_region
          _
        $region32: #{transformer_decoder.3} parent=11 // pred_fallthru
          _
        // Predicated region
        $region33: #{transformer_decoder.3} parent=11 // pred_check
          %p714 = pneg %p222
        $region34: #{transformer_decoder.3} parent=11 // pred_check_branch
          %716 = sbr.rel (%p714) target = $region36
        $region35: #{transformer_decoder.3} parent=11 // pred_region
          %s718 = ssub.s32 16, 16
          %719 = vsyncadd [#allocation5], %s718
          %s721 = sshll.u32 [#allocation6], 4
          %s722 = int_to_ptr.vmem [resolvable:$true] %s721
          %724 = dma.hbm_to_vmem [thread:$0]  %s7, 16, %s722, [#allocation5]
        $region36: #{transformer_decoder.3} parent=11 // pred_fallthru
          _
        // Predicated region
        $region37: #{transformer_decoder.3} parent=11 // pred_check
          %p725 = pneg %p243
        $region38: #{transformer_decoder.3} parent=11 // pred_check_branch
          %727 = sbr.rel (%p725) target = $region40
        $region39: #{transformer_decoder.3} parent=11 // pred_region
          _
        $region40: #{transformer_decoder.3} parent=11 // pred_fallthru
          _
        // Predicated region
        $region41: #{transformer_decoder.3} parent=11 // pred_check
          %p728 = pneg %p264
        $region42: #{transformer_decoder.3} parent=11 // pred_check_branch
          %730 = sbr.rel (%p728) target = $region44
        $region43: #{transformer_decoder.3} parent=11 // pred_region
          %s732 = ssub.s32 16, 16
          %733 = vsyncadd [#allocation8], %s732
          %s735 = sshll.u32 [#allocation7], 4
          %s736 = int_to_ptr.vmem [resolvable:$true] %s735
          %738 = dma.hbm_to_vmem [thread:$0]  %s9, 16, %s736, [#allocation8]
        $region44: #{transformer_decoder.3} parent=11 // pred_fallthru
          _
        // Predicated region
        $region45: #{transformer_decoder.3} parent=11 // pred_check
          %p739 = pneg %p285
        $region46: #{transformer_decoder.3} parent=11 // pred_check_branch
          %741 = sbr.rel (%p739) target = $region48
        $region47: #{transformer_decoder.3} parent=11 // pred_region
          _
        $region48: #{transformer_decoder.3} parent=11 // pred_fallthru
          _
        // Predicated region
        $region49: #{transformer_decoder.3} parent=11 // pred_check
          %p742 = pneg %p306
        $region50: #{transformer_decoder.3} parent=11 // pred_check_branch
          %744 = sbr.rel (%p742) target = $region52
        $region51: #{transformer_decoder.3} parent=11 // pred_region
          %s746 = ssub.s32 16, 16
          %747 = vsyncadd [#allocation8], %s746
          %s749 = sshll.u32 [#allocation9], 4
          %s750 = int_to_ptr.vmem [resolvable:$true] %s749
          %752 = dma.hbm_to_vmem [thread:$0]  %s11, 16, %s750, [#allocation8]
        $region52: #{transformer_decoder.3} parent=11 // pred_fallthru
          _
        // Predicated region
        $region53: #{transformer_decoder.3} parent=11 // pred_check
          %p753 = pneg %p327
        $region54: #{transformer_decoder.3} parent=11 // pred_check_branch
          %755 = sbr.rel (%p753) target = $region56
        $region55: #{transformer_decoder.3} parent=11 // pred_region
          %s757 = ssub.s32 512, 512
          %758 = vsyncadd [#allocation11], %s757
          %s759 = sshll.u32 [#allocation10], 4
          %s760 = int_to_ptr.vmem [resolvable:$true] %s759
          %765 = dma.hbm_to_vmem [thread:$0]  %s12, 512, %s760, [#allocation11], 128, 128, 8
        $region56: #{transformer_decoder.3} parent=11 // pred_fallthru
          _
        // Predicated region
        $region57: #{transformer_decoder.3} parent=11 // pred_check
          %p766 = pneg %p348
        $region58: #{transformer_decoder.3} parent=11 // pred_check_branch
          %768 = sbr.rel (%p766) target = $region60
        $region59: #{transformer_decoder.3} parent=11 // pred_region
          %s770 = ssub.s32 16, 16
          %771 = vsyncadd [#allocation11], %s770
          %s773 = sshll.u32 [#allocation12], 4
          %s774 = int_to_ptr.vmem [resolvable:$true] %s773
          %776 = dma.hbm_to_vmem [thread:$0]  %s13, 16, %s774, [#allocation11]
        $region60: #{transformer_decoder.3} parent=11 // pred_fallthru
          _
        // Predicated region
        $region61: #{transformer_decoder.3} parent=11 // pred_check
          %p777 = pneg %p369
        $region62: #{transformer_decoder.3} parent=11 // pred_check_branch
          %779 = sbr.rel (%p777) target = $region64
        $region63: #{transformer_decoder.3} parent=11 // pred_region
          _
        $region64: #{transformer_decoder.3} parent=11 // pred_fallthru
          _
        // Predicated region
        $region65: #{transformer_decoder.3} parent=11 // pred_check
          %p780 = pneg %p390
        $region66: #{transformer_decoder.3} parent=11 // pred_check_branch
          %782 = sbr.rel (%p780) target = $region68
        $region67: #{transformer_decoder.3} parent=11 // pred_region
          %s784 = ssub.s32 16, 16
          %785 = vsyncadd [#allocation14], %s784
          %s787 = sshll.u32 [#allocation13], 4
          %s788 = int_to_ptr.vmem [resolvable:$true] %s787
          %790 = dma.hbm_to_vmem [thread:$0]  %s15, 16, %s788, [#allocation14]
        $region68: #{transformer_decoder.3} parent=11 // pred_fallthru
          _
        // Predicated region
        $region69: #{transformer_decoder.3} parent=11 // pred_check
          %p791 = pneg %p411
        $region70: #{transformer_decoder.3} parent=11 // pred_check_branch
          %793 = sbr.rel (%p791) target = $region72
        $region71: #{transformer_decoder.3} parent=11 // pred_region
          %s795 = ssub.s32 512, 512
          %796 = vsyncadd [#allocation14], %s795
          %s797 = sshll.u32 [#allocation15], 4
          %s798 = int_to_ptr.vmem [resolvable:$true] %s797
          %803 = dma.hbm_to_vmem [thread:$0]  %s16, 512, %s798, [#allocation14], 128, 128, 8
        $region72: #{transformer_decoder.3} parent=11 // pred_fallthru
          _
        // Predicated region
        $region73: #{transformer_decoder.3} parent=11 // pred_check
          %p804 = pneg %p432
        $region74: #{transformer_decoder.3} parent=11 // pred_check_branch
          %806 = sbr.rel (%p804) target = $region76
        $region75: #{transformer_decoder.3} parent=11 // pred_region
          %s808 = ssub.s32 16, 16
          %809 = vsyncadd [#allocation17], %s808
          %s811 = sshll.u32 [#allocation16], 4
          %s812 = int_to_ptr.vmem [resolvable:$true] %s811
          %814 = dma.hbm_to_vmem [thread:$0]  %s17, 16, %s812, [#allocation17]
        $region76: #{transformer_decoder.3} parent=11 // pred_fallthru
          _
        // Predicated region
        $region77: #{transformer_decoder.3} parent=11 // pred_check
          %p815 = pneg %p453
        $region78: #{transformer_decoder.3} parent=11 // pred_check_branch
          %817 = sbr.rel (%p815) target = $region80
        $region79: #{transformer_decoder.3} parent=11 // pred_region
          %s819 = ssub.s32 512, 512
          %820 = vsyncadd [#allocation17], %s819
          %s821 = sshll.u32 [#allocation18], 4
          %s822 = int_to_ptr.vmem [resolvable:$true] %s821
          %827 = dma.hbm_to_vmem [thread:$0]  %s18, 512, %s822, [#allocation17], 128, 128, 8
        $region80: #{transformer_decoder.3} parent=11 // pred_fallthru
          _
        // Predicated region
        $region81: #{transformer_decoder.3} parent=11 // pred_check
          %p828 = pneg %p474
        $region82: #{transformer_decoder.3} parent=11 // pred_check_branch
          %830 = sbr.rel (%p828) target = $region84
        $region83: #{transformer_decoder.3} parent=11 // pred_region
          %s832 = ssub.s32 16, 16
          %833 = vsyncadd [#allocation20], %s832
          %s835 = sshll.u32 [#allocation19], 4
          %s836 = int_to_ptr.vmem [resolvable:$true] %s835
          %838 = dma.hbm_to_vmem [thread:$0]  %s19, 16, %s836, [#allocation20]
        $region84: #{transformer_decoder.3} parent=11 // pred_fallthru
          _
        // Predicated region
        $region85: #{transformer_decoder.3} parent=11 // pred_check
          %p839 = pneg %p495
        $region86: #{transformer_decoder.3} parent=11 // pred_check_branch
          %841 = sbr.rel (%p839) target = $region88
        $region87: #{transformer_decoder.3} parent=11 // pred_region
          _
        $region88: #{transformer_decoder.3} parent=11 // pred_fallthru
          _
        // Predicated region
        $region89: #{transformer_decoder.3} parent=11 // pred_check
          %p842 = pneg %p516
        $region90: #{transformer_decoder.3} parent=11 // pred_check_branch
          %844 = sbr.rel (%p842) target = $region92
        $region91: #{transformer_decoder.3} parent=11 // pred_region
          %s846 = ssub.s32 16, 16
          %847 = vsyncadd [#allocation20], %s846
          %s849 = sshll.u32 [#allocation21], 4
          %s850 = int_to_ptr.vmem [resolvable:$true] %s849
          %852 = dma.hbm_to_vmem [thread:$0]  %s21, 16, %s850, [#allocation20]
        $region92: #{transformer_decoder.3} parent=11 // pred_fallthru
          _
        // Predicated region
        $region93: #{transformer_decoder.3} parent=11 // pred_check
          %p853 = pneg %p537
        $region94: #{transformer_decoder.3} parent=11 // pred_check_branch
          %855 = sbr.rel (%p853) target = $region96
        $region95: #{transformer_decoder.3} parent=11 // pred_region
          %s857 = ssub.s32 16, 16
          %858 = vsyncadd [#allocation23], %s857
          %s860 = sshll.u32 [#allocation22], 4
          %s861 = int_to_ptr.vmem [resolvable:$true] %s860
          %863 = dma.hbm_to_vmem [thread:$0]  %s22, 16, %s861, [#allocation23]
        $region96: #{transformer_decoder.3} parent=11 // pred_fallthru
          _
        // Predicated region
        $region97: #{transformer_decoder.3} parent=11 // pred_check
          %p864 = pneg %p558
        $region98: #{transformer_decoder.3} parent=11 // pred_check_branch
          %866 = sbr.rel (%p864) target = $region100
        $region99: #{transformer_decoder.3} parent=11 // pred_region
          %s868 = ssub.s32 16, 16
          %869 = vsyncadd [#allocation23], %s868
          %s871 = sshll.u32 [#allocation24], 4
          %s872 = int_to_ptr.vmem [resolvable:$true] %s871
          %874 = dma.hbm_to_vmem [thread:$0]  %s23, 16, %s872, [#allocation23]
        $region100: #{transformer_decoder.3} parent=11 // pred_fallthru
          _
        // Predicated region
        $region101: #{transformer_decoder.3} parent=11 // pred_check
          %p875 = pneg %p579
        $region102: #{transformer_decoder.3} parent=11 // pred_check_branch
          %877 = sbr.rel (%p875) target = $region104
        $region103: #{transformer_decoder.3} parent=11 // pred_region
          %s879 = ssub.s32 16, 16
          %880 = vsyncadd [#allocation26], %s879
          %s882 = sshll.u32 [#allocation25], 4
          %s883 = int_to_ptr.vmem [resolvable:$true] %s882
          %885 = dma.hbm_to_vmem [thread:$0]  %s24, 16, %s883, [#allocation26]
        $region104: #{transformer_decoder.3} parent=11 // pred_fallthru
          _
        // Predicated region
        $region105: #{transformer_decoder.3} parent=11 // pred_check
          %p886 = pneg %p600
        $region106: #{transformer_decoder.3} parent=11 // pred_check_branch
          %888 = sbr.rel (%p886) target = $region108
        $region107: #{transformer_decoder.3} parent=11 // pred_region
          %s890 = ssub.s32 16, 16
          %891 = vsyncadd [#allocation26], %s890
          %s893 = sshll.u32 [#allocation27], 4
          %s894 = int_to_ptr.vmem [resolvable:$true] %s893
          %896 = dma.hbm_to_vmem [thread:$0]  %s25, 16, %s894, [#allocation26]
        $region108: #{transformer_decoder.3} parent=11 // pred_fallthru
          _
        // Predicated region
        $region109: #{transformer_decoder.3} parent=11 // pred_check
          %p897 = pneg %p621
        $region110: #{transformer_decoder.3} parent=11 // pred_check_branch
          %899 = sbr.rel (%p897) target = $region112
        $region111: #{transformer_decoder.3} parent=11 // pred_region
          %s901 = ssub.s32 16, 16
          %902 = vsyncadd [#allocation29], %s901
          %s904 = sshll.u32 [#allocation28], 4
          %s905 = int_to_ptr.vmem [resolvable:$true] %s904
          %907 = dma.hbm_to_vmem [thread:$0]  %s26, 16, %s905, [#allocation29]
        $region112: #{transformer_decoder.3} parent=11 // pred_fallthru
          _
        // Predicated region
        $region113: #{transformer_decoder.3} parent=11 // pred_check
          %p908 = pneg %p642
        $region114: #{transformer_decoder.3} parent=11 // pred_check_branch
          %910 = sbr.rel (%p908) target = $region116
        $region115: #{transformer_decoder.3} parent=11 // pred_region
          %s912 = ssub.s32 16, 16
          %913 = vsyncadd [#allocation29], %s912
          %s915 = sshll.u32 [#allocation30], 4
          %s916 = int_to_ptr.vmem [resolvable:$true] %s915
          %918 = dma.hbm_to_vmem [thread:$0]  %s27, 16, %s916, [#allocation29]
        $region116: #{transformer_decoder.3} parent=11 // pred_fallthru
          _
      $region12: #{transformer_decoder.3} parent=5 // pred_fallthru
        _
      %p919 = scmp.lt.s32.totalorder %s44, 2
      // Predicated region
      $region117: #{transformer_decoder.3} parent=5 // pred_check
        %p920 = pneg %p919
      $region118: #{transformer_decoder.3} parent=5 // pred_check_branch
        %922 = sbr.rel (%p920) target = $region120
      $region119: #{transformer_decoder.3} parent=5 // pred_region
        // Predicated region
        $region121: #{transformer_decoder.3} parent=119 // pred_check
          %p923 = pneg %p64
        $region122: #{transformer_decoder.3} parent=119 // pred_check_branch
          %925 = sbr.rel (%p923) target = $region124
        $region123: #{transformer_decoder.3} parent=119 // pred_region
          %p926 = scmp.lt.s32.totalorder %s44, 1
          %s927 = scalar_select %p926, %s44, 1
          %s928 = smul.addr %s927, 8
          %s929 = scalar_lea.vmem %s0, %s928
        $region124: #{transformer_decoder.3} parent=119 // pred_fallthru
          _
        // Predicated region
        $region125: #{transformer_decoder.3} parent=119 // pred_check
          %p930 = pneg %p90
        $region126: #{transformer_decoder.3} parent=119 // pred_check_branch
          %932 = sbr.rel (%p930) target = $region128
        $region127: #{transformer_decoder.3} parent=119 // pred_region
          %p933 = scmp.lt.s32.totalorder %s44, 1
          %s934 = scalar_select %p933, %s44, 1
          %s935 = smul.addr %s934, 8
          %s936 = scalar_lea.vmem %s1, %s935
        $region128: #{transformer_decoder.3} parent=119 // pred_fallthru
          _
      $region120: #{transformer_decoder.3} parent=5 // pred_fallthru
        _
      %p937 = scmp.le.s32.totalorder 1, %s44
      %p938 = scmp.lt.s32.totalorder %s44, 3
      %p939 = pnand %p937, %p938
      %p940 = pneg %p939
      // Predicated region
      $region129: #{transformer_decoder.3} parent=5 // pred_check
        _
      $region130: #{transformer_decoder.3} parent=5 // pred_check_branch
        %942 = sbr.rel (%p939) target = $region132
      $region131: #{transformer_decoder.3} parent=5 // pred_region
        %s943 = ssub.s32 %s44, 1
        // Predicated region
        $region133: #{transformer_decoder.3} parent=131 // pred_check
          %p944 = pneg %p138
        $region134: #{transformer_decoder.3} parent=131 // pred_check_branch
          %946 = sbr.rel (%p944) target = $region136
        $region135: #{transformer_decoder.3} parent=131 // pred_region
          %947 = dma.done [#allocation3], 16
        $region136: #{transformer_decoder.3} parent=131 // pred_fallthru
          _
        // Predicated region
        $region137: #{transformer_decoder.3} parent=131 // pred_check
          %p948 = pneg %p180
        $region138: #{transformer_decoder.3} parent=131 // pred_check_branch
          %950 = sbr.rel (%p948) target = $region140
        $region139: #{transformer_decoder.3} parent=131 // pred_region
          %951 = dma.done [#allocation5], 16
        $region140: #{transformer_decoder.3} parent=131 // pred_fallthru
          _
        // Predicated region
        $region141: #{transformer_decoder.3} parent=131 // pred_check
          %p952 = pneg %p222
        $region142: #{transformer_decoder.3} parent=131 // pred_check_branch
          %954 = sbr.rel (%p952) target = $region144
        $region143: #{transformer_decoder.3} parent=131 // pred_region
          %955 = dma.done [#allocation5], 16
        $region144: #{transformer_decoder.3} parent=131 // pred_fallthru
          _
        // Predicated region
        $region145: #{transformer_decoder.3} parent=131 // pred_check
          %p956 = pneg %p264
        $region146: #{transformer_decoder.3} parent=131 // pred_check_branch
          %958 = sbr.rel (%p956) target = $region148
        $region147: #{transformer_decoder.3} parent=131 // pred_region
          %959 = dma.done [#allocation8], 16
        $region148: #{transformer_decoder.3} parent=131 // pred_fallthru
          _
        // Predicated region
        $region149: #{transformer_decoder.3} parent=131 // pred_check
          %p960 = pneg %p306
        $region150: #{transformer_decoder.3} parent=131 // pred_check_branch
          %962 = sbr.rel (%p960) target = $region152
        $region151: #{transformer_decoder.3} parent=131 // pred_region
          %963 = dma.done [#allocation8], 16
        $region152: #{transformer_decoder.3} parent=131 // pred_fallthru
          _
        // Predicated region
        $region153: #{transformer_decoder.3} parent=131 // pred_check
          %p964 = pneg %p327
        $region154: #{transformer_decoder.3} parent=131 // pred_check_branch
          %966 = sbr.rel (%p964) target = $region156
        $region155: #{transformer_decoder.3} parent=131 // pred_region
          %967 = dma.done [#allocation11], 512
        $region156: #{transformer_decoder.3} parent=131 // pred_fallthru
          _
        // Predicated region
        $region157: #{transformer_decoder.3} parent=131 // pred_check
          %p968 = pneg %p348
        $region158: #{transformer_decoder.3} parent=131 // pred_check_branch
          %970 = sbr.rel (%p968) target = $region160
        $region159: #{transformer_decoder.3} parent=131 // pred_region
          %971 = dma.done [#allocation11], 16
        $region160: #{transformer_decoder.3} parent=131 // pred_fallthru
          _
        // Predicated region
        $region161: #{transformer_decoder.3} parent=131 // pred_check
          %p972 = pneg %p390
        $region162: #{transformer_decoder.3} parent=131 // pred_check_branch
          %974 = sbr.rel (%p972) target = $region164
        $region163: #{transformer_decoder.3} parent=131 // pred_region
          %975 = dma.done [#allocation14], 16
        $region164: #{transformer_decoder.3} parent=131 // pred_fallthru
          _
        // Predicated region
        $region165: #{transformer_decoder.3} parent=131 // pred_check
          %p976 = pneg %p411
        $region166: #{transformer_decoder.3} parent=131 // pred_check_branch
          %978 = sbr.rel (%p976) target = $region168
        $region167: #{transformer_decoder.3} parent=131 // pred_region
          %979 = dma.done [#allocation14], 512
        $region168: #{transformer_decoder.3} parent=131 // pred_fallthru
          _
        // Predicated region
        $region169: #{transformer_decoder.3} parent=131 // pred_check
          %p980 = pneg %p432
        $region170: #{transformer_decoder.3} parent=131 // pred_check_branch
          %982 = sbr.rel (%p980) target = $region172
        $region171: #{transformer_decoder.3} parent=131 // pred_region
          %983 = dma.done [#allocation17], 16
        $region172: #{transformer_decoder.3} parent=131 // pred_fallthru
          _
        // Predicated region
        $region173: #{transformer_decoder.3} parent=131 // pred_check
          %p984 = pneg %p453
        $region174: #{transformer_decoder.3} parent=131 // pred_check_branch
          %986 = sbr.rel (%p984) target = $region176
        $region175: #{transformer_decoder.3} parent=131 // pred_region
          %987 = dma.done [#allocation17], 512
        $region176: #{transformer_decoder.3} parent=131 // pred_fallthru
          _
        // Predicated region
        $region177: #{transformer_decoder.3} parent=131 // pred_check
          %p988 = pneg %p474
        $region178: #{transformer_decoder.3} parent=131 // pred_check_branch
          %990 = sbr.rel (%p988) target = $region180
        $region179: #{transformer_decoder.3} parent=131 // pred_region
          %991 = dma.done [#allocation20], 16
        $region180: #{transformer_decoder.3} parent=131 // pred_fallthru
          _
        // Predicated region
        $region181: #{transformer_decoder.3} parent=131 // pred_check
          %p992 = pneg %p516
        $region182: #{transformer_decoder.3} parent=131 // pred_check_branch
          %994 = sbr.rel (%p992) target = $region184
        $region183: #{transformer_decoder.3} parent=131 // pred_region
          %995 = dma.done [#allocation20], 16
        $region184: #{transformer_decoder.3} parent=131 // pred_fallthru
          _
        // Predicated region
        $region185: #{transformer_decoder.3} parent=131 // pred_check
          %p996 = pneg %p537
        $region186: #{transformer_decoder.3} parent=131 // pred_check_branch
          %998 = sbr.rel (%p996) target = $region188
        $region187: #{transformer_decoder.3} parent=131 // pred_region
          %999 = dma.done [#allocation23], 16
        $region188: #{transformer_decoder.3} parent=131 // pred_fallthru
          _
        // Predicated region
        $region189: #{transformer_decoder.3} parent=131 // pred_check
          %p1000 = pneg %p558
        $region190: #{transformer_decoder.3} parent=131 // pred_check_branch
          %1002 = sbr.rel (%p1000) target = $region192
        $region191: #{transformer_decoder.3} parent=131 // pred_region
          %1003 = dma.done [#allocation23], 16
        $region192: #{transformer_decoder.3} parent=131 // pred_fallthru
          _
        // Predicated region
        $region193: #{transformer_decoder.3} parent=131 // pred_check
          %p1004 = pneg %p579
        $region194: #{transformer_decoder.3} parent=131 // pred_check_branch
          %1006 = sbr.rel (%p1004) target = $region196
        $region195: #{transformer_decoder.3} parent=131 // pred_region
          %1007 = dma.done [#allocation26], 16
        $region196: #{transformer_decoder.3} parent=131 // pred_fallthru
          _
        // Predicated region
        $region197: #{transformer_decoder.3} parent=131 // pred_check
          %p1008 = pneg %p600
        $region198: #{transformer_decoder.3} parent=131 // pred_check_branch
          %1010 = sbr.rel (%p1008) target = $region200
        $region199: #{transformer_decoder.3} parent=131 // pred_region
          %1011 = dma.done [#allocation26], 16
        $region200: #{transformer_decoder.3} parent=131 // pred_fallthru
          _
        // Predicated region
        $region201: #{transformer_decoder.3} parent=131 // pred_check
          %p1012 = pneg %p621
        $region202: #{transformer_decoder.3} parent=131 // pred_check_branch
          %1014 = sbr.rel (%p1012) target = $region204
        $region203: #{transformer_decoder.3} parent=131 // pred_region
          %1015 = dma.done [#allocation29], 16
        $region204: #{transformer_decoder.3} parent=131 // pred_fallthru
          _
        // Predicated region
        $region205: #{transformer_decoder.3} parent=131 // pred_check
          %p1016 = pneg %p642
        $region206: #{transformer_decoder.3} parent=131 // pred_check_branch
          %1018 = sbr.rel (%p1016) target = $region208
        $region207: #{transformer_decoder.3} parent=131 // pred_region
          %1019 = dma.done [#allocation29], 16
        $region208: #{transformer_decoder.3} parent=131 // pred_fallthru
          _
        %p1020 = scmp.lt.s32.totalorder %s49, 1
        %s1021 = scalar_select %p1020, %s49, 1
        %s1022 = smul.addr %s1021, 8
        %s1023 = scalar_lea.vmem %s0, %s1022
        %p1024 = pneg %p70
        %p1025 = pneg %p67
        %p1026 = scmp.lt.s32.totalorder %s49, 1
        %s1027 = scalar_select %p1026, %s49, 1
        %s1028 = smul.addr %s1027, 8
        %s1029 = scalar_lea.vmem %s1, %s1028
        %p1030 = pneg %p96
        %p1031 = pneg %p93
        %p1032 = pneg %p117
        %p1033 = pneg %p114
        %p1034 = pneg %p138
        %p1035 = pneg %p135
        %p1036 = pneg %p159
        %p1037 = pneg %p156
        %p1038 = pneg %p180
        %p1039 = pneg %p177
        %p1040 = pneg %p201
        %p1041 = pneg %p198
        %p1042 = pneg %p222
        %p1043 = pneg %p219
        %p1044 = pneg %p243
        %p1045 = pneg %p240
        %p1046 = pneg %p264
        %p1047 = pneg %p261
        %p1048 = pneg %p285
        %p1049 = pneg %p282
        %p1050 = pneg %p306
        %p1051 = pneg %p303
        %p1052 = pneg %p327
        %p1053 = pneg %p324
        %p1054 = pneg %p348
        %p1055 = pneg %p345
        %p1056 = pneg %p369
        %p1057 = pneg %p366
        %p1058 = pneg %p390
        %p1059 = pneg %p387
        %p1060 = pneg %p411
        %p1061 = pneg %p408
        %p1062 = pneg %p432
        %p1063 = pneg %p429
        %p1064 = pneg %p453
        %p1065 = pneg %p450
        %p1066 = pneg %p474
        %p1067 = pneg %p471
        %p1068 = pneg %p495
        %p1069 = pneg %p492
        %p1070 = pneg %p516
        %p1071 = pneg %p513
        %p1072 = pneg %p537
        %p1073 = pneg %p534
        %p1074 = pneg %p558
        %p1075 = pneg %p555
        %p1076 = pneg %p579
        %p1077 = pneg %p576
        %p1078 = pneg %p600
        %p1079 = pneg %p597
        %p1080 = pneg %p621
        %p1081 = pneg %p618
        %p1082 = pneg %p642
        %p1083 = pneg %p639
        %p1084 = pneg %p668
        %p1085 = pneg %p665
        %p1086 = scmp.lt.s32.totalorder %s49, 1
        %s1087 = scalar_select %p1086, %s49, 1
        %s1088 = smul.addr %s1087, 8
        %s1089 = scalar_lea.vmem %s28, %s1088
        %p1090 = scmp.lt.s32.totalorder %s49, 1
        %s1091 = scalar_select %p1090, %s49, 1
        %s1092 = smul.addr %s1091, 8
        %s1093 = scalar_lea.vmem %s0, %s1092
        %p1094 = scmp.lt.s32.totalorder %s49, 1
        %s1095 = scalar_select %p1094, %s49, 1
        %s1096 = smul.addr %s1095, 8
        %s1097 = scalar_lea.vmem %s1, %s1096
        %p1098 = scmp.lt.s32.totalorder %s49, 1
        %s1099 = scalar_select %p1098, %s49, 1
        %s1100 = smul.addr %s1099, 8
        %s1101 = scalar_lea.vmem %s28, %s1100
        %v1102 = vld [vmem:[%s1093] sm:$0xff]
        %v1103 = vld [vmem:[%s1097] sm:$0xff]
        %v1104 = vld [vmem:[%s2] sm:$0xff]
        %v1105 = vld [vmem:[%s2 + $0x8] sm:$0xff]
        %v1106 = vld [vmem:[%s2 + $0x10] sm:$0xff]
        %v1107 = vld [vmem:[%s2 + $0x18] sm:$0xff]
        %v1108 = vld [vmem:[#allocation2] sm:$0x1]
        %v1110 = vlaneseq
        %v1111 = vshrl.u32 %v1110, 7
        %v1112 = vsub.s32 0, %v1111
        %v1113 = vrot.slane %v1108, %v1112
        %vm1115 = vcmask 261120
        %v1117 = vsel %vm1115, %v1102, 0
        %1119 = vmatprep.subr.mxu0 0.0
        %1120 = vmatpush1.msra.mxu0 %v1104
        %1121 = vmatprep.subr.mxu0 0.0
        %1122 = vmatpush1.msra.mxu0 %v1105
        %1123 = vmatprep.subr.mxu0 0.0
        %1124 = vmatpush1.msra.mxu0 %v1106
        %1125 = vmatprep.subr.mxu0 0.0
        %1126 = vmatpush1.msra.mxu0 %v1107
        %1127 = vmatprep.subr.mxu0 0.0
        %1128 = vmatpush1.msra.mxu0 0.0
        %1129 = vmatprep.subr.mxu0 0.0
        %1130 = vmatpush1.msra.mxu0 0.0
        %1131 = vmatprep.subr.mxu0 0.0
        %1132 = vmatpush1.msra.mxu0 0.0
        %1133 = vmatprep.subr.mxu0 0.0
        %1134 = vmatpush1.msra.mxu0 0.0
        %1135 = vmatprep.subr.mxu0 0.0
        %1136 = vmatpush1.msra.mxu0 0.0
        %1137 = vmatprep.subr.mxu0 0.0
        %1138 = vmatpush1.msra.mxu0 0.0
        %1139 = vmatprep.subr.mxu0 0.0
        %1140 = vmatpush1.msra.mxu0 0.0
        %1141 = vmatprep.subr.mxu0 0.0
        %1142 = vmatpush1.msra.mxu0 0.0
        %1143 = vmatprep.subr.mxu0 0.0
        %1144 = vmatpush1.msra.mxu0 0.0
        %1145 = vmatprep.subr.mxu0 0.0
        %1146 = vmatpush1.msra.mxu0 0.0
        %1147 = vmatprep.subr.mxu0 0.0
        %1148 = vmatpush1.msra.mxu0 0.0
        %1149 = vmatprep.subr.mxu0 0.0
        %1150 = vmatpush1.msra.mxu0 0.0
        %1151 = vmatprep.subr.mxu0 0.0
        %1152 = vmatpush1.msra.mxu0 0.0
        %1153 = vmatprep.subr.mxu0 0.0
        %1154 = vmatpush1.msra.mxu0 0.0
        %1155 = vmatprep.subr.mxu0 0.0
        %1156 = vmatpush1.msra.mxu0 0.0
        %1157 = vmatprep.subr.mxu0 0.0
        %1158 = vmatpush1.msra.mxu0 0.0
        %1159 = vmatprep.subr.mxu0 0.0
        %1160 = vmatpush1.msra.mxu0 0.0
        %1161 = vmatprep.subr.mxu0 0.0
        %1162 = vmatpush1.msra.mxu0 0.0
        %1163 = vmatprep.subr.mxu0 0.0
        %1164 = vmatpush1.msra.mxu0 0.0
        %1165 = vmatprep.subr.mxu0 0.0
        %1166 = vmatpush1.msra.mxu0 0.0
        %1167 = vmatprep.subr.mxu0 0.0
        %1168 = vmatpush1.msra.mxu0 0.0
        %1169 = vmatprep.subr.mxu0 0.0
        %1170 = vmatpush1.msra.mxu0 0.0
        %1171 = vmatprep.subr.mxu0 0.0
        %1172 = vmatpush1.msra.mxu0 0.0
        %1173 = vmatprep.subr.mxu0 0.0
        %1174 = vmatpush1.msra.mxu0 0.0
        %1175 = vmatprep.subr.mxu0 0.0
        %1176 = vmatpush1.msra.mxu0 0.0
        %1177 = vmatprep.subr.mxu0 0.0
        %1178 = vmatpush1.msra.mxu0 0.0
        %1179 = vmatprep.subr.mxu0 0.0
        %1180 = vmatpush1.msra.mxu0 0.0
        %1181 = vmatprep.subr.mxu0 0.0
        %1182 = vmatpush1.msra.mxu0 0.0
        %1183 = vmatprep.mubr.f32.mxu0 0.0
        %1184 = vmatmul.mubr.f32.gmra.mrb[0].mxu0 %v1117
        %v1185 = vpop.f32.mrb[0].mxu0
        %v1186 = vadd.f32 %v1113, %v1185
        %v1187 = vpop.f32.mrb[0].mxu0
        %1188 = vdwg.mxu0
        %v1189 = vld [vmem:[%s4] sm:$0xff]
        %v1190 = vld [vmem:[%s4 + $0x8] sm:$0xff]
        %v1191 = vld [vmem:[%s4 + $0x10] sm:$0xff]
        %v1192 = vld [vmem:[%s4 + $0x18] sm:$0xff]
        %v1193 = vld [vmem:[#allocation4] sm:$0x1]
        %v1195 = vlaneseq
        %v1196 = vshrl.u32 %v1195, 7
        %v1197 = vsub.s32 0, %v1196
        %v1198 = vrot.slane %v1193, %v1197
        %1200 = vmatprep.subr.mxu0 0.0
        %1201 = vmatpush1.msra.mxu0 %v1189
        %1202 = vmatprep.subr.mxu0 0.0
        %1203 = vmatpush1.msra.mxu0 %v1190
        %1204 = vmatprep.subr.mxu0 0.0
        %1205 = vmatpush1.msra.mxu0 %v1191
        %1206 = vmatprep.subr.mxu0 0.0
        %1207 = vmatpush1.msra.mxu0 %v1192
        %1208 = vmatprep.subr.mxu0 0.0
        %1209 = vmatpush1.msra.mxu0 0.0
        %1210 = vmatprep.subr.mxu0 0.0
        %1211 = vmatpush1.msra.mxu0 0.0
        %1212 = vmatprep.subr.mxu0 0.0
        %1213 = vmatpush1.msra.mxu0 0.0
        %1214 = vmatprep.subr.mxu0 0.0
        %1215 = vmatpush1.msra.mxu0 0.0
        %1216 = vmatprep.subr.mxu0 0.0
        %1217 = vmatpush1.msra.mxu0 0.0
        %1218 = vmatprep.subr.mxu0 0.0
        %1219 = vmatpush1.msra.mxu0 0.0
        %1220 = vmatprep.subr.mxu0 0.0
        %1221 = vmatpush1.msra.mxu0 0.0
        %1222 = vmatprep.subr.mxu0 0.0
        %1223 = vmatpush1.msra.mxu0 0.0
        %1224 = vmatprep.subr.mxu0 0.0
        %1225 = vmatpush1.msra.mxu0 0.0
        %1226 = vmatprep.subr.mxu0 0.0
        %1227 = vmatpush1.msra.mxu0 0.0
        %1228 = vmatprep.subr.mxu0 0.0
        %1229 = vmatpush1.msra.mxu0 0.0
        %1230 = vmatprep.subr.mxu0 0.0
        %1231 = vmatpush1.msra.mxu0 0.0
        %1232 = vmatprep.subr.mxu0 0.0
        %1233 = vmatpush1.msra.mxu0 0.0
        %1234 = vmatprep.subr.mxu0 0.0
        %1235 = vmatpush1.msra.mxu0 0.0
        %1236 = vmatprep.subr.mxu0 0.0
        %1237 = vmatpush1.msra.mxu0 0.0
        %1238 = vmatprep.subr.mxu0 0.0
        %1239 = vmatpush1.msra.mxu0 0.0
        %1240 = vmatprep.subr.mxu0 0.0
        %1241 = vmatpush1.msra.mxu0 0.0
        %1242 = vmatprep.subr.mxu0 0.0
        %1243 = vmatpush1.msra.mxu0 0.0
        %1244 = vmatprep.subr.mxu0 0.0
        %1245 = vmatpush1.msra.mxu0 0.0
        %1246 = vmatprep.subr.mxu0 0.0
        %1247 = vmatpush1.msra.mxu0 0.0
        %1248 = vmatprep.subr.mxu0 0.0
        %1249 = vmatpush1.msra.mxu0 0.0
        %1250 = vmatprep.subr.mxu0 0.0
        %1251 = vmatpush1.msra.mxu0 0.0
        %1252 = vmatprep.subr.mxu0 0.0
        %1253 = vmatpush1.msra.mxu0 0.0
        %1254 = vmatprep.subr.mxu0 0.0
        %1255 = vmatpush1.msra.mxu0 0.0
        %1256 = vmatprep.subr.mxu0 0.0
        %1257 = vmatpush1.msra.mxu0 0.0
        %1258 = vmatprep.subr.mxu0 0.0
        %1259 = vmatpush1.msra.mxu0 0.0
        %1260 = vmatprep.subr.mxu0 0.0
        %1261 = vmatpush1.msra.mxu0 0.0
        %1262 = vmatprep.subr.mxu0 0.0
        %1263 = vmatpush1.msra.mxu0 0.0
        %1264 = vmatprep.mubr.f32.mxu0 0.0
        %1265 = vmatmul.mubr.f32.gmra.mrb[0].mxu0 %v1117
        %v1266 = vpop.f32.mrb[0].mxu0
        %v1267 = vadd.f32 %v1198, %v1266
        %v1268 = vpop.f32.mrb[0].mxu0
        %1269 = vdwg.mxu0
        %v1270 = vld [vmem:[%s6] sm:$0xff]
        %v1271 = vld [vmem:[%s6 + $0x8] sm:$0xff]
        %v1272 = vld [vmem:[%s6 + $0x10] sm:$0xff]
        %v1273 = vld [vmem:[%s6 + $0x18] sm:$0xff]
        %v1274 = vld [vmem:[#allocation6] sm:$0x1]
        %v1276 = vlaneseq
        %v1277 = vshrl.u32 %v1276, 7
        %v1278 = vsub.s32 0, %v1277
        %v1279 = vrot.slane %v1274, %v1278
        %1281 = vmatprep.subr.mxu0 0.0
        %1282 = vmatpush1.msra.mxu0 %v1270
        %1283 = vmatprep.subr.mxu0 0.0
        %1284 = vmatpush1.msra.mxu0 %v1271
        %1285 = vmatprep.subr.mxu0 0.0
        %1286 = vmatpush1.msra.mxu0 %v1272
        %1287 = vmatprep.subr.mxu0 0.0
        %1288 = vmatpush1.msra.mxu0 %v1273
        %1289 = vmatprep.subr.mxu0 0.0
        %1290 = vmatpush1.msra.mxu0 0.0
        %1291 = vmatprep.subr.mxu0 0.0
        %1292 = vmatpush1.msra.mxu0 0.0
        %1293 = vmatprep.subr.mxu0 0.0
        %1294 = vmatpush1.msra.mxu0 0.0
        %1295 = vmatprep.subr.mxu0 0.0
        %1296 = vmatpush1.msra.mxu0 0.0
        %1297 = vmatprep.subr.mxu0 0.0
        %1298 = vmatpush1.msra.mxu0 0.0
        %1299 = vmatprep.subr.mxu0 0.0
        %1300 = vmatpush1.msra.mxu0 0.0
        %1301 = vmatprep.subr.mxu0 0.0
        %1302 = vmatpush1.msra.mxu0 0.0
        %1303 = vmatprep.subr.mxu0 0.0
        %1304 = vmatpush1.msra.mxu0 0.0
        %1305 = vmatprep.subr.mxu0 0.0
        %1306 = vmatpush1.msra.mxu0 0.0
        %1307 = vmatprep.subr.mxu0 0.0
        %1308 = vmatpush1.msra.mxu0 0.0
        %1309 = vmatprep.subr.mxu0 0.0
        %1310 = vmatpush1.msra.mxu0 0.0
        %1311 = vmatprep.subr.mxu0 0.0
        %1312 = vmatpush1.msra.mxu0 0.0
        %1313 = vmatprep.subr.mxu0 0.0
        %1314 = vmatpush1.msra.mxu0 0.0
        %1315 = vmatprep.subr.mxu0 0.0
        %1316 = vmatpush1.msra.mxu0 0.0
        %1317 = vmatprep.subr.mxu0 0.0
        %1318 = vmatpush1.msra.mxu0 0.0
        %1319 = vmatprep.subr.mxu0 0.0
        %1320 = vmatpush1.msra.mxu0 0.0
        %1321 = vmatprep.subr.mxu0 0.0
        %1322 = vmatpush1.msra.mxu0 0.0
        %1323 = vmatprep.subr.mxu0 0.0
        %1324 = vmatpush1.msra.mxu0 0.0
        %1325 = vmatprep.subr.mxu0 0.0
        %1326 = vmatpush1.msra.mxu0 0.0
        %1327 = vmatprep.subr.mxu0 0.0
        %1328 = vmatpush1.msra.mxu0 0.0
        %1329 = vmatprep.subr.mxu0 0.0
        %1330 = vmatpush1.msra.mxu0 0.0
        %1331 = vmatprep.subr.mxu0 0.0
        %1332 = vmatpush1.msra.mxu0 0.0
        %1333 = vmatprep.subr.mxu0 0.0
        %1334 = vmatpush1.msra.mxu0 0.0
        %1335 = vmatprep.subr.mxu0 0.0
        %1336 = vmatpush1.msra.mxu0 0.0
        %1337 = vmatprep.subr.mxu0 0.0
        %1338 = vmatpush1.msra.mxu0 0.0
        %1339 = vmatprep.subr.mxu0 0.0
        %1340 = vmatpush1.msra.mxu0 0.0
        %1341 = vmatprep.subr.mxu0 0.0
        %1342 = vmatpush1.msra.mxu0 0.0
        %1343 = vmatprep.subr.mxu0 0.0
        %1344 = vmatpush1.msra.mxu0 0.0
        %1345 = vmatprep.mubr.f32.mxu0 0.0
        %1346 = vmatmul.mubr.f32.gmra.mrb[0].mxu0 %v1117
        %v1347 = vpop.f32.mrb[0].mxu0
        %v1348 = vadd.f32 %v1279, %v1347
        %v1349 = vpop.f32.mrb[0].mxu0
        %1350 = vdwg.mxu0
        %v1351 = vlaneseq
        %v1352 = vand.u32 %v1351, 127
        %vm1353 = vcmp.ge.s32.totalorder %v1352, 0
        %vm1354 = vcmp.lt.s32.totalorder %v1352, 8
        %vm1355 = vmand %vm1353, %vm1354
        %v1356 = vsel %vm1355, 1, 0
        %v1357 = vcvt.s32.f32 %v1356
        %v1358 = vmul.f32 %v1186, %v1357
        %v1360 = vsel %vm1115, %v1358, 0
        %v1363 = vsel %vm1115, %v1267, 0
        %1365 = vmatprep.subr.mxu0 0.0
        %1366 = vmatpush1.xpose.msra.mxu0 %v1363
        %1367 = vmatprep.subr.mxu0 0.0
        %1368 = vmatpush1.xpose.msra.mxu0 0.0
        %1369 = vmatprep.subr.mxu0 0.0
        %1370 = vmatpush1.xpose.msra.mxu0 0.0
        %1371 = vmatprep.subr.mxu0 0.0
        %1372 = vmatpush1.xpose.msra.mxu0 0.0
        %1373 = vmatprep.subr.mxu0 0.0
        %1374 = vmatpush1.xpose.msra.mxu0 0.0
        %1375 = vmatprep.subr.mxu0 0.0
        %1376 = vmatpush1.xpose.msra.mxu0 0.0
        %1377 = vmatprep.subr.mxu0 0.0
        %1378 = vmatpush1.xpose.msra.mxu0 0.0
        %1379 = vmatprep.subr.mxu0 0.0
        %1380 = vmatpush1.xpose.msra.mxu0 0.0
        %1381 = vmatprep.subr.mxu0 0.0
        %1382 = vmatpush1.xpose.msra.mxu0 0.0
        %1383 = vmatprep.subr.mxu0 0.0
        %1384 = vmatpush1.xpose.msra.mxu0 0.0
        %1385 = vmatprep.subr.mxu0 0.0
        %1386 = vmatpush1.xpose.msra.mxu0 0.0
        %1387 = vmatprep.subr.mxu0 0.0
        %1388 = vmatpush1.xpose.msra.mxu0 0.0
        %1389 = vmatprep.subr.mxu0 0.0
        %1390 = vmatpush1.xpose.msra.mxu0 0.0
        %1391 = vmatprep.subr.mxu0 0.0
        %1392 = vmatpush1.xpose.msra.mxu0 0.0
        %1393 = vmatprep.subr.mxu0 0.0
        %1394 = vmatpush1.xpose.msra.mxu0 0.0
        %1395 = vmatprep.subr.mxu0 0.0
        %1396 = vmatpush1.xpose.msra.mxu0 0.0
        %1397 = vmatprep.subr.mxu0 0.0
        %1398 = vmatpush1.xpose.msra.mxu0 0.0
        %1399 = vmatprep.subr.mxu0 0.0
        %1400 = vmatpush1.xpose.msra.mxu0 0.0
        %1401 = vmatprep.subr.mxu0 0.0
        %1402 = vmatpush1.xpose.msra.mxu0 0.0
        %1403 = vmatprep.subr.mxu0 0.0
        %1404 = vmatpush1.xpose.msra.mxu0 0.0
        %1405 = vmatprep.subr.mxu0 0.0
        %1406 = vmatpush1.xpose.msra.mxu0 0.0
        %1407 = vmatprep.subr.mxu0 0.0
        %1408 = vmatpush1.xpose.msra.mxu0 0.0
        %1409 = vmatprep.subr.mxu0 0.0
        %1410 = vmatpush1.xpose.msra.mxu0 0.0
        %1411 = vmatprep.subr.mxu0 0.0
        %1412 = vmatpush1.xpose.msra.mxu0 0.0
        %1413 = vmatprep.subr.mxu0 0.0
        %1414 = vmatpush1.xpose.msra.mxu0 0.0
        %1415 = vmatprep.subr.mxu0 0.0
        %1416 = vmatpush1.xpose.msra.mxu0 0.0
        %1417 = vmatprep.subr.mxu0 0.0
        %1418 = vmatpush1.xpose.msra.mxu0 0.0
        %1419 = vmatprep.subr.mxu0 0.0
        %1420 = vmatpush1.xpose.msra.mxu0 0.0
        %1421 = vmatprep.subr.mxu0 0.0
        %1422 = vmatpush1.xpose.msra.mxu0 0.0
        %1423 = vmatprep.subr.mxu0 0.0
        %1424 = vmatpush1.xpose.msra.mxu0 0.0
        %1425 = vmatprep.subr.mxu0 0.0
        %1426 = vmatpush1.xpose.msra.mxu0 0.0
        %1427 = vmatprep.subr.mxu0 0.0
        %1428 = vmatpush1.xpose.msra.mxu0 0.0
        %1429 = vmatprep.mubr.f32.mxu0 0.0
        %1430 = vmatmul.mubr.f32.gmra.mrb[0].mxu0 %v1360
        %v1431 = vpop.f32.mrb[0].mxu0
        %v1432 = vadd.f32 0.0, %v1431
        %v1433 = vpop.f32.mrb[0].mxu0
        %1434 = vdwg.mxu0
        %v1435 = vmul.f32 %v1432, 0.35355338
        %vm1436 = vcmask 64512
        %v1437 = vsel %vm1436, %v1435, -inf
        %1438 = vmax.xlane.f32.xlu0 %v1437
        %v1439 = vpop.xlane.xlu0 %1438
        %v1440 = vsub.f32 %v1435, %v1439
        %v1441 = vmul.f32 %v1440, 1.442695
        %v1442 = vpow.pop %v1441
        %v1443 = vsel %vm1436, %v1442, 0.0
        %1444 = vadd.xlane.f32.xlu0 %v1443
        %v1445 = vpop.xlane.xlu0 %1444
        %v1446 = vrcp.pop %v1445
        %v1447 = vmul.f32 %v1442, %v1446
        %v1448 = vmul.f32 %v1348, %v1357
        %vm1449 = vcmp.ge.s32.totalorder %v1352, 8
        %vm1450 = vcmp.lt.s32.totalorder %v1352, 16
        %vm1451 = vmand %vm1449, %vm1450
        %v1452 = vsel %vm1451, 1, 0
        %v1453 = vcvt.s32.f32 %v1452
        %v1454 = vmul.f32 %v1186, %v1453
        %v1456 = vsel %vm1115, %v1454, 0
        %1458 = vmatprep.subr.mxu0 0.0
        %1459 = vmatpush1.xpose.msra.mxu0 %v1363
        %1460 = vmatprep.subr.mxu0 0.0
        %1461 = vmatpush1.xpose.msra.mxu0 0.0
        %1462 = vmatprep.subr.mxu0 0.0
        %1463 = vmatpush1.xpose.msra.mxu0 0.0
        %1464 = vmatprep.subr.mxu0 0.0
        %1465 = vmatpush1.xpose.msra.mxu0 0.0
        %1466 = vmatprep.subr.mxu0 0.0
        %1467 = vmatpush1.xpose.msra.mxu0 0.0
        %1468 = vmatprep.subr.mxu0 0.0
        %1469 = vmatpush1.xpose.msra.mxu0 0.0
        %1470 = vmatprep.subr.mxu0 0.0
        %1471 = vmatpush1.xpose.msra.mxu0 0.0
        %1472 = vmatprep.subr.mxu0 0.0
        %1473 = vmatpush1.xpose.msra.mxu0 0.0
        %1474 = vmatprep.subr.mxu0 0.0
        %1475 = vmatpush1.xpose.msra.mxu0 0.0
        %1476 = vmatprep.subr.mxu0 0.0
        %1477 = vmatpush1.xpose.msra.mxu0 0.0
        %1478 = vmatprep.subr.mxu0 0.0
        %1479 = vmatpush1.xpose.msra.mxu0 0.0
        %1480 = vmatprep.subr.mxu0 0.0
        %1481 = vmatpush1.xpose.msra.mxu0 0.0
        %1482 = vmatprep.subr.mxu0 0.0
        %1483 = vmatpush1.xpose.msra.mxu0 0.0
        %1484 = vmatprep.subr.mxu0 0.0
        %1485 = vmatpush1.xpose.msra.mxu0 0.0
        %1486 = vmatprep.subr.mxu0 0.0
        %1487 = vmatpush1.xpose.msra.mxu0 0.0
        %1488 = vmatprep.subr.mxu0 0.0
        %1489 = vmatpush1.xpose.msra.mxu0 0.0
        %1490 = vmatprep.subr.mxu0 0.0
        %1491 = vmatpush1.xpose.msra.mxu0 0.0
        %1492 = vmatprep.subr.mxu0 0.0
        %1493 = vmatpush1.xpose.msra.mxu0 0.0
        %1494 = vmatprep.subr.mxu0 0.0
        %1495 = vmatpush1.xpose.msra.mxu0 0.0
        %1496 = vmatprep.subr.mxu0 0.0
        %1497 = vmatpush1.xpose.msra.mxu0 0.0
        %1498 = vmatprep.subr.mxu0 0.0
        %1499 = vmatpush1.xpose.msra.mxu0 0.0
        %1500 = vmatprep.subr.mxu0 0.0
        %1501 = vmatpush1.xpose.msra.mxu0 0.0
        %1502 = vmatprep.subr.mxu0 0.0
        %1503 = vmatpush1.xpose.msra.mxu0 0.0
        %1504 = vmatprep.subr.mxu0 0.0
        %1505 = vmatpush1.xpose.msra.mxu0 0.0
        %1506 = vmatprep.subr.mxu0 0.0
        %1507 = vmatpush1.xpose.msra.mxu0 0.0
        %1508 = vmatprep.subr.mxu0 0.0
        %1509 = vmatpush1.xpose.msra.mxu0 0.0
        %1510 = vmatprep.subr.mxu0 0.0
        %1511 = vmatpush1.xpose.msra.mxu0 0.0
        %1512 = vmatprep.subr.mxu0 0.0
        %1513 = vmatpush1.xpose.msra.mxu0 0.0
        %1514 = vmatprep.subr.mxu0 0.0
        %1515 = vmatpush1.xpose.msra.mxu0 0.0
        %1516 = vmatprep.subr.mxu0 0.0
        %1517 = vmatpush1.xpose.msra.mxu0 0.0
        %1518 = vmatprep.subr.mxu0 0.0
        %1519 = vmatpush1.xpose.msra.mxu0 0.0
        %1520 = vmatprep.subr.mxu0 0.0
        %1521 = vmatpush1.xpose.msra.mxu0 0.0
        %1522 = vmatprep.mubr.f32.mxu0 0.0
        %1523 = vmatmul.mubr.f32.gmra.mrb[0].mxu0 %v1456
        %v1524 = vpop.f32.mrb[0].mxu0
        %v1525 = vadd.f32 0.0, %v1524
        %v1526 = vpop.f32.mrb[0].mxu0
        %1527 = vdwg.mxu0
        %v1528 = vmul.f32 %v1525, 0.35355338
        %v1529 = vsel %vm1436, %v1528, -inf
        %1530 = vmax.xlane.f32.xlu0 %v1529
        %v1531 = vpop.xlane.xlu0 %1530
        %v1532 = vsub.f32 %v1528, %v1531
        %v1533 = vmul.f32 %v1532, 1.442695
        %v1534 = vpow.pop %v1533
        %v1535 = vsel %vm1436, %v1534, 0.0
        %1536 = vadd.xlane.f32.xlu0 %v1535
        %v1537 = vpop.xlane.xlu0 %1536
        %v1538 = vrcp.pop %v1537
        %v1539 = vmul.f32 %v1534, %v1538
        %v1540 = vmul.f32 %v1348, %v1453
        %v1542 = vsel %vm1436, %v1539, 0
        %1544 = vmatprep.subr.mxu0 0.0
        %1545 = vmatpush1.msra.mxu0 %v1540
        %1546 = vmatprep.subr.mxu0 0.0
        %1547 = vmatpush1.msra.mxu0 0.0
        %1548 = vmatprep.subr.mxu0 0.0
        %1549 = vmatpush1.msra.mxu0 0.0
        %1550 = vmatprep.subr.mxu0 0.0
        %1551 = vmatpush1.msra.mxu0 0.0
        %1552 = vmatprep.subr.mxu0 0.0
        %1553 = vmatpush1.msra.mxu0 0.0
        %1554 = vmatprep.subr.mxu0 0.0
        %1555 = vmatpush1.msra.mxu0 0.0
        %1556 = vmatprep.subr.mxu0 0.0
        %1557 = vmatpush1.msra.mxu0 0.0
        %1558 = vmatprep.subr.mxu0 0.0
        %1559 = vmatpush1.msra.mxu0 0.0
        %1560 = vmatprep.subr.mxu0 0.0
        %1561 = vmatpush1.msra.mxu0 0.0
        %1562 = vmatprep.subr.mxu0 0.0
        %1563 = vmatpush1.msra.mxu0 0.0
        %1564 = vmatprep.subr.mxu0 0.0
        %1565 = vmatpush1.msra.mxu0 0.0
        %1566 = vmatprep.subr.mxu0 0.0
        %1567 = vmatpush1.msra.mxu0 0.0
        %1568 = vmatprep.subr.mxu0 0.0
        %1569 = vmatpush1.msra.mxu0 0.0
        %1570 = vmatprep.subr.mxu0 0.0
        %1571 = vmatpush1.msra.mxu0 0.0
        %1572 = vmatprep.subr.mxu0 0.0
        %1573 = vmatpush1.msra.mxu0 0.0
        %1574 = vmatprep.subr.mxu0 0.0
        %1575 = vmatpush1.msra.mxu0 0.0
        %1576 = vmatprep.subr.mxu0 0.0
        %1577 = vmatpush1.msra.mxu0 0.0
        %1578 = vmatprep.subr.mxu0 0.0
        %1579 = vmatpush1.msra.mxu0 0.0
        %1580 = vmatprep.subr.mxu0 0.0
        %1581 = vmatpush1.msra.mxu0 0.0
        %1582 = vmatprep.subr.mxu0 0.0
        %1583 = vmatpush1.msra.mxu0 0.0
        %1584 = vmatprep.subr.mxu0 0.0
        %1585 = vmatpush1.msra.mxu0 0.0
        %1586 = vmatprep.subr.mxu0 0.0
        %1587 = vmatpush1.msra.mxu0 0.0
        %1588 = vmatprep.subr.mxu0 0.0
        %1589 = vmatpush1.msra.mxu0 0.0
        %1590 = vmatprep.subr.mxu0 0.0
        %1591 = vmatpush1.msra.mxu0 0.0
        %1592 = vmatprep.subr.mxu0 0.0
        %1593 = vmatpush1.msra.mxu0 0.0
        %1594 = vmatprep.subr.mxu0 0.0
        %1595 = vmatpush1.msra.mxu0 0.0
        %1596 = vmatprep.subr.mxu0 0.0
        %1597 = vmatpush1.msra.mxu0 0.0
        %1598 = vmatprep.subr.mxu0 0.0
        %1599 = vmatpush1.msra.mxu0 0.0
        %1600 = vmatprep.subr.mxu0 0.0
        %1601 = vmatpush1.msra.mxu0 0.0
        %1602 = vmatprep.subr.mxu0 0.0
        %1603 = vmatpush1.msra.mxu0 0.0
        %1604 = vmatprep.subr.mxu0 0.0
        %1605 = vmatpush1.msra.mxu0 0.0
        %1606 = vmatprep.subr.mxu0 0.0
        %1607 = vmatpush1.msra.mxu0 0.0
        %1608 = vmatprep.mubr.f32.mxu0 0.0
        %1609 = vmatmul.mubr.f32.gmra.mrb[0].mxu0 %v1542
        %v1610 = vpop.f32.mrb[0].mxu0
        %v1611 = vadd.f32 0.0, %v1610
        %v1612 = vpop.f32.mrb[0].mxu0
        %1613 = vdwg.mxu0
        %v1615 = vsel %vm1436, %v1447, 0
        %1617 = vmatprep.subr.mxu0 0.0
        %1618 = vmatpush1.msra.mxu0 %v1448
        %1619 = vmatprep.subr.mxu0 0.0
        %1620 = vmatpush1.msra.mxu0 0.0
        %1621 = vmatprep.subr.mxu0 0.0
        %1622 = vmatpush1.msra.mxu0 0.0
        %1623 = vmatprep.subr.mxu0 0.0
        %1624 = vmatpush1.msra.mxu0 0.0
        %1625 = vmatprep.subr.mxu0 0.0
        %1626 = vmatpush1.msra.mxu0 0.0
        %1627 = vmatprep.subr.mxu0 0.0
        %1628 = vmatpush1.msra.mxu0 0.0
        %1629 = vmatprep.subr.mxu0 0.0
        %1630 = vmatpush1.msra.mxu0 0.0
        %1631 = vmatprep.subr.mxu0 0.0
        %1632 = vmatpush1.msra.mxu0 0.0
        %1633 = vmatprep.subr.mxu0 0.0
        %1634 = vmatpush1.msra.mxu0 0.0
        %1635 = vmatprep.subr.mxu0 0.0
        %1636 = vmatpush1.msra.mxu0 0.0
        %1637 = vmatprep.subr.mxu0 0.0
        %1638 = vmatpush1.msra.mxu0 0.0
        %1639 = vmatprep.subr.mxu0 0.0
        %1640 = vmatpush1.msra.mxu0 0.0
        %1641 = vmatprep.subr.mxu0 0.0
        %1642 = vmatpush1.msra.mxu0 0.0
        %1643 = vmatprep.subr.mxu0 0.0
        %1644 = vmatpush1.msra.mxu0 0.0
        %1645 = vmatprep.subr.mxu0 0.0
        %1646 = vmatpush1.msra.mxu0 0.0
        %1647 = vmatprep.subr.mxu0 0.0
        %1648 = vmatpush1.msra.mxu0 0.0
        %1649 = vmatprep.subr.mxu0 0.0
        %1650 = vmatpush1.msra.mxu0 0.0
        %1651 = vmatprep.subr.mxu0 0.0
        %1652 = vmatpush1.msra.mxu0 0.0
        %1653 = vmatprep.subr.mxu0 0.0
        %1654 = vmatpush1.msra.mxu0 0.0
        %1655 = vmatprep.subr.mxu0 0.0
        %1656 = vmatpush1.msra.mxu0 0.0
        %1657 = vmatprep.subr.mxu0 0.0
        %1658 = vmatpush1.msra.mxu0 0.0
        %1659 = vmatprep.subr.mxu0 0.0
        %1660 = vmatpush1.msra.mxu0 0.0
        %1661 = vmatprep.subr.mxu0 0.0
        %1662 = vmatpush1.msra.mxu0 0.0
        %1663 = vmatprep.subr.mxu0 0.0
        %1664 = vmatpush1.msra.mxu0 0.0
        %1665 = vmatprep.subr.mxu0 0.0
        %1666 = vmatpush1.msra.mxu0 0.0
        %1667 = vmatprep.subr.mxu0 0.0
        %1668 = vmatpush1.msra.mxu0 0.0
        %1669 = vmatprep.subr.mxu0 0.0
        %1670 = vmatpush1.msra.mxu0 0.0
        %1671 = vmatprep.subr.mxu0 0.0
        %1672 = vmatpush1.msra.mxu0 0.0
        %1673 = vmatprep.subr.mxu0 0.0
        %1674 = vmatpush1.msra.mxu0 0.0
        %1675 = vmatprep.subr.mxu0 0.0
        %1676 = vmatpush1.msra.mxu0 0.0
        %1677 = vmatprep.subr.mxu0 0.0
        %1678 = vmatpush1.msra.mxu0 0.0
        %1679 = vmatprep.subr.mxu0 0.0
        %1680 = vmatpush1.msra.mxu0 0.0
        %1681 = vmatprep.mubr.f32.mxu0 0.0
        %1682 = vmatmul.mubr.f32.gmra.mrb[0].mxu0 %v1615
        %v1683 = vpop.f32.mrb[0].mxu0
        %v1684 = vadd.f32 %v1611, %v1683
        %v1685 = vpop.f32.mrb[0].mxu0
        %1686 = vdwg.mxu0
        %vm1687 = vcmp.ge.s32.totalorder %v1352, 16
        %vm1688 = vcmp.lt.s32.totalorder %v1352, 24
        %vm1689 = vmand %vm1687, %vm1688
        %v1690 = vsel %vm1689, 1, 0
        %v1691 = vcvt.s32.f32 %v1690
        %v1692 = vmul.f32 %v1186, %v1691
        %v1694 = vsel %vm1115, %v1692, 0
        %1696 = vmatprep.subr.mxu0 0.0
        %1697 = vmatpush1.xpose.msra.mxu0 %v1363
        %1698 = vmatprep.subr.mxu0 0.0
        %1699 = vmatpush1.xpose.msra.mxu0 0.0
        %1700 = vmatprep.subr.mxu0 0.0
        %1701 = vmatpush1.xpose.msra.mxu0 0.0
        %1702 = vmatprep.subr.mxu0 0.0
        %1703 = vmatpush1.xpose.msra.mxu0 0.0
        %1704 = vmatprep.subr.mxu0 0.0
        %1705 = vmatpush1.xpose.msra.mxu0 0.0
        %1706 = vmatprep.subr.mxu0 0.0
        %1707 = vmatpush1.xpose.msra.mxu0 0.0
        %1708 = vmatprep.subr.mxu0 0.0
        %1709 = vmatpush1.xpose.msra.mxu0 0.0
        %1710 = vmatprep.subr.mxu0 0.0
        %1711 = vmatpush1.xpose.msra.mxu0 0.0
        %1712 = vmatprep.subr.mxu0 0.0
        %1713 = vmatpush1.xpose.msra.mxu0 0.0
        %1714 = vmatprep.subr.mxu0 0.0
        %1715 = vmatpush1.xpose.msra.mxu0 0.0
        %1716 = vmatprep.subr.mxu0 0.0
        %1717 = vmatpush1.xpose.msra.mxu0 0.0
        %1718 = vmatprep.subr.mxu0 0.0
        %1719 = vmatpush1.xpose.msra.mxu0 0.0
        %1720 = vmatprep.subr.mxu0 0.0
        %1721 = vmatpush1.xpose.msra.mxu0 0.0
        %1722 = vmatprep.subr.mxu0 0.0
        %1723 = vmatpush1.xpose.msra.mxu0 0.0
        %1724 = vmatprep.subr.mxu0 0.0
        %1725 = vmatpush1.xpose.msra.mxu0 0.0
        %1726 = vmatprep.subr.mxu0 0.0
        %1727 = vmatpush1.xpose.msra.mxu0 0.0
        %1728 = vmatprep.subr.mxu0 0.0
        %1729 = vmatpush1.xpose.msra.mxu0 0.0
        %1730 = vmatprep.subr.mxu0 0.0
        %1731 = vmatpush1.xpose.msra.mxu0 0.0
        %1732 = vmatprep.subr.mxu0 0.0
        %1733 = vmatpush1.xpose.msra.mxu0 0.0
        %1734 = vmatprep.subr.mxu0 0.0
        %1735 = vmatpush1.xpose.msra.mxu0 0.0
        %1736 = vmatprep.subr.mxu0 0.0
        %1737 = vmatpush1.xpose.msra.mxu0 0.0
        %1738 = vmatprep.subr.mxu0 0.0
        %1739 = vmatpush1.xpose.msra.mxu0 0.0
        %1740 = vmatprep.subr.mxu0 0.0
        %1741 = vmatpush1.xpose.msra.mxu0 0.0
        %1742 = vmatprep.subr.mxu0 0.0
        %1743 = vmatpush1.xpose.msra.mxu0 0.0
        %1744 = vmatprep.subr.mxu0 0.0
        %1745 = vmatpush1.xpose.msra.mxu0 0.0
        %1746 = vmatprep.subr.mxu0 0.0
        %1747 = vmatpush1.xpose.msra.mxu0 0.0
        %1748 = vmatprep.subr.mxu0 0.0
        %1749 = vmatpush1.xpose.msra.mxu0 0.0
        %1750 = vmatprep.subr.mxu0 0.0
        %1751 = vmatpush1.xpose.msra.mxu0 0.0
        %1752 = vmatprep.subr.mxu0 0.0
        %1753 = vmatpush1.xpose.msra.mxu0 0.0
        %1754 = vmatprep.subr.mxu0 0.0
        %1755 = vmatpush1.xpose.msra.mxu0 0.0
        %1756 = vmatprep.subr.mxu0 0.0
        %1757 = vmatpush1.xpose.msra.mxu0 0.0
        %1758 = vmatprep.subr.mxu0 0.0
        %1759 = vmatpush1.xpose.msra.mxu0 0.0
        %1760 = vmatprep.mubr.f32.mxu0 0.0
        %1761 = vmatmul.mubr.f32.gmra.mrb[0].mxu0 %v1694
        %v1762 = vpop.f32.mrb[0].mxu0
        %v1763 = vadd.f32 0.0, %v1762
        %v1764 = vpop.f32.mrb[0].mxu0
        %1765 = vdwg.mxu0
        %v1766 = vmul.f32 %v1763, 0.35355338
        %v1767 = vsel %vm1436, %v1766, -inf
        %1768 = vmax.xlane.f32.xlu0 %v1767
        %v1769 = vpop.xlane.xlu0 %1768
        %v1770 = vsub.f32 %v1766, %v1769
        %v1771 = vmul.f32 %v1770, 1.442695
        %v1772 = vpow.pop %v1771
        %v1773 = vsel %vm1436, %v1772, 0.0
        %1774 = vadd.xlane.f32.xlu0 %v1773
        %v1775 = vpop.xlane.xlu0 %1774
        %v1776 = vrcp.pop %v1775
        %v1777 = vmul.f32 %v1772, %v1776
        %v1778 = vmul.f32 %v1348, %v1691
        %v1780 = vsel %vm1436, %v1777, 0
        %1782 = vmatprep.subr.mxu0 0.0
        %1783 = vmatpush1.msra.mxu0 %v1778
        %1784 = vmatprep.subr.mxu0 0.0
        %1785 = vmatpush1.msra.mxu0 0.0
        %1786 = vmatprep.subr.mxu0 0.0
        %1787 = vmatpush1.msra.mxu0 0.0
        %1788 = vmatprep.subr.mxu0 0.0
        %1789 = vmatpush1.msra.mxu0 0.0
        %1790 = vmatprep.subr.mxu0 0.0
        %1791 = vmatpush1.msra.mxu0 0.0
        %1792 = vmatprep.subr.mxu0 0.0
        %1793 = vmatpush1.msra.mxu0 0.0
        %1794 = vmatprep.subr.mxu0 0.0
        %1795 = vmatpush1.msra.mxu0 0.0
        %1796 = vmatprep.subr.mxu0 0.0
        %1797 = vmatpush1.msra.mxu0 0.0
        %1798 = vmatprep.subr.mxu0 0.0
        %1799 = vmatpush1.msra.mxu0 0.0
        %1800 = vmatprep.subr.mxu0 0.0
        %1801 = vmatpush1.msra.mxu0 0.0
        %1802 = vmatprep.subr.mxu0 0.0
        %1803 = vmatpush1.msra.mxu0 0.0
        %1804 = vmatprep.subr.mxu0 0.0
        %1805 = vmatpush1.msra.mxu0 0.0
        %1806 = vmatprep.subr.mxu0 0.0
        %1807 = vmatpush1.msra.mxu0 0.0
        %1808 = vmatprep.subr.mxu0 0.0
        %1809 = vmatpush1.msra.mxu0 0.0
        %1810 = vmatprep.subr.mxu0 0.0
        %1811 = vmatpush1.msra.mxu0 0.0
        %1812 = vmatprep.subr.mxu0 0.0
        %1813 = vmatpush1.msra.mxu0 0.0
        %1814 = vmatprep.subr.mxu0 0.0
        %1815 = vmatpush1.msra.mxu0 0.0
        %1816 = vmatprep.subr.mxu0 0.0
        %1817 = vmatpush1.msra.mxu0 0.0
        %1818 = vmatprep.subr.mxu0 0.0
        %1819 = vmatpush1.msra.mxu0 0.0
        %1820 = vmatprep.subr.mxu0 0.0
        %1821 = vmatpush1.msra.mxu0 0.0
        %1822 = vmatprep.subr.mxu0 0.0
        %1823 = vmatpush1.msra.mxu0 0.0
        %1824 = vmatprep.subr.mxu0 0.0
        %1825 = vmatpush1.msra.mxu0 0.0
        %1826 = vmatprep.subr.mxu0 0.0
        %1827 = vmatpush1.msra.mxu0 0.0
        %1828 = vmatprep.subr.mxu0 0.0
        %1829 = vmatpush1.msra.mxu0 0.0
        %1830 = vmatprep.subr.mxu0 0.0
        %1831 = vmatpush1.msra.mxu0 0.0
        %1832 = vmatprep.subr.mxu0 0.0
        %1833 = vmatpush1.msra.mxu0 0.0
        %1834 = vmatprep.subr.mxu0 0.0
        %1835 = vmatpush1.msra.mxu0 0.0
        %1836 = vmatprep.subr.mxu0 0.0
        %1837 = vmatpush1.msra.mxu0 0.0
        %1838 = vmatprep.subr.mxu0 0.0
        %1839 = vmatpush1.msra.mxu0 0.0
        %1840 = vmatprep.subr.mxu0 0.0
        %1841 = vmatpush1.msra.mxu0 0.0
        %1842 = vmatprep.subr.mxu0 0.0
        %1843 = vmatpush1.msra.mxu0 0.0
        %1844 = vmatprep.subr.mxu0 0.0
        %1845 = vmatpush1.msra.mxu0 0.0
        %1846 = vmatprep.mubr.f32.mxu0 0.0
        %1847 = vmatmul.mubr.f32.gmra.mrb[0].mxu0 %v1780
        %v1848 = vpop.f32.mrb[0].mxu0
        %v1849 = vadd.f32 0.0, %v1848
        %v1850 = vpop.f32.mrb[0].mxu0
        %1851 = vdwg.mxu0
        %v1852 = vadd.f32 %v1684, %v1849
        %vm1853 = vcmp.ge.s32.totalorder %v1352, 24
        %vm1854 = vcmp.lt.s32.totalorder %v1352, 32
        %vm1855 = vmand %vm1853, %vm1854
        %v1856 = vsel %vm1855, 1, 0
        %v1857 = vcvt.s32.f32 %v1856
        %v1858 = vmul.f32 %v1186, %v1857
        %v1860 = vsel %vm1115, %v1858, 0
        %1862 = vmatprep.subr.mxu0 0.0
        %1863 = vmatpush1.xpose.msra.mxu0 %v1363
        %1864 = vmatprep.subr.mxu0 0.0
        %1865 = vmatpush1.xpose.msra.mxu0 0.0
        %1866 = vmatprep.subr.mxu0 0.0
        %1867 = vmatpush1.xpose.msra.mxu0 0.0
        %1868 = vmatprep.subr.mxu0 0.0
        %1869 = vmatpush1.xpose.msra.mxu0 0.0
        %1870 = vmatprep.subr.mxu0 0.0
        %1871 = vmatpush1.xpose.msra.mxu0 0.0
        %1872 = vmatprep.subr.mxu0 0.0
        %1873 = vmatpush1.xpose.msra.mxu0 0.0
        %1874 = vmatprep.subr.mxu0 0.0
        %1875 = vmatpush1.xpose.msra.mxu0 0.0
        %1876 = vmatprep.subr.mxu0 0.0
        %1877 = vmatpush1.xpose.msra.mxu0 0.0
        %1878 = vmatprep.subr.mxu0 0.0
        %1879 = vmatpush1.xpose.msra.mxu0 0.0
        %1880 = vmatprep.subr.mxu0 0.0
        %1881 = vmatpush1.xpose.msra.mxu0 0.0
        %1882 = vmatprep.subr.mxu0 0.0
        %1883 = vmatpush1.xpose.msra.mxu0 0.0
        %1884 = vmatprep.subr.mxu0 0.0
        %1885 = vmatpush1.xpose.msra.mxu0 0.0
        %1886 = vmatprep.subr.mxu0 0.0
        %1887 = vmatpush1.xpose.msra.mxu0 0.0
        %1888 = vmatprep.subr.mxu0 0.0
        %1889 = vmatpush1.xpose.msra.mxu0 0.0
        %1890 = vmatprep.subr.mxu0 0.0
        %1891 = vmatpush1.xpose.msra.mxu0 0.0
        %1892 = vmatprep.subr.mxu0 0.0
        %1893 = vmatpush1.xpose.msra.mxu0 0.0
        %1894 = vmatprep.subr.mxu0 0.0
        %1895 = vmatpush1.xpose.msra.mxu0 0.0
        %1896 = vmatprep.subr.mxu0 0.0
        %1897 = vmatpush1.xpose.msra.mxu0 0.0
        %1898 = vmatprep.subr.mxu0 0.0
        %1899 = vmatpush1.xpose.msra.mxu0 0.0
        %1900 = vmatprep.subr.mxu0 0.0
        %1901 = vmatpush1.xpose.msra.mxu0 0.0
        %1902 = vmatprep.subr.mxu0 0.0
        %1903 = vmatpush1.xpose.msra.mxu0 0.0
        %1904 = vmatprep.subr.mxu0 0.0
        %1905 = vmatpush1.xpose.msra.mxu0 0.0
        %1906 = vmatprep.subr.mxu0 0.0
        %1907 = vmatpush1.xpose.msra.mxu0 0.0
        %1908 = vmatprep.subr.mxu0 0.0
        %1909 = vmatpush1.xpose.msra.mxu0 0.0
        %1910 = vmatprep.subr.mxu0 0.0
        %1911 = vmatpush1.xpose.msra.mxu0 0.0
        %1912 = vmatprep.subr.mxu0 0.0
        %1913 = vmatpush1.xpose.msra.mxu0 0.0
        %1914 = vmatprep.subr.mxu0 0.0
        %1915 = vmatpush1.xpose.msra.mxu0 0.0
        %1916 = vmatprep.subr.mxu0 0.0
        %1917 = vmatpush1.xpose.msra.mxu0 0.0
        %1918 = vmatprep.subr.mxu0 0.0
        %1919 = vmatpush1.xpose.msra.mxu0 0.0
        %1920 = vmatprep.subr.mxu0 0.0
        %1921 = vmatpush1.xpose.msra.mxu0 0.0
        %1922 = vmatprep.subr.mxu0 0.0
        %1923 = vmatpush1.xpose.msra.mxu0 0.0
        %1924 = vmatprep.subr.mxu0 0.0
        %1925 = vmatpush1.xpose.msra.mxu0 0.0
        %1926 = vmatprep.mubr.f32.mxu0 0.0
        %1927 = vmatmul.mubr.f32.gmra.mrb[0].mxu0 %v1860
        %v1928 = vpop.f32.mrb[0].mxu0
        %v1929 = vadd.f32 0.0, %v1928
        %v1930 = vpop.f32.mrb[0].mxu0
        %1931 = vdwg.mxu0
        %v1932 = vmul.f32 %v1929, 0.35355338
        %v1933 = vsel %vm1436, %v1932, -inf
        %1934 = vmax.xlane.f32.xlu0 %v1933
        %v1935 = vpop.xlane.xlu0 %1934
        %v1936 = vsub.f32 %v1932, %v1935
        %v1937 = vmul.f32 %v1936, 1.442695
        %v1938 = vpow.pop %v1937
        %v1939 = vsel %vm1436, %v1938, 0.0
        %1940 = vadd.xlane.f32.xlu0 %v1939
        %v1941 = vpop.xlane.xlu0 %1940
        %v1942 = vrcp.pop %v1941
        %v1943 = vmul.f32 %v1938, %v1942
        %v1944 = vmul.f32 %v1348, %v1857
        %v1946 = vsel %vm1436, %v1943, 0
        %1948 = vmatprep.subr.mxu0 0.0
        %1949 = vmatpush1.msra.mxu0 %v1944
        %1950 = vmatprep.subr.mxu0 0.0
        %1951 = vmatpush1.msra.mxu0 0.0
        %1952 = vmatprep.subr.mxu0 0.0
        %1953 = vmatpush1.msra.mxu0 0.0
        %1954 = vmatprep.subr.mxu0 0.0
        %1955 = vmatpush1.msra.mxu0 0.0
        %1956 = vmatprep.subr.mxu0 0.0
        %1957 = vmatpush1.msra.mxu0 0.0
        %1958 = vmatprep.subr.mxu0 0.0
        %1959 = vmatpush1.msra.mxu0 0.0
        %1960 = vmatprep.subr.mxu0 0.0
        %1961 = vmatpush1.msra.mxu0 0.0
        %1962 = vmatprep.subr.mxu0 0.0
        %1963 = vmatpush1.msra.mxu0 0.0
        %1964 = vmatprep.subr.mxu0 0.0
        %1965 = vmatpush1.msra.mxu0 0.0
        %1966 = vmatprep.subr.mxu0 0.0
        %1967 = vmatpush1.msra.mxu0 0.0
        %1968 = vmatprep.subr.mxu0 0.0
        %1969 = vmatpush1.msra.mxu0 0.0
        %1970 = vmatprep.subr.mxu0 0.0
        %1971 = vmatpush1.msra.mxu0 0.0
        %1972 = vmatprep.subr.mxu0 0.0
        %1973 = vmatpush1.msra.mxu0 0.0
        %1974 = vmatprep.subr.mxu0 0.0
        %1975 = vmatpush1.msra.mxu0 0.0
        %1976 = vmatprep.subr.mxu0 0.0
        %1977 = vmatpush1.msra.mxu0 0.0
        %1978 = vmatprep.subr.mxu0 0.0
        %1979 = vmatpush1.msra.mxu0 0.0
        %1980 = vmatprep.subr.mxu0 0.0
        %1981 = vmatpush1.msra.mxu0 0.0
        %1982 = vmatprep.subr.mxu0 0.0
        %1983 = vmatpush1.msra.mxu0 0.0
        %1984 = vmatprep.subr.mxu0 0.0
        %1985 = vmatpush1.msra.mxu0 0.0
        %1986 = vmatprep.subr.mxu0 0.0
        %1987 = vmatpush1.msra.mxu0 0.0
        %1988 = vmatprep.subr.mxu0 0.0
        %1989 = vmatpush1.msra.mxu0 0.0
        %1990 = vmatprep.subr.mxu0 0.0
        %1991 = vmatpush1.msra.mxu0 0.0
        %1992 = vmatprep.subr.mxu0 0.0
        %1993 = vmatpush1.msra.mxu0 0.0
        %1994 = vmatprep.subr.mxu0 0.0
        %1995 = vmatpush1.msra.mxu0 0.0
        %1996 = vmatprep.subr.mxu0 0.0
        %1997 = vmatpush1.msra.mxu0 0.0
        %1998 = vmatprep.subr.mxu0 0.0
        %1999 = vmatpush1.msra.mxu0 0.0
        %2000 = vmatprep.subr.mxu0 0.0
        %2001 = vmatpush1.msra.mxu0 0.0
        %2002 = vmatprep.subr.mxu0 0.0
        %2003 = vmatpush1.msra.mxu0 0.0
        %2004 = vmatprep.subr.mxu0 0.0
        %2005 = vmatpush1.msra.mxu0 0.0
        %2006 = vmatprep.subr.mxu0 0.0
        %2007 = vmatpush1.msra.mxu0 0.0
        %2008 = vmatprep.subr.mxu0 0.0
        %2009 = vmatpush1.msra.mxu0 0.0
        %2010 = vmatprep.subr.mxu0 0.0
        %2011 = vmatpush1.msra.mxu0 0.0
        %2012 = vmatprep.mubr.f32.mxu0 0.0
        %2013 = vmatmul.mubr.f32.gmra.mrb[0].mxu0 %v1946
        %v2014 = vpop.f32.mrb[0].mxu0
        %v2015 = vadd.f32 0.0, %v2014
        %v2016 = vpop.f32.mrb[0].mxu0
        %2017 = vdwg.mxu0
        %v2018 = vadd.f32 %v1852, %v2015
        %v2019 = vld [vmem:[%s8] sm:$0xff]
        %v2020 = vld [vmem:[%s8 + $0x8] sm:$0xff]
        %v2021 = vld [vmem:[%s8 + $0x10] sm:$0xff]
        %v2022 = vld [vmem:[%s8 + $0x18] sm:$0xff]
        %v2023 = vld [vmem:[#allocation7] sm:$0x1]
        %v2025 = vlaneseq
        %v2026 = vshrl.u32 %v2025, 7
        %v2027 = vsub.s32 0, %v2026
        %v2028 = vrot.slane %v2023, %v2027
        %v2031 = vsel %vm1115, %v2018, 0
        %2033 = vmatprep.subr.mxu0 0.0
        %2034 = vmatpush1.msra.mxu0 %v2019
        %2035 = vmatprep.subr.mxu0 0.0
        %2036 = vmatpush1.msra.mxu0 %v2020
        %2037 = vmatprep.subr.mxu0 0.0
        %2038 = vmatpush1.msra.mxu0 %v2021
        %2039 = vmatprep.subr.mxu0 0.0
        %2040 = vmatpush1.msra.mxu0 %v2022
        %2041 = vmatprep.subr.mxu0 0.0
        %2042 = vmatpush1.msra.mxu0 0.0
        %2043 = vmatprep.subr.mxu0 0.0
        %2044 = vmatpush1.msra.mxu0 0.0
        %2045 = vmatprep.subr.mxu0 0.0
        %2046 = vmatpush1.msra.mxu0 0.0
        %2047 = vmatprep.subr.mxu0 0.0
        %2048 = vmatpush1.msra.mxu0 0.0
        %2049 = vmatprep.subr.mxu0 0.0
        %2050 = vmatpush1.msra.mxu0 0.0
        %2051 = vmatprep.subr.mxu0 0.0
        %2052 = vmatpush1.msra.mxu0 0.0
        %2053 = vmatprep.subr.mxu0 0.0
        %2054 = vmatpush1.msra.mxu0 0.0
        %2055 = vmatprep.subr.mxu0 0.0
        %2056 = vmatpush1.msra.mxu0 0.0
        %2057 = vmatprep.subr.mxu0 0.0
        %2058 = vmatpush1.msra.mxu0 0.0
        %2059 = vmatprep.subr.mxu0 0.0
        %2060 = vmatpush1.msra.mxu0 0.0
        %2061 = vmatprep.subr.mxu0 0.0
        %2062 = vmatpush1.msra.mxu0 0.0
        %2063 = vmatprep.subr.mxu0 0.0
        %2064 = vmatpush1.msra.mxu0 0.0
        %2065 = vmatprep.subr.mxu0 0.0
        %2066 = vmatpush1.msra.mxu0 0.0
        %2067 = vmatprep.subr.mxu0 0.0
        %2068 = vmatpush1.msra.mxu0 0.0
        %2069 = vmatprep.subr.mxu0 0.0
        %2070 = vmatpush1.msra.mxu0 0.0
        %2071 = vmatprep.subr.mxu0 0.0
        %2072 = vmatpush1.msra.mxu0 0.0
        %2073 = vmatprep.subr.mxu0 0.0
        %2074 = vmatpush1.msra.mxu0 0.0
        %2075 = vmatprep.subr.mxu0 0.0
        %2076 = vmatpush1.msra.mxu0 0.0
        %2077 = vmatprep.subr.mxu0 0.0
        %2078 = vmatpush1.msra.mxu0 0.0
        %2079 = vmatprep.subr.mxu0 0.0
        %2080 = vmatpush1.msra.mxu0 0.0
        %2081 = vmatprep.subr.mxu0 0.0
        %2082 = vmatpush1.msra.mxu0 0.0
        %2083 = vmatprep.subr.mxu0 0.0
        %2084 = vmatpush1.msra.mxu0 0.0
        %2085 = vmatprep.subr.mxu0 0.0
        %2086 = vmatpush1.msra.mxu0 0.0
        %2087 = vmatprep.subr.mxu0 0.0
        %2088 = vmatpush1.msra.mxu0 0.0
        %2089 = vmatprep.subr.mxu0 0.0
        %2090 = vmatpush1.msra.mxu0 0.0
        %2091 = vmatprep.subr.mxu0 0.0
        %2092 = vmatpush1.msra.mxu0 0.0
        %2093 = vmatprep.subr.mxu0 0.0
        %2094 = vmatpush1.msra.mxu0 0.0
        %2095 = vmatprep.subr.mxu0 0.0
        %2096 = vmatpush1.msra.mxu0 0.0
        %2097 = vmatprep.mubr.f32.mxu0 0.0
        %2098 = vmatmul.mubr.f32.gmra.mrb[0].mxu0 %v2031
        %v2099 = vpop.f32.mrb[0].mxu0
        %v2100 = vadd.f32 %v2028, %v2099
        %v2101 = vpop.f32.mrb[0].mxu0
        %2102 = vdwg.mxu0
        %v2103 = vld [vmem:[#allocation22] sm:$0x1]
        %v2104 = vld [vmem:[#allocation24] sm:$0x1]
        %v2105 = vadd.f32 %v1102, %v2100
        %v2106 = vsel %vm1115, %v2105, 0.0
        %2107 = vadd.xlane.f32.xlu0 %v2106
        %v2108 = vpop.xlane.xlu0 %2107
        %v2109 = vrcp.pop 32.0
        %v2110 = vmul.f32 %v2108, %v2109
        %v2111 = vsub.f32 %v2105, %v2110
        %v2112 = vmul.f32 %v2111, %v2111
        %v2113 = vsel %vm1115, %v2112, 0.0
        %2114 = vadd.xlane.f32.xlu0 %v2113
        %v2115 = vpop.xlane.xlu0 %2114
        %v2116 = vmul.f32 %v2115, %v2109
        %v2117 = vadd.f32 %v2116, 1e-05
        %v2118 = vrsqrt.pop %v2117
        %v2119 = vmul.f32 %v2111, %v2118
        %v2121 = vlaneseq
        %v2122 = vshrl.u32 %v2121, 7
        %v2123 = vsub.s32 0, %v2122
        %v2124 = vrot.slane %v2103, %v2123
        %v2126 = vmul.f32 %v2119, %v2124
        %v2128 = vlaneseq
        %v2129 = vshrl.u32 %v2128, 7
        %v2130 = vsub.s32 0, %v2129
        %v2131 = vrot.slane %v2104, %v2130
        %v2133 = vadd.f32 %v2126, %v2131
        %v2134 = vld [vmem:[%s10] sm:$0xff]
        %v2135 = vld [vmem:[%s10 + $0x8] sm:$0xff]
        %v2136 = vld [vmem:[%s10 + $0x10] sm:$0xff]
        %v2137 = vld [vmem:[%s10 + $0x18] sm:$0xff]
        %v2138 = vld [vmem:[#allocation9] sm:$0x1]
        %v2140 = vlaneseq
        %v2141 = vshrl.u32 %v2140, 7
        %v2142 = vsub.s32 0, %v2141
        %v2143 = vrot.slane %v2138, %v2142
        %v2146 = vsel %vm1115, %v1103, 0
        %2148 = vmatprep.subr.mxu0 0.0
        %2149 = vmatpush1.msra.mxu0 %v2134
        %2150 = vmatprep.subr.mxu0 0.0
        %2151 = vmatpush1.msra.mxu0 %v2135
        %2152 = vmatprep.subr.mxu0 0.0
        %2153 = vmatpush1.msra.mxu0 %v2136
        %2154 = vmatprep.subr.mxu0 0.0
        %2155 = vmatpush1.msra.mxu0 %v2137
        %2156 = vmatprep.subr.mxu0 0.0
        %2157 = vmatpush1.msra.mxu0 0.0
        %2158 = vmatprep.subr.mxu0 0.0
        %2159 = vmatpush1.msra.mxu0 0.0
        %2160 = vmatprep.subr.mxu0 0.0
        %2161 = vmatpush1.msra.mxu0 0.0
        %2162 = vmatprep.subr.mxu0 0.0
        %2163 = vmatpush1.msra.mxu0 0.0
        %2164 = vmatprep.subr.mxu0 0.0
        %2165 = vmatpush1.msra.mxu0 0.0
        %2166 = vmatprep.subr.mxu0 0.0
        %2167 = vmatpush1.msra.mxu0 0.0
        %2168 = vmatprep.subr.mxu0 0.0
        %2169 = vmatpush1.msra.mxu0 0.0
        %2170 = vmatprep.subr.mxu0 0.0
        %2171 = vmatpush1.msra.mxu0 0.0
        %2172 = vmatprep.subr.mxu0 0.0
        %2173 = vmatpush1.msra.mxu0 0.0
        %2174 = vmatprep.subr.mxu0 0.0
        %2175 = vmatpush1.msra.mxu0 0.0
        %2176 = vmatprep.subr.mxu0 0.0
        %2177 = vmatpush1.msra.mxu0 0.0
        %2178 = vmatprep.subr.mxu0 0.0
        %2179 = vmatpush1.msra.mxu0 0.0
        %2180 = vmatprep.subr.mxu0 0.0
        %2181 = vmatpush1.msra.mxu0 0.0
        %2182 = vmatprep.subr.mxu0 0.0
        %2183 = vmatpush1.msra.mxu0 0.0
        %2184 = vmatprep.subr.mxu0 0.0
        %2185 = vmatpush1.msra.mxu0 0.0
        %2186 = vmatprep.subr.mxu0 0.0
        %2187 = vmatpush1.msra.mxu0 0.0
        %2188 = vmatprep.subr.mxu0 0.0
        %2189 = vmatpush1.msra.mxu0 0.0
        %2190 = vmatprep.subr.mxu0 0.0
        %2191 = vmatpush1.msra.mxu0 0.0
        %2192 = vmatprep.subr.mxu0 0.0
        %2193 = vmatpush1.msra.mxu0 0.0
        %2194 = vmatprep.subr.mxu0 0.0
        %2195 = vmatpush1.msra.mxu0 0.0
        %2196 = vmatprep.subr.mxu0 0.0
        %2197 = vmatpush1.msra.mxu0 0.0
        %2198 = vmatprep.subr.mxu0 0.0
        %2199 = vmatpush1.msra.mxu0 0.0
        %2200 = vmatprep.subr.mxu0 0.0
        %2201 = vmatpush1.msra.mxu0 0.0
        %2202 = vmatprep.subr.mxu0 0.0
        %2203 = vmatpush1.msra.mxu0 0.0
        %2204 = vmatprep.subr.mxu0 0.0
        %2205 = vmatpush1.msra.mxu0 0.0
        %2206 = vmatprep.subr.mxu0 0.0
        %2207 = vmatpush1.msra.mxu0 0.0
        %2208 = vmatprep.subr.mxu0 0.0
        %2209 = vmatpush1.msra.mxu0 0.0
        %2210 = vmatprep.subr.mxu0 0.0
        %2211 = vmatpush1.msra.mxu0 0.0
        %2212 = vmatprep.mubr.f32.mxu0 0.0
        %2213 = vmatmul.mubr.f32.gmra.mrb[0].mxu0 %v2146
        %v2214 = vpop.f32.mrb[0].mxu0
        %v2215 = vadd.f32 %v2143, %v2214
        %v2216 = vpop.f32.mrb[0].mxu0
        %2217 = vdwg.mxu0
        %v2218 = vld [vmem:[#allocation10] sm:$0xff]
        %v2219 = vld [vmem:[#allocation10 + $0x8] sm:$0xff]
        %v2220 = vld [vmem:[#allocation10 + $0x10] sm:$0xff]
        %v2221 = vld [vmem:[#allocation10 + $0x18] sm:$0xff]
        %v2222 = vld [vmem:[#allocation12] sm:$0x1]
        %v2224 = vlaneseq
        %v2225 = vshrl.u32 %v2224, 7
        %v2226 = vsub.s32 0, %v2225
        %v2227 = vrot.slane %v2222, %v2226
        %2229 = vmatprep.subr.mxu0 0.0
        %2230 = vmatpush1.msra.mxu0 %v2218
        %2231 = vmatprep.subr.mxu0 0.0
        %2232 = vmatpush1.msra.mxu0 %v2219
        %2233 = vmatprep.subr.mxu0 0.0
        %2234 = vmatpush1.msra.mxu0 %v2220
        %2235 = vmatprep.subr.mxu0 0.0
        %2236 = vmatpush1.msra.mxu0 %v2221
        %2237 = vmatprep.subr.mxu0 0.0
        %2238 = vmatpush1.msra.mxu0 0.0
        %2239 = vmatprep.subr.mxu0 0.0
        %2240 = vmatpush1.msra.mxu0 0.0
        %2241 = vmatprep.subr.mxu0 0.0
        %2242 = vmatpush1.msra.mxu0 0.0
        %2243 = vmatprep.subr.mxu0 0.0
        %2244 = vmatpush1.msra.mxu0 0.0
        %2245 = vmatprep.subr.mxu0 0.0
        %2246 = vmatpush1.msra.mxu0 0.0
        %2247 = vmatprep.subr.mxu0 0.0
        %2248 = vmatpush1.msra.mxu0 0.0
        %2249 = vmatprep.subr.mxu0 0.0
        %2250 = vmatpush1.msra.mxu0 0.0
        %2251 = vmatprep.subr.mxu0 0.0
        %2252 = vmatpush1.msra.mxu0 0.0
        %2253 = vmatprep.subr.mxu0 0.0
        %2254 = vmatpush1.msra.mxu0 0.0
        %2255 = vmatprep.subr.mxu0 0.0
        %2256 = vmatpush1.msra.mxu0 0.0
        %2257 = vmatprep.subr.mxu0 0.0
        %2258 = vmatpush1.msra.mxu0 0.0
        %2259 = vmatprep.subr.mxu0 0.0
        %2260 = vmatpush1.msra.mxu0 0.0
        %2261 = vmatprep.subr.mxu0 0.0
        %2262 = vmatpush1.msra.mxu0 0.0
        %2263 = vmatprep.subr.mxu0 0.0
        %2264 = vmatpush1.msra.mxu0 0.0
        %2265 = vmatprep.subr.mxu0 0.0
        %2266 = vmatpush1.msra.mxu0 0.0
        %2267 = vmatprep.subr.mxu0 0.0
        %2268 = vmatpush1.msra.mxu0 0.0
        %2269 = vmatprep.subr.mxu0 0.0
        %2270 = vmatpush1.msra.mxu0 0.0
        %2271 = vmatprep.subr.mxu0 0.0
        %2272 = vmatpush1.msra.mxu0 0.0
        %2273 = vmatprep.subr.mxu0 0.0
        %2274 = vmatpush1.msra.mxu0 0.0
        %2275 = vmatprep.subr.mxu0 0.0
        %2276 = vmatpush1.msra.mxu0 0.0
        %2277 = vmatprep.subr.mxu0 0.0
        %2278 = vmatpush1.msra.mxu0 0.0
        %2279 = vmatprep.subr.mxu0 0.0
        %2280 = vmatpush1.msra.mxu0 0.0
        %2281 = vmatprep.subr.mxu0 0.0
        %2282 = vmatpush1.msra.mxu0 0.0
        %2283 = vmatprep.subr.mxu0 0.0
        %2284 = vmatpush1.msra.mxu0 0.0
        %2285 = vmatprep.subr.mxu0 0.0
        %2286 = vmatpush1.msra.mxu0 0.0
        %2287 = vmatprep.subr.mxu0 0.0
        %2288 = vmatpush1.msra.mxu0 0.0
        %2289 = vmatprep.subr.mxu0 0.0
        %2290 = vmatpush1.msra.mxu0 0.0
        %2291 = vmatprep.subr.mxu0 0.0
        %2292 = vmatpush1.msra.mxu0 0.0
        %2293 = vmatprep.mubr.f32.mxu0 0.0
        %2294 = vmatmul.mubr.f32.gmra.mrb[0].mxu0 %v2146
        %v2295 = vpop.f32.mrb[0].mxu0
        %v2296 = vadd.f32 %v2227, %v2295
        %v2297 = vpop.f32.mrb[0].mxu0
        %2298 = vdwg.mxu0
        %v2299 = vld [vmem:[%s14] sm:$0xff]
        %v2300 = vld [vmem:[%s14 + $0x8] sm:$0xff]
        %v2301 = vld [vmem:[%s14 + $0x10] sm:$0xff]
        %v2302 = vld [vmem:[%s14 + $0x18] sm:$0xff]
        %v2303 = vld [vmem:[#allocation13] sm:$0x1]
        %v2305 = vlaneseq
        %v2306 = vshrl.u32 %v2305, 7
        %v2307 = vsub.s32 0, %v2306
        %v2308 = vrot.slane %v2303, %v2307
        %v2311 = vsel %vm1115, %v2133, 0
        %2313 = vmatprep.subr.mxu0 0.0
        %2314 = vmatpush1.msra.mxu0 %v2299
        %2315 = vmatprep.subr.mxu0 0.0
        %2316 = vmatpush1.msra.mxu0 %v2300
        %2317 = vmatprep.subr.mxu0 0.0
        %2318 = vmatpush1.msra.mxu0 %v2301
        %2319 = vmatprep.subr.mxu0 0.0
        %2320 = vmatpush1.msra.mxu0 %v2302
        %2321 = vmatprep.subr.mxu0 0.0
        %2322 = vmatpush1.msra.mxu0 0.0
        %2323 = vmatprep.subr.mxu0 0.0
        %2324 = vmatpush1.msra.mxu0 0.0
        %2325 = vmatprep.subr.mxu0 0.0
        %2326 = vmatpush1.msra.mxu0 0.0
        %2327 = vmatprep.subr.mxu0 0.0
        %2328 = vmatpush1.msra.mxu0 0.0
        %2329 = vmatprep.subr.mxu0 0.0
        %2330 = vmatpush1.msra.mxu0 0.0
        %2331 = vmatprep.subr.mxu0 0.0
        %2332 = vmatpush1.msra.mxu0 0.0
        %2333 = vmatprep.subr.mxu0 0.0
        %2334 = vmatpush1.msra.mxu0 0.0
        %2335 = vmatprep.subr.mxu0 0.0
        %2336 = vmatpush1.msra.mxu0 0.0
        %2337 = vmatprep.subr.mxu0 0.0
        %2338 = vmatpush1.msra.mxu0 0.0
        %2339 = vmatprep.subr.mxu0 0.0
        %2340 = vmatpush1.msra.mxu0 0.0
        %2341 = vmatprep.subr.mxu0 0.0
        %2342 = vmatpush1.msra.mxu0 0.0
        %2343 = vmatprep.subr.mxu0 0.0
        %2344 = vmatpush1.msra.mxu0 0.0
        %2345 = vmatprep.subr.mxu0 0.0
        %2346 = vmatpush1.msra.mxu0 0.0
        %2347 = vmatprep.subr.mxu0 0.0
        %2348 = vmatpush1.msra.mxu0 0.0
        %2349 = vmatprep.subr.mxu0 0.0
        %2350 = vmatpush1.msra.mxu0 0.0
        %2351 = vmatprep.subr.mxu0 0.0
        %2352 = vmatpush1.msra.mxu0 0.0
        %2353 = vmatprep.subr.mxu0 0.0
        %2354 = vmatpush1.msra.mxu0 0.0
        %2355 = vmatprep.subr.mxu0 0.0
        %2356 = vmatpush1.msra.mxu0 0.0
        %2357 = vmatprep.subr.mxu0 0.0
        %2358 = vmatpush1.msra.mxu0 0.0
        %2359 = vmatprep.subr.mxu0 0.0
        %2360 = vmatpush1.msra.mxu0 0.0
        %2361 = vmatprep.subr.mxu0 0.0
        %2362 = vmatpush1.msra.mxu0 0.0
        %2363 = vmatprep.subr.mxu0 0.0
        %2364 = vmatpush1.msra.mxu0 0.0
        %2365 = vmatprep.subr.mxu0 0.0
        %2366 = vmatpush1.msra.mxu0 0.0
        %2367 = vmatprep.subr.mxu0 0.0
        %2368 = vmatpush1.msra.mxu0 0.0
        %2369 = vmatprep.subr.mxu0 0.0
        %2370 = vmatpush1.msra.mxu0 0.0
        %2371 = vmatprep.subr.mxu0 0.0
        %2372 = vmatpush1.msra.mxu0 0.0
        %2373 = vmatprep.subr.mxu0 0.0
        %2374 = vmatpush1.msra.mxu0 0.0
        %2375 = vmatprep.subr.mxu0 0.0
        %2376 = vmatpush1.msra.mxu0 0.0
        %2377 = vmatprep.mubr.f32.mxu0 0.0
        %2378 = vmatmul.mubr.f32.gmra.mrb[0].mxu0 %v2311
        %v2379 = vpop.f32.mrb[0].mxu0
        %v2380 = vadd.f32 %v2308, %v2379
        %v2381 = vpop.f32.mrb[0].mxu0
        %2382 = vdwg.mxu0
        %v2383 = vmul.f32 %v2215, %v1357
        %v2385 = vsel %vm1115, %v2383, 0
        %v2388 = vsel %vm1115, %v2296, 0
        %2390 = vmatprep.subr.mxu0 0.0
        %2391 = vmatpush1.xpose.msra.mxu0 %v2388
        %2392 = vmatprep.subr.mxu0 0.0
        %2393 = vmatpush1.xpose.msra.mxu0 0.0
        %2394 = vmatprep.subr.mxu0 0.0
        %2395 = vmatpush1.xpose.msra.mxu0 0.0
        %2396 = vmatprep.subr.mxu0 0.0
        %2397 = vmatpush1.xpose.msra.mxu0 0.0
        %2398 = vmatprep.subr.mxu0 0.0
        %2399 = vmatpush1.xpose.msra.mxu0 0.0
        %2400 = vmatprep.subr.mxu0 0.0
        %2401 = vmatpush1.xpose.msra.mxu0 0.0
        %2402 = vmatprep.subr.mxu0 0.0
        %2403 = vmatpush1.xpose.msra.mxu0 0.0
        %2404 = vmatprep.subr.mxu0 0.0
        %2405 = vmatpush1.xpose.msra.mxu0 0.0
        %2406 = vmatprep.subr.mxu0 0.0
        %2407 = vmatpush1.xpose.msra.mxu0 0.0
        %2408 = vmatprep.subr.mxu0 0.0
        %2409 = vmatpush1.xpose.msra.mxu0 0.0
        %2410 = vmatprep.subr.mxu0 0.0
        %2411 = vmatpush1.xpose.msra.mxu0 0.0
        %2412 = vmatprep.subr.mxu0 0.0
        %2413 = vmatpush1.xpose.msra.mxu0 0.0
        %2414 = vmatprep.subr.mxu0 0.0
        %2415 = vmatpush1.xpose.msra.mxu0 0.0
        %2416 = vmatprep.subr.mxu0 0.0
        %2417 = vmatpush1.xpose.msra.mxu0 0.0
        %2418 = vmatprep.subr.mxu0 0.0
        %2419 = vmatpush1.xpose.msra.mxu0 0.0
        %2420 = vmatprep.subr.mxu0 0.0
        %2421 = vmatpush1.xpose.msra.mxu0 0.0
        %2422 = vmatprep.subr.mxu0 0.0
        %2423 = vmatpush1.xpose.msra.mxu0 0.0
        %2424 = vmatprep.subr.mxu0 0.0
        %2425 = vmatpush1.xpose.msra.mxu0 0.0
        %2426 = vmatprep.subr.mxu0 0.0
        %2427 = vmatpush1.xpose.msra.mxu0 0.0
        %2428 = vmatprep.subr.mxu0 0.0
        %2429 = vmatpush1.xpose.msra.mxu0 0.0
        %2430 = vmatprep.subr.mxu0 0.0
        %2431 = vmatpush1.xpose.msra.mxu0 0.0
        %2432 = vmatprep.subr.mxu0 0.0
        %2433 = vmatpush1.xpose.msra.mxu0 0.0
        %2434 = vmatprep.subr.mxu0 0.0
        %2435 = vmatpush1.xpose.msra.mxu0 0.0
        %2436 = vmatprep.subr.mxu0 0.0
        %2437 = vmatpush1.xpose.msra.mxu0 0.0
        %2438 = vmatprep.subr.mxu0 0.0
        %2439 = vmatpush1.xpose.msra.mxu0 0.0
        %2440 = vmatprep.subr.mxu0 0.0
        %2441 = vmatpush1.xpose.msra.mxu0 0.0
        %2442 = vmatprep.subr.mxu0 0.0
        %2443 = vmatpush1.xpose.msra.mxu0 0.0
        %2444 = vmatprep.subr.mxu0 0.0
        %2445 = vmatpush1.xpose.msra.mxu0 0.0
        %2446 = vmatprep.subr.mxu0 0.0
        %2447 = vmatpush1.xpose.msra.mxu0 0.0
        %2448 = vmatprep.subr.mxu0 0.0
        %2449 = vmatpush1.xpose.msra.mxu0 0.0
        %2450 = vmatprep.subr.mxu0 0.0
        %2451 = vmatpush1.xpose.msra.mxu0 0.0
        %2452 = vmatprep.subr.mxu0 0.0
        %2453 = vmatpush1.xpose.msra.mxu0 0.0
        %2454 = vmatprep.mubr.f32.mxu0 0.0
        %2455 = vmatmul.mubr.f32.gmra.mrb[0].mxu0 %v2385
        %v2456 = vpop.f32.mrb[0].mxu0
        %v2457 = vadd.f32 0.0, %v2456
        %v2458 = vpop.f32.mrb[0].mxu0
        %2459 = vdwg.mxu0
        %v2460 = vmul.f32 %v2457, 0.35355338
        %v2461 = vsel %vm1436, %v2460, -inf
        %2462 = vmax.xlane.f32.xlu0 %v2461
        %v2463 = vpop.xlane.xlu0 %2462
        %v2464 = vsub.f32 %v2460, %v2463
        %v2465 = vmul.f32 %v2464, 1.442695
        %v2466 = vpow.pop %v2465
        %v2467 = vsel %vm1436, %v2466, 0.0
        %2468 = vadd.xlane.f32.xlu0 %v2467
        %v2469 = vpop.xlane.xlu0 %2468
        %v2470 = vrcp.pop %v2469
        %v2471 = vmul.f32 %v2466, %v2470
        %v2472 = vmul.f32 %v2380, %v1357
        %v2473 = vmul.f32 %v2215, %v1453
        %v2475 = vsel %vm1115, %v2473, 0
        %2477 = vmatprep.subr.mxu0 0.0
        %2478 = vmatpush1.xpose.msra.mxu0 %v2388
        %2479 = vmatprep.subr.mxu0 0.0
        %2480 = vmatpush1.xpose.msra.mxu0 0.0
        %2481 = vmatprep.subr.mxu0 0.0
        %2482 = vmatpush1.xpose.msra.mxu0 0.0
        %2483 = vmatprep.subr.mxu0 0.0
        %2484 = vmatpush1.xpose.msra.mxu0 0.0
        %2485 = vmatprep.subr.mxu0 0.0
        %2486 = vmatpush1.xpose.msra.mxu0 0.0
        %2487 = vmatprep.subr.mxu0 0.0
        %2488 = vmatpush1.xpose.msra.mxu0 0.0
        %2489 = vmatprep.subr.mxu0 0.0
        %2490 = vmatpush1.xpose.msra.mxu0 0.0
        %2491 = vmatprep.subr.mxu0 0.0
        %2492 = vmatpush1.xpose.msra.mxu0 0.0
        %2493 = vmatprep.subr.mxu0 0.0
        %2494 = vmatpush1.xpose.msra.mxu0 0.0
        %2495 = vmatprep.subr.mxu0 0.0
        %2496 = vmatpush1.xpose.msra.mxu0 0.0
        %2497 = vmatprep.subr.mxu0 0.0
        %2498 = vmatpush1.xpose.msra.mxu0 0.0
        %2499 = vmatprep.subr.mxu0 0.0
        %2500 = vmatpush1.xpose.msra.mxu0 0.0
        %2501 = vmatprep.subr.mxu0 0.0
        %2502 = vmatpush1.xpose.msra.mxu0 0.0
        %2503 = vmatprep.subr.mxu0 0.0
        %2504 = vmatpush1.xpose.msra.mxu0 0.0
        %2505 = vmatprep.subr.mxu0 0.0
        %2506 = vmatpush1.xpose.msra.mxu0 0.0
        %2507 = vmatprep.subr.mxu0 0.0
        %2508 = vmatpush1.xpose.msra.mxu0 0.0
        %2509 = vmatprep.subr.mxu0 0.0
        %2510 = vmatpush1.xpose.msra.mxu0 0.0
        %2511 = vmatprep.subr.mxu0 0.0
        %2512 = vmatpush1.xpose.msra.mxu0 0.0
        %2513 = vmatprep.subr.mxu0 0.0
        %2514 = vmatpush1.xpose.msra.mxu0 0.0
        %2515 = vmatprep.subr.mxu0 0.0
        %2516 = vmatpush1.xpose.msra.mxu0 0.0
        %2517 = vmatprep.subr.mxu0 0.0
        %2518 = vmatpush1.xpose.msra.mxu0 0.0
        %2519 = vmatprep.subr.mxu0 0.0
        %2520 = vmatpush1.xpose.msra.mxu0 0.0
        %2521 = vmatprep.subr.mxu0 0.0
        %2522 = vmatpush1.xpose.msra.mxu0 0.0
        %2523 = vmatprep.subr.mxu0 0.0
        %2524 = vmatpush1.xpose.msra.mxu0 0.0
        %2525 = vmatprep.subr.mxu0 0.0
        %2526 = vmatpush1.xpose.msra.mxu0 0.0
        %2527 = vmatprep.subr.mxu0 0.0
        %2528 = vmatpush1.xpose.msra.mxu0 0.0
        %2529 = vmatprep.subr.mxu0 0.0
        %2530 = vmatpush1.xpose.msra.mxu0 0.0
        %2531 = vmatprep.subr.mxu0 0.0
        %2532 = vmatpush1.xpose.msra.mxu0 0.0
        %2533 = vmatprep.subr.mxu0 0.0
        %2534 = vmatpush1.xpose.msra.mxu0 0.0
        %2535 = vmatprep.subr.mxu0 0.0
        %2536 = vmatpush1.xpose.msra.mxu0 0.0
        %2537 = vmatprep.subr.mxu0 0.0
        %2538 = vmatpush1.xpose.msra.mxu0 0.0
        %2539 = vmatprep.subr.mxu0 0.0
        %2540 = vmatpush1.xpose.msra.mxu0 0.0
        %2541 = vmatprep.mubr.f32.mxu0 0.0
        %2542 = vmatmul.mubr.f32.gmra.mrb[0].mxu0 %v2475
        %v2543 = vpop.f32.mrb[0].mxu0
        %v2544 = vadd.f32 0.0, %v2543
        %v2545 = vpop.f32.mrb[0].mxu0
        %2546 = vdwg.mxu0
        %v2547 = vmul.f32 %v2544, 0.35355338
        %v2548 = vsel %vm1436, %v2547, -inf
        %2549 = vmax.xlane.f32.xlu0 %v2548
        %v2550 = vpop.xlane.xlu0 %2549
        %v2551 = vsub.f32 %v2547, %v2550
        %v2552 = vmul.f32 %v2551, 1.442695
        %v2553 = vpow.pop %v2552
        %v2554 = vsel %vm1436, %v2553, 0.0
        %2555 = vadd.xlane.f32.xlu0 %v2554
        %v2556 = vpop.xlane.xlu0 %2555
        %v2557 = vrcp.pop %v2556
        %v2558 = vmul.f32 %v2553, %v2557
        %v2559 = vmul.f32 %v2380, %v1453
        %v2561 = vsel %vm1436, %v2558, 0
        %2563 = vmatprep.subr.mxu0 0.0
        %2564 = vmatpush1.msra.mxu0 %v2559
        %2565 = vmatprep.subr.mxu0 0.0
        %2566 = vmatpush1.msra.mxu0 0.0
        %2567 = vmatprep.subr.mxu0 0.0
        %2568 = vmatpush1.msra.mxu0 0.0
        %2569 = vmatprep.subr.mxu0 0.0
        %2570 = vmatpush1.msra.mxu0 0.0
        %2571 = vmatprep.subr.mxu0 0.0
        %2572 = vmatpush1.msra.mxu0 0.0
        %2573 = vmatprep.subr.mxu0 0.0
        %2574 = vmatpush1.msra.mxu0 0.0
        %2575 = vmatprep.subr.mxu0 0.0
        %2576 = vmatpush1.msra.mxu0 0.0
        %2577 = vmatprep.subr.mxu0 0.0
        %2578 = vmatpush1.msra.mxu0 0.0
        %2579 = vmatprep.subr.mxu0 0.0
        %2580 = vmatpush1.msra.mxu0 0.0
        %2581 = vmatprep.subr.mxu0 0.0
        %2582 = vmatpush1.msra.mxu0 0.0
        %2583 = vmatprep.subr.mxu0 0.0
        %2584 = vmatpush1.msra.mxu0 0.0
        %2585 = vmatprep.subr.mxu0 0.0
        %2586 = vmatpush1.msra.mxu0 0.0
        %2587 = vmatprep.subr.mxu0 0.0
        %2588 = vmatpush1.msra.mxu0 0.0
        %2589 = vmatprep.subr.mxu0 0.0
        %2590 = vmatpush1.msra.mxu0 0.0
        %2591 = vmatprep.subr.mxu0 0.0
        %2592 = vmatpush1.msra.mxu0 0.0
        %2593 = vmatprep.subr.mxu0 0.0
        %2594 = vmatpush1.msra.mxu0 0.0
        %2595 = vmatprep.subr.mxu0 0.0
        %2596 = vmatpush1.msra.mxu0 0.0
        %2597 = vmatprep.subr.mxu0 0.0
        %2598 = vmatpush1.msra.mxu0 0.0
        %2599 = vmatprep.subr.mxu0 0.0
        %2600 = vmatpush1.msra.mxu0 0.0
        %2601 = vmatprep.subr.mxu0 0.0
        %2602 = vmatpush1.msra.mxu0 0.0
        %2603 = vmatprep.subr.mxu0 0.0
        %2604 = vmatpush1.msra.mxu0 0.0
        %2605 = vmatprep.subr.mxu0 0.0
        %2606 = vmatpush1.msra.mxu0 0.0
        %2607 = vmatprep.subr.mxu0 0.0
        %2608 = vmatpush1.msra.mxu0 0.0
        %2609 = vmatprep.subr.mxu0 0.0
        %2610 = vmatpush1.msra.mxu0 0.0
        %2611 = vmatprep.subr.mxu0 0.0
        %2612 = vmatpush1.msra.mxu0 0.0
        %2613 = vmatprep.subr.mxu0 0.0
        %2614 = vmatpush1.msra.mxu0 0.0
        %2615 = vmatprep.subr.mxu0 0.0
        %2616 = vmatpush1.msra.mxu0 0.0
        %2617 = vmatprep.subr.mxu0 0.0
        %2618 = vmatpush1.msra.mxu0 0.0
        %2619 = vmatprep.subr.mxu0 0.0
        %2620 = vmatpush1.msra.mxu0 0.0
        %2621 = vmatprep.subr.mxu0 0.0
        %2622 = vmatpush1.msra.mxu0 0.0
        %2623 = vmatprep.subr.mxu0 0.0
        %2624 = vmatpush1.msra.mxu0 0.0
        %2625 = vmatprep.subr.mxu0 0.0
        %2626 = vmatpush1.msra.mxu0 0.0
        %2627 = vmatprep.mubr.f32.mxu0 0.0
        %2628 = vmatmul.mubr.f32.gmra.mrb[0].mxu0 %v2561
        %v2629 = vpop.f32.mrb[0].mxu0
        %v2630 = vadd.f32 0.0, %v2629
        %v2631 = vpop.f32.mrb[0].mxu0
        %2632 = vdwg.mxu0
        %v2634 = vsel %vm1436, %v2471, 0
        %2636 = vmatprep.subr.mxu0 0.0
        %2637 = vmatpush1.msra.mxu0 %v2472
        %2638 = vmatprep.subr.mxu0 0.0
        %2639 = vmatpush1.msra.mxu0 0.0
        %2640 = vmatprep.subr.mxu0 0.0
        %2641 = vmatpush1.msra.mxu0 0.0
        %2642 = vmatprep.subr.mxu0 0.0
        %2643 = vmatpush1.msra.mxu0 0.0
        %2644 = vmatprep.subr.mxu0 0.0
        %2645 = vmatpush1.msra.mxu0 0.0
        %2646 = vmatprep.subr.mxu0 0.0
        %2647 = vmatpush1.msra.mxu0 0.0
        %2648 = vmatprep.subr.mxu0 0.0
        %2649 = vmatpush1.msra.mxu0 0.0
        %2650 = vmatprep.subr.mxu0 0.0
        %2651 = vmatpush1.msra.mxu0 0.0
        %2652 = vmatprep.subr.mxu0 0.0
        %2653 = vmatpush1.msra.mxu0 0.0
        %2654 = vmatprep.subr.mxu0 0.0
        %2655 = vmatpush1.msra.mxu0 0.0
        %2656 = vmatprep.subr.mxu0 0.0
        %2657 = vmatpush1.msra.mxu0 0.0
        %2658 = vmatprep.subr.mxu0 0.0
        %2659 = vmatpush1.msra.mxu0 0.0
        %2660 = vmatprep.subr.mxu0 0.0
        %2661 = vmatpush1.msra.mxu0 0.0
        %2662 = vmatprep.subr.mxu0 0.0
        %2663 = vmatpush1.msra.mxu0 0.0
        %2664 = vmatprep.subr.mxu0 0.0
        %2665 = vmatpush1.msra.mxu0 0.0
        %2666 = vmatprep.subr.mxu0 0.0
        %2667 = vmatpush1.msra.mxu0 0.0
        %2668 = vmatprep.subr.mxu0 0.0
        %2669 = vmatpush1.msra.mxu0 0.0
        %2670 = vmatprep.subr.mxu0 0.0
        %2671 = vmatpush1.msra.mxu0 0.0
        %2672 = vmatprep.subr.mxu0 0.0
        %2673 = vmatpush1.msra.mxu0 0.0
        %2674 = vmatprep.subr.mxu0 0.0
        %2675 = vmatpush1.msra.mxu0 0.0
        %2676 = vmatprep.subr.mxu0 0.0
        %2677 = vmatpush1.msra.mxu0 0.0
        %2678 = vmatprep.subr.mxu0 0.0
        %2679 = vmatpush1.msra.mxu0 0.0
        %2680 = vmatprep.subr.mxu0 0.0
        %2681 = vmatpush1.msra.mxu0 0.0
        %2682 = vmatprep.subr.mxu0 0.0
        %2683 = vmatpush1.msra.mxu0 0.0
        %2684 = vmatprep.subr.mxu0 0.0
        %2685 = vmatpush1.msra.mxu0 0.0
        %2686 = vmatprep.subr.mxu0 0.0
        %2687 = vmatpush1.msra.mxu0 0.0
        %2688 = vmatprep.subr.mxu0 0.0
        %2689 = vmatpush1.msra.mxu0 0.0
        %2690 = vmatprep.subr.mxu0 0.0
        %2691 = vmatpush1.msra.mxu0 0.0
        %2692 = vmatprep.subr.mxu0 0.0
        %2693 = vmatpush1.msra.mxu0 0.0
        %2694 = vmatprep.subr.mxu0 0.0
        %2695 = vmatpush1.msra.mxu0 0.0
        %2696 = vmatprep.subr.mxu0 0.0
        %2697 = vmatpush1.msra.mxu0 0.0
        %2698 = vmatprep.subr.mxu0 0.0
        %2699 = vmatpush1.msra.mxu0 0.0
        %2700 = vmatprep.mubr.f32.mxu0 0.0
        %2701 = vmatmul.mubr.f32.gmra.mrb[0].mxu0 %v2634
        %v2702 = vpop.f32.mrb[0].mxu0
        %v2703 = vadd.f32 %v2630, %v2702
        %v2704 = vpop.f32.mrb[0].mxu0
        %2705 = vdwg.mxu0
        %v2706 = vmul.f32 %v2215, %v1691
        %v2708 = vsel %vm1115, %v2706, 0
        %2710 = vmatprep.subr.mxu0 0.0
        %2711 = vmatpush1.xpose.msra.mxu0 %v2388
        %2712 = vmatprep.subr.mxu0 0.0
        %2713 = vmatpush1.xpose.msra.mxu0 0.0
        %2714 = vmatprep.subr.mxu0 0.0
        %2715 = vmatpush1.xpose.msra.mxu0 0.0
        %2716 = vmatprep.subr.mxu0 0.0
        %2717 = vmatpush1.xpose.msra.mxu0 0.0
        %2718 = vmatprep.subr.mxu0 0.0
        %2719 = vmatpush1.xpose.msra.mxu0 0.0
        %2720 = vmatprep.subr.mxu0 0.0
        %2721 = vmatpush1.xpose.msra.mxu0 0.0
        %2722 = vmatprep.subr.mxu0 0.0
        %2723 = vmatpush1.xpose.msra.mxu0 0.0
        %2724 = vmatprep.subr.mxu0 0.0
        %2725 = vmatpush1.xpose.msra.mxu0 0.0
        %2726 = vmatprep.subr.mxu0 0.0
        %2727 = vmatpush1.xpose.msra.mxu0 0.0
        %2728 = vmatprep.subr.mxu0 0.0
        %2729 = vmatpush1.xpose.msra.mxu0 0.0
        %2730 = vmatprep.subr.mxu0 0.0
        %2731 = vmatpush1.xpose.msra.mxu0 0.0
        %2732 = vmatprep.subr.mxu0 0.0
        %2733 = vmatpush1.xpose.msra.mxu0 0.0
        %2734 = vmatprep.subr.mxu0 0.0
        %2735 = vmatpush1.xpose.msra.mxu0 0.0
        %2736 = vmatprep.subr.mxu0 0.0
        %2737 = vmatpush1.xpose.msra.mxu0 0.0
        %2738 = vmatprep.subr.mxu0 0.0
        %2739 = vmatpush1.xpose.msra.mxu0 0.0
        %2740 = vmatprep.subr.mxu0 0.0
        %2741 = vmatpush1.xpose.msra.mxu0 0.0
        %2742 = vmatprep.subr.mxu0 0.0
        %2743 = vmatpush1.xpose.msra.mxu0 0.0
        %2744 = vmatprep.subr.mxu0 0.0
        %2745 = vmatpush1.xpose.msra.mxu0 0.0
        %2746 = vmatprep.subr.mxu0 0.0
        %2747 = vmatpush1.xpose.msra.mxu0 0.0
        %2748 = vmatprep.subr.mxu0 0.0
        %2749 = vmatpush1.xpose.msra.mxu0 0.0
        %2750 = vmatprep.subr.mxu0 0.0
        %2751 = vmatpush1.xpose.msra.mxu0 0.0
        %2752 = vmatprep.subr.mxu0 0.0
        %2753 = vmatpush1.xpose.msra.mxu0 0.0
        %2754 = vmatprep.subr.mxu0 0.0
        %2755 = vmatpush1.xpose.msra.mxu0 0.0
        %2756 = vmatprep.subr.mxu0 0.0
        %2757 = vmatpush1.xpose.msra.mxu0 0.0
        %2758 = vmatprep.subr.mxu0 0.0
        %2759 = vmatpush1.xpose.msra.mxu0 0.0
        %2760 = vmatprep.subr.mxu0 0.0
        %2761 = vmatpush1.xpose.msra.mxu0 0.0
        %2762 = vmatprep.subr.mxu0 0.0
        %2763 = vmatpush1.xpose.msra.mxu0 0.0
        %2764 = vmatprep.subr.mxu0 0.0
        %2765 = vmatpush1.xpose.msra.mxu0 0.0
        %2766 = vmatprep.subr.mxu0 0.0
        %2767 = vmatpush1.xpose.msra.mxu0 0.0
        %2768 = vmatprep.subr.mxu0 0.0
        %2769 = vmatpush1.xpose.msra.mxu0 0.0
        %2770 = vmatprep.subr.mxu0 0.0
        %2771 = vmatpush1.xpose.msra.mxu0 0.0
        %2772 = vmatprep.subr.mxu0 0.0
        %2773 = vmatpush1.xpose.msra.mxu0 0.0
        %2774 = vmatprep.mubr.f32.mxu0 0.0
        %2775 = vmatmul.mubr.f32.gmra.mrb[0].mxu0 %v2708
        %v2776 = vpop.f32.mrb[0].mxu0
        %v2777 = vadd.f32 0.0, %v2776
        %v2778 = vpop.f32.mrb[0].mxu0
        %2779 = vdwg.mxu0
        %v2780 = vmul.f32 %v2777, 0.35355338
        %v2781 = vsel %vm1436, %v2780, -inf
        %2782 = vmax.xlane.f32.xlu0 %v2781
        %v2783 = vpop.xlane.xlu0 %2782
        %v2784 = vsub.f32 %v2780, %v2783
        %v2785 = vmul.f32 %v2784, 1.442695
        %v2786 = vpow.pop %v2785
        %v2787 = vsel %vm1436, %v2786, 0.0
        %2788 = vadd.xlane.f32.xlu0 %v2787
        %v2789 = vpop.xlane.xlu0 %2788
        %v2790 = vrcp.pop %v2789
        %v2791 = vmul.f32 %v2786, %v2790
        %v2792 = vmul.f32 %v2380, %v1691
        %v2794 = vsel %vm1436, %v2791, 0
        %2796 = vmatprep.subr.mxu0 0.0
        %2797 = vmatpush1.msra.mxu0 %v2792
        %2798 = vmatprep.subr.mxu0 0.0
        %2799 = vmatpush1.msra.mxu0 0.0
        %2800 = vmatprep.subr.mxu0 0.0
        %2801 = vmatpush1.msra.mxu0 0.0
        %2802 = vmatprep.subr.mxu0 0.0
        %2803 = vmatpush1.msra.mxu0 0.0
        %2804 = vmatprep.subr.mxu0 0.0
        %2805 = vmatpush1.msra.mxu0 0.0
        %2806 = vmatprep.subr.mxu0 0.0
        %2807 = vmatpush1.msra.mxu0 0.0
        %2808 = vmatprep.subr.mxu0 0.0
        %2809 = vmatpush1.msra.mxu0 0.0
        %2810 = vmatprep.subr.mxu0 0.0
        %2811 = vmatpush1.msra.mxu0 0.0
        %2812 = vmatprep.subr.mxu0 0.0
        %2813 = vmatpush1.msra.mxu0 0.0
        %2814 = vmatprep.subr.mxu0 0.0
        %2815 = vmatpush1.msra.mxu0 0.0
        %2816 = vmatprep.subr.mxu0 0.0
        %2817 = vmatpush1.msra.mxu0 0.0
        %2818 = vmatprep.subr.mxu0 0.0
        %2819 = vmatpush1.msra.mxu0 0.0
        %2820 = vmatprep.subr.mxu0 0.0
        %2821 = vmatpush1.msra.mxu0 0.0
        %2822 = vmatprep.subr.mxu0 0.0
        %2823 = vmatpush1.msra.mxu0 0.0
        %2824 = vmatprep.subr.mxu0 0.0
        %2825 = vmatpush1.msra.mxu0 0.0
        %2826 = vmatprep.subr.mxu0 0.0
        %2827 = vmatpush1.msra.mxu0 0.0
        %2828 = vmatprep.subr.mxu0 0.0
        %2829 = vmatpush1.msra.mxu0 0.0
        %2830 = vmatprep.subr.mxu0 0.0
        %2831 = vmatpush1.msra.mxu0 0.0
        %2832 = vmatprep.subr.mxu0 0.0
        %2833 = vmatpush1.msra.mxu0 0.0
        %2834 = vmatprep.subr.mxu0 0.0
        %2835 = vmatpush1.msra.mxu0 0.0
        %2836 = vmatprep.subr.mxu0 0.0
        %2837 = vmatpush1.msra.mxu0 0.0
        %2838 = vmatprep.subr.mxu0 0.0
        %2839 = vmatpush1.msra.mxu0 0.0
        %2840 = vmatprep.subr.mxu0 0.0
        %2841 = vmatpush1.msra.mxu0 0.0
        %2842 = vmatprep.subr.mxu0 0.0
        %2843 = vmatpush1.msra.mxu0 0.0
        %2844 = vmatprep.subr.mxu0 0.0
        %2845 = vmatpush1.msra.mxu0 0.0
        %2846 = vmatprep.subr.mxu0 0.0
        %2847 = vmatpush1.msra.mxu0 0.0
        %2848 = vmatprep.subr.mxu0 0.0
        %2849 = vmatpush1.msra.mxu0 0.0
        %2850 = vmatprep.subr.mxu0 0.0
        %2851 = vmatpush1.msra.mxu0 0.0
        %2852 = vmatprep.subr.mxu0 0.0
        %2853 = vmatpush1.msra.mxu0 0.0
        %2854 = vmatprep.subr.mxu0 0.0
        %2855 = vmatpush1.msra.mxu0 0.0
        %2856 = vmatprep.subr.mxu0 0.0
        %2857 = vmatpush1.msra.mxu0 0.0
        %2858 = vmatprep.subr.mxu0 0.0
        %2859 = vmatpush1.msra.mxu0 0.0
        %2860 = vmatprep.mubr.f32.mxu0 0.0
        %2861 = vmatmul.mubr.f32.gmra.mrb[0].mxu0 %v2794
        %v2862 = vpop.f32.mrb[0].mxu0
        %v2863 = vadd.f32 0.0, %v2862
        %v2864 = vpop.f32.mrb[0].mxu0
        %2865 = vdwg.mxu0
        %v2866 = vadd.f32 %v2703, %v2863
        %v2867 = vmul.f32 %v2215, %v1857
        %v2869 = vsel %vm1115, %v2867, 0
        %2871 = vmatprep.subr.mxu0 0.0
        %2872 = vmatpush1.xpose.msra.mxu0 %v2388
        %2873 = vmatprep.subr.mxu0 0.0
        %2874 = vmatpush1.xpose.msra.mxu0 0.0
        %2875 = vmatprep.subr.mxu0 0.0
        %2876 = vmatpush1.xpose.msra.mxu0 0.0
        %2877 = vmatprep.subr.mxu0 0.0
        %2878 = vmatpush1.xpose.msra.mxu0 0.0
        %2879 = vmatprep.subr.mxu0 0.0
        %2880 = vmatpush1.xpose.msra.mxu0 0.0
        %2881 = vmatprep.subr.mxu0 0.0
        %2882 = vmatpush1.xpose.msra.mxu0 0.0
        %2883 = vmatprep.subr.mxu0 0.0
        %2884 = vmatpush1.xpose.msra.mxu0 0.0
        %2885 = vmatprep.subr.mxu0 0.0
        %2886 = vmatpush1.xpose.msra.mxu0 0.0
        %2887 = vmatprep.subr.mxu0 0.0
        %2888 = vmatpush1.xpose.msra.mxu0 0.0
        %2889 = vmatprep.subr.mxu0 0.0
        %2890 = vmatpush1.xpose.msra.mxu0 0.0
        %2891 = vmatprep.subr.mxu0 0.0
        %2892 = vmatpush1.xpose.msra.mxu0 0.0
        %2893 = vmatprep.subr.mxu0 0.0
        %2894 = vmatpush1.xpose.msra.mxu0 0.0
        %2895 = vmatprep.subr.mxu0 0.0
        %2896 = vmatpush1.xpose.msra.mxu0 0.0
        %2897 = vmatprep.subr.mxu0 0.0
        %2898 = vmatpush1.xpose.msra.mxu0 0.0
        %2899 = vmatprep.subr.mxu0 0.0
        %2900 = vmatpush1.xpose.msra.mxu0 0.0
        %2901 = vmatprep.subr.mxu0 0.0
        %2902 = vmatpush1.xpose.msra.mxu0 0.0
        %2903 = vmatprep.subr.mxu0 0.0
        %2904 = vmatpush1.xpose.msra.mxu0 0.0
        %2905 = vmatprep.subr.mxu0 0.0
        %2906 = vmatpush1.xpose.msra.mxu0 0.0
        %2907 = vmatprep.subr.mxu0 0.0
        %2908 = vmatpush1.xpose.msra.mxu0 0.0
        %2909 = vmatprep.subr.mxu0 0.0
        %2910 = vmatpush1.xpose.msra.mxu0 0.0
        %2911 = vmatprep.subr.mxu0 0.0
        %2912 = vmatpush1.xpose.msra.mxu0 0.0
        %2913 = vmatprep.subr.mxu0 0.0
        %2914 = vmatpush1.xpose.msra.mxu0 0.0
        %2915 = vmatprep.subr.mxu0 0.0
        %2916 = vmatpush1.xpose.msra.mxu0 0.0
        %2917 = vmatprep.subr.mxu0 0.0
        %2918 = vmatpush1.xpose.msra.mxu0 0.0
        %2919 = vmatprep.subr.mxu0 0.0
        %2920 = vmatpush1.xpose.msra.mxu0 0.0
        %2921 = vmatprep.subr.mxu0 0.0
        %2922 = vmatpush1.xpose.msra.mxu0 0.0
        %2923 = vmatprep.subr.mxu0 0.0
        %2924 = vmatpush1.xpose.msra.mxu0 0.0
        %2925 = vmatprep.subr.mxu0 0.0
        %2926 = vmatpush1.xpose.msra.mxu0 0.0
        %2927 = vmatprep.subr.mxu0 0.0
        %2928 = vmatpush1.xpose.msra.mxu0 0.0
        %2929 = vmatprep.subr.mxu0 0.0
        %2930 = vmatpush1.xpose.msra.mxu0 0.0
        %2931 = vmatprep.subr.mxu0 0.0
        %2932 = vmatpush1.xpose.msra.mxu0 0.0
        %2933 = vmatprep.subr.mxu0 0.0
        %2934 = vmatpush1.xpose.msra.mxu0 0.0
        %2935 = vmatprep.mubr.f32.mxu0 0.0
        %2936 = vmatmul.mubr.f32.gmra.mrb[0].mxu0 %v2869
        %v2937 = vpop.f32.mrb[0].mxu0
        %v2938 = vadd.f32 0.0, %v2937
        %v2939 = vpop.f32.mrb[0].mxu0
        %2940 = vdwg.mxu0
        %v2941 = vmul.f32 %v2938, 0.35355338
        %v2942 = vsel %vm1436, %v2941, -inf
        %2943 = vmax.xlane.f32.xlu0 %v2942
        %v2944 = vpop.xlane.xlu0 %2943
        %v2945 = vsub.f32 %v2941, %v2944
        %v2946 = vmul.f32 %v2945, 1.442695
        %v2947 = vpow.pop %v2946
        %v2948 = vsel %vm1436, %v2947, 0.0
        %2949 = vadd.xlane.f32.xlu0 %v2948
        %v2950 = vpop.xlane.xlu0 %2949
        %v2951 = vrcp.pop %v2950
        %v2952 = vmul.f32 %v2947, %v2951
        %v2953 = vmul.f32 %v2380, %v1857
        %v2955 = vsel %vm1436, %v2952, 0
        %2957 = vmatprep.subr.mxu0 0.0
        %2958 = vmatpush1.msra.mxu0 %v2953
        %2959 = vmatprep.subr.mxu0 0.0
        %2960 = vmatpush1.msra.mxu0 0.0
        %2961 = vmatprep.subr.mxu0 0.0
        %2962 = vmatpush1.msra.mxu0 0.0
        %2963 = vmatprep.subr.mxu0 0.0
        %2964 = vmatpush1.msra.mxu0 0.0
        %2965 = vmatprep.subr.mxu0 0.0
        %2966 = vmatpush1.msra.mxu0 0.0
        %2967 = vmatprep.subr.mxu0 0.0
        %2968 = vmatpush1.msra.mxu0 0.0
        %2969 = vmatprep.subr.mxu0 0.0
        %2970 = vmatpush1.msra.mxu0 0.0
        %2971 = vmatprep.subr.mxu0 0.0
        %2972 = vmatpush1.msra.mxu0 0.0
        %2973 = vmatprep.subr.mxu0 0.0
        %2974 = vmatpush1.msra.mxu0 0.0
        %2975 = vmatprep.subr.mxu0 0.0
        %2976 = vmatpush1.msra.mxu0 0.0
        %2977 = vmatprep.subr.mxu0 0.0
        %2978 = vmatpush1.msra.mxu0 0.0
        %2979 = vmatprep.subr.mxu0 0.0
        %2980 = vmatpush1.msra.mxu0 0.0
        %2981 = vmatprep.subr.mxu0 0.0
        %2982 = vmatpush1.msra.mxu0 0.0
        %2983 = vmatprep.subr.mxu0 0.0
        %2984 = vmatpush1.msra.mxu0 0.0
        %2985 = vmatprep.subr.mxu0 0.0
        %2986 = vmatpush1.msra.mxu0 0.0
        %2987 = vmatprep.subr.mxu0 0.0
        %2988 = vmatpush1.msra.mxu0 0.0
        %2989 = vmatprep.subr.mxu0 0.0
        %2990 = vmatpush1.msra.mxu0 0.0
        %2991 = vmatprep.subr.mxu0 0.0
        %2992 = vmatpush1.msra.mxu0 0.0
        %2993 = vmatprep.subr.mxu0 0.0
        %2994 = vmatpush1.msra.mxu0 0.0
        %2995 = vmatprep.subr.mxu0 0.0
        %2996 = vmatpush1.msra.mxu0 0.0
        %2997 = vmatprep.subr.mxu0 0.0
        %2998 = vmatpush1.msra.mxu0 0.0
        %2999 = vmatprep.subr.mxu0 0.0
        %3000 = vmatpush1.msra.mxu0 0.0
        %3001 = vmatprep.subr.mxu0 0.0
        %3002 = vmatpush1.msra.mxu0 0.0
        %3003 = vmatprep.subr.mxu0 0.0
        %3004 = vmatpush1.msra.mxu0 0.0
        %3005 = vmatprep.subr.mxu0 0.0
        %3006 = vmatpush1.msra.mxu0 0.0
        %3007 = vmatprep.subr.mxu0 0.0
        %3008 = vmatpush1.msra.mxu0 0.0
        %3009 = vmatprep.subr.mxu0 0.0
        %3010 = vmatpush1.msra.mxu0 0.0
        %3011 = vmatprep.subr.mxu0 0.0
        %3012 = vmatpush1.msra.mxu0 0.0
        %3013 = vmatprep.subr.mxu0 0.0
        %3014 = vmatpush1.msra.mxu0 0.0
        %3015 = vmatprep.subr.mxu0 0.0
        %3016 = vmatpush1.msra.mxu0 0.0
        %3017 = vmatprep.subr.mxu0 0.0
        %3018 = vmatpush1.msra.mxu0 0.0
        %3019 = vmatprep.subr.mxu0 0.0
        %3020 = vmatpush1.msra.mxu0 0.0
        %3021 = vmatprep.mubr.f32.mxu0 0.0
        %3022 = vmatmul.mubr.f32.gmra.mrb[0].mxu0 %v2955
        %v3023 = vpop.f32.mrb[0].mxu0
        %v3024 = vadd.f32 0.0, %v3023
        %v3025 = vpop.f32.mrb[0].mxu0
        %3026 = vdwg.mxu0
        %v3027 = vadd.f32 %v2866, %v3024
        %v3028 = vld [vmem:[#allocation15] sm:$0xff]
        %v3029 = vld [vmem:[#allocation15 + $0x8] sm:$0xff]
        %v3030 = vld [vmem:[#allocation15 + $0x10] sm:$0xff]
        %v3031 = vld [vmem:[#allocation15 + $0x18] sm:$0xff]
        %v3032 = vld [vmem:[#allocation16] sm:$0x1]
        %v3034 = vlaneseq
        %v3035 = vshrl.u32 %v3034, 7
        %v3036 = vsub.s32 0, %v3035
        %v3037 = vrot.slane %v3032, %v3036
        %v3040 = vsel %vm1115, %v3027, 0
        %3042 = vmatprep.subr.mxu0 0.0
        %3043 = vmatpush1.msra.mxu0 %v3028
        %3044 = vmatprep.subr.mxu0 0.0
        %3045 = vmatpush1.msra.mxu0 %v3029
        %3046 = vmatprep.subr.mxu0 0.0
        %3047 = vmatpush1.msra.mxu0 %v3030
        %3048 = vmatprep.subr.mxu0 0.0
        %3049 = vmatpush1.msra.mxu0 %v3031
        %3050 = vmatprep.subr.mxu0 0.0
        %3051 = vmatpush1.msra.mxu0 0.0
        %3052 = vmatprep.subr.mxu0 0.0
        %3053 = vmatpush1.msra.mxu0 0.0
        %3054 = vmatprep.subr.mxu0 0.0
        %3055 = vmatpush1.msra.mxu0 0.0
        %3056 = vmatprep.subr.mxu0 0.0
        %3057 = vmatpush1.msra.mxu0 0.0
        %3058 = vmatprep.subr.mxu0 0.0
        %3059 = vmatpush1.msra.mxu0 0.0
        %3060 = vmatprep.subr.mxu0 0.0
        %3061 = vmatpush1.msra.mxu0 0.0
        %3062 = vmatprep.subr.mxu0 0.0
        %3063 = vmatpush1.msra.mxu0 0.0
        %3064 = vmatprep.subr.mxu0 0.0
        %3065 = vmatpush1.msra.mxu0 0.0
        %3066 = vmatprep.subr.mxu0 0.0
        %3067 = vmatpush1.msra.mxu0 0.0
        %3068 = vmatprep.subr.mxu0 0.0
        %3069 = vmatpush1.msra.mxu0 0.0
        %3070 = vmatprep.subr.mxu0 0.0
        %3071 = vmatpush1.msra.mxu0 0.0
        %3072 = vmatprep.subr.mxu0 0.0
        %3073 = vmatpush1.msra.mxu0 0.0
        %3074 = vmatprep.subr.mxu0 0.0
        %3075 = vmatpush1.msra.mxu0 0.0
        %3076 = vmatprep.subr.mxu0 0.0
        %3077 = vmatpush1.msra.mxu0 0.0
        %3078 = vmatprep.subr.mxu0 0.0
        %3079 = vmatpush1.msra.mxu0 0.0
        %3080 = vmatprep.subr.mxu0 0.0
        %3081 = vmatpush1.msra.mxu0 0.0
        %3082 = vmatprep.subr.mxu0 0.0
        %3083 = vmatpush1.msra.mxu0 0.0
        %3084 = vmatprep.subr.mxu0 0.0
        %3085 = vmatpush1.msra.mxu0 0.0
        %3086 = vmatprep.subr.mxu0 0.0
        %3087 = vmatpush1.msra.mxu0 0.0
        %3088 = vmatprep.subr.mxu0 0.0
        %3089 = vmatpush1.msra.mxu0 0.0
        %3090 = vmatprep.subr.mxu0 0.0
        %3091 = vmatpush1.msra.mxu0 0.0
        %3092 = vmatprep.subr.mxu0 0.0
        %3093 = vmatpush1.msra.mxu0 0.0
        %3094 = vmatprep.subr.mxu0 0.0
        %3095 = vmatpush1.msra.mxu0 0.0
        %3096 = vmatprep.subr.mxu0 0.0
        %3097 = vmatpush1.msra.mxu0 0.0
        %3098 = vmatprep.subr.mxu0 0.0
        %3099 = vmatpush1.msra.mxu0 0.0
        %3100 = vmatprep.subr.mxu0 0.0
        %3101 = vmatpush1.msra.mxu0 0.0
        %3102 = vmatprep.subr.mxu0 0.0
        %3103 = vmatpush1.msra.mxu0 0.0
        %3104 = vmatprep.subr.mxu0 0.0
        %3105 = vmatpush1.msra.mxu0 0.0
        %3106 = vmatprep.mubr.f32.mxu0 0.0
        %3107 = vmatmul.mubr.f32.gmra.mrb[0].mxu0 %v3040
        %v3108 = vpop.f32.mrb[0].mxu0
        %v3109 = vadd.f32 %v3037, %v3108
        %v3110 = vpop.f32.mrb[0].mxu0
        %3111 = vdwg.mxu0
        %v3112 = vld [vmem:[#allocation25] sm:$0x1]
        %v3113 = vld [vmem:[#allocation27] sm:$0x1]
        %v3114 = vadd.f32 %v2133, %v3109
        %v3115 = vsel %vm1115, %v3114, 0.0
        %3116 = vadd.xlane.f32.xlu0 %v3115
        %v3117 = vpop.xlane.xlu0 %3116
        %v3118 = vmul.f32 %v3117, %v2109
        %v3119 = vsub.f32 %v3114, %v3118
        %v3120 = vmul.f32 %v3119, %v3119
        %v3121 = vsel %vm1115, %v3120, 0.0
        %3122 = vadd.xlane.f32.xlu0 %v3121
        %v3123 = vpop.xlane.xlu0 %3122
        %v3124 = vmul.f32 %v3123, %v2109
        %v3125 = vadd.f32 %v3124, 1e-05
        %v3126 = vrsqrt.pop %v3125
        %v3127 = vmul.f32 %v3119, %v3126
        %v3129 = vlaneseq
        %v3130 = vshrl.u32 %v3129, 7
        %v3131 = vsub.s32 0, %v3130
        %v3132 = vrot.slane %v3112, %v3131
        %v3134 = vmul.f32 %v3127, %v3132
        %v3136 = vlaneseq
        %v3137 = vshrl.u32 %v3136, 7
        %v3138 = vsub.s32 0, %v3137
        %v3139 = vrot.slane %v3113, %v3138
        %v3141 = vadd.f32 %v3134, %v3139
        %v3142 = vld [vmem:[#allocation18] sm:$0xff]
        %v3143 = vld [vmem:[#allocation18 + $0x8] sm:$0xff]
        %v3144 = vld [vmem:[#allocation18 + $0x10] sm:$0xff]
        %v3145 = vld [vmem:[#allocation18 + $0x18] sm:$0xff]
        %v3146 = vld [vmem:[#allocation19] sm:$0x1]
        %v3148 = vlaneseq
        %v3149 = vshrl.u32 %v3148, 7
        %v3150 = vsub.s32 0, %v3149
        %v3151 = vrot.slane %v3146, %v3150
        %v3154 = vsel %vm1115, %v3141, 0
        %3156 = vmatprep.subr.mxu0 0.0
        %3157 = vmatpush1.msra.mxu0 %v3142
        %3158 = vmatprep.subr.mxu0 0.0
        %3159 = vmatpush1.msra.mxu0 %v3143
        %3160 = vmatprep.subr.mxu0 0.0
        %3161 = vmatpush1.msra.mxu0 %v3144
        %3162 = vmatprep.subr.mxu0 0.0
        %3163 = vmatpush1.msra.mxu0 %v3145
        %3164 = vmatprep.subr.mxu0 0.0
        %3165 = vmatpush1.msra.mxu0 0.0
        %3166 = vmatprep.subr.mxu0 0.0
        %3167 = vmatpush1.msra.mxu0 0.0
        %3168 = vmatprep.subr.mxu0 0.0
        %3169 = vmatpush1.msra.mxu0 0.0
        %3170 = vmatprep.subr.mxu0 0.0
        %3171 = vmatpush1.msra.mxu0 0.0
        %3172 = vmatprep.subr.mxu0 0.0
        %3173 = vmatpush1.msra.mxu0 0.0
        %3174 = vmatprep.subr.mxu0 0.0
        %3175 = vmatpush1.msra.mxu0 0.0
        %3176 = vmatprep.subr.mxu0 0.0
        %3177 = vmatpush1.msra.mxu0 0.0
        %3178 = vmatprep.subr.mxu0 0.0
        %3179 = vmatpush1.msra.mxu0 0.0
        %3180 = vmatprep.subr.mxu0 0.0
        %3181 = vmatpush1.msra.mxu0 0.0
        %3182 = vmatprep.subr.mxu0 0.0
        %3183 = vmatpush1.msra.mxu0 0.0
        %3184 = vmatprep.subr.mxu0 0.0
        %3185 = vmatpush1.msra.mxu0 0.0
        %3186 = vmatprep.subr.mxu0 0.0
        %3187 = vmatpush1.msra.mxu0 0.0
        %3188 = vmatprep.subr.mxu0 0.0
        %3189 = vmatpush1.msra.mxu0 0.0
        %3190 = vmatprep.subr.mxu0 0.0
        %3191 = vmatpush1.msra.mxu0 0.0
        %3192 = vmatprep.subr.mxu0 0.0
        %3193 = vmatpush1.msra.mxu0 0.0
        %3194 = vmatprep.subr.mxu0 0.0
        %3195 = vmatpush1.msra.mxu0 0.0
        %3196 = vmatprep.subr.mxu0 0.0
        %3197 = vmatpush1.msra.mxu0 0.0
        %3198 = vmatprep.subr.mxu0 0.0
        %3199 = vmatpush1.msra.mxu0 0.0
        %3200 = vmatprep.subr.mxu0 0.0
        %3201 = vmatpush1.msra.mxu0 0.0
        %3202 = vmatprep.subr.mxu0 0.0
        %3203 = vmatpush1.msra.mxu0 0.0
        %3204 = vmatprep.subr.mxu0 0.0
        %3205 = vmatpush1.msra.mxu0 0.0
        %3206 = vmatprep.subr.mxu0 0.0
        %3207 = vmatpush1.msra.mxu0 0.0
        %3208 = vmatprep.subr.mxu0 0.0
        %3209 = vmatpush1.msra.mxu0 0.0
        %3210 = vmatprep.subr.mxu0 0.0
        %3211 = vmatpush1.msra.mxu0 0.0
        %3212 = vmatprep.subr.mxu0 0.0
        %3213 = vmatpush1.msra.mxu0 0.0
        %3214 = vmatprep.subr.mxu0 0.0
        %3215 = vmatpush1.msra.mxu0 0.0
        %3216 = vmatprep.subr.mxu0 0.0
        %3217 = vmatpush1.msra.mxu0 0.0
        %3218 = vmatprep.subr.mxu0 0.0
        %3219 = vmatpush1.msra.mxu0 0.0
        %3220 = vmatprep.mubr.f32.mxu0 0.0
        %3221 = vmatmul.mubr.f32.gmra.mrb[0].mxu0 %v3154
        %v3222 = vpop.f32.mrb[0].mxu0
        %v3223 = vadd.f32 %v3151, %v3222
        %v3224 = vpop.f32.mrb[0].mxu0
        %3225 = vdwg.mxu0
        %v3226 = vmax.f32 %v3223, 0.0
        %v3227 = vld [vmem:[%s20] sm:$0xff]
        %v3228 = vld [vmem:[%s20 + $0x8] sm:$0xff]
        %v3229 = vld [vmem:[%s20 + $0x10] sm:$0xff]
        %v3230 = vld [vmem:[%s20 + $0x18] sm:$0xff]
        %v3231 = vld [vmem:[%s20 + $0x20] sm:$0xff]
        %v3232 = vld [vmem:[%s20 + $0x28] sm:$0xff]
        %v3233 = vld [vmem:[%s20 + $0x30] sm:$0xff]
        %v3234 = vld [vmem:[%s20 + $0x38] sm:$0xff]
        %v3235 = vld [vmem:[#allocation21] sm:$0x1]
        %v3237 = vlaneseq
        %v3238 = vshrl.u32 %v3237, 7
        %v3239 = vsub.s32 0, %v3238
        %v3240 = vrot.slane %v3235, %v3239
        %vm3242 = vcmask 523264
        %v3244 = vsel %vm3242, %v3226, 0
        %3246 = vmatprep.subr.mxu0 0.0
        %3247 = vmatpush1.msra.mxu0 %v3227
        %3248 = vmatprep.subr.mxu0 0.0
        %3249 = vmatpush1.msra.mxu0 %v3228
        %3250 = vmatprep.subr.mxu0 0.0
        %3251 = vmatpush1.msra.mxu0 %v3229
        %3252 = vmatprep.subr.mxu0 0.0
        %3253 = vmatpush1.msra.mxu0 %v3230
        %3254 = vmatprep.subr.mxu0 0.0
        %3255 = vmatpush1.msra.mxu0 %v3231
        %3256 = vmatprep.subr.mxu0 0.0
        %3257 = vmatpush1.msra.mxu0 %v3232
        %3258 = vmatprep.subr.mxu0 0.0
        %3259 = vmatpush1.msra.mxu0 %v3233
        %3260 = vmatprep.subr.mxu0 0.0
        %3261 = vmatpush1.msra.mxu0 %v3234
        %3262 = vmatprep.subr.mxu0 0.0
        %3263 = vmatpush1.msra.mxu0 0.0
        %3264 = vmatprep.subr.mxu0 0.0
        %3265 = vmatpush1.msra.mxu0 0.0
        %3266 = vmatprep.subr.mxu0 0.0
        %3267 = vmatpush1.msra.mxu0 0.0
        %3268 = vmatprep.subr.mxu0 0.0
        %3269 = vmatpush1.msra.mxu0 0.0
        %3270 = vmatprep.subr.mxu0 0.0
        %3271 = vmatpush1.msra.mxu0 0.0
        %3272 = vmatprep.subr.mxu0 0.0
        %3273 = vmatpush1.msra.mxu0 0.0
        %3274 = vmatprep.subr.mxu0 0.0
        %3275 = vmatpush1.msra.mxu0 0.0
        %3276 = vmatprep.subr.mxu0 0.0
        %3277 = vmatpush1.msra.mxu0 0.0
        %3278 = vmatprep.subr.mxu0 0.0
        %3279 = vmatpush1.msra.mxu0 0.0
        %3280 = vmatprep.subr.mxu0 0.0
        %3281 = vmatpush1.msra.mxu0 0.0
        %3282 = vmatprep.subr.mxu0 0.0
        %3283 = vmatpush1.msra.mxu0 0.0
        %3284 = vmatprep.subr.mxu0 0.0
        %3285 = vmatpush1.msra.mxu0 0.0
        %3286 = vmatprep.subr.mxu0 0.0
        %3287 = vmatpush1.msra.mxu0 0.0
        %3288 = vmatprep.subr.mxu0 0.0
        %3289 = vmatpush1.msra.mxu0 0.0
        %3290 = vmatprep.subr.mxu0 0.0
        %3291 = vmatpush1.msra.mxu0 0.0
        %3292 = vmatprep.subr.mxu0 0.0
        %3293 = vmatpush1.msra.mxu0 0.0
        %3294 = vmatprep.subr.mxu0 0.0
        %3295 = vmatpush1.msra.mxu0 0.0
        %3296 = vmatprep.subr.mxu0 0.0
        %3297 = vmatpush1.msra.mxu0 0.0
        %3298 = vmatprep.subr.mxu0 0.0
        %3299 = vmatpush1.msra.mxu0 0.0
        %3300 = vmatprep.subr.mxu0 0.0
        %3301 = vmatpush1.msra.mxu0 0.0
        %3302 = vmatprep.subr.mxu0 0.0
        %3303 = vmatpush1.msra.mxu0 0.0
        %3304 = vmatprep.subr.mxu0 0.0
        %3305 = vmatpush1.msra.mxu0 0.0
        %3306 = vmatprep.subr.mxu0 0.0
        %3307 = vmatpush1.msra.mxu0 0.0
        %3308 = vmatprep.subr.mxu0 0.0
        %3309 = vmatpush1.msra.mxu0 0.0
        %3310 = vmatprep.mubr.f32.mxu0 0.0
        %3311 = vmatmul.mubr.f32.gmra.mrb[0].mxu0 %v3244
        %v3312 = vpop.f32.mrb[0].mxu0
        %v3313 = vadd.f32 %v3240, %v3312
        %v3314 = vpop.f32.mrb[0].mxu0
        %3315 = vdwg.mxu0
        %v3316 = vld [vmem:[#allocation28] sm:$0x1]
        %v3317 = vld [vmem:[#allocation30] sm:$0x1]
        %v3318 = vadd.f32 %v3141, %v3313
        %v3319 = vsel %vm1115, %v3318, 0.0
        %3320 = vadd.xlane.f32.xlu0 %v3319
        %v3321 = vpop.xlane.xlu0 %3320
        %v3322 = vmul.f32 %v3321, %v2109
        %v3323 = vsub.f32 %v3318, %v3322
        %v3324 = vmul.f32 %v3323, %v3323
        %v3325 = vsel %vm1115, %v3324, 0.0
        %3326 = vadd.xlane.f32.xlu0 %v3325
        %v3327 = vpop.xlane.xlu0 %3326
        %v3328 = vmul.f32 %v3327, %v2109
        %v3329 = vadd.f32 %v3328, 1e-05
        %v3330 = vrsqrt.pop %v3329
        %v3331 = vmul.f32 %v3323, %v3330
        %v3333 = vlaneseq
        %v3334 = vshrl.u32 %v3333, 7
        %v3335 = vsub.s32 0, %v3334
        %v3336 = vrot.slane %v3316, %v3335
        %v3338 = vmul.f32 %v3331, %v3336
        %v3340 = vlaneseq
        %v3341 = vshrl.u32 %v3340, 7
        %v3342 = vsub.s32 0, %v3341
        %v3343 = vrot.slane %v3317, %v3342
        %v3345 = vadd.f32 %v3338, %v3343
        %3346 = vst.msk [vmem:[%s1101] sm:$0xff] %vm1115, %v3345
        %p3347 = scmp.lt.s32.totalorder %s49, 1
        %s3348 = scalar_select %p3347, %s49, 1
        %s3349 = smul.addr %s3348, 8
        %s3350 = scalar_lea.vmem %s28, %s3349
        // Predicated region
        $region209: #{transformer_decoder.3} parent=131 // pred_check
          %p3351 = pneg %p665
        $region210: #{transformer_decoder.3} parent=131 // pred_check_branch
          %3353 = sbr.rel (%p3351) target = $region212
        $region211: #{transformer_decoder.3} parent=131 // pred_region
          _
        $region212: #{transformer_decoder.3} parent=131 // pred_fallthru
          _
      $region132: #{transformer_decoder.3} parent=5 // pred_fallthru
        _
      %p3354 = scmp.le.s32.totalorder 2, %s44
      // Predicated region
      $region213: #{transformer_decoder.3} parent=5 // pred_check
        %p3355 = pneg %p3354
      $region214: #{transformer_decoder.3} parent=5 // pred_check_branch
        %3357 = sbr.rel (%p3355) target = $region216
      $region215: #{transformer_decoder.3} parent=5 // pred_region
        %s3358 = ssub.s32 %s44, 2
        // Predicated region
        $region217: #{transformer_decoder.3} parent=215 // pred_check
          %p3359 = pneg %p671
        $region218: #{transformer_decoder.3} parent=215 // pred_check_branch
          %3361 = sbr.rel (%p3359) target = $region220
        $region219: #{transformer_decoder.3} parent=215 // pred_region
          %p3362 = scmp.lt.s32.totalorder %s50, 1
          %s3363 = scalar_select %p3362, %s50, 1
          %s3364 = smul.addr %s3363, 8
          %s3365 = scalar_lea.vmem %s28, %s3364
        $region220: #{transformer_decoder.3} parent=215 // pred_fallthru
          _
      $region216: #{transformer_decoder.3} parent=5 // pred_fallthru
        _
    $region6: #{transformer_decoder.3} parent=1 // loop_footer
      %s48 = sadd.s32 1, %s44
    $region7: #{transformer_decoder.3} parent=1 // loop_footer_branch
      %43 = sbr.rel target = $region3
    $region8: #{transformer_decoder.3} parent=1 // loop_exit
      _
    %3366 = vsyncpa [#allocation3], 1
    %s3367 = scalar_lea.sflag [#allocation3], 1
    %3368 = vsyncpa %s3367, 1
    %3369 = vsyncpa [#allocation5], 1
    %3370 = vsyncpa [#allocation8], 1
    %3371 = vsyncpa [#allocation11], 1
    %3372 = vsyncpa [#allocation14], 1
    %3373 = vsyncpa [#allocation17], 1
    %3374 = vsyncpa [#allocation20], 1
    %3375 = vsyncpa [#allocation23], 1
    %3376 = vsyncpa [#allocation26], 1
    %3377 = vsyncpa [#allocation29], 1

</llo_original>
